<compile_context>
chip_gen: v6e
topology: v6e:2x2x1
jax: 0.10.0
libtpu: 0.0.40
codegen_flags: <defaults>
</compile_context>

<pallas_src>
import functools

import jax
import jax.numpy as jnp
from jax.experimental import pallas as pl
from jax.experimental.pallas import tpu as pltpu


# --------------------------------- kernel ------------------------------------

def _bottleneck_kernel(xpad_ref, xres_ref, w1_ref, b1_ref, w2_ref, b2_ref,
                       o_ref, im1_ref, hpad_ref, im2_ref, *, add_shortcut):
    tb, H, W, C2 = o_ref.shape
    C1 = xpad_ref.shape[-1]
    C_mid = w1_ref.shape[-1]
    M = tb * H * W

    # ---- cv1: im2col (9 taps concatenated along K) -> one MXU matmul ----
    for t, (dy, dx) in enumerate((dy, dx) for dy in range(3) for dx in range(3)):
        patch = xpad_ref[:, dy:dy + H, dx:dx + W, :].reshape(M, C1)   # bf16
        im1_ref[:, t * C1:(t + 1) * C1] = patch
    acc1 = jnp.dot(im1_ref[...], w1_ref[...],
                   preferred_element_type=jnp.float32)                # (M, C_mid) f32
    h = acc1 + b1_ref[...]                                            # BN scale folded into w1
    h = h * pl.reciprocal(1.0 + jnp.exp(-h), approx=True)             # SiLU (exp + rcp on EUP)

    # ---- zero-padded hidden activation in a persistent VMEM scratch (no concats) ----
    hpad_ref[...] = jnp.zeros_like(hpad_ref)
    hpad_ref[:, 1:1 + H, 1:1 + W, :] = (
        h.reshape(tb, H, W, C_mid).astype(hpad_ref.dtype))

    # ---- cv2: im2col from the padded scratch -> one MXU matmul ----
    for t, (dy, dx) in enumerate((dy, dx) for dy in range(3) for dx in range(3)):
        patch = hpad_ref[:, dy:dy + H, dx:dx + W, :].reshape(M, C_mid)  # bf16
        im2_ref[:, t * C_mid:(t + 1) * C_mid] = patch
    acc2 = jnp.dot(im2_ref[...], w2_ref[...],
                   preferred_element_type=jnp.float32)                # (M, C2) f32
    y = acc2 + b2_ref[...]
    y = y * pl.reciprocal(1.0 + jnp.exp(-y), approx=True)             # SiLU

    y = y.reshape(tb, H, W, C2)
    if add_shortcut:
        y = y + xres_ref[...]                                         # f32, unstrided view

    o_ref[...] = y.astype(o_ref.dtype)


# --------------------------------- wrapper -----------------------------------

def bottleneck(x_nchw, params, *, shortcut=True, batch_tile=None):
    B, C1, H, W = x_nchw.shape
    C_mid = params["conv1_w"].shape[0]
    C2 = params["conv2_w"].shape[0]
    eps = 1e-5

    # Batch tiling: prefer >=2 grid steps (one per v7x TensorCore) while folding the
    # rest of the batch into the matmul M axis.
    if batch_tile is None:
        batch_tile = B // 2 if (B % 2 == 0 and B >= 2) else 1
    assert B % batch_tile == 0
    steps = B // batch_tile

    # NCHW -> NHWC (channels on the 128-wide lane axis).
    x = jnp.transpose(x_nchw, (0, 2, 3, 1)).astype(jnp.float32)

    # Zero-pad spatial dims for the 3x3 convs; pad the width (sublane) axis up to a
    # multiple of 8 so the tiled blocks are unpadded. Conv operands go to bf16.
    Hp = H + 2
    Wp = W + 2
    Wp_pad = -(-Wp // 8) * 8
    xpad = jnp.pad(x, ((0, 0), (1, 1), (1, 1 + (Wp_pad - Wp)), (0, 0)))
    xpad = xpad.astype(jnp.bfloat16)

    # Fold BN (inference) scale into the conv weights; keep only per-channel bias rows.
    # Weight layout: (Cout, Cin, 3, 3) -> (9*Cin, Cout), row = (ky*3+kx)*Cin + cin.
    def fold(w_oihw, g, b, rm, rv):
        s = g / jnp.sqrt(rv + eps)                                    # (Cout,)
        w = jnp.transpose(w_oihw, (2, 3, 1, 0))                       # (3,3,Cin,Cout)
        cin, cout = w.shape[2], w.shape[3]
        w = (w * s[None, None, None, :]).reshape(9 * cin, cout)
        bias = (b - rm * s).reshape(1, -1).astype(jnp.float32)
        return w.astype(jnp.bfloat16), bias

    w1, b1 = fold(params["conv1_w"], params["bn1_g"], params["bn1_b"],
                  params["bn1_rm"], params["bn1_rv"])
    w2, b2 = fold(params["conv2_w"], params["bn2_g"], params["bn2_b"],
                  params["bn2_rm"], params["bn2_rv"])

    add = bool(shortcut and C1 == C2)
    kernel = functools.partial(_bottleneck_kernel, add_shortcut=add)

    M = batch_tile * H * W
    flops = 2 * B * H * W * 9 * (C1 * C_mid + C_mid * C2)
    transcendentals = B * H * W * (C_mid + C2)                        # one exp per SiLU elem
    bytes_accessed = (2 * xpad.size + 4 * x.size + 4 * B * H * W * C2
                      + 2 * (w1.size + w2.size) + 4 * (b1.size + b2.size))

    out_nhwc = pl.pallas_call(
        kernel,
        out_shape=jax.ShapeDtypeStruct((B, H, W, C2), jnp.float32),
        grid_spec=pltpu.PrefetchScalarGridSpec(
            num_scalar_prefetch=0,
            grid=(steps,),
            in_specs=[
                pl.BlockSpec((batch_tile, Hp, Wp_pad, C1), lambda b: (b, 0, 0, 0)),
                pl.BlockSpec((batch_tile, H, W, C1), lambda b: (b, 0, 0, 0)),
                pl.BlockSpec((9 * C1, C_mid), lambda b: (0, 0)),
                pl.BlockSpec((1, C_mid), lambda b: (0, 0)),
                pl.BlockSpec((9 * C_mid, C2), lambda b: (0, 0)),
                pl.BlockSpec((1, C2), lambda b: (0, 0)),
            ],
            out_specs=pl.BlockSpec((batch_tile, H, W, C2), lambda b: (b, 0, 0, 0)),
            scratch_shapes=[
                pltpu.VMEM((M, 9 * C1), jnp.bfloat16),                 # im2col for cv1
                pltpu.VMEM((batch_tile, Hp, Wp_pad, C_mid), jnp.bfloat16),  # padded hidden act
                pltpu.VMEM((M, 9 * C_mid), jnp.bfloat16),              # im2col for cv2
            ],
        ),
        compiler_params=pltpu.CompilerParams(
            dimension_semantics=("parallel",)),
        cost_estimate=pl.CostEstimate(flops=flops,
                                      transcendentals=transcendentals,
                                      bytes_accessed=bytes_accessed),
    )(xpad, x, w1, b1, w2, b2)

    return jnp.transpose(out_nhwc, (0, 3, 1, 2))


# ----------------------- deterministic parameter init ------------------------

def init_params(key, c1, c2, e=0.5):
    c_ = int(c2 * e)
    ks = jax.random.split(key, 10)

    def n(k, shape, s=0.05):
        return s * jax.random.normal(k, shape, jnp.float32)

    return dict(
        conv1_w=n(ks[0], (c_, c1, 3, 3)),
        bn1_g=1.0 + 0.1 * jax.random.normal(ks[1], (c_,), dtype=jnp.float32),
        bn1_b=n(ks[2], (c_,), 0.02),
        bn1_rm=n(ks[3], (c_,), 0.02),
        bn1_rv=1.0 + 0.1 * jax.random.uniform(ks[4], (c_,), dtype=jnp.float32),
        conv2_w=n(ks[5], (c2, c_, 3, 3)),
        bn2_g=1.0 + 0.1 * jax.random.normal(ks[6], (c2,), dtype=jnp.float32),
        bn2_b=n(ks[7], (c2,), 0.02),
        bn2_rm=n(ks[8], (c2,), 0.02),
        bn2_rv=1.0 + 0.1 * jax.random.uniform(ks[9], (c2,), dtype=jnp.float32),
    )


# ------------------------- pure-JAX reference (check) ------------------------

def reference(x, params, *, shortcut=True):
    eps = 1e-5

    def conv_bn_silu(z, w, g, b, rm, rv):
        y = jax.lax.conv_general_dilated(
            z, w, window_strides=(1, 1), padding=((1, 1), (1, 1)),
            dimension_numbers=("NCHW", "OIHW", "NCHW"),
            precision=jax.lax.Precision.HIGHEST)
        s = g / jnp.sqrt(rv + eps)
        y = y * s[None, :, None, None] + (b - rm * s)[None, :, None, None]
        return y * jax.nn.sigmoid(y)

    y = conv_bn_silu(x, params["conv1_w"], params["bn1_g"], params["bn1_b"],
                     params["bn1_rm"], params["bn1_rv"])
    y = conv_bn_silu(y, params["conv2_w"], params["bn2_g"], params["bn2_b"],
                     params["bn2_rm"], params["bn2_rv"])
    add = shortcut and x.shape[1] == y.shape[1]
    return x + y if add else y


# ----------------------------------- main -------------------------------------

if __name__ == "__main__":
    B, C, H, W = 2, 128, 16, 16          # c1 = c2 = 128, e = 0.5 -> c_ = 64
    key = jax.random.PRNGKey(0)
    kx, kp = jax.random.split(key)
    x = jax.random.normal(kx, (B, C, H, W), jnp.float32)
    params = init_params(kp, C, C, e=0.5)

    out = bottleneck(x, params, shortcut=True)
    out = jax.block_until_ready(out)

    ref = reference(x, params, shortcut=True)
    max_err = float(jnp.max(jnp.abs(out - ref)))
    rms_err = float(jnp.sqrt(jnp.mean((out - ref) ** 2)))
    assert out.shape == (B, C, H, W)
    # bf16 MXU operands (native single-pass mode) => bf16-level numerics vs f32 reference.
    assert max_err < 1e-1, f"max abs err {max_err}"
    assert rms_err < 2e-2, f"rms err {rms_err}"

    print("KERNEL_OK")
</pallas_src>

<mosaic_0001>
module attributes {stable_mosaic.version = 11 : i64} {
  func.func @_bottleneck_kernel(%arg0: i32, %arg1: memref<1x18x24x128xbf16, #tpu.memory_space<vmem>>, %arg2: memref<1x16x16x128xf32, #tpu.memory_space<vmem>>, %arg3: memref<1152x64xbf16, #tpu.memory_space<vmem>>, %arg4: memref<1x64xf32, #tpu.memory_space<vmem>>, %arg5: memref<576x128xbf16, #tpu.memory_space<vmem>>, %arg6: memref<1x128xf32, #tpu.memory_space<vmem>>, %arg7: memref<1x16x16x128xf32, #tpu.memory_space<vmem>>, %arg8: memref<256x1152xbf16, #tpu.memory_space<vmem>>, %arg9: memref<1x18x24x64xbf16, #tpu.memory_space<vmem>>, %arg10: memref<256x576xbf16, #tpu.memory_space<vmem>>) attributes {dimension_semantics = [#tpu.dimension_semantics<parallel>], iteration_bounds = array<i64: 2>, scalar_prefetch = 0 : i64, scratch_operands = 3 : i64, tpu.core_type = #tpu.core_type<tc>, window_params = [{transform_indices = @transform_0, window_bounds = array<i64: 1, 18, 24, 128>}, {transform_indices = @transform_1, window_bounds = array<i64: 1, 16, 16, 128>}, {pipeline_mode = #tpu.pipeline_mode<synchronous>, transform_indices = @transform_2, window_bounds = array<i64: 1152, 64>}, {pipeline_mode = #tpu.pipeline_mode<synchronous>, transform_indices = @transform_3, window_bounds = array<i64: 1, 64>}, {pipeline_mode = #tpu.pipeline_mode<synchronous>, transform_indices = @transform_4, window_bounds = array<i64: 576, 128>}, {pipeline_mode = #tpu.pipeline_mode<synchronous>, transform_indices = @transform_5, window_bounds = array<i64: 1, 128>}, {transform_indices = @transform_6, window_bounds = array<i64: 1, 16, 16, 128>}]} {
    %c0 = arith.constant 0 : index
    %c0_0 = arith.constant 0 : index
    %c0_1 = arith.constant 0 : index
    %c0_2 = arith.constant 0 : index
    %0 = vector.load %arg1[%c0, %c0_0, %c0_1, %c0_2] : memref<1x18x24x128xbf16, #tpu.memory_space<vmem>>, vector<1x16x16x128xbf16>
    %1 = vector.shape_cast %0 : vector<1x16x16x128xbf16> to vector<256x128xbf16>
    %c0_3 = arith.constant 0 : index
    %c0_4 = arith.constant 0 : index
    %2 = vector.load %arg8[%c0_3, %c0_4] : memref<256x1152xbf16, #tpu.memory_space<vmem>>, vector<256x128xbf16>
    tpu.vector_store %arg8[%c0_3, %c0_4], %1 {strides = array<i32>} : memref<256x1152xbf16, #tpu.memory_space<vmem>>, vector<256x128xbf16>,
    %c0_5 = arith.constant 0 : index
    %c0_6 = arith.constant 0 : index
    %c1 = arith.constant 1 : index
    %c0_7 = arith.constant 0 : index
    %3 = vector.load %arg1[%c0_5, %c0_6, %c1, %c0_7] : memref<1x18x24x128xbf16, #tpu.memory_space<vmem>>, vector<1x16x16x128xbf16>
    %4 = vector.shape_cast %3 : vector<1x16x16x128xbf16> to vector<256x128xbf16>
    %c0_8 = arith.constant 0 : index
    %c128 = arith.constant 128 : index
    %5 = vector.load %arg8[%c0_8, %c128] : memref<256x1152xbf16, #tpu.memory_space<vmem>>, vector<256x128xbf16>
    tpu.vector_store %arg8[%c0_8, %c128], %4 {strides = array<i32>} : memref<256x1152xbf16, #tpu.memory_space<vmem>>, vector<256x128xbf16>,
    %c0_9 = arith.constant 0 : index
    %c0_10 = arith.constant 0 : index
    %c2 = arith.constant 2 : index
    %c0_11 = arith.constant 0 : index
    %6 = vector.load %arg1[%c0_9, %c0_10, %c2, %c0_11] : memref<1x18x24x128xbf16, #tpu.memory_space<vmem>>, vector<1x16x16x128xbf16>
    %7 = vector.shape_cast %6 : vector<1x16x16x128xbf16> to vector<256x128xbf16>
    %c0_12 = arith.constant 0 : index
    %c256 = arith.constant 256 : index
    %8 = vector.load %arg8[%c0_12, %c256] : memref<256x1152xbf16, #tpu.memory_space<vmem>>, vector<256x128xbf16>
    tpu.vector_store %arg8[%c0_12, %c256], %7 {strides = array<i32>} : memref<256x1152xbf16, #tpu.memory_space<vmem>>, vector<256x128xbf16>,
    %c0_13 = arith.constant 0 : index
    %c1_14 = arith.constant 1 : index
    %c0_15 = arith.constant 0 : index
    %c0_16 = arith.constant 0 : index
    %9 = vector.load %arg1[%c0_13, %c1_14, %c0_15, %c0_16] : memref<1x18x24x128xbf16, #tpu.memory_space<vmem>>, vector<1x16x16x128xbf16>
    %10 = vector.shape_cast %9 : vector<1x16x16x128xbf16> to vector<256x128xbf16>
    %c0_17 = arith.constant 0 : index
    %c384 = arith.constant 384 : index
    %11 = vector.load %arg8[%c0_17, %c384] : memref<256x1152xbf16, #tpu.memory_space<vmem>>, vector<256x128xbf16>
    tpu.vector_store %arg8[%c0_17, %c384], %10 {strides = array<i32>} : memref<256x1152xbf16, #tpu.memory_space<vmem>>, vector<256x128xbf16>,
    %c0_18 = arith.constant 0 : index
    %c1_19 = arith.constant 1 : index
    %c1_20 = arith.constant 1 : index
    %c0_21 = arith.constant 0 : index
    %12 = vector.load %arg1[%c0_18, %c1_19, %c1_20, %c0_21] : memref<1x18x24x128xbf16, #tpu.memory_space<vmem>>, vector<1x16x16x128xbf16>
    %13 = vector.shape_cast %12 : vector<1x16x16x128xbf16> to vector<256x128xbf16>
    %c0_22 = arith.constant 0 : index
    %c512 = arith.constant 512 : index
    %14 = vector.load %arg8[%c0_22, %c512] : memref<256x1152xbf16, #tpu.memory_space<vmem>>, vector<256x128xbf16>
    tpu.vector_store %arg8[%c0_22, %c512], %13 {strides = array<i32>} : memref<256x1152xbf16, #tpu.memory_space<vmem>>, vector<256x128xbf16>,
    %c0_23 = arith.constant 0 : index
    %c1_24 = arith.constant 1 : index
    %c2_25 = arith.constant 2 : index
    %c0_26 = arith.constant 0 : index
    %15 = vector.load %arg1[%c0_23, %c1_24, %c2_25, %c0_26] : memref<1x18x24x128xbf16, #tpu.memory_space<vmem>>, vector<1x16x16x128xbf16>
    %16 = vector.shape_cast %15 : vector<1x16x16x128xbf16> to vector<256x128xbf16>
    %c0_27 = arith.constant 0 : index
    %c640 = arith.constant 640 : index
    %17 = vector.load %arg8[%c0_27, %c640] : memref<256x1152xbf16, #tpu.memory_space<vmem>>, vector<256x128xbf16>
    tpu.vector_store %arg8[%c0_27, %c640], %16 {strides = array<i32>} : memref<256x1152xbf16, #tpu.memory_space<vmem>>, vector<256x128xbf16>,
    %c0_28 = arith.constant 0 : index
    %c2_29 = arith.constant 2 : index
    %c0_30 = arith.constant 0 : index
    %c0_31 = arith.constant 0 : index
    %18 = vector.load %arg1[%c0_28, %c2_29, %c0_30, %c0_31] : memref<1x18x24x128xbf16, #tpu.memory_space<vmem>>, vector<1x16x16x128xbf16>
    %19 = vector.shape_cast %18 : vector<1x16x16x128xbf16> to vector<256x128xbf16>
    %c0_32 = arith.constant 0 : index
    %c768 = arith.constant 768 : index
    %20 = vector.load %arg8[%c0_32, %c768] : memref<256x1152xbf16, #tpu.memory_space<vmem>>, vector<256x128xbf16>
    tpu.vector_store %arg8[%c0_32, %c768], %19 {strides = array<i32>} : memref<256x1152xbf16, #tpu.memory_space<vmem>>, vector<256x128xbf16>,
    %c0_33 = arith.constant 0 : index
    %c2_34 = arith.constant 2 : index
    %c1_35 = arith.constant 1 : index
    %c0_36 = arith.constant 0 : index
    %21 = vector.load %arg1[%c0_33, %c2_34, %c1_35, %c0_36] : memref<1x18x24x128xbf16, #tpu.memory_space<vmem>>, vector<1x16x16x128xbf16>
    %22 = vector.shape_cast %21 : vector<1x16x16x128xbf16> to vector<256x128xbf16>
    %c0_37 = arith.constant 0 : index
    %c896 = arith.constant 896 : index
    %23 = vector.load %arg8[%c0_37, %c896] : memref<256x1152xbf16, #tpu.memory_space<vmem>>, vector<256x128xbf16>
    tpu.vector_store %arg8[%c0_37, %c896], %22 {strides = array<i32>} : memref<256x1152xbf16, #tpu.memory_space<vmem>>, vector<256x128xbf16>,
    %c0_38 = arith.constant 0 : index
    %c2_39 = arith.constant 2 : index
    %c2_40 = arith.constant 2 : index
    %c0_41 = arith.constant 0 : index
    %24 = vector.load %arg1[%c0_38, %c2_39, %c2_40, %c0_41] : memref<1x18x24x128xbf16, #tpu.memory_space<vmem>>, vector<1x16x16x128xbf16>
    %25 = vector.shape_cast %24 : vector<1x16x16x128xbf16> to vector<256x128xbf16>
    %c0_42 = arith.constant 0 : index
    %c1024 = arith.constant 1024 : index
    %26 = vector.load %arg8[%c0_42, %c1024] : memref<256x1152xbf16, #tpu.memory_space<vmem>>, vector<256x128xbf16>
    tpu.vector_store %arg8[%c0_42, %c1024], %25 {strides = array<i32>} : memref<256x1152xbf16, #tpu.memory_space<vmem>>, vector<256x128xbf16>,
    %c0_43 = arith.constant 0 : index
    %c0_44 = arith.constant 0 : index
    %27 = vector.load %arg8[%c0_43, %c0_44] : memref<256x1152xbf16, #tpu.memory_space<vmem>>, vector<256x1152xbf16>
    %c0_45 = arith.constant 0 : index
    %c0_46 = arith.constant 0 : index
    %28 = vector.load %arg3[%c0_45, %c0_46] : memref<1152x64xbf16, #tpu.memory_space<vmem>>, vector<1152x64xbf16>
    %cst = arith.constant dense<0.000000e+00> : vector<256x64xf32>
    %29 = tpu.matmul %27, %28, %cst {dimension_numbers = #tpu.dot_dimension_numbers<[1], [0], [0], [1], [0, 0, 1, 1], [], []>} : vector<256x1152xbf16>, vector<1152x64xbf16>, vector<256x64xf32> -> vector<256x64xf32>
    %c0_47 = arith.constant 0 : index
    %c0_48 = arith.constant 0 : index
    %30 = vector.load %arg4[%c0_47, %c0_48] : memref<1x64xf32, #tpu.memory_space<vmem>>, vector<1x64xf32>
    %31 = vector.broadcast %30 : vector<1x64xf32> to vector<256x64xf32>
    %32 = arith.addf %29, %31 : vector<256x64xf32>
    %cst_49 = arith.constant 0.000000e+00 : f32
    %33 = vector.broadcast %cst_49 : f32 to vector<256x64xf32>
    %34 = arith.subf %33, %32 : vector<256x64xf32>
    %35 = math.exp %34 : vector<256x64xf32>
    %cst_50 = arith.constant 1.000000e+00 : f32
    %36 = vector.broadcast %cst_50 : f32 to vector<256x64xf32>
    %37 = arith.addf %36, %35 : vector<256x64xf32>
    %38 = tpu.reciprocal %37 {approx = true} : vector<256x64xf32> -> vector<256x64xf32>
    %39 = arith.mulf %32, %38 : vector<256x64xf32>
    %cst_51 = arith.constant 0.000000e+00 : bf16
    %40 = vector.broadcast %cst_51 : bf16 to vector<1x18x24x64xbf16>
    %c0_52 = arith.constant 0 : index
    %c0_53 = arith.constant 0 : index
    %c0_54 = arith.constant 0 : index
    %c0_55 = arith.constant 0 : index
    %41 = vector.load %arg9[%c0_52, %c0_53, %c0_54, %c0_55] : memref<1x18x24x64xbf16, #tpu.memory_space<vmem>>, vector<1x18x24x64xbf16>
    tpu.vector_store %arg9[%c0_52, %c0_53, %c0_54, %c0_55], %40 {strides = array<i32>} : memref<1x18x24x64xbf16, #tpu.memory_space<vmem>>, vector<1x18x24x64xbf16>,
    %42 = vector.shape_cast %39 : vector<256x64xf32> to vector<1x16x16x64xf32>
    %43 = arith.truncf %42 : vector<1x16x16x64xf32> to vector<1x16x16x64xbf16>
    %c0_56 = arith.constant 0 : index
    %c1_57 = arith.constant 1 : index
    %c1_58 = arith.constant 1 : index
    %c0_59 = arith.constant 0 : index
    %44 = vector.load %arg9[%c0_56, %c1_57, %c1_58, %c0_59] : memref<1x18x24x64xbf16, #tpu.memory_space<vmem>>, vector<1x16x16x64xbf16>
    tpu.vector_store %arg9[%c0_56, %c1_57, %c1_58, %c0_59], %43 {strides = array<i32>} : memref<1x18x24x64xbf16, #tpu.memory_space<vmem>>, vector<1x16x16x64xbf16>,
    %c0_60 = arith.constant 0 : index
    %c0_61 = arith.constant 0 : index
    %c0_62 = arith.constant 0 : index
    %c0_63 = arith.constant 0 : index
    %45 = vector.load %arg9[%c0_60, %c0_61, %c0_62, %c0_63] : memref<1x18x24x64xbf16, #tpu.memory_space<vmem>>, vector<1x16x16x64xbf16>
    %46 = vector.shape_cast %45 : vector<1x16x16x64xbf16> to vector<256x64xbf16>
    %c0_64 = arith.constant 0 : index
    %c0_65 = arith.constant 0 : index
    %47 = vector.load %arg10[%c0_64, %c0_65] : memref<256x576xbf16, #tpu.memory_space<vmem>>, vector<256x64xbf16>
    tpu.vector_store %arg10[%c0_64, %c0_65], %46 {strides = array<i32>} : memref<256x576xbf16, #tpu.memory_space<vmem>>, vector<256x64xbf16>,
    %c0_66 = arith.constant 0 : index
    %c0_67 = arith.constant 0 : index
    %c1_68 = arith.constant 1 : index
    %c0_69 = arith.constant 0 : index
    %48 = vector.load %arg9[%c0_66, %c0_67, %c1_68, %c0_69] : memref<1x18x24x64xbf16, #tpu.memory_space<vmem>>, vector<1x16x16x64xbf16>
    %49 = vector.shape_cast %48 : vector<1x16x16x64xbf16> to vector<256x64xbf16>
    %c0_70 = arith.constant 0 : index
    %c64 = arith.constant 64 : index
    %50 = vector.load %arg10[%c0_70, %c64] : memref<256x576xbf16, #tpu.memory_space<vmem>>, vector<256x64xbf16>
    tpu.vector_store %arg10[%c0_70, %c64], %49 {strides = array<i32>} : memref<256x576xbf16, #tpu.memory_space<vmem>>, vector<256x64xbf16>,
    %c0_71 = arith.constant 0 : index
    %c0_72 = arith.constant 0 : index
    %c2_73 = arith.constant 2 : index
    %c0_74 = arith.constant 0 : index
    %51 = vector.load %arg9[%c0_71, %c0_72, %c2_73, %c0_74] : memref<1x18x24x64xbf16, #tpu.memory_space<vmem>>, vector<1x16x16x64xbf16>
    %52 = vector.shape_cast %51 : vector<1x16x16x64xbf16> to vector<256x64xbf16>
    %c0_75 = arith.constant 0 : index
    %c128_76 = arith.constant 128 : index
    %53 = vector.load %arg10[%c0_75, %c128_76] : memref<256x576xbf16, #tpu.memory_space<vmem>>, vector<256x64xbf16>
    tpu.vector_store %arg10[%c0_75, %c128_76], %52 {strides = array<i32>} : memref<256x576xbf16, #tpu.memory_space<vmem>>, vector<256x64xbf16>,
    %c0_77 = arith.constant 0 : index
    %c1_78 = arith.constant 1 : index
    %c0_79 = arith.constant 0 : index
    %c0_80 = arith.constant 0 : index
    %54 = vector.load %arg9[%c0_77, %c1_78, %c0_79, %c0_80] : memref<1x18x24x64xbf16, #tpu.memory_space<vmem>>, vector<1x16x16x64xbf16>
    %55 = vector.shape_cast %54 : vector<1x16x16x64xbf16> to vector<256x64xbf16>
    %c0_81 = arith.constant 0 : index
    %c192 = arith.constant 192 : index
    %56 = vector.load %arg10[%c0_81, %c192] : memref<256x576xbf16, #tpu.memory_space<vmem>>, vector<256x64xbf16>
    tpu.vector_store %arg10[%c0_81, %c192], %55 {strides = array<i32>} : memref<256x576xbf16, #tpu.memory_space<vmem>>, vector<256x64xbf16>,
    %c0_82 = arith.constant 0 : index
    %c1_83 = arith.constant 1 : index
    %c1_84 = arith.constant 1 : index
    %c0_85 = arith.constant 0 : index
    %57 = vector.load %arg9[%c0_82, %c1_83, %c1_84, %c0_85] : memref<1x18x24x64xbf16, #tpu.memory_space<vmem>>, vector<1x16x16x64xbf16>
    %58 = vector.shape_cast %57 : vector<1x16x16x64xbf16> to vector<256x64xbf16>
    %c0_86 = arith.constant 0 : index
    %c256_87 = arith.constant 256 : index
    %59 = vector.load %arg10[%c0_86, %c256_87] : memref<256x576xbf16, #tpu.memory_space<vmem>>, vector<256x64xbf16>
    tpu.vector_store %arg10[%c0_86, %c256_87], %58 {strides = array<i32>} : memref<256x576xbf16, #tpu.memory_space<vmem>>, vector<256x64xbf16>,
    %c0_88 = arith.constant 0 : index
    %c1_89 = arith.constant 1 : index
    %c2_90 = arith.constant 2 : index
    %c0_91 = arith.constant 0 : index
    %60 = vector.load %arg9[%c0_88, %c1_89, %c2_90, %c0_91] : memref<1x18x24x64xbf16, #tpu.memory_space<vmem>>, vector<1x16x16x64xbf16>
    %61 = vector.shape_cast %60 : vector<1x16x16x64xbf16> to vector<256x64xbf16>
    %c0_92 = arith.constant 0 : index
    %c320 = arith.constant 320 : index
    %62 = vector.load %arg10[%c0_92, %c320] : memref<256x576xbf16, #tpu.memory_space<vmem>>, vector<256x64xbf16>
    tpu.vector_store %arg10[%c0_92, %c320], %61 {strides = array<i32>} : memref<256x576xbf16, #tpu.memory_space<vmem>>, vector<256x64xbf16>,
    %c0_93 = arith.constant 0 : index
    %c2_94 = arith.constant 2 : index
    %c0_95 = arith.constant 0 : index
    %c0_96 = arith.constant 0 : index
    %63 = vector.load %arg9[%c0_93, %c2_94, %c0_95, %c0_96] : memref<1x18x24x64xbf16, #tpu.memory_space<vmem>>, vector<1x16x16x64xbf16>
    %64 = vector.shape_cast %63 : vector<1x16x16x64xbf16> to vector<256x64xbf16>
    %c0_97 = arith.constant 0 : index
    %c384_98 = arith.constant 384 : index
    %65 = vector.load %arg10[%c0_97, %c384_98] : memref<256x576xbf16, #tpu.memory_space<vmem>>, vector<256x64xbf16>
    tpu.vector_store %arg10[%c0_97, %c384_98], %64 {strides = array<i32>} : memref<256x576xbf16, #tpu.memory_space<vmem>>, vector<256x64xbf16>,
    %c0_99 = arith.constant 0 : index
    %c2_100 = arith.constant 2 : index
    %c1_101 = arith.constant 1 : index
    %c0_102 = arith.constant 0 : index
    %66 = vector.load %arg9[%c0_99, %c2_100, %c1_101, %c0_102] : memref<1x18x24x64xbf16, #tpu.memory_space<vmem>>, vector<1x16x16x64xbf16>
    %67 = vector.shape_cast %66 : vector<1x16x16x64xbf16> to vector<256x64xbf16>
    %c0_103 = arith.constant 0 : index
    %c448 = arith.constant 448 : index
    %68 = vector.load %arg10[%c0_103, %c448] : memref<256x576xbf16, #tpu.memory_space<vmem>>, vector<256x64xbf16>
    tpu.vector_store %arg10[%c0_103, %c448], %67 {strides = array<i32>} : memref<256x576xbf16, #tpu.memory_space<vmem>>, vector<256x64xbf16>,
    %c0_104 = arith.constant 0 : index
    %c2_105 = arith.constant 2 : index
    %c2_106 = arith.constant 2 : index
    %c0_107 = arith.constant 0 : index
    %69 = vector.load %arg9[%c0_104, %c2_105, %c2_106, %c0_107] : memref<1x18x24x64xbf16, #tpu.memory_space<vmem>>, vector<1x16x16x64xbf16>
    %70 = vector.shape_cast %69 : vector<1x16x16x64xbf16> to vector<256x64xbf16>
    %c0_108 = arith.constant 0 : index
    %c512_109 = arith.constant 512 : index
    %71 = vector.load %arg10[%c0_108, %c512_109] : memref<256x576xbf16, #tpu.memory_space<vmem>>, vector<256x64xbf16>
    tpu.vector_store %arg10[%c0_108, %c512_109], %70 {strides = array<i32>} : memref<256x576xbf16, #tpu.memory_space<vmem>>, vector<256x64xbf16>,
    %c0_110 = arith.constant 0 : index
    %c0_111 = arith.constant 0 : index
    %72 = vector.load %arg10[%c0_110, %c0_111] : memref<256x576xbf16, #tpu.memory_space<vmem>>, vector<256x576xbf16>
    %c0_112 = arith.constant 0 : index
    %c0_113 = arith.constant 0 : index
    %73 = vector.load %arg5[%c0_112, %c0_113] : memref<576x128xbf16, #tpu.memory_space<vmem>>, vector<576x128xbf16>
    %cst_114 = arith.constant dense<0.000000e+00> : vector<256x128xf32>
    %74 = tpu.matmul %72, %73, %cst_114 {dimension_numbers = #tpu.dot_dimension_numbers<[1], [0], [0], [1], [0, 0, 1, 1], [], []>} : vector<256x576xbf16>, vector<576x128xbf16>, vector<256x128xf32> -> vector<256x128xf32>
    %c0_115 = arith.constant 0 : index
    %c0_116 = arith.constant 0 : index
    %75 = vector.load %arg6[%c0_115, %c0_116] : memref<1x128xf32, #tpu.memory_space<vmem>>, vector<1x128xf32>
    %76 = vector.broadcast %75 : vector<1x128xf32> to vector<256x128xf32>
    %77 = arith.addf %74, %76 : vector<256x128xf32>
    %cst_117 = arith.constant 0.000000e+00 : f32
    %78 = vector.broadcast %cst_117 : f32 to vector<256x128xf32>
    %79 = arith.subf %78, %77 : vector<256x128xf32>
    %80 = math.exp %79 : vector<256x128xf32>
    %cst_118 = arith.constant 1.000000e+00 : f32
    %81 = vector.broadcast %cst_118 : f32 to vector<256x128xf32>
    %82 = arith.addf %81, %80 : vector<256x128xf32>
    %83 = tpu.reciprocal %82 {approx = true} : vector<256x128xf32> -> vector<256x128xf32>
    %84 = arith.mulf %77, %83 : vector<256x128xf32>
    %85 = vector.shape_cast %84 : vector<256x128xf32> to vector<1x16x16x128xf32>
    %c0_119 = arith.constant 0 : index
    %c0_120 = arith.constant 0 : index
    %c0_121 = arith.constant 0 : index
    %c0_122 = arith.constant 0 : index
    %86 = vector.load %arg2[%c0_119, %c0_120, %c0_121, %c0_122] : memref<1x16x16x128xf32, #tpu.memory_space<vmem>>, vector<1x16x16x128xf32>
    %87 = arith.addf %85, %86 : vector<1x16x16x128xf32>
    %c0_123 = arith.constant 0 : index
    %c0_124 = arith.constant 0 : index
    %c0_125 = arith.constant 0 : index
    %c0_126 = arith.constant 0 : index
    %88 = vector.load %arg7[%c0_123, %c0_124, %c0_125, %c0_126] : memref<1x16x16x128xf32, #tpu.memory_space<vmem>>, vector<1x16x16x128xf32>
    tpu.vector_store %arg7[%c0_123, %c0_124, %c0_125, %c0_126], %87 {strides = array<i32>} : memref<1x16x16x128xf32, #tpu.memory_space<vmem>>, vector<1x16x16x128xf32>,
    return
  }
  func.func @transform_0(%arg0: i32) -> (i32, i32, i32, i32) {
    %c0_i32 = arith.constant 0 : i32
    %c0_i32_0 = arith.constant 0 : i32
    %c0_i32_1 = arith.constant 0 : i32
    %c0_i32_2 = arith.constant 0 : i32
    return %arg0, %c0_i32, %c0_i32_0, %c0_i32_1 : i32, i32, i32, i32
  }
  func.func @transform_1(%arg0: i32) -> (i32, i32, i32, i32) {
    %c0_i32 = arith.constant 0 : i32
    %c0_i32_0 = arith.constant 0 : i32
    %c0_i32_1 = arith.constant 0 : i32
    %c0_i32_2 = arith.constant 0 : i32
    return %arg0, %c0_i32, %c0_i32_0, %c0_i32_1 : i32, i32, i32, i32
  }
  func.func @transform_2(%arg0: i32) -> (i32, i32) {
    %c0_i32 = arith.constant 0 : i32
    %c0_i32_0 = arith.constant 0 : i32
    %c0_i32_1 = arith.constant 0 : i32
    return %c0_i32, %c0_i32_0 : i32, i32
  }
  func.func @transform_3(%arg0: i32) -> (i32, i32) {
    %c0_i32 = arith.constant 0 : i32
    %c0_i32_0 = arith.constant 0 : i32
    %c0_i32_1 = arith.constant 0 : i32
    return %c0_i32, %c0_i32_0 : i32, i32
  }
  func.func @transform_4(%arg0: i32) -> (i32, i32) {
    %c0_i32 = arith.constant 0 : i32
    %c0_i32_0 = arith.constant 0 : i32
    %c0_i32_1 = arith.constant 0 : i32
    return %c0_i32, %c0_i32_0 : i32, i32
  }
  func.func @transform_5(%arg0: i32) -> (i32, i32) {
    %c0_i32 = arith.constant 0 : i32
    %c0_i32_0 = arith.constant 0 : i32
    %c0_i32_1 = arith.constant 0 : i32
    return %c0_i32, %c0_i32_0 : i32, i32
  }
  func.func @transform_6(%arg0: i32) -> (i32, i32, i32, i32) {
    %c0_i32 = arith.constant 0 : i32
    %c0_i32_0 = arith.constant 0 : i32
    %c0_i32_1 = arith.constant 0 : i32
    %c0_i32_2 = arith.constant 0 : i32
    return %arg0, %c0_i32, %c0_i32_0, %c0_i32_1 : i32, i32, i32, i32
  }
}

</mosaic_0001>

<llo_original>
// kernel: tpu_custom_call.1
$region0: #{tpu_custom_call.1}
  #allocation0 [shape = 'u32[]', space=smem, size = 0x4, offset = 0x4, fixed_abs, tag = 'smem constant byte address 0x4 - core index']
  #allocation1 [shape = 'u32[144,128]{1,0:T(1,128)}', space=vmem, size = 0x12000, scoped, tag = 'internal scratch']
  #allocation2 [shape = 'bf16[256,1152]{1,0:T(8,128)(2,1)}', space=vmem, size = 0x90000, scoped, tag = 'scratch operand']
  #allocation3 [shape = 'bf16[1,18,24,64]{3,2,1,0:T(8,128)(2,1)}', space=vmem, size = 0x1b000, scoped, tag = 'scratch operand']
  #allocation4 [shape = 'bf16[256,576]{1,0:T(8,128)(2,1)}', space=vmem, size = 0x50000, scoped, tag = 'scratch operand']
  %s0 = inlined_call_operand.hbm [shape: bf16[2,18,24,128], index: 0, kind: input, shape index: {}]
  %s1 = inlined_call_operand.vmem [shape: f32[2,16,16,128], index: 1, kind: input, shape index: {}]
  %s2 = inlined_call_operand.vmem [shape: bf16[1152,64], index: 2, kind: input, shape index: {}]
  %s3 = inlined_call_operand.vmem [shape: f32[1,64], index: 3, kind: input, shape index: {}]
  %s4 = inlined_call_operand.vmem [shape: bf16[576,128], index: 4, kind: input, shape index: {}]
  %s5 = inlined_call_operand.vmem [shape: f32[1,128], index: 5, kind: input, shape index: {}]
  %s6 = inlined_call_operand.hbm [shape: f32[2,16,16,128], index: 6, kind: output, shape index: {}]
  %s7 = sld [smem:[#allocation0]]
  $region61: #{tpu_custom_call.1} parent=0
    _
  %s9 = ssub.s32 1, %s7
  %s10 = scalar_select 0, %s9, %s7
  $region1: #{tpu_custom_call.1} parent=0
    #allocation5 [shape = 'u8[221184]{0}', space=vmem, size = 0x36000, scoped, tag = 'input window, operand 0']
    #allocation6 [shape = 's32[2]{0}', space=sflag, size = 0x8, scoped, tag = 'scoped memory for tpu_custom_call.1']
    #allocation7 [shape = 's32[2]{0}', space=sflag, size = 0x8, scoped, tag = 'scoped memory for tpu_custom_call.1']
    #allocation8 [shape = 'u8[262144]{0}', space=vmem, size = 0x40000, scoped, tag = 'output window, operand 0']
    %11 = vsyncpa [#allocation6], 0
    %s12 = scalar_lea.sflag [#allocation6], 1
    %13 = vsyncpa %s12, 0
    %14 = vsyncpa [#allocation7], 0
    %s15 = scalar_lea.sflag [#allocation7], 1
    %16 = vsyncpa %s15, 0
    loop: start=0, step=1, limit=4
    $region2: #{tpu_custom_call.1} parent=1 // loop_pre_header
      _
    $region3: #{tpu_custom_call.1} parent=1 // loop_header
      %s18 = sphi 0, %s22
      %p19 = scmp.ge.s32.totalorder %s18, 4
      %s28 = sphi 0, %s30
      %s31 = sphi 0, %s28
      %s32 = sphi 0, %s31
      %s48 = sphi 0, %s32
      %s54 = sphi 0, %s56
      %s57 = sphi 0, %s54
      %s58 = sphi 0, %s57
      %s74 = sphi 0, %s58
      %s78 = sphi 0, %s78
      %s80 = sphi 0, %s78
      %s81 = sphi 0, %s80
      %s95 = sphi 0, %s81
      %s99 = sphi 0, %s99
      %s101 = sphi 0, %s99
      %s102 = sphi 0, %s101
      %s116 = sphi 0, %s102
      %s120 = sphi 0, %s120
      %s122 = sphi 0, %s120
      %s123 = sphi 0, %s122
      %s137 = sphi 0, %s123
      %s141 = sphi 0, %s141
      %s143 = sphi 0, %s141
      %s144 = sphi 0, %s143
      %s158 = sphi 0, %s144
      %s164 = sphi 0, %s166
      %s167 = sphi 0, %s164
      %s168 = sphi 0, %s167
      %s184 = sphi 0, %s168
    $region4: #{tpu_custom_call.1} parent=1 // loop_header_branch
      %21 = sbr.rel (%p19) target = $region8
    $region5: #{tpu_custom_call.1} parent=1 // loop_body
      %s23 = ssub.s32 %s18, 1
      %s24 = ssub.s32 %s18, 2
      %s25 = sadd.s32 %s18, 1
      %s26 = ssub.s32 %s18, %s25
      %p27 = scmp.eq.s32.totalorder %s26, 0
      %s29 = sadd.s32 %s28, 1
      %s30 = scalar_select %p27, %s28, %s29
      %p33 = pneg %p27
      %p34 = scmp.eq.s32.totalorder %s18, 1
      %p35 = por %p33, %p34
      %p36 = scmp.ne.s32.totalorder %s28, %s31
      %p37 = scmp.eq.s32.totalorder %s18, 0
      %p38 = por %p36, %p37
      %p39 = scmp.ne.s32.totalorder %s28, %s31
      %p40 = scmp.eq.s32.totalorder %s23, 1
      %p41 = por %p39, %p40
      %p42 = scmp.ne.s32.totalorder %s31, %s32
      %p43 = scmp.eq.s32.totalorder %s23, 0
      %p44 = por %p42, %p43
      %p45 = scmp.ne.s32.totalorder %s31, %s32
      %p46 = scmp.eq.s32.totalorder %s24, 1
      %p47 = por %p45, %p46
      %p49 = scmp.ne.s32.totalorder %s32, %s48
      %p50 = scmp.eq.s32.totalorder %s24, 0
      %p51 = por %p49, %p50
      %s52 = ssub.s32 %s18, %s25
      %p53 = scmp.eq.s32.totalorder %s52, 0
      %s55 = sadd.s32 %s54, 1
      %s56 = scalar_select %p53, %s54, %s55
      %p59 = pneg %p53
      %p60 = scmp.eq.s32.totalorder %s18, 1
      %p61 = por %p59, %p60
      %p62 = scmp.ne.s32.totalorder %s54, %s57
      %p63 = scmp.eq.s32.totalorder %s18, 0
      %p64 = por %p62, %p63
      %p65 = scmp.ne.s32.totalorder %s54, %s57
      %p66 = scmp.eq.s32.totalorder %s23, 1
      %p67 = por %p65, %p66
      %p68 = scmp.ne.s32.totalorder %s57, %s58
      %p69 = scmp.eq.s32.totalorder %s23, 0
      %p70 = por %p68, %p69
      %p71 = scmp.ne.s32.totalorder %s57, %s58
      %p72 = scmp.eq.s32.totalorder %s24, 1
      %p73 = por %p71, %p72
      %p75 = scmp.ne.s32.totalorder %s58, %s74
      %p76 = scmp.eq.s32.totalorder %s24, 0
      %p77 = por %p75, %p76
      %s79 = sadd.s32 %s78, 1
      %p82 = scmp.eq.s32.totalorder %s18, 1
      %p83 = scmp.ne.s32.totalorder %s78, %s80
      %p84 = scmp.eq.s32.totalorder %s18, 0
      %p85 = por %p83, %p84
      %p86 = scmp.ne.s32.totalorder %s78, %s80
      %p87 = scmp.eq.s32.totalorder %s23, 1
      %p88 = por %p86, %p87
      %p89 = scmp.ne.s32.totalorder %s80, %s81
      %p90 = scmp.eq.s32.totalorder %s23, 0
      %p91 = por %p89, %p90
      %p92 = scmp.ne.s32.totalorder %s80, %s81
      %p93 = scmp.eq.s32.totalorder %s24, 1
      %p94 = por %p92, %p93
      %p96 = scmp.ne.s32.totalorder %s81, %s95
      %p97 = scmp.eq.s32.totalorder %s24, 0
      %p98 = por %p96, %p97
      %s100 = sadd.s32 %s99, 1
      %p103 = scmp.eq.s32.totalorder %s18, 1
      %p104 = scmp.ne.s32.totalorder %s99, %s101
      %p105 = scmp.eq.s32.totalorder %s18, 0
      %p106 = por %p104, %p105
      %p107 = scmp.ne.s32.totalorder %s99, %s101
      %p108 = scmp.eq.s32.totalorder %s23, 1
      %p109 = por %p107, %p108
      %p110 = scmp.ne.s32.totalorder %s101, %s102
      %p111 = scmp.eq.s32.totalorder %s23, 0
      %p112 = por %p110, %p111
      %p113 = scmp.ne.s32.totalorder %s101, %s102
      %p114 = scmp.eq.s32.totalorder %s24, 1
      %p115 = por %p113, %p114
      %p117 = scmp.ne.s32.totalorder %s102, %s116
      %p118 = scmp.eq.s32.totalorder %s24, 0
      %p119 = por %p117, %p118
      %s121 = sadd.s32 %s120, 1
      %p124 = scmp.eq.s32.totalorder %s18, 1
      %p125 = scmp.ne.s32.totalorder %s120, %s122
      %p126 = scmp.eq.s32.totalorder %s18, 0
      %p127 = por %p125, %p126
      %p128 = scmp.ne.s32.totalorder %s120, %s122
      %p129 = scmp.eq.s32.totalorder %s23, 1
      %p130 = por %p128, %p129
      %p131 = scmp.ne.s32.totalorder %s122, %s123
      %p132 = scmp.eq.s32.totalorder %s23, 0
      %p133 = por %p131, %p132
      %p134 = scmp.ne.s32.totalorder %s122, %s123
      %p135 = scmp.eq.s32.totalorder %s24, 1
      %p136 = por %p134, %p135
      %p138 = scmp.ne.s32.totalorder %s123, %s137
      %p139 = scmp.eq.s32.totalorder %s24, 0
      %p140 = por %p138, %p139
      %s142 = sadd.s32 %s141, 1
      %p145 = scmp.eq.s32.totalorder %s18, 1
      %p146 = scmp.ne.s32.totalorder %s141, %s143
      %p147 = scmp.eq.s32.totalorder %s18, 0
      %p148 = por %p146, %p147
      %p149 = scmp.ne.s32.totalorder %s141, %s143
      %p150 = scmp.eq.s32.totalorder %s23, 1
      %p151 = por %p149, %p150
      %p152 = scmp.ne.s32.totalorder %s143, %s144
      %p153 = scmp.eq.s32.totalorder %s23, 0
      %p154 = por %p152, %p153
      %p155 = scmp.ne.s32.totalorder %s143, %s144
      %p156 = scmp.eq.s32.totalorder %s24, 1
      %p157 = por %p155, %p156
      %p159 = scmp.ne.s32.totalorder %s144, %s158
      %p160 = scmp.eq.s32.totalorder %s24, 0
      %p161 = por %p159, %p160
      %s162 = ssub.s32 %s18, %s25
      %p163 = scmp.eq.s32.totalorder %s162, 0
      %s165 = sadd.s32 %s164, 1
      %s166 = scalar_select %p163, %s164, %s165
      %p169 = pneg %p163
      %p170 = scmp.eq.s32.totalorder %s18, 1
      %p171 = por %p169, %p170
      %p172 = scmp.ne.s32.totalorder %s164, %s167
      %p173 = scmp.eq.s32.totalorder %s18, 0
      %p174 = por %p172, %p173
      %p175 = scmp.ne.s32.totalorder %s164, %s167
      %p176 = scmp.eq.s32.totalorder %s23, 1
      %p177 = por %p175, %p176
      %p178 = scmp.ne.s32.totalorder %s167, %s168
      %p179 = scmp.eq.s32.totalorder %s23, 0
      %p180 = por %p178, %p179
      %p181 = scmp.ne.s32.totalorder %s167, %s168
      %p182 = scmp.eq.s32.totalorder %s24, 1
      %p183 = por %p181, %p182
      %p185 = scmp.ne.s32.totalorder %s168, %s184
      %p186 = scmp.eq.s32.totalorder %s24, 0
      %p187 = por %p185, %p186
      %p188 = scmp.le.s32.totalorder 1, %s18
      %p189 = scmp.lt.s32.totalorder %s18, 3
      %p190 = pnand %p188, %p189
      %p191 = pneg %p190
      // Predicated region
      $region9: #{tpu_custom_call.1} parent=5 // pred_check
        _
      $region10: #{tpu_custom_call.1} parent=5 // pred_check_branch
        %193 = sbr.rel (%p190) target = $region12
      $region11: #{tpu_custom_call.1} parent=5 // pred_region
        %s194 = ssub.s32 %s18, 1
        // Predicated region
        $region13: #{tpu_custom_call.1} parent=11 // pred_check
          %p195 = pneg %p91
        $region14: #{tpu_custom_call.1} parent=11 // pred_check_branch
          %197 = sbr.rel (%p195) target = $region16
        $region15: #{tpu_custom_call.1} parent=11 // pred_region
          _
        $region16: #{tpu_custom_call.1} parent=11 // pred_fallthru
          _
        // Predicated region
        $region17: #{tpu_custom_call.1} parent=11 // pred_check
          %p198 = pneg %p112
        $region18: #{tpu_custom_call.1} parent=11 // pred_check_branch
          %200 = sbr.rel (%p198) target = $region20
        $region19: #{tpu_custom_call.1} parent=11 // pred_region
          _
        $region20: #{tpu_custom_call.1} parent=11 // pred_fallthru
          _
        // Predicated region
        $region21: #{tpu_custom_call.1} parent=11 // pred_check
          %p201 = pneg %p133
        $region22: #{tpu_custom_call.1} parent=11 // pred_check_branch
          %203 = sbr.rel (%p201) target = $region24
        $region23: #{tpu_custom_call.1} parent=11 // pred_region
          _
        $region24: #{tpu_custom_call.1} parent=11 // pred_fallthru
          _
        // Predicated region
        $region25: #{tpu_custom_call.1} parent=11 // pred_check
          %p204 = pneg %p154
        $region26: #{tpu_custom_call.1} parent=11 // pred_check_branch
          %206 = sbr.rel (%p204) target = $region28
        $region27: #{tpu_custom_call.1} parent=11 // pred_region
          _
        $region28: #{tpu_custom_call.1} parent=11 // pred_fallthru
          _
      $region12: #{tpu_custom_call.1} parent=5 // pred_fallthru
        _
      %p207 = scmp.lt.s32.totalorder %s18, 2
      // Predicated region
      $region29: #{tpu_custom_call.1} parent=5 // pred_check
        %p208 = pneg %p207
      $region30: #{tpu_custom_call.1} parent=5 // pred_check_branch
        %210 = sbr.rel (%p208) target = $region32
      $region31: #{tpu_custom_call.1} parent=5 // pred_region
        // Predicated region
        $region33: #{tpu_custom_call.1} parent=31 // pred_check
          %p211 = pneg %p38
        $region34: #{tpu_custom_call.1} parent=31 // pred_check_branch
          %213 = sbr.rel (%p211) target = $region36
        $region35: #{tpu_custom_call.1} parent=31 // pred_region
          %s214 = sand.u32 %s28, 1
          %s215 = scalar_lea.sflag [#allocation6], %s214
          %s216 = sand.u32 %s28, 1
          %s217 = smul.addr %s216, 216
          %s218 = scalar_lea.vmem [#allocation5], %s217
          %s220 = ssub.s32 3456, 3456
          %221 = vsyncadd %s215, %s220
          %s222 = smul.addr %s18, 54
          %s223 = smul.addr %s222, 64
          %s224 = scalar_lea.hbm %s0, %s223
          %s225 = sshll.u32 %s218, 4
          %s226 = int_to_ptr.vmem [resolvable:$true] %s225
          %231 = dma.hbm_to_vmem [thread:$0]  %s224, 3456, %s226, %s215, 64, 64, 4
        $region36: #{tpu_custom_call.1} parent=31 // pred_fallthru
          _
        // Predicated region
        $region37: #{tpu_custom_call.1} parent=31 // pred_check
          %p232 = pneg %p64
        $region38: #{tpu_custom_call.1} parent=31 // pred_check_branch
          %234 = sbr.rel (%p232) target = $region40
        $region39: #{tpu_custom_call.1} parent=31 // pred_region
          %p235 = scmp.lt.s32.totalorder %s18, 1
          %s236 = scalar_select %p235, %s18, 1
          %s237 = smul.addr %s236, 32
          %s238 = smul.addr %s237, 8
          %s239 = scalar_lea.vmem %s1, %s238
        $region40: #{tpu_custom_call.1} parent=31 // pred_fallthru
          _
      $region32: #{tpu_custom_call.1} parent=5 // pred_fallthru
        _
      %p240 = scmp.le.s32.totalorder 1, %s18
      %p241 = scmp.lt.s32.totalorder %s18, 3
      %p242 = pnand %p240, %p241
      %p243 = pneg %p242
      // Predicated region
      $region41: #{tpu_custom_call.1} parent=5 // pred_check
        _
      $region42: #{tpu_custom_call.1} parent=5 // pred_check_branch
        %245 = sbr.rel (%p242) target = $region44
      $region43: #{tpu_custom_call.1} parent=5 // pred_region
        %s246 = ssub.s32 %s18, 1
        %s247 = sand.u32 %s31, 1
        %s248 = scalar_lea.sflag [#allocation6], %s247
        %s249 = sand.u32 %s31, 1
        %s250 = smul.addr %s249, 216
        %s251 = scalar_lea.vmem [#allocation5], %s250
        // Predicated region
        $region45: #{tpu_custom_call.1} parent=43 // pred_check
          %p252 = pneg %p44
        $region46: #{tpu_custom_call.1} parent=43 // pred_check_branch
          %254 = sbr.rel (%p252) target = $region48
        $region47: #{tpu_custom_call.1} parent=43 // pred_region
          %255 = dma.done %s248, 3456
        $region48: #{tpu_custom_call.1} parent=43 // pred_fallthru
          _
        %s256 = sand.u32 %s31, 1
        %s257 = scalar_lea.sflag [#allocation6], %s256
        %s258 = sand.u32 %s31, 1
        %s259 = smul.addr %s258, 216
        %s260 = scalar_lea.vmem [#allocation5], %s259
        %p261 = pneg %p44
        %p262 = pneg %p41
        %p263 = scmp.lt.s32.totalorder %s23, 1
        %s264 = scalar_select %p263, %s23, 1
        %s265 = smul.addr %s264, 32
        %s266 = smul.addr %s265, 8
        %s267 = scalar_lea.vmem %s1, %s266
        %p268 = pneg %p70
        %p269 = pneg %p67
        %p270 = pneg %p91
        %p271 = pneg %p88
        %p272 = pneg %p112
        %p273 = pneg %p109
        %p274 = pneg %p133
        %p275 = pneg %p130
        %p276 = pneg %p154
        %p277 = pneg %p151
        %p278 = pneg %p180
        %p279 = pneg %p177
        %s280 = sand.u32 %s167, 1
        %s281 = scalar_lea.sflag [#allocation7], %s280
        %s282 = sand.u32 %s167, 1
        %s283 = smul.addr %s282, 256
        %s284 = scalar_lea.vmem [#allocation8], %s283
        %p285 = scmp.lt.s32.totalorder %s23, 1
        %s286 = scalar_select %p285, %s23, 1
        %s287 = smul.addr %s286, 32
        %s288 = smul.addr %s287, 8
        %s289 = scalar_lea.vmem %s1, %s288
        %v291 = vld [vmem:[%s251] sm:$0xf]
        %v292 = vld [vmem:[%s251 + $0x4] sm:$0xf]
        %v293 = vld [vmem:[%s251 + $0xc] sm:$0xf]
        %v294 = vld [vmem:[%s251 + $0x10] sm:$0xf]
        %v295 = vld [vmem:[%s251 + $0x18] sm:$0xf]
        %v296 = vld [vmem:[%s251 + $0x1c] sm:$0xf]
        %v297 = vld [vmem:[%s251 + $0x24] sm:$0xf]
        %v298 = vld [vmem:[%s251 + $0x28] sm:$0xf]
        %v299 = vld [vmem:[%s251 + $0x30] sm:$0xf]
        %v300 = vld [vmem:[%s251 + $0x34] sm:$0xf]
        %v301 = vld [vmem:[%s251 + $0x3c] sm:$0xf]
        %v302 = vld [vmem:[%s251 + $0x40] sm:$0xf]
        %v303 = vld [vmem:[%s251 + $0x48] sm:$0xf]
        %v304 = vld [vmem:[%s251 + $0x4c] sm:$0xf]
        %v305 = vld [vmem:[%s251 + $0x54] sm:$0xf]
        %v306 = vld [vmem:[%s251 + $0x58] sm:$0xf]
        %v307 = vld [vmem:[%s251 + $0x60] sm:$0xf]
        %v308 = vld [vmem:[%s251 + $0x64] sm:$0xf]
        %v309 = vld [vmem:[%s251 + $0x6c] sm:$0xf]
        %v310 = vld [vmem:[%s251 + $0x70] sm:$0xf]
        %v311 = vld [vmem:[%s251 + $0x78] sm:$0xf]
        %v312 = vld [vmem:[%s251 + $0x7c] sm:$0xf]
        %v313 = vld [vmem:[%s251 + $0x84] sm:$0xf]
        %v314 = vld [vmem:[%s251 + $0x88] sm:$0xf]
        %v315 = vld [vmem:[%s251 + $0x90] sm:$0xf]
        %v316 = vld [vmem:[%s251 + $0x94] sm:$0xf]
        %v317 = vld [vmem:[%s251 + $0x9c] sm:$0xf]
        %v318 = vld [vmem:[%s251 + $0xa0] sm:$0xf]
        %v319 = vld [vmem:[%s251 + $0xa8] sm:$0xf]
        %v320 = vld [vmem:[%s251 + $0xac] sm:$0xf]
        %v321 = vld [vmem:[%s251 + $0xb4] sm:$0xf]
        %v322 = vld [vmem:[%s251 + $0xb8] sm:$0xf]
        %323 = vst [vmem:[#allocation2] sm:$0xf] %v291
        %324 = vst [vmem:[#allocation2 + $0x24] sm:$0xf] %v292
        %325 = vst [vmem:[#allocation2 + $0x48] sm:$0xf] %v293
        %326 = vst [vmem:[#allocation2 + $0x6c] sm:$0xf] %v294
        %327 = vst [vmem:[#allocation2 + $0x90] sm:$0xf] %v295
        %328 = vst [vmem:[#allocation2 + $0xb4] sm:$0xf] %v296
        %329 = vst [vmem:[#allocation2 + $0xd8] sm:$0xf] %v297
        %330 = vst [vmem:[#allocation2 + $0xfc] sm:$0xf] %v298
        %331 = vst [vmem:[#allocation2 + $0x120] sm:$0xf] %v299
        %332 = vst [vmem:[#allocation2 + $0x144] sm:$0xf] %v300
        %333 = vst [vmem:[#allocation2 + $0x168] sm:$0xf] %v301
        %334 = vst [vmem:[#allocation2 + $0x18c] sm:$0xf] %v302
        %335 = vst [vmem:[#allocation2 + $0x1b0] sm:$0xf] %v303
        %336 = vst [vmem:[#allocation2 + $0x1d4] sm:$0xf] %v304
        %337 = vst [vmem:[#allocation2 + $0x1f8] sm:$0xf] %v305
        %338 = vst [vmem:[#allocation2 + $0x21c] sm:$0xf] %v306
        %339 = vst [vmem:[#allocation2 + $0x240] sm:$0xf] %v307
        %340 = vst [vmem:[#allocation2 + $0x264] sm:$0xf] %v308
        %341 = vst [vmem:[#allocation2 + $0x288] sm:$0xf] %v309
        %342 = vst [vmem:[#allocation2 + $0x2ac] sm:$0xf] %v310
        %343 = vst [vmem:[#allocation2 + $0x2d0] sm:$0xf] %v311
        %344 = vst [vmem:[#allocation2 + $0x2f4] sm:$0xf] %v312
        %345 = vst [vmem:[#allocation2 + $0x318] sm:$0xf] %v313
        %346 = vst [vmem:[#allocation2 + $0x33c] sm:$0xf] %v314
        %347 = vst [vmem:[#allocation2 + $0x360] sm:$0xf] %v315
        %348 = vst [vmem:[#allocation2 + $0x384] sm:$0xf] %v316
        %349 = vst [vmem:[#allocation2 + $0x3a8] sm:$0xf] %v317
        %350 = vst [vmem:[#allocation2 + $0x3cc] sm:$0xf] %v318
        %351 = vst [vmem:[#allocation2 + $0x3f0] sm:$0xf] %v319
        %352 = vst [vmem:[#allocation2 + $0x414] sm:$0xf] %v320
        %353 = vst [vmem:[#allocation2 + $0x438] sm:$0xf] %v321
        %354 = vst [vmem:[#allocation2 + $0x45c] sm:$0xf] %v322
        %v355 = vld [vmem:[%s251] sm:$0xf]
        %v356 = vld [vmem:[%s251 + $0x4] sm:$0xf]
        %v357 = vld [vmem:[%s251 + $0x8] sm:$0x1]
        %v358 = vld [vmem:[%s251 + $0xc] sm:$0xf]
        %v359 = vld [vmem:[%s251 + $0x10] sm:$0xf]
        %v360 = vld [vmem:[%s251 + $0x14] sm:$0x1]
        %v361 = vld [vmem:[%s251 + $0x18] sm:$0xf]
        %v362 = vld [vmem:[%s251 + $0x1c] sm:$0xf]
        %v363 = vld [vmem:[%s251 + $0x20] sm:$0x1]
        %v364 = vld [vmem:[%s251 + $0x24] sm:$0xf]
        %v365 = vld [vmem:[%s251 + $0x28] sm:$0xf]
        %v366 = vld [vmem:[%s251 + $0x2c] sm:$0x1]
        %v367 = vld [vmem:[%s251 + $0x30] sm:$0xf]
        %v368 = vld [vmem:[%s251 + $0x34] sm:$0xf]
        %v369 = vld [vmem:[%s251 + $0x38] sm:$0x1]
        %v370 = vld [vmem:[%s251 + $0x3c] sm:$0xf]
        %v371 = vld [vmem:[%s251 + $0x40] sm:$0xf]
        %v372 = vld [vmem:[%s251 + $0x44] sm:$0x1]
        %v373 = vld [vmem:[%s251 + $0x48] sm:$0xf]
        %v374 = vld [vmem:[%s251 + $0x4c] sm:$0xf]
        %v375 = vld [vmem:[%s251 + $0x50] sm:$0x1]
        %v376 = vld [vmem:[%s251 + $0x54] sm:$0xf]
        %v377 = vld [vmem:[%s251 + $0x58] sm:$0xf]
        %v378 = vld [vmem:[%s251 + $0x5c] sm:$0x1]
        %v379 = vld [vmem:[%s251 + $0x60] sm:$0xf]
        %v380 = vld [vmem:[%s251 + $0x64] sm:$0xf]
        %v381 = vld [vmem:[%s251 + $0x68] sm:$0x1]
        %v382 = vld [vmem:[%s251 + $0x6c] sm:$0xf]
        %v383 = vld [vmem:[%s251 + $0x70] sm:$0xf]
        %v384 = vld [vmem:[%s251 + $0x74] sm:$0x1]
        %v385 = vld [vmem:[%s251 + $0x78] sm:$0xf]
        %v386 = vld [vmem:[%s251 + $0x7c] sm:$0xf]
        %v387 = vld [vmem:[%s251 + $0x80] sm:$0x1]
        %v388 = vld [vmem:[%s251 + $0x84] sm:$0xf]
        %v389 = vld [vmem:[%s251 + $0x88] sm:$0xf]
        %v390 = vld [vmem:[%s251 + $0x8c] sm:$0x1]
        %v391 = vld [vmem:[%s251 + $0x90] sm:$0xf]
        %v392 = vld [vmem:[%s251 + $0x94] sm:$0xf]
        %v393 = vld [vmem:[%s251 + $0x98] sm:$0x1]
        %v394 = vld [vmem:[%s251 + $0x9c] sm:$0xf]
        %v395 = vld [vmem:[%s251 + $0xa0] sm:$0xf]
        %v396 = vld [vmem:[%s251 + $0xa4] sm:$0x1]
        %v397 = vld [vmem:[%s251 + $0xa8] sm:$0xf]
        %v398 = vld [vmem:[%s251 + $0xac] sm:$0xf]
        %v399 = vld [vmem:[%s251 + $0xb0] sm:$0x1]
        %v400 = vld [vmem:[%s251 + $0xb4] sm:$0xf]
        %v401 = vld [vmem:[%s251 + $0xb8] sm:$0xf]
        %v402 = vld [vmem:[%s251 + $0xbc] sm:$0x1]
        %vm403 = vsmask.f32 3328
        %vm404 = vsmask.f32 7440
        %vm405 = vmor %vm403, %vm404
        %v407 = vshrl.u32 %v355, 16
        %v409 = vrot.slane %v407, 4
        %v410 = vshll.u32 %v355, 16
        %v412 = vrot.slane %v410, 5
        %v413 = vor.u32 %v409, %v412
        %v414 = vrot.slane %v413, 4
        %v416 = vshll.u32 %v356, 16
        %v418 = vrot.slane %v416, 5
        %v419 = vsel %vm405, %v414, %v418
        %v420 = vshrl.u32 %v356, 16
        %v422 = vrot.slane %v420, 4
        %v423 = vor.u32 %v422, %v418
        %v424 = vrot.slane %v423, 4
        %v426 = vshll.u32 %v357, 16
        %v428 = vrot.slane %v426, 5
        %v429 = vsel %vm405, %v424, %v428
        %v431 = vshrl.u32 %v358, 16
        %v433 = vrot.slane %v431, 4
        %v434 = vshll.u32 %v358, 16
        %v436 = vrot.slane %v434, 5
        %v437 = vor.u32 %v433, %v436
        %v438 = vrot.slane %v437, 4
        %v440 = vshll.u32 %v359, 16
        %v442 = vrot.slane %v440, 5
        %v443 = vsel %vm405, %v438, %v442
        %v444 = vshrl.u32 %v359, 16
        %v446 = vrot.slane %v444, 4
        %v447 = vor.u32 %v446, %v442
        %v448 = vrot.slane %v447, 4
        %v450 = vshll.u32 %v360, 16
        %v452 = vrot.slane %v450, 5
        %v453 = vsel %vm405, %v448, %v452
        %v455 = vshrl.u32 %v361, 16
        %v457 = vrot.slane %v455, 4
        %v458 = vshll.u32 %v361, 16
        %v460 = vrot.slane %v458, 5
        %v461 = vor.u32 %v457, %v460
        %v462 = vrot.slane %v461, 4
        %v464 = vshll.u32 %v362, 16
        %v466 = vrot.slane %v464, 5
        %v467 = vsel %vm405, %v462, %v466
        %v468 = vshrl.u32 %v362, 16
        %v470 = vrot.slane %v468, 4
        %v471 = vor.u32 %v470, %v466
        %v472 = vrot.slane %v471, 4
        %v474 = vshll.u32 %v363, 16
        %v476 = vrot.slane %v474, 5
        %v477 = vsel %vm405, %v472, %v476
        %v479 = vshrl.u32 %v364, 16
        %v481 = vrot.slane %v479, 4
        %v482 = vshll.u32 %v364, 16
        %v484 = vrot.slane %v482, 5
        %v485 = vor.u32 %v481, %v484
        %v486 = vrot.slane %v485, 4
        %v488 = vshll.u32 %v365, 16
        %v490 = vrot.slane %v488, 5
        %v491 = vsel %vm405, %v486, %v490
        %v492 = vshrl.u32 %v365, 16
        %v494 = vrot.slane %v492, 4
        %v495 = vor.u32 %v494, %v490
        %v496 = vrot.slane %v495, 4
        %v498 = vshll.u32 %v366, 16
        %v500 = vrot.slane %v498, 5
        %v501 = vsel %vm405, %v496, %v500
        %v503 = vshrl.u32 %v367, 16
        %v505 = vrot.slane %v503, 4
        %v506 = vshll.u32 %v367, 16
        %v508 = vrot.slane %v506, 5
        %v509 = vor.u32 %v505, %v508
        %v510 = vrot.slane %v509, 4
        %v512 = vshll.u32 %v368, 16
        %v514 = vrot.slane %v512, 5
        %v515 = vsel %vm405, %v510, %v514
        %v516 = vshrl.u32 %v368, 16
        %v518 = vrot.slane %v516, 4
        %v519 = vor.u32 %v518, %v514
        %v520 = vrot.slane %v519, 4
        %v522 = vshll.u32 %v369, 16
        %v524 = vrot.slane %v522, 5
        %v525 = vsel %vm405, %v520, %v524
        %v527 = vshrl.u32 %v370, 16
        %v529 = vrot.slane %v527, 4
        %v530 = vshll.u32 %v370, 16
        %v532 = vrot.slane %v530, 5
        %v533 = vor.u32 %v529, %v532
        %v534 = vrot.slane %v533, 4
        %v536 = vshll.u32 %v371, 16
        %v538 = vrot.slane %v536, 5
        %v539 = vsel %vm405, %v534, %v538
        %v540 = vshrl.u32 %v371, 16
        %v542 = vrot.slane %v540, 4
        %v543 = vor.u32 %v542, %v538
        %v544 = vrot.slane %v543, 4
        %v546 = vshll.u32 %v372, 16
        %v548 = vrot.slane %v546, 5
        %v549 = vsel %vm405, %v544, %v548
        %v551 = vshrl.u32 %v373, 16
        %v553 = vrot.slane %v551, 4
        %v554 = vshll.u32 %v373, 16
        %v556 = vrot.slane %v554, 5
        %v557 = vor.u32 %v553, %v556
        %v558 = vrot.slane %v557, 4
        %v560 = vshll.u32 %v374, 16
        %v562 = vrot.slane %v560, 5
        %v563 = vsel %vm405, %v558, %v562
        %v564 = vshrl.u32 %v374, 16
        %v566 = vrot.slane %v564, 4
        %v567 = vor.u32 %v566, %v562
        %v568 = vrot.slane %v567, 4
        %v570 = vshll.u32 %v375, 16
        %v572 = vrot.slane %v570, 5
        %v573 = vsel %vm405, %v568, %v572
        %v575 = vshrl.u32 %v376, 16
        %v577 = vrot.slane %v575, 4
        %v578 = vshll.u32 %v376, 16
        %v580 = vrot.slane %v578, 5
        %v581 = vor.u32 %v577, %v580
        %v582 = vrot.slane %v581, 4
        %v584 = vshll.u32 %v377, 16
        %v586 = vrot.slane %v584, 5
        %v587 = vsel %vm405, %v582, %v586
        %v588 = vshrl.u32 %v377, 16
        %v590 = vrot.slane %v588, 4
        %v591 = vor.u32 %v590, %v586
        %v592 = vrot.slane %v591, 4
        %v594 = vshll.u32 %v378, 16
        %v596 = vrot.slane %v594, 5
        %v597 = vsel %vm405, %v592, %v596
        %v599 = vshrl.u32 %v379, 16
        %v601 = vrot.slane %v599, 4
        %v602 = vshll.u32 %v379, 16
        %v604 = vrot.slane %v602, 5
        %v605 = vor.u32 %v601, %v604
        %v606 = vrot.slane %v605, 4
        %v608 = vshll.u32 %v380, 16
        %v610 = vrot.slane %v608, 5
        %v611 = vsel %vm405, %v606, %v610
        %v612 = vshrl.u32 %v380, 16
        %v614 = vrot.slane %v612, 4
        %v615 = vor.u32 %v614, %v610
        %v616 = vrot.slane %v615, 4
        %v618 = vshll.u32 %v381, 16
        %v620 = vrot.slane %v618, 5
        %v621 = vsel %vm405, %v616, %v620
        %v623 = vshrl.u32 %v382, 16
        %v625 = vrot.slane %v623, 4
        %v626 = vshll.u32 %v382, 16
        %v628 = vrot.slane %v626, 5
        %v629 = vor.u32 %v625, %v628
        %v630 = vrot.slane %v629, 4
        %v632 = vshll.u32 %v383, 16
        %v634 = vrot.slane %v632, 5
        %v635 = vsel %vm405, %v630, %v634
        %v636 = vshrl.u32 %v383, 16
        %v638 = vrot.slane %v636, 4
        %v639 = vor.u32 %v638, %v634
        %v640 = vrot.slane %v639, 4
        %v642 = vshll.u32 %v384, 16
        %v644 = vrot.slane %v642, 5
        %v645 = vsel %vm405, %v640, %v644
        %v647 = vshrl.u32 %v385, 16
        %v649 = vrot.slane %v647, 4
        %v650 = vshll.u32 %v385, 16
        %v652 = vrot.slane %v650, 5
        %v653 = vor.u32 %v649, %v652
        %v654 = vrot.slane %v653, 4
        %v656 = vshll.u32 %v386, 16
        %v658 = vrot.slane %v656, 5
        %v659 = vsel %vm405, %v654, %v658
        %v660 = vshrl.u32 %v386, 16
        %v662 = vrot.slane %v660, 4
        %v663 = vor.u32 %v662, %v658
        %v664 = vrot.slane %v663, 4
        %v666 = vshll.u32 %v387, 16
        %v668 = vrot.slane %v666, 5
        %v669 = vsel %vm405, %v664, %v668
        %v671 = vshrl.u32 %v388, 16
        %v673 = vrot.slane %v671, 4
        %v674 = vshll.u32 %v388, 16
        %v676 = vrot.slane %v674, 5
        %v677 = vor.u32 %v673, %v676
        %v678 = vrot.slane %v677, 4
        %v680 = vshll.u32 %v389, 16
        %v682 = vrot.slane %v680, 5
        %v683 = vsel %vm405, %v678, %v682
        %v684 = vshrl.u32 %v389, 16
        %v686 = vrot.slane %v684, 4
        %v687 = vor.u32 %v686, %v682
        %v688 = vrot.slane %v687, 4
        %v690 = vshll.u32 %v390, 16
        %v692 = vrot.slane %v690, 5
        %v693 = vsel %vm405, %v688, %v692
        %v695 = vshrl.u32 %v391, 16
        %v697 = vrot.slane %v695, 4
        %v698 = vshll.u32 %v391, 16
        %v700 = vrot.slane %v698, 5
        %v701 = vor.u32 %v697, %v700
        %v702 = vrot.slane %v701, 4
        %v704 = vshll.u32 %v392, 16
        %v706 = vrot.slane %v704, 5
        %v707 = vsel %vm405, %v702, %v706
        %v708 = vshrl.u32 %v392, 16
        %v710 = vrot.slane %v708, 4
        %v711 = vor.u32 %v710, %v706
        %v712 = vrot.slane %v711, 4
        %v714 = vshll.u32 %v393, 16
        %v716 = vrot.slane %v714, 5
        %v717 = vsel %vm405, %v712, %v716
        %v719 = vshrl.u32 %v394, 16
        %v721 = vrot.slane %v719, 4
        %v722 = vshll.u32 %v394, 16
        %v724 = vrot.slane %v722, 5
        %v725 = vor.u32 %v721, %v724
        %v726 = vrot.slane %v725, 4
        %v728 = vshll.u32 %v395, 16
        %v730 = vrot.slane %v728, 5
        %v731 = vsel %vm405, %v726, %v730
        %v732 = vshrl.u32 %v395, 16
        %v734 = vrot.slane %v732, 4
        %v735 = vor.u32 %v734, %v730
        %v736 = vrot.slane %v735, 4
        %v738 = vshll.u32 %v396, 16
        %v740 = vrot.slane %v738, 5
        %v741 = vsel %vm405, %v736, %v740
        %v743 = vshrl.u32 %v397, 16
        %v745 = vrot.slane %v743, 4
        %v746 = vshll.u32 %v397, 16
        %v748 = vrot.slane %v746, 5
        %v749 = vor.u32 %v745, %v748
        %v750 = vrot.slane %v749, 4
        %v752 = vshll.u32 %v398, 16
        %v754 = vrot.slane %v752, 5
        %v755 = vsel %vm405, %v750, %v754
        %v756 = vshrl.u32 %v398, 16
        %v758 = vrot.slane %v756, 4
        %v759 = vor.u32 %v758, %v754
        %v760 = vrot.slane %v759, 4
        %v762 = vshll.u32 %v399, 16
        %v764 = vrot.slane %v762, 5
        %v765 = vsel %vm405, %v760, %v764
        %v767 = vshrl.u32 %v400, 16
        %v769 = vrot.slane %v767, 4
        %v770 = vshll.u32 %v400, 16
        %v772 = vrot.slane %v770, 5
        %v773 = vor.u32 %v769, %v772
        %v774 = vrot.slane %v773, 4
        %v776 = vshll.u32 %v401, 16
        %v778 = vrot.slane %v776, 5
        %v779 = vsel %vm405, %v774, %v778
        %v780 = vshrl.u32 %v401, 16
        %v782 = vrot.slane %v780, 4
        %v783 = vor.u32 %v782, %v778
        %v784 = vrot.slane %v783, 4
        %v786 = vshll.u32 %v402, 16
        %v788 = vrot.slane %v786, 5
        %v789 = vsel %vm405, %v784, %v788
        %822 = vst [vmem:[#allocation2 + $0x4] sm:$0xf] %v419
        %823 = vst [vmem:[#allocation2 + $0x28] sm:$0xf] %v429
        %824 = vst [vmem:[#allocation2 + $0x4c] sm:$0xf] %v443
        %825 = vst [vmem:[#allocation2 + $0x70] sm:$0xf] %v453
        %826 = vst [vmem:[#allocation2 + $0x94] sm:$0xf] %v467
        %827 = vst [vmem:[#allocation2 + $0xb8] sm:$0xf] %v477
        %828 = vst [vmem:[#allocation2 + $0xdc] sm:$0xf] %v491
        %829 = vst [vmem:[#allocation2 + $0x100] sm:$0xf] %v501
        %830 = vst [vmem:[#allocation2 + $0x124] sm:$0xf] %v515
        %831 = vst [vmem:[#allocation2 + $0x148] sm:$0xf] %v525
        %832 = vst [vmem:[#allocation2 + $0x16c] sm:$0xf] %v539
        %833 = vst [vmem:[#allocation2 + $0x190] sm:$0xf] %v549
        %834 = vst [vmem:[#allocation2 + $0x1b4] sm:$0xf] %v563
        %835 = vst [vmem:[#allocation2 + $0x1d8] sm:$0xf] %v573
        %836 = vst [vmem:[#allocation2 + $0x1fc] sm:$0xf] %v587
        %837 = vst [vmem:[#allocation2 + $0x220] sm:$0xf] %v597
        %838 = vst [vmem:[#allocation2 + $0x244] sm:$0xf] %v611
        %839 = vst [vmem:[#allocation2 + $0x268] sm:$0xf] %v621
        %840 = vst [vmem:[#allocation2 + $0x28c] sm:$0xf] %v635
        %841 = vst [vmem:[#allocation2 + $0x2b0] sm:$0xf] %v645
        %842 = vst [vmem:[#allocation2 + $0x2d4] sm:$0xf] %v659
        %843 = vst [vmem:[#allocation2 + $0x2f8] sm:$0xf] %v669
        %844 = vst [vmem:[#allocation2 + $0x31c] sm:$0xf] %v683
        %845 = vst [vmem:[#allocation2 + $0x340] sm:$0xf] %v693
        %846 = vst [vmem:[#allocation2 + $0x364] sm:$0xf] %v707
        %847 = vst [vmem:[#allocation2 + $0x388] sm:$0xf] %v717
        %848 = vst [vmem:[#allocation2 + $0x3ac] sm:$0xf] %v731
        %849 = vst [vmem:[#allocation2 + $0x3d0] sm:$0xf] %v741
        %850 = vst [vmem:[#allocation2 + $0x3f4] sm:$0xf] %v755
        %851 = vst [vmem:[#allocation2 + $0x418] sm:$0xf] %v765
        %852 = vst [vmem:[#allocation2 + $0x43c] sm:$0xf] %v779
        %853 = vst [vmem:[#allocation2 + $0x460] sm:$0xf] %v789
        %v854 = vld [vmem:[%s251] sm:$0xe]
        %v855 = vld [vmem:[%s251 + $0x4] sm:$0xf]
        %v856 = vld [vmem:[%s251 + $0x8] sm:$0x1]
        %v857 = vld [vmem:[%s251 + $0xc] sm:$0xe]
        %v858 = vld [vmem:[%s251 + $0x10] sm:$0xf]
        %v859 = vld [vmem:[%s251 + $0x14] sm:$0x1]
        %v860 = vld [vmem:[%s251 + $0x18] sm:$0xe]
        %v861 = vld [vmem:[%s251 + $0x1c] sm:$0xf]
        %v862 = vld [vmem:[%s251 + $0x20] sm:$0x1]
        %v863 = vld [vmem:[%s251 + $0x24] sm:$0xe]
        %v864 = vld [vmem:[%s251 + $0x28] sm:$0xf]
        %v865 = vld [vmem:[%s251 + $0x2c] sm:$0x1]
        %v866 = vld [vmem:[%s251 + $0x30] sm:$0xe]
        %v867 = vld [vmem:[%s251 + $0x34] sm:$0xf]
        %v868 = vld [vmem:[%s251 + $0x38] sm:$0x1]
        %v869 = vld [vmem:[%s251 + $0x3c] sm:$0xe]
        %v870 = vld [vmem:[%s251 + $0x40] sm:$0xf]
        %v871 = vld [vmem:[%s251 + $0x44] sm:$0x1]
        %v872 = vld [vmem:[%s251 + $0x48] sm:$0xe]
        %v873 = vld [vmem:[%s251 + $0x4c] sm:$0xf]
        %v874 = vld [vmem:[%s251 + $0x50] sm:$0x1]
        %v875 = vld [vmem:[%s251 + $0x54] sm:$0xe]
        %v876 = vld [vmem:[%s251 + $0x58] sm:$0xf]
        %v877 = vld [vmem:[%s251 + $0x5c] sm:$0x1]
        %v878 = vld [vmem:[%s251 + $0x60] sm:$0xe]
        %v879 = vld [vmem:[%s251 + $0x64] sm:$0xf]
        %v880 = vld [vmem:[%s251 + $0x68] sm:$0x1]
        %v881 = vld [vmem:[%s251 + $0x6c] sm:$0xe]
        %v882 = vld [vmem:[%s251 + $0x70] sm:$0xf]
        %v883 = vld [vmem:[%s251 + $0x74] sm:$0x1]
        %v884 = vld [vmem:[%s251 + $0x78] sm:$0xe]
        %v885 = vld [vmem:[%s251 + $0x7c] sm:$0xf]
        %v886 = vld [vmem:[%s251 + $0x80] sm:$0x1]
        %v887 = vld [vmem:[%s251 + $0x84] sm:$0xe]
        %v888 = vld [vmem:[%s251 + $0x88] sm:$0xf]
        %v889 = vld [vmem:[%s251 + $0x8c] sm:$0x1]
        %v890 = vld [vmem:[%s251 + $0x90] sm:$0xe]
        %v891 = vld [vmem:[%s251 + $0x94] sm:$0xf]
        %v892 = vld [vmem:[%s251 + $0x98] sm:$0x1]
        %v893 = vld [vmem:[%s251 + $0x9c] sm:$0xe]
        %v894 = vld [vmem:[%s251 + $0xa0] sm:$0xf]
        %v895 = vld [vmem:[%s251 + $0xa4] sm:$0x1]
        %v896 = vld [vmem:[%s251 + $0xa8] sm:$0xe]
        %v897 = vld [vmem:[%s251 + $0xac] sm:$0xf]
        %v898 = vld [vmem:[%s251 + $0xb0] sm:$0x1]
        %v899 = vld [vmem:[%s251 + $0xb4] sm:$0xe]
        %v900 = vld [vmem:[%s251 + $0xb8] sm:$0xf]
        %v901 = vld [vmem:[%s251 + $0xbc] sm:$0x1]
        %vm950 = vcmask 1042432
        %vm951 = vcmask 1046532
        %vm952 = vmor %vm950, %vm951
        %v953 = vrot.slane %v854, 5
        %v954 = vrot.slane %v953, 4
        %v955 = vrot.slane %v855, 5
        %v956 = vsel %vm952, %v954, %v955
        %v957 = vrot.slane %v955, 4
        %v958 = vrot.slane %v856, 5
        %v959 = vsel %vm952, %v957, %v958
        %v960 = vrot.slane %v857, 5
        %v961 = vrot.slane %v960, 4
        %v962 = vrot.slane %v858, 5
        %v963 = vsel %vm952, %v961, %v962
        %v964 = vrot.slane %v962, 4
        %v965 = vrot.slane %v859, 5
        %v966 = vsel %vm952, %v964, %v965
        %v967 = vrot.slane %v860, 5
        %v968 = vrot.slane %v967, 4
        %v969 = vrot.slane %v861, 5
        %v970 = vsel %vm952, %v968, %v969
        %v971 = vrot.slane %v969, 4
        %v972 = vrot.slane %v862, 5
        %v973 = vsel %vm952, %v971, %v972
        %v974 = vrot.slane %v863, 5
        %v975 = vrot.slane %v974, 4
        %v976 = vrot.slane %v864, 5
        %v977 = vsel %vm952, %v975, %v976
        %v978 = vrot.slane %v976, 4
        %v979 = vrot.slane %v865, 5
        %v980 = vsel %vm952, %v978, %v979
        %v981 = vrot.slane %v866, 5
        %v982 = vrot.slane %v981, 4
        %v983 = vrot.slane %v867, 5
        %v984 = vsel %vm952, %v982, %v983
        %v985 = vrot.slane %v983, 4
        %v986 = vrot.slane %v868, 5
        %v987 = vsel %vm952, %v985, %v986
        %v988 = vrot.slane %v869, 5
        %v989 = vrot.slane %v988, 4
        %v990 = vrot.slane %v870, 5
        %v991 = vsel %vm952, %v989, %v990
        %v992 = vrot.slane %v990, 4
        %v993 = vrot.slane %v871, 5
        %v994 = vsel %vm952, %v992, %v993
        %v995 = vrot.slane %v872, 5
        %v996 = vrot.slane %v995, 4
        %v997 = vrot.slane %v873, 5
        %v998 = vsel %vm952, %v996, %v997
        %v999 = vrot.slane %v997, 4
        %v1000 = vrot.slane %v874, 5
        %v1001 = vsel %vm952, %v999, %v1000
        %v1002 = vrot.slane %v875, 5
        %v1003 = vrot.slane %v1002, 4
        %v1004 = vrot.slane %v876, 5
        %v1005 = vsel %vm952, %v1003, %v1004
        %v1006 = vrot.slane %v1004, 4
        %v1007 = vrot.slane %v877, 5
        %v1008 = vsel %vm952, %v1006, %v1007
        %v1009 = vrot.slane %v878, 5
        %v1010 = vrot.slane %v1009, 4
        %v1011 = vrot.slane %v879, 5
        %v1012 = vsel %vm952, %v1010, %v1011
        %v1013 = vrot.slane %v1011, 4
        %v1014 = vrot.slane %v880, 5
        %v1015 = vsel %vm952, %v1013, %v1014
        %v1016 = vrot.slane %v881, 5
        %v1017 = vrot.slane %v1016, 4
        %v1018 = vrot.slane %v882, 5
        %v1019 = vsel %vm952, %v1017, %v1018
        %v1020 = vrot.slane %v1018, 4
        %v1021 = vrot.slane %v883, 5
        %v1022 = vsel %vm952, %v1020, %v1021
        %v1023 = vrot.slane %v884, 5
        %v1024 = vrot.slane %v1023, 4
        %v1025 = vrot.slane %v885, 5
        %v1026 = vsel %vm952, %v1024, %v1025
        %v1027 = vrot.slane %v1025, 4
        %v1028 = vrot.slane %v886, 5
        %v1029 = vsel %vm952, %v1027, %v1028
        %v1030 = vrot.slane %v887, 5
        %v1031 = vrot.slane %v1030, 4
        %v1032 = vrot.slane %v888, 5
        %v1033 = vsel %vm952, %v1031, %v1032
        %v1034 = vrot.slane %v1032, 4
        %v1035 = vrot.slane %v889, 5
        %v1036 = vsel %vm952, %v1034, %v1035
        %v1037 = vrot.slane %v890, 5
        %v1038 = vrot.slane %v1037, 4
        %v1039 = vrot.slane %v891, 5
        %v1040 = vsel %vm952, %v1038, %v1039
        %v1041 = vrot.slane %v1039, 4
        %v1042 = vrot.slane %v892, 5
        %v1043 = vsel %vm952, %v1041, %v1042
        %v1044 = vrot.slane %v893, 5
        %v1045 = vrot.slane %v1044, 4
        %v1046 = vrot.slane %v894, 5
        %v1047 = vsel %vm952, %v1045, %v1046
        %v1048 = vrot.slane %v1046, 4
        %v1049 = vrot.slane %v895, 5
        %v1050 = vsel %vm952, %v1048, %v1049
        %v1051 = vrot.slane %v896, 5
        %v1052 = vrot.slane %v1051, 4
        %v1053 = vrot.slane %v897, 5
        %v1054 = vsel %vm952, %v1052, %v1053
        %v1055 = vrot.slane %v1053, 4
        %v1056 = vrot.slane %v898, 5
        %v1057 = vsel %vm952, %v1055, %v1056
        %v1058 = vrot.slane %v899, 5
        %v1059 = vrot.slane %v1058, 4
        %v1060 = vrot.slane %v900, 5
        %v1061 = vsel %vm952, %v1059, %v1060
        %v1062 = vrot.slane %v1060, 4
        %v1063 = vrot.slane %v901, 5
        %v1064 = vsel %vm952, %v1062, %v1063
        %1097 = vst [vmem:[#allocation2 + $0x8] sm:$0xf] %v956
        %1098 = vst [vmem:[#allocation2 + $0x2c] sm:$0xf] %v959
        %1099 = vst [vmem:[#allocation2 + $0x50] sm:$0xf] %v963
        %1100 = vst [vmem:[#allocation2 + $0x74] sm:$0xf] %v966
        %1101 = vst [vmem:[#allocation2 + $0x98] sm:$0xf] %v970
        %1102 = vst [vmem:[#allocation2 + $0xbc] sm:$0xf] %v973
        %1103 = vst [vmem:[#allocation2 + $0xe0] sm:$0xf] %v977
        %1104 = vst [vmem:[#allocation2 + $0x104] sm:$0xf] %v980
        %1105 = vst [vmem:[#allocation2 + $0x128] sm:$0xf] %v984
        %1106 = vst [vmem:[#allocation2 + $0x14c] sm:$0xf] %v987
        %1107 = vst [vmem:[#allocation2 + $0x170] sm:$0xf] %v991
        %1108 = vst [vmem:[#allocation2 + $0x194] sm:$0xf] %v994
        %1109 = vst [vmem:[#allocation2 + $0x1b8] sm:$0xf] %v998
        %1110 = vst [vmem:[#allocation2 + $0x1dc] sm:$0xf] %v1001
        %1111 = vst [vmem:[#allocation2 + $0x200] sm:$0xf] %v1005
        %1112 = vst [vmem:[#allocation2 + $0x224] sm:$0xf] %v1008
        %1113 = vst [vmem:[#allocation2 + $0x248] sm:$0xf] %v1012
        %1114 = vst [vmem:[#allocation2 + $0x26c] sm:$0xf] %v1015
        %1115 = vst [vmem:[#allocation2 + $0x290] sm:$0xf] %v1019
        %1116 = vst [vmem:[#allocation2 + $0x2b4] sm:$0xf] %v1022
        %1117 = vst [vmem:[#allocation2 + $0x2d8] sm:$0xf] %v1026
        %1118 = vst [vmem:[#allocation2 + $0x2fc] sm:$0xf] %v1029
        %1119 = vst [vmem:[#allocation2 + $0x320] sm:$0xf] %v1033
        %1120 = vst [vmem:[#allocation2 + $0x344] sm:$0xf] %v1036
        %1121 = vst [vmem:[#allocation2 + $0x368] sm:$0xf] %v1040
        %1122 = vst [vmem:[#allocation2 + $0x38c] sm:$0xf] %v1043
        %1123 = vst [vmem:[#allocation2 + $0x3b0] sm:$0xf] %v1047
        %1124 = vst [vmem:[#allocation2 + $0x3d4] sm:$0xf] %v1050
        %1125 = vst [vmem:[#allocation2 + $0x3f8] sm:$0xf] %v1054
        %1126 = vst [vmem:[#allocation2 + $0x41c] sm:$0xf] %v1057
        %1127 = vst [vmem:[#allocation2 + $0x440] sm:$0xf] %v1061
        %1128 = vst [vmem:[#allocation2 + $0x464] sm:$0xf] %v1064
        %s1129 = scalar_lea.vmem %s251, 12 [#allocation5]
        %v1130 = vld [vmem:[%s1129] sm:$0xf]
        %v1131 = vld [vmem:[%s1129 + $0x4] sm:$0xf]
        %v1132 = vld [vmem:[%s1129 + $0xc] sm:$0xf]
        %v1133 = vld [vmem:[%s1129 + $0x10] sm:$0xf]
        %v1134 = vld [vmem:[%s1129 + $0x18] sm:$0xf]
        %v1135 = vld [vmem:[%s1129 + $0x1c] sm:$0xf]
        %v1136 = vld [vmem:[%s1129 + $0x24] sm:$0xf]
        %v1137 = vld [vmem:[%s1129 + $0x28] sm:$0xf]
        %v1138 = vld [vmem:[%s1129 + $0x30] sm:$0xf]
        %v1139 = vld [vmem:[%s1129 + $0x34] sm:$0xf]
        %v1140 = vld [vmem:[%s1129 + $0x3c] sm:$0xf]
        %v1141 = vld [vmem:[%s1129 + $0x40] sm:$0xf]
        %v1142 = vld [vmem:[%s1129 + $0x48] sm:$0xf]
        %v1143 = vld [vmem:[%s1129 + $0x4c] sm:$0xf]
        %v1144 = vld [vmem:[%s1129 + $0x54] sm:$0xf]
        %v1145 = vld [vmem:[%s1129 + $0x58] sm:$0xf]
        %v1146 = vld [vmem:[%s1129 + $0x60] sm:$0xf]
        %v1147 = vld [vmem:[%s1129 + $0x64] sm:$0xf]
        %v1148 = vld [vmem:[%s1129 + $0x6c] sm:$0xf]
        %v1149 = vld [vmem:[%s1129 + $0x70] sm:$0xf]
        %v1150 = vld [vmem:[%s1129 + $0x78] sm:$0xf]
        %v1151 = vld [vmem:[%s1129 + $0x7c] sm:$0xf]
        %v1152 = vld [vmem:[%s1129 + $0x84] sm:$0xf]
        %v1153 = vld [vmem:[%s1129 + $0x88] sm:$0xf]
        %v1154 = vld [vmem:[%s1129 + $0x90] sm:$0xf]
        %v1155 = vld [vmem:[%s1129 + $0x94] sm:$0xf]
        %v1156 = vld [vmem:[%s1129 + $0x9c] sm:$0xf]
        %v1157 = vld [vmem:[%s1129 + $0xa0] sm:$0xf]
        %v1158 = vld [vmem:[%s1129 + $0xa8] sm:$0xf]
        %v1159 = vld [vmem:[%s1129 + $0xac] sm:$0xf]
        %v1160 = vld [vmem:[%s1129 + $0xb4] sm:$0xf]
        %v1161 = vld [vmem:[%s1129 + $0xb8] sm:$0xf]
        %1162 = vst [vmem:[#allocation2 + $0xc] sm:$0xf] %v1130
        %1163 = vst [vmem:[#allocation2 + $0x30] sm:$0xf] %v1131
        %1164 = vst [vmem:[#allocation2 + $0x54] sm:$0xf] %v1132
        %1165 = vst [vmem:[#allocation2 + $0x78] sm:$0xf] %v1133
        %1166 = vst [vmem:[#allocation2 + $0x9c] sm:$0xf] %v1134
        %1167 = vst [vmem:[#allocation2 + $0xc0] sm:$0xf] %v1135
        %1168 = vst [vmem:[#allocation2 + $0xe4] sm:$0xf] %v1136
        %1169 = vst [vmem:[#allocation2 + $0x108] sm:$0xf] %v1137
        %1170 = vst [vmem:[#allocation2 + $0x12c] sm:$0xf] %v1138
        %1171 = vst [vmem:[#allocation2 + $0x150] sm:$0xf] %v1139
        %1172 = vst [vmem:[#allocation2 + $0x174] sm:$0xf] %v1140
        %1173 = vst [vmem:[#allocation2 + $0x198] sm:$0xf] %v1141
        %1174 = vst [vmem:[#allocation2 + $0x1bc] sm:$0xf] %v1142
        %1175 = vst [vmem:[#allocation2 + $0x1e0] sm:$0xf] %v1143
        %1176 = vst [vmem:[#allocation2 + $0x204] sm:$0xf] %v1144
        %1177 = vst [vmem:[#allocation2 + $0x228] sm:$0xf] %v1145
        %1178 = vst [vmem:[#allocation2 + $0x24c] sm:$0xf] %v1146
        %1179 = vst [vmem:[#allocation2 + $0x270] sm:$0xf] %v1147
        %1180 = vst [vmem:[#allocation2 + $0x294] sm:$0xf] %v1148
        %1181 = vst [vmem:[#allocation2 + $0x2b8] sm:$0xf] %v1149
        %1182 = vst [vmem:[#allocation2 + $0x2dc] sm:$0xf] %v1150
        %1183 = vst [vmem:[#allocation2 + $0x300] sm:$0xf] %v1151
        %1184 = vst [vmem:[#allocation2 + $0x324] sm:$0xf] %v1152
        %1185 = vst [vmem:[#allocation2 + $0x348] sm:$0xf] %v1153
        %1186 = vst [vmem:[#allocation2 + $0x36c] sm:$0xf] %v1154
        %1187 = vst [vmem:[#allocation2 + $0x390] sm:$0xf] %v1155
        %1188 = vst [vmem:[#allocation2 + $0x3b4] sm:$0xf] %v1156
        %1189 = vst [vmem:[#allocation2 + $0x3d8] sm:$0xf] %v1157
        %1190 = vst [vmem:[#allocation2 + $0x3fc] sm:$0xf] %v1158
        %1191 = vst [vmem:[#allocation2 + $0x420] sm:$0xf] %v1159
        %1192 = vst [vmem:[#allocation2 + $0x444] sm:$0xf] %v1160
        %1193 = vst [vmem:[#allocation2 + $0x468] sm:$0xf] %v1161
        %v1194 = vld [vmem:[%s1129] sm:$0xf]
        %v1195 = vld [vmem:[%s1129 + $0x4] sm:$0xf]
        %v1196 = vld [vmem:[%s1129 + $0x8] sm:$0x1]
        %v1197 = vld [vmem:[%s1129 + $0xc] sm:$0xf]
        %v1198 = vld [vmem:[%s1129 + $0x10] sm:$0xf]
        %v1199 = vld [vmem:[%s1129 + $0x14] sm:$0x1]
        %v1200 = vld [vmem:[%s1129 + $0x18] sm:$0xf]
        %v1201 = vld [vmem:[%s1129 + $0x1c] sm:$0xf]
        %v1202 = vld [vmem:[%s1129 + $0x20] sm:$0x1]
        %v1203 = vld [vmem:[%s1129 + $0x24] sm:$0xf]
        %v1204 = vld [vmem:[%s1129 + $0x28] sm:$0xf]
        %v1205 = vld [vmem:[%s1129 + $0x2c] sm:$0x1]
        %v1206 = vld [vmem:[%s1129 + $0x30] sm:$0xf]
        %v1207 = vld [vmem:[%s1129 + $0x34] sm:$0xf]
        %v1208 = vld [vmem:[%s1129 + $0x38] sm:$0x1]
        %v1209 = vld [vmem:[%s1129 + $0x3c] sm:$0xf]
        %v1210 = vld [vmem:[%s1129 + $0x40] sm:$0xf]
        %v1211 = vld [vmem:[%s1129 + $0x44] sm:$0x1]
        %v1212 = vld [vmem:[%s1129 + $0x48] sm:$0xf]
        %v1213 = vld [vmem:[%s1129 + $0x4c] sm:$0xf]
        %v1214 = vld [vmem:[%s1129 + $0x50] sm:$0x1]
        %v1215 = vld [vmem:[%s1129 + $0x54] sm:$0xf]
        %v1216 = vld [vmem:[%s1129 + $0x58] sm:$0xf]
        %v1217 = vld [vmem:[%s1129 + $0x5c] sm:$0x1]
        %v1218 = vld [vmem:[%s1129 + $0x60] sm:$0xf]
        %v1219 = vld [vmem:[%s1129 + $0x64] sm:$0xf]
        %v1220 = vld [vmem:[%s1129 + $0x68] sm:$0x1]
        %v1221 = vld [vmem:[%s1129 + $0x6c] sm:$0xf]
        %v1222 = vld [vmem:[%s1129 + $0x70] sm:$0xf]
        %v1223 = vld [vmem:[%s1129 + $0x74] sm:$0x1]
        %v1224 = vld [vmem:[%s1129 + $0x78] sm:$0xf]
        %v1225 = vld [vmem:[%s1129 + $0x7c] sm:$0xf]
        %v1226 = vld [vmem:[%s1129 + $0x80] sm:$0x1]
        %v1227 = vld [vmem:[%s1129 + $0x84] sm:$0xf]
        %v1228 = vld [vmem:[%s1129 + $0x88] sm:$0xf]
        %v1229 = vld [vmem:[%s1129 + $0x8c] sm:$0x1]
        %v1230 = vld [vmem:[%s1129 + $0x90] sm:$0xf]
        %v1231 = vld [vmem:[%s1129 + $0x94] sm:$0xf]
        %v1232 = vld [vmem:[%s1129 + $0x98] sm:$0x1]
        %v1233 = vld [vmem:[%s1129 + $0x9c] sm:$0xf]
        %v1234 = vld [vmem:[%s1129 + $0xa0] sm:$0xf]
        %v1235 = vld [vmem:[%s1129 + $0xa4] sm:$0x1]
        %v1236 = vld [vmem:[%s1129 + $0xa8] sm:$0xf]
        %v1237 = vld [vmem:[%s1129 + $0xac] sm:$0xf]
        %v1238 = vld [vmem:[%s1129 + $0xb0] sm:$0x1]
        %v1239 = vld [vmem:[%s1129 + $0xb4] sm:$0xf]
        %v1240 = vld [vmem:[%s1129 + $0xb8] sm:$0xf]
        %v1241 = vld [vmem:[%s1129 + $0xbc] sm:$0x1]
        %v1243 = vshrl.u32 %v1194, 16
        %v1245 = vrot.slane %v1243, 4
        %v1246 = vshll.u32 %v1194, 16
        %v1248 = vrot.slane %v1246, 5
        %v1249 = vor.u32 %v1245, %v1248
        %v1250 = vrot.slane %v1249, 4
        %v1252 = vshll.u32 %v1195, 16
        %v1254 = vrot.slane %v1252, 5
        %v1255 = vsel %vm405, %v1250, %v1254
        %v1256 = vshrl.u32 %v1195, 16
        %v1258 = vrot.slane %v1256, 4
        %v1259 = vor.u32 %v1258, %v1254
        %v1260 = vrot.slane %v1259, 4
        %v1262 = vshll.u32 %v1196, 16
        %v1264 = vrot.slane %v1262, 5
        %v1265 = vsel %vm405, %v1260, %v1264
        %v1267 = vshrl.u32 %v1197, 16
        %v1269 = vrot.slane %v1267, 4
        %v1270 = vshll.u32 %v1197, 16
        %v1272 = vrot.slane %v1270, 5
        %v1273 = vor.u32 %v1269, %v1272
        %v1274 = vrot.slane %v1273, 4
        %v1276 = vshll.u32 %v1198, 16
        %v1278 = vrot.slane %v1276, 5
        %v1279 = vsel %vm405, %v1274, %v1278
        %v1280 = vshrl.u32 %v1198, 16
        %v1282 = vrot.slane %v1280, 4
        %v1283 = vor.u32 %v1282, %v1278
        %v1284 = vrot.slane %v1283, 4
        %v1286 = vshll.u32 %v1199, 16
        %v1288 = vrot.slane %v1286, 5
        %v1289 = vsel %vm405, %v1284, %v1288
        %v1291 = vshrl.u32 %v1200, 16
        %v1293 = vrot.slane %v1291, 4
        %v1294 = vshll.u32 %v1200, 16
        %v1296 = vrot.slane %v1294, 5
        %v1297 = vor.u32 %v1293, %v1296
        %v1298 = vrot.slane %v1297, 4
        %v1300 = vshll.u32 %v1201, 16
        %v1302 = vrot.slane %v1300, 5
        %v1303 = vsel %vm405, %v1298, %v1302
        %v1304 = vshrl.u32 %v1201, 16
        %v1306 = vrot.slane %v1304, 4
        %v1307 = vor.u32 %v1306, %v1302
        %v1308 = vrot.slane %v1307, 4
        %v1310 = vshll.u32 %v1202, 16
        %v1312 = vrot.slane %v1310, 5
        %v1313 = vsel %vm405, %v1308, %v1312
        %v1315 = vshrl.u32 %v1203, 16
        %v1317 = vrot.slane %v1315, 4
        %v1318 = vshll.u32 %v1203, 16
        %v1320 = vrot.slane %v1318, 5
        %v1321 = vor.u32 %v1317, %v1320
        %v1322 = vrot.slane %v1321, 4
        %v1324 = vshll.u32 %v1204, 16
        %v1326 = vrot.slane %v1324, 5
        %v1327 = vsel %vm405, %v1322, %v1326
        %v1328 = vshrl.u32 %v1204, 16
        %v1330 = vrot.slane %v1328, 4
        %v1331 = vor.u32 %v1330, %v1326
        %v1332 = vrot.slane %v1331, 4
        %v1334 = vshll.u32 %v1205, 16
        %v1336 = vrot.slane %v1334, 5
        %v1337 = vsel %vm405, %v1332, %v1336
        %v1339 = vshrl.u32 %v1206, 16
        %v1341 = vrot.slane %v1339, 4
        %v1342 = vshll.u32 %v1206, 16
        %v1344 = vrot.slane %v1342, 5
        %v1345 = vor.u32 %v1341, %v1344
        %v1346 = vrot.slane %v1345, 4
        %v1348 = vshll.u32 %v1207, 16
        %v1350 = vrot.slane %v1348, 5
        %v1351 = vsel %vm405, %v1346, %v1350
        %v1352 = vshrl.u32 %v1207, 16
        %v1354 = vrot.slane %v1352, 4
        %v1355 = vor.u32 %v1354, %v1350
        %v1356 = vrot.slane %v1355, 4
        %v1358 = vshll.u32 %v1208, 16
        %v1360 = vrot.slane %v1358, 5
        %v1361 = vsel %vm405, %v1356, %v1360
        %v1363 = vshrl.u32 %v1209, 16
        %v1365 = vrot.slane %v1363, 4
        %v1366 = vshll.u32 %v1209, 16
        %v1368 = vrot.slane %v1366, 5
        %v1369 = vor.u32 %v1365, %v1368
        %v1370 = vrot.slane %v1369, 4
        %v1372 = vshll.u32 %v1210, 16
        %v1374 = vrot.slane %v1372, 5
        %v1375 = vsel %vm405, %v1370, %v1374
        %v1376 = vshrl.u32 %v1210, 16
        %v1378 = vrot.slane %v1376, 4
        %v1379 = vor.u32 %v1378, %v1374
        %v1380 = vrot.slane %v1379, 4
        %v1382 = vshll.u32 %v1211, 16
        %v1384 = vrot.slane %v1382, 5
        %v1385 = vsel %vm405, %v1380, %v1384
        %v1387 = vshrl.u32 %v1212, 16
        %v1389 = vrot.slane %v1387, 4
        %v1390 = vshll.u32 %v1212, 16
        %v1392 = vrot.slane %v1390, 5
        %v1393 = vor.u32 %v1389, %v1392
        %v1394 = vrot.slane %v1393, 4
        %v1396 = vshll.u32 %v1213, 16
        %v1398 = vrot.slane %v1396, 5
        %v1399 = vsel %vm405, %v1394, %v1398
        %v1400 = vshrl.u32 %v1213, 16
        %v1402 = vrot.slane %v1400, 4
        %v1403 = vor.u32 %v1402, %v1398
        %v1404 = vrot.slane %v1403, 4
        %v1406 = vshll.u32 %v1214, 16
        %v1408 = vrot.slane %v1406, 5
        %v1409 = vsel %vm405, %v1404, %v1408
        %v1411 = vshrl.u32 %v1215, 16
        %v1413 = vrot.slane %v1411, 4
        %v1414 = vshll.u32 %v1215, 16
        %v1416 = vrot.slane %v1414, 5
        %v1417 = vor.u32 %v1413, %v1416
        %v1418 = vrot.slane %v1417, 4
        %v1420 = vshll.u32 %v1216, 16
        %v1422 = vrot.slane %v1420, 5
        %v1423 = vsel %vm405, %v1418, %v1422
        %v1424 = vshrl.u32 %v1216, 16
        %v1426 = vrot.slane %v1424, 4
        %v1427 = vor.u32 %v1426, %v1422
        %v1428 = vrot.slane %v1427, 4
        %v1430 = vshll.u32 %v1217, 16
        %v1432 = vrot.slane %v1430, 5
        %v1433 = vsel %vm405, %v1428, %v1432
        %v1435 = vshrl.u32 %v1218, 16
        %v1437 = vrot.slane %v1435, 4
        %v1438 = vshll.u32 %v1218, 16
        %v1440 = vrot.slane %v1438, 5
        %v1441 = vor.u32 %v1437, %v1440
        %v1442 = vrot.slane %v1441, 4
        %v1444 = vshll.u32 %v1219, 16
        %v1446 = vrot.slane %v1444, 5
        %v1447 = vsel %vm405, %v1442, %v1446
        %v1448 = vshrl.u32 %v1219, 16
        %v1450 = vrot.slane %v1448, 4
        %v1451 = vor.u32 %v1450, %v1446
        %v1452 = vrot.slane %v1451, 4
        %v1454 = vshll.u32 %v1220, 16
        %v1456 = vrot.slane %v1454, 5
        %v1457 = vsel %vm405, %v1452, %v1456
        %v1459 = vshrl.u32 %v1221, 16
        %v1461 = vrot.slane %v1459, 4
        %v1462 = vshll.u32 %v1221, 16
        %v1464 = vrot.slane %v1462, 5
        %v1465 = vor.u32 %v1461, %v1464
        %v1466 = vrot.slane %v1465, 4
        %v1468 = vshll.u32 %v1222, 16
        %v1470 = vrot.slane %v1468, 5
        %v1471 = vsel %vm405, %v1466, %v1470
        %v1472 = vshrl.u32 %v1222, 16
        %v1474 = vrot.slane %v1472, 4
        %v1475 = vor.u32 %v1474, %v1470
        %v1476 = vrot.slane %v1475, 4
        %v1478 = vshll.u32 %v1223, 16
        %v1480 = vrot.slane %v1478, 5
        %v1481 = vsel %vm405, %v1476, %v1480
        %v1483 = vshrl.u32 %v1224, 16
        %v1485 = vrot.slane %v1483, 4
        %v1486 = vshll.u32 %v1224, 16
        %v1488 = vrot.slane %v1486, 5
        %v1489 = vor.u32 %v1485, %v1488
        %v1490 = vrot.slane %v1489, 4
        %v1492 = vshll.u32 %v1225, 16
        %v1494 = vrot.slane %v1492, 5
        %v1495 = vsel %vm405, %v1490, %v1494
        %v1496 = vshrl.u32 %v1225, 16
        %v1498 = vrot.slane %v1496, 4
        %v1499 = vor.u32 %v1498, %v1494
        %v1500 = vrot.slane %v1499, 4
        %v1502 = vshll.u32 %v1226, 16
        %v1504 = vrot.slane %v1502, 5
        %v1505 = vsel %vm405, %v1500, %v1504
        %v1507 = vshrl.u32 %v1227, 16
        %v1509 = vrot.slane %v1507, 4
        %v1510 = vshll.u32 %v1227, 16
        %v1512 = vrot.slane %v1510, 5
        %v1513 = vor.u32 %v1509, %v1512
        %v1514 = vrot.slane %v1513, 4
        %v1516 = vshll.u32 %v1228, 16
        %v1518 = vrot.slane %v1516, 5
        %v1519 = vsel %vm405, %v1514, %v1518
        %v1520 = vshrl.u32 %v1228, 16
        %v1522 = vrot.slane %v1520, 4
        %v1523 = vor.u32 %v1522, %v1518
        %v1524 = vrot.slane %v1523, 4
        %v1526 = vshll.u32 %v1229, 16
        %v1528 = vrot.slane %v1526, 5
        %v1529 = vsel %vm405, %v1524, %v1528
        %v1531 = vshrl.u32 %v1230, 16
        %v1533 = vrot.slane %v1531, 4
        %v1534 = vshll.u32 %v1230, 16
        %v1536 = vrot.slane %v1534, 5
        %v1537 = vor.u32 %v1533, %v1536
        %v1538 = vrot.slane %v1537, 4
        %v1540 = vshll.u32 %v1231, 16
        %v1542 = vrot.slane %v1540, 5
        %v1543 = vsel %vm405, %v1538, %v1542
        %v1544 = vshrl.u32 %v1231, 16
        %v1546 = vrot.slane %v1544, 4
        %v1547 = vor.u32 %v1546, %v1542
        %v1548 = vrot.slane %v1547, 4
        %v1550 = vshll.u32 %v1232, 16
        %v1552 = vrot.slane %v1550, 5
        %v1553 = vsel %vm405, %v1548, %v1552
        %v1555 = vshrl.u32 %v1233, 16
        %v1557 = vrot.slane %v1555, 4
        %v1558 = vshll.u32 %v1233, 16
        %v1560 = vrot.slane %v1558, 5
        %v1561 = vor.u32 %v1557, %v1560
        %v1562 = vrot.slane %v1561, 4
        %v1564 = vshll.u32 %v1234, 16
        %v1566 = vrot.slane %v1564, 5
        %v1567 = vsel %vm405, %v1562, %v1566
        %v1568 = vshrl.u32 %v1234, 16
        %v1570 = vrot.slane %v1568, 4
        %v1571 = vor.u32 %v1570, %v1566
        %v1572 = vrot.slane %v1571, 4
        %v1574 = vshll.u32 %v1235, 16
        %v1576 = vrot.slane %v1574, 5
        %v1577 = vsel %vm405, %v1572, %v1576
        %v1579 = vshrl.u32 %v1236, 16
        %v1581 = vrot.slane %v1579, 4
        %v1582 = vshll.u32 %v1236, 16
        %v1584 = vrot.slane %v1582, 5
        %v1585 = vor.u32 %v1581, %v1584
        %v1586 = vrot.slane %v1585, 4
        %v1588 = vshll.u32 %v1237, 16
        %v1590 = vrot.slane %v1588, 5
        %v1591 = vsel %vm405, %v1586, %v1590
        %v1592 = vshrl.u32 %v1237, 16
        %v1594 = vrot.slane %v1592, 4
        %v1595 = vor.u32 %v1594, %v1590
        %v1596 = vrot.slane %v1595, 4
        %v1598 = vshll.u32 %v1238, 16
        %v1600 = vrot.slane %v1598, 5
        %v1601 = vsel %vm405, %v1596, %v1600
        %v1603 = vshrl.u32 %v1239, 16
        %v1605 = vrot.slane %v1603, 4
        %v1606 = vshll.u32 %v1239, 16
        %v1608 = vrot.slane %v1606, 5
        %v1609 = vor.u32 %v1605, %v1608
        %v1610 = vrot.slane %v1609, 4
        %v1612 = vshll.u32 %v1240, 16
        %v1614 = vrot.slane %v1612, 5
        %v1615 = vsel %vm405, %v1610, %v1614
        %v1616 = vshrl.u32 %v1240, 16
        %v1618 = vrot.slane %v1616, 4
        %v1619 = vor.u32 %v1618, %v1614
        %v1620 = vrot.slane %v1619, 4
        %v1622 = vshll.u32 %v1241, 16
        %v1624 = vrot.slane %v1622, 5
        %v1625 = vsel %vm405, %v1620, %v1624
        %1658 = vst [vmem:[#allocation2 + $0x10] sm:$0xf] %v1255
        %1659 = vst [vmem:[#allocation2 + $0x34] sm:$0xf] %v1265
        %1660 = vst [vmem:[#allocation2 + $0x58] sm:$0xf] %v1279
        %1661 = vst [vmem:[#allocation2 + $0x7c] sm:$0xf] %v1289
        %1662 = vst [vmem:[#allocation2 + $0xa0] sm:$0xf] %v1303
        %1663 = vst [vmem:[#allocation2 + $0xc4] sm:$0xf] %v1313
        %1664 = vst [vmem:[#allocation2 + $0xe8] sm:$0xf] %v1327
        %1665 = vst [vmem:[#allocation2 + $0x10c] sm:$0xf] %v1337
        %1666 = vst [vmem:[#allocation2 + $0x130] sm:$0xf] %v1351
        %1667 = vst [vmem:[#allocation2 + $0x154] sm:$0xf] %v1361
        %1668 = vst [vmem:[#allocation2 + $0x178] sm:$0xf] %v1375
        %1669 = vst [vmem:[#allocation2 + $0x19c] sm:$0xf] %v1385
        %1670 = vst [vmem:[#allocation2 + $0x1c0] sm:$0xf] %v1399
        %1671 = vst [vmem:[#allocation2 + $0x1e4] sm:$0xf] %v1409
        %1672 = vst [vmem:[#allocation2 + $0x208] sm:$0xf] %v1423
        %1673 = vst [vmem:[#allocation2 + $0x22c] sm:$0xf] %v1433
        %1674 = vst [vmem:[#allocation2 + $0x250] sm:$0xf] %v1447
        %1675 = vst [vmem:[#allocation2 + $0x274] sm:$0xf] %v1457
        %1676 = vst [vmem:[#allocation2 + $0x298] sm:$0xf] %v1471
        %1677 = vst [vmem:[#allocation2 + $0x2bc] sm:$0xf] %v1481
        %1678 = vst [vmem:[#allocation2 + $0x2e0] sm:$0xf] %v1495
        %1679 = vst [vmem:[#allocation2 + $0x304] sm:$0xf] %v1505
        %1680 = vst [vmem:[#allocation2 + $0x328] sm:$0xf] %v1519
        %1681 = vst [vmem:[#allocation2 + $0x34c] sm:$0xf] %v1529
        %1682 = vst [vmem:[#allocation2 + $0x370] sm:$0xf] %v1543
        %1683 = vst [vmem:[#allocation2 + $0x394] sm:$0xf] %v1553
        %1684 = vst [vmem:[#allocation2 + $0x3b8] sm:$0xf] %v1567
        %1685 = vst [vmem:[#allocation2 + $0x3dc] sm:$0xf] %v1577
        %1686 = vst [vmem:[#allocation2 + $0x400] sm:$0xf] %v1591
        %1687 = vst [vmem:[#allocation2 + $0x424] sm:$0xf] %v1601
        %1688 = vst [vmem:[#allocation2 + $0x448] sm:$0xf] %v1615
        %1689 = vst [vmem:[#allocation2 + $0x46c] sm:$0xf] %v1625
        %v1690 = vld [vmem:[%s1129] sm:$0xe]
        %v1691 = vld [vmem:[%s1129 + $0x4] sm:$0xf]
        %v1692 = vld [vmem:[%s1129 + $0x8] sm:$0x1]
        %v1693 = vld [vmem:[%s1129 + $0xc] sm:$0xe]
        %v1694 = vld [vmem:[%s1129 + $0x10] sm:$0xf]
        %v1695 = vld [vmem:[%s1129 + $0x14] sm:$0x1]
        %v1696 = vld [vmem:[%s1129 + $0x18] sm:$0xe]
        %v1697 = vld [vmem:[%s1129 + $0x1c] sm:$0xf]
        %v1698 = vld [vmem:[%s1129 + $0x20] sm:$0x1]
        %v1699 = vld [vmem:[%s1129 + $0x24] sm:$0xe]
        %v1700 = vld [vmem:[%s1129 + $0x28] sm:$0xf]
        %v1701 = vld [vmem:[%s1129 + $0x2c] sm:$0x1]
        %v1702 = vld [vmem:[%s1129 + $0x30] sm:$0xe]
        %v1703 = vld [vmem:[%s1129 + $0x34] sm:$0xf]
        %v1704 = vld [vmem:[%s1129 + $0x38] sm:$0x1]
        %v1705 = vld [vmem:[%s1129 + $0x3c] sm:$0xe]
        %v1706 = vld [vmem:[%s1129 + $0x40] sm:$0xf]
        %v1707 = vld [vmem:[%s1129 + $0x44] sm:$0x1]
        %v1708 = vld [vmem:[%s1129 + $0x48] sm:$0xe]
        %v1709 = vld [vmem:[%s1129 + $0x4c] sm:$0xf]
        %v1710 = vld [vmem:[%s1129 + $0x50] sm:$0x1]
        %v1711 = vld [vmem:[%s1129 + $0x54] sm:$0xe]
        %v1712 = vld [vmem:[%s1129 + $0x58] sm:$0xf]
        %v1713 = vld [vmem:[%s1129 + $0x5c] sm:$0x1]
        %v1714 = vld [vmem:[%s1129 + $0x60] sm:$0xe]
        %v1715 = vld [vmem:[%s1129 + $0x64] sm:$0xf]
        %v1716 = vld [vmem:[%s1129 + $0x68] sm:$0x1]
        %v1717 = vld [vmem:[%s1129 + $0x6c] sm:$0xe]
        %v1718 = vld [vmem:[%s1129 + $0x70] sm:$0xf]
        %v1719 = vld [vmem:[%s1129 + $0x74] sm:$0x1]
        %v1720 = vld [vmem:[%s1129 + $0x78] sm:$0xe]
        %v1721 = vld [vmem:[%s1129 + $0x7c] sm:$0xf]
        %v1722 = vld [vmem:[%s1129 + $0x80] sm:$0x1]
        %v1723 = vld [vmem:[%s1129 + $0x84] sm:$0xe]
        %v1724 = vld [vmem:[%s1129 + $0x88] sm:$0xf]
        %v1725 = vld [vmem:[%s1129 + $0x8c] sm:$0x1]
        %v1726 = vld [vmem:[%s1129 + $0x90] sm:$0xe]
        %v1727 = vld [vmem:[%s1129 + $0x94] sm:$0xf]
        %v1728 = vld [vmem:[%s1129 + $0x98] sm:$0x1]
        %v1729 = vld [vmem:[%s1129 + $0x9c] sm:$0xe]
        %v1730 = vld [vmem:[%s1129 + $0xa0] sm:$0xf]
        %v1731 = vld [vmem:[%s1129 + $0xa4] sm:$0x1]
        %v1732 = vld [vmem:[%s1129 + $0xa8] sm:$0xe]
        %v1733 = vld [vmem:[%s1129 + $0xac] sm:$0xf]
        %v1734 = vld [vmem:[%s1129 + $0xb0] sm:$0x1]
        %v1735 = vld [vmem:[%s1129 + $0xb4] sm:$0xe]
        %v1736 = vld [vmem:[%s1129 + $0xb8] sm:$0xf]
        %v1737 = vld [vmem:[%s1129 + $0xbc] sm:$0x1]
        %v1786 = vrot.slane %v1690, 5
        %v1787 = vrot.slane %v1786, 4
        %v1788 = vrot.slane %v1691, 5
        %v1789 = vsel %vm952, %v1787, %v1788
        %v1790 = vrot.slane %v1788, 4
        %v1791 = vrot.slane %v1692, 5
        %v1792 = vsel %vm952, %v1790, %v1791
        %v1793 = vrot.slane %v1693, 5
        %v1794 = vrot.slane %v1793, 4
        %v1795 = vrot.slane %v1694, 5
        %v1796 = vsel %vm952, %v1794, %v1795
        %v1797 = vrot.slane %v1795, 4
        %v1798 = vrot.slane %v1695, 5
        %v1799 = vsel %vm952, %v1797, %v1798
        %v1800 = vrot.slane %v1696, 5
        %v1801 = vrot.slane %v1800, 4
        %v1802 = vrot.slane %v1697, 5
        %v1803 = vsel %vm952, %v1801, %v1802
        %v1804 = vrot.slane %v1802, 4
        %v1805 = vrot.slane %v1698, 5
        %v1806 = vsel %vm952, %v1804, %v1805
        %v1807 = vrot.slane %v1699, 5
        %v1808 = vrot.slane %v1807, 4
        %v1809 = vrot.slane %v1700, 5
        %v1810 = vsel %vm952, %v1808, %v1809
        %v1811 = vrot.slane %v1809, 4
        %v1812 = vrot.slane %v1701, 5
        %v1813 = vsel %vm952, %v1811, %v1812
        %v1814 = vrot.slane %v1702, 5
        %v1815 = vrot.slane %v1814, 4
        %v1816 = vrot.slane %v1703, 5
        %v1817 = vsel %vm952, %v1815, %v1816
        %v1818 = vrot.slane %v1816, 4
        %v1819 = vrot.slane %v1704, 5
        %v1820 = vsel %vm952, %v1818, %v1819
        %v1821 = vrot.slane %v1705, 5
        %v1822 = vrot.slane %v1821, 4
        %v1823 = vrot.slane %v1706, 5
        %v1824 = vsel %vm952, %v1822, %v1823
        %v1825 = vrot.slane %v1823, 4
        %v1826 = vrot.slane %v1707, 5
        %v1827 = vsel %vm952, %v1825, %v1826
        %v1828 = vrot.slane %v1708, 5
        %v1829 = vrot.slane %v1828, 4
        %v1830 = vrot.slane %v1709, 5
        %v1831 = vsel %vm952, %v1829, %v1830
        %v1832 = vrot.slane %v1830, 4
        %v1833 = vrot.slane %v1710, 5
        %v1834 = vsel %vm952, %v1832, %v1833
        %v1835 = vrot.slane %v1711, 5
        %v1836 = vrot.slane %v1835, 4
        %v1837 = vrot.slane %v1712, 5
        %v1838 = vsel %vm952, %v1836, %v1837
        %v1839 = vrot.slane %v1837, 4
        %v1840 = vrot.slane %v1713, 5
        %v1841 = vsel %vm952, %v1839, %v1840
        %v1842 = vrot.slane %v1714, 5
        %v1843 = vrot.slane %v1842, 4
        %v1844 = vrot.slane %v1715, 5
        %v1845 = vsel %vm952, %v1843, %v1844
        %v1846 = vrot.slane %v1844, 4
        %v1847 = vrot.slane %v1716, 5
        %v1848 = vsel %vm952, %v1846, %v1847
        %v1849 = vrot.slane %v1717, 5
        %v1850 = vrot.slane %v1849, 4
        %v1851 = vrot.slane %v1718, 5
        %v1852 = vsel %vm952, %v1850, %v1851
        %v1853 = vrot.slane %v1851, 4
        %v1854 = vrot.slane %v1719, 5
        %v1855 = vsel %vm952, %v1853, %v1854
        %v1856 = vrot.slane %v1720, 5
        %v1857 = vrot.slane %v1856, 4
        %v1858 = vrot.slane %v1721, 5
        %v1859 = vsel %vm952, %v1857, %v1858
        %v1860 = vrot.slane %v1858, 4
        %v1861 = vrot.slane %v1722, 5
        %v1862 = vsel %vm952, %v1860, %v1861
        %v1863 = vrot.slane %v1723, 5
        %v1864 = vrot.slane %v1863, 4
        %v1865 = vrot.slane %v1724, 5
        %v1866 = vsel %vm952, %v1864, %v1865
        %v1867 = vrot.slane %v1865, 4
        %v1868 = vrot.slane %v1725, 5
        %v1869 = vsel %vm952, %v1867, %v1868
        %v1870 = vrot.slane %v1726, 5
        %v1871 = vrot.slane %v1870, 4
        %v1872 = vrot.slane %v1727, 5
        %v1873 = vsel %vm952, %v1871, %v1872
        %v1874 = vrot.slane %v1872, 4
        %v1875 = vrot.slane %v1728, 5
        %v1876 = vsel %vm952, %v1874, %v1875
        %v1877 = vrot.slane %v1729, 5
        %v1878 = vrot.slane %v1877, 4
        %v1879 = vrot.slane %v1730, 5
        %v1880 = vsel %vm952, %v1878, %v1879
        %v1881 = vrot.slane %v1879, 4
        %v1882 = vrot.slane %v1731, 5
        %v1883 = vsel %vm952, %v1881, %v1882
        %v1884 = vrot.slane %v1732, 5
        %v1885 = vrot.slane %v1884, 4
        %v1886 = vrot.slane %v1733, 5
        %v1887 = vsel %vm952, %v1885, %v1886
        %v1888 = vrot.slane %v1886, 4
        %v1889 = vrot.slane %v1734, 5
        %v1890 = vsel %vm952, %v1888, %v1889
        %v1891 = vrot.slane %v1735, 5
        %v1892 = vrot.slane %v1891, 4
        %v1893 = vrot.slane %v1736, 5
        %v1894 = vsel %vm952, %v1892, %v1893
        %v1895 = vrot.slane %v1893, 4
        %v1896 = vrot.slane %v1737, 5
        %v1897 = vsel %vm952, %v1895, %v1896
        %1930 = vst [vmem:[#allocation2 + $0x14] sm:$0xf] %v1789
        %1931 = vst [vmem:[#allocation2 + $0x38] sm:$0xf] %v1792
        %1932 = vst [vmem:[#allocation2 + $0x5c] sm:$0xf] %v1796
        %1933 = vst [vmem:[#allocation2 + $0x80] sm:$0xf] %v1799
        %1934 = vst [vmem:[#allocation2 + $0xa4] sm:$0xf] %v1803
        %1935 = vst [vmem:[#allocation2 + $0xc8] sm:$0xf] %v1806
        %1936 = vst [vmem:[#allocation2 + $0xec] sm:$0xf] %v1810
        %1937 = vst [vmem:[#allocation2 + $0x110] sm:$0xf] %v1813
        %1938 = vst [vmem:[#allocation2 + $0x134] sm:$0xf] %v1817
        %1939 = vst [vmem:[#allocation2 + $0x158] sm:$0xf] %v1820
        %1940 = vst [vmem:[#allocation2 + $0x17c] sm:$0xf] %v1824
        %1941 = vst [vmem:[#allocation2 + $0x1a0] sm:$0xf] %v1827
        %1942 = vst [vmem:[#allocation2 + $0x1c4] sm:$0xf] %v1831
        %1943 = vst [vmem:[#allocation2 + $0x1e8] sm:$0xf] %v1834
        %1944 = vst [vmem:[#allocation2 + $0x20c] sm:$0xf] %v1838
        %1945 = vst [vmem:[#allocation2 + $0x230] sm:$0xf] %v1841
        %1946 = vst [vmem:[#allocation2 + $0x254] sm:$0xf] %v1845
        %1947 = vst [vmem:[#allocation2 + $0x278] sm:$0xf] %v1848
        %1948 = vst [vmem:[#allocation2 + $0x29c] sm:$0xf] %v1852
        %1949 = vst [vmem:[#allocation2 + $0x2c0] sm:$0xf] %v1855
        %1950 = vst [vmem:[#allocation2 + $0x2e4] sm:$0xf] %v1859
        %1951 = vst [vmem:[#allocation2 + $0x308] sm:$0xf] %v1862
        %1952 = vst [vmem:[#allocation2 + $0x32c] sm:$0xf] %v1866
        %1953 = vst [vmem:[#allocation2 + $0x350] sm:$0xf] %v1869
        %1954 = vst [vmem:[#allocation2 + $0x374] sm:$0xf] %v1873
        %1955 = vst [vmem:[#allocation2 + $0x398] sm:$0xf] %v1876
        %1956 = vst [vmem:[#allocation2 + $0x3bc] sm:$0xf] %v1880
        %1957 = vst [vmem:[#allocation2 + $0x3e0] sm:$0xf] %v1883
        %1958 = vst [vmem:[#allocation2 + $0x404] sm:$0xf] %v1887
        %1959 = vst [vmem:[#allocation2 + $0x428] sm:$0xf] %v1890
        %1960 = vst [vmem:[#allocation2 + $0x44c] sm:$0xf] %v1894
        %1961 = vst [vmem:[#allocation2 + $0x470] sm:$0xf] %v1897
        %s1962 = scalar_lea.vmem %s251, 24 [#allocation5]
        %v1963 = vld [vmem:[%s1962] sm:$0xf]
        %v1964 = vld [vmem:[%s1962 + $0x4] sm:$0xf]
        %v1965 = vld [vmem:[%s1962 + $0xc] sm:$0xf]
        %v1966 = vld [vmem:[%s1962 + $0x10] sm:$0xf]
        %v1967 = vld [vmem:[%s1962 + $0x18] sm:$0xf]
        %v1968 = vld [vmem:[%s1962 + $0x1c] sm:$0xf]
        %v1969 = vld [vmem:[%s1962 + $0x24] sm:$0xf]
        %v1970 = vld [vmem:[%s1962 + $0x28] sm:$0xf]
        %v1971 = vld [vmem:[%s1962 + $0x30] sm:$0xf]
        %v1972 = vld [vmem:[%s1962 + $0x34] sm:$0xf]
        %v1973 = vld [vmem:[%s1962 + $0x3c] sm:$0xf]
        %v1974 = vld [vmem:[%s1962 + $0x40] sm:$0xf]
        %v1975 = vld [vmem:[%s1962 + $0x48] sm:$0xf]
        %v1976 = vld [vmem:[%s1962 + $0x4c] sm:$0xf]
        %v1977 = vld [vmem:[%s1962 + $0x54] sm:$0xf]
        %v1978 = vld [vmem:[%s1962 + $0x58] sm:$0xf]
        %v1979 = vld [vmem:[%s1962 + $0x60] sm:$0xf]
        %v1980 = vld [vmem:[%s1962 + $0x64] sm:$0xf]
        %v1981 = vld [vmem:[%s1962 + $0x6c] sm:$0xf]
        %v1982 = vld [vmem:[%s1962 + $0x70] sm:$0xf]
        %v1983 = vld [vmem:[%s1962 + $0x78] sm:$0xf]
        %v1984 = vld [vmem:[%s1962 + $0x7c] sm:$0xf]
        %v1985 = vld [vmem:[%s1962 + $0x84] sm:$0xf]
        %v1986 = vld [vmem:[%s1962 + $0x88] sm:$0xf]
        %v1987 = vld [vmem:[%s1962 + $0x90] sm:$0xf]
        %v1988 = vld [vmem:[%s1962 + $0x94] sm:$0xf]
        %v1989 = vld [vmem:[%s1962 + $0x9c] sm:$0xf]
        %v1990 = vld [vmem:[%s1962 + $0xa0] sm:$0xf]
        %v1991 = vld [vmem:[%s1962 + $0xa8] sm:$0xf]
        %v1992 = vld [vmem:[%s1962 + $0xac] sm:$0xf]
        %v1993 = vld [vmem:[%s1962 + $0xb4] sm:$0xf]
        %v1994 = vld [vmem:[%s1962 + $0xb8] sm:$0xf]
        %1995 = vst [vmem:[#allocation2 + $0x18] sm:$0xf] %v1963
        %1996 = vst [vmem:[#allocation2 + $0x3c] sm:$0xf] %v1964
        %1997 = vst [vmem:[#allocation2 + $0x60] sm:$0xf] %v1965
        %1998 = vst [vmem:[#allocation2 + $0x84] sm:$0xf] %v1966
        %1999 = vst [vmem:[#allocation2 + $0xa8] sm:$0xf] %v1967
        %2000 = vst [vmem:[#allocation2 + $0xcc] sm:$0xf] %v1968
        %2001 = vst [vmem:[#allocation2 + $0xf0] sm:$0xf] %v1969
        %2002 = vst [vmem:[#allocation2 + $0x114] sm:$0xf] %v1970
        %2003 = vst [vmem:[#allocation2 + $0x138] sm:$0xf] %v1971
        %2004 = vst [vmem:[#allocation2 + $0x15c] sm:$0xf] %v1972
        %2005 = vst [vmem:[#allocation2 + $0x180] sm:$0xf] %v1973
        %2006 = vst [vmem:[#allocation2 + $0x1a4] sm:$0xf] %v1974
        %2007 = vst [vmem:[#allocation2 + $0x1c8] sm:$0xf] %v1975
        %2008 = vst [vmem:[#allocation2 + $0x1ec] sm:$0xf] %v1976
        %2009 = vst [vmem:[#allocation2 + $0x210] sm:$0xf] %v1977
        %2010 = vst [vmem:[#allocation2 + $0x234] sm:$0xf] %v1978
        %2011 = vst [vmem:[#allocation2 + $0x258] sm:$0xf] %v1979
        %2012 = vst [vmem:[#allocation2 + $0x27c] sm:$0xf] %v1980
        %2013 = vst [vmem:[#allocation2 + $0x2a0] sm:$0xf] %v1981
        %2014 = vst [vmem:[#allocation2 + $0x2c4] sm:$0xf] %v1982
        %2015 = vst [vmem:[#allocation2 + $0x2e8] sm:$0xf] %v1983
        %2016 = vst [vmem:[#allocation2 + $0x30c] sm:$0xf] %v1984
        %2017 = vst [vmem:[#allocation2 + $0x330] sm:$0xf] %v1985
        %2018 = vst [vmem:[#allocation2 + $0x354] sm:$0xf] %v1986
        %2019 = vst [vmem:[#allocation2 + $0x378] sm:$0xf] %v1987
        %2020 = vst [vmem:[#allocation2 + $0x39c] sm:$0xf] %v1988
        %2021 = vst [vmem:[#allocation2 + $0x3c0] sm:$0xf] %v1989
        %2022 = vst [vmem:[#allocation2 + $0x3e4] sm:$0xf] %v1990
        %2023 = vst [vmem:[#allocation2 + $0x408] sm:$0xf] %v1991
        %2024 = vst [vmem:[#allocation2 + $0x42c] sm:$0xf] %v1992
        %2025 = vst [vmem:[#allocation2 + $0x450] sm:$0xf] %v1993
        %2026 = vst [vmem:[#allocation2 + $0x474] sm:$0xf] %v1994
        %v2027 = vld [vmem:[%s1962] sm:$0xf]
        %v2028 = vld [vmem:[%s1962 + $0x4] sm:$0xf]
        %v2029 = vld [vmem:[%s1962 + $0x8] sm:$0x1]
        %v2030 = vld [vmem:[%s1962 + $0xc] sm:$0xf]
        %v2031 = vld [vmem:[%s1962 + $0x10] sm:$0xf]
        %v2032 = vld [vmem:[%s1962 + $0x14] sm:$0x1]
        %v2033 = vld [vmem:[%s1962 + $0x18] sm:$0xf]
        %v2034 = vld [vmem:[%s1962 + $0x1c] sm:$0xf]
        %v2035 = vld [vmem:[%s1962 + $0x20] sm:$0x1]
        %v2036 = vld [vmem:[%s1962 + $0x24] sm:$0xf]
        %v2037 = vld [vmem:[%s1962 + $0x28] sm:$0xf]
        %v2038 = vld [vmem:[%s1962 + $0x2c] sm:$0x1]
        %v2039 = vld [vmem:[%s1962 + $0x30] sm:$0xf]
        %v2040 = vld [vmem:[%s1962 + $0x34] sm:$0xf]
        %v2041 = vld [vmem:[%s1962 + $0x38] sm:$0x1]
        %v2042 = vld [vmem:[%s1962 + $0x3c] sm:$0xf]
        %v2043 = vld [vmem:[%s1962 + $0x40] sm:$0xf]
        %v2044 = vld [vmem:[%s1962 + $0x44] sm:$0x1]
        %v2045 = vld [vmem:[%s1962 + $0x48] sm:$0xf]
        %v2046 = vld [vmem:[%s1962 + $0x4c] sm:$0xf]
        %v2047 = vld [vmem:[%s1962 + $0x50] sm:$0x1]
        %v2048 = vld [vmem:[%s1962 + $0x54] sm:$0xf]
        %v2049 = vld [vmem:[%s1962 + $0x58] sm:$0xf]
        %v2050 = vld [vmem:[%s1962 + $0x5c] sm:$0x1]
        %v2051 = vld [vmem:[%s1962 + $0x60] sm:$0xf]
        %v2052 = vld [vmem:[%s1962 + $0x64] sm:$0xf]
        %v2053 = vld [vmem:[%s1962 + $0x68] sm:$0x1]
        %v2054 = vld [vmem:[%s1962 + $0x6c] sm:$0xf]
        %v2055 = vld [vmem:[%s1962 + $0x70] sm:$0xf]
        %v2056 = vld [vmem:[%s1962 + $0x74] sm:$0x1]
        %v2057 = vld [vmem:[%s1962 + $0x78] sm:$0xf]
        %v2058 = vld [vmem:[%s1962 + $0x7c] sm:$0xf]
        %v2059 = vld [vmem:[%s1962 + $0x80] sm:$0x1]
        %v2060 = vld [vmem:[%s1962 + $0x84] sm:$0xf]
        %v2061 = vld [vmem:[%s1962 + $0x88] sm:$0xf]
        %v2062 = vld [vmem:[%s1962 + $0x8c] sm:$0x1]
        %v2063 = vld [vmem:[%s1962 + $0x90] sm:$0xf]
        %v2064 = vld [vmem:[%s1962 + $0x94] sm:$0xf]
        %v2065 = vld [vmem:[%s1962 + $0x98] sm:$0x1]
        %v2066 = vld [vmem:[%s1962 + $0x9c] sm:$0xf]
        %v2067 = vld [vmem:[%s1962 + $0xa0] sm:$0xf]
        %v2068 = vld [vmem:[%s1962 + $0xa4] sm:$0x1]
        %v2069 = vld [vmem:[%s1962 + $0xa8] sm:$0xf]
        %v2070 = vld [vmem:[%s1962 + $0xac] sm:$0xf]
        %v2071 = vld [vmem:[%s1962 + $0xb0] sm:$0x1]
        %v2072 = vld [vmem:[%s1962 + $0xb4] sm:$0xf]
        %v2073 = vld [vmem:[%s1962 + $0xb8] sm:$0xf]
        %v2074 = vld [vmem:[%s1962 + $0xbc] sm:$0x1]
        %v2076 = vshrl.u32 %v2027, 16
        %v2078 = vrot.slane %v2076, 4
        %v2079 = vshll.u32 %v2027, 16
        %v2081 = vrot.slane %v2079, 5
        %v2082 = vor.u32 %v2078, %v2081
        %v2083 = vrot.slane %v2082, 4
        %v2085 = vshll.u32 %v2028, 16
        %v2087 = vrot.slane %v2085, 5
        %v2088 = vsel %vm405, %v2083, %v2087
        %v2089 = vshrl.u32 %v2028, 16
        %v2091 = vrot.slane %v2089, 4
        %v2092 = vor.u32 %v2091, %v2087
        %v2093 = vrot.slane %v2092, 4
        %v2095 = vshll.u32 %v2029, 16
        %v2097 = vrot.slane %v2095, 5
        %v2098 = vsel %vm405, %v2093, %v2097
        %v2100 = vshrl.u32 %v2030, 16
        %v2102 = vrot.slane %v2100, 4
        %v2103 = vshll.u32 %v2030, 16
        %v2105 = vrot.slane %v2103, 5
        %v2106 = vor.u32 %v2102, %v2105
        %v2107 = vrot.slane %v2106, 4
        %v2109 = vshll.u32 %v2031, 16
        %v2111 = vrot.slane %v2109, 5
        %v2112 = vsel %vm405, %v2107, %v2111
        %v2113 = vshrl.u32 %v2031, 16
        %v2115 = vrot.slane %v2113, 4
        %v2116 = vor.u32 %v2115, %v2111
        %v2117 = vrot.slane %v2116, 4
        %v2119 = vshll.u32 %v2032, 16
        %v2121 = vrot.slane %v2119, 5
        %v2122 = vsel %vm405, %v2117, %v2121
        %v2124 = vshrl.u32 %v2033, 16
        %v2126 = vrot.slane %v2124, 4
        %v2127 = vshll.u32 %v2033, 16
        %v2129 = vrot.slane %v2127, 5
        %v2130 = vor.u32 %v2126, %v2129
        %v2131 = vrot.slane %v2130, 4
        %v2133 = vshll.u32 %v2034, 16
        %v2135 = vrot.slane %v2133, 5
        %v2136 = vsel %vm405, %v2131, %v2135
        %v2137 = vshrl.u32 %v2034, 16
        %v2139 = vrot.slane %v2137, 4
        %v2140 = vor.u32 %v2139, %v2135
        %v2141 = vrot.slane %v2140, 4
        %v2143 = vshll.u32 %v2035, 16
        %v2145 = vrot.slane %v2143, 5
        %v2146 = vsel %vm405, %v2141, %v2145
        %v2148 = vshrl.u32 %v2036, 16
        %v2150 = vrot.slane %v2148, 4
        %v2151 = vshll.u32 %v2036, 16
        %v2153 = vrot.slane %v2151, 5
        %v2154 = vor.u32 %v2150, %v2153
        %v2155 = vrot.slane %v2154, 4
        %v2157 = vshll.u32 %v2037, 16
        %v2159 = vrot.slane %v2157, 5
        %v2160 = vsel %vm405, %v2155, %v2159
        %v2161 = vshrl.u32 %v2037, 16
        %v2163 = vrot.slane %v2161, 4
        %v2164 = vor.u32 %v2163, %v2159
        %v2165 = vrot.slane %v2164, 4
        %v2167 = vshll.u32 %v2038, 16
        %v2169 = vrot.slane %v2167, 5
        %v2170 = vsel %vm405, %v2165, %v2169
        %v2172 = vshrl.u32 %v2039, 16
        %v2174 = vrot.slane %v2172, 4
        %v2175 = vshll.u32 %v2039, 16
        %v2177 = vrot.slane %v2175, 5
        %v2178 = vor.u32 %v2174, %v2177
        %v2179 = vrot.slane %v2178, 4
        %v2181 = vshll.u32 %v2040, 16
        %v2183 = vrot.slane %v2181, 5
        %v2184 = vsel %vm405, %v2179, %v2183
        %v2185 = vshrl.u32 %v2040, 16
        %v2187 = vrot.slane %v2185, 4
        %v2188 = vor.u32 %v2187, %v2183
        %v2189 = vrot.slane %v2188, 4
        %v2191 = vshll.u32 %v2041, 16
        %v2193 = vrot.slane %v2191, 5
        %v2194 = vsel %vm405, %v2189, %v2193
        %v2196 = vshrl.u32 %v2042, 16
        %v2198 = vrot.slane %v2196, 4
        %v2199 = vshll.u32 %v2042, 16
        %v2201 = vrot.slane %v2199, 5
        %v2202 = vor.u32 %v2198, %v2201
        %v2203 = vrot.slane %v2202, 4
        %v2205 = vshll.u32 %v2043, 16
        %v2207 = vrot.slane %v2205, 5
        %v2208 = vsel %vm405, %v2203, %v2207
        %v2209 = vshrl.u32 %v2043, 16
        %v2211 = vrot.slane %v2209, 4
        %v2212 = vor.u32 %v2211, %v2207
        %v2213 = vrot.slane %v2212, 4
        %v2215 = vshll.u32 %v2044, 16
        %v2217 = vrot.slane %v2215, 5
        %v2218 = vsel %vm405, %v2213, %v2217
        %v2220 = vshrl.u32 %v2045, 16
        %v2222 = vrot.slane %v2220, 4
        %v2223 = vshll.u32 %v2045, 16
        %v2225 = vrot.slane %v2223, 5
        %v2226 = vor.u32 %v2222, %v2225
        %v2227 = vrot.slane %v2226, 4
        %v2229 = vshll.u32 %v2046, 16
        %v2231 = vrot.slane %v2229, 5
        %v2232 = vsel %vm405, %v2227, %v2231
        %v2233 = vshrl.u32 %v2046, 16
        %v2235 = vrot.slane %v2233, 4
        %v2236 = vor.u32 %v2235, %v2231
        %v2237 = vrot.slane %v2236, 4
        %v2239 = vshll.u32 %v2047, 16
        %v2241 = vrot.slane %v2239, 5
        %v2242 = vsel %vm405, %v2237, %v2241
        %v2244 = vshrl.u32 %v2048, 16
        %v2246 = vrot.slane %v2244, 4
        %v2247 = vshll.u32 %v2048, 16
        %v2249 = vrot.slane %v2247, 5
        %v2250 = vor.u32 %v2246, %v2249
        %v2251 = vrot.slane %v2250, 4
        %v2253 = vshll.u32 %v2049, 16
        %v2255 = vrot.slane %v2253, 5
        %v2256 = vsel %vm405, %v2251, %v2255
        %v2257 = vshrl.u32 %v2049, 16
        %v2259 = vrot.slane %v2257, 4
        %v2260 = vor.u32 %v2259, %v2255
        %v2261 = vrot.slane %v2260, 4
        %v2263 = vshll.u32 %v2050, 16
        %v2265 = vrot.slane %v2263, 5
        %v2266 = vsel %vm405, %v2261, %v2265
        %v2268 = vshrl.u32 %v2051, 16
        %v2270 = vrot.slane %v2268, 4
        %v2271 = vshll.u32 %v2051, 16
        %v2273 = vrot.slane %v2271, 5
        %v2274 = vor.u32 %v2270, %v2273
        %v2275 = vrot.slane %v2274, 4
        %v2277 = vshll.u32 %v2052, 16
        %v2279 = vrot.slane %v2277, 5
        %v2280 = vsel %vm405, %v2275, %v2279
        %v2281 = vshrl.u32 %v2052, 16
        %v2283 = vrot.slane %v2281, 4
        %v2284 = vor.u32 %v2283, %v2279
        %v2285 = vrot.slane %v2284, 4
        %v2287 = vshll.u32 %v2053, 16
        %v2289 = vrot.slane %v2287, 5
        %v2290 = vsel %vm405, %v2285, %v2289
        %v2292 = vshrl.u32 %v2054, 16
        %v2294 = vrot.slane %v2292, 4
        %v2295 = vshll.u32 %v2054, 16
        %v2297 = vrot.slane %v2295, 5
        %v2298 = vor.u32 %v2294, %v2297
        %v2299 = vrot.slane %v2298, 4
        %v2301 = vshll.u32 %v2055, 16
        %v2303 = vrot.slane %v2301, 5
        %v2304 = vsel %vm405, %v2299, %v2303
        %v2305 = vshrl.u32 %v2055, 16
        %v2307 = vrot.slane %v2305, 4
        %v2308 = vor.u32 %v2307, %v2303
        %v2309 = vrot.slane %v2308, 4
        %v2311 = vshll.u32 %v2056, 16
        %v2313 = vrot.slane %v2311, 5
        %v2314 = vsel %vm405, %v2309, %v2313
        %v2316 = vshrl.u32 %v2057, 16
        %v2318 = vrot.slane %v2316, 4
        %v2319 = vshll.u32 %v2057, 16
        %v2321 = vrot.slane %v2319, 5
        %v2322 = vor.u32 %v2318, %v2321
        %v2323 = vrot.slane %v2322, 4
        %v2325 = vshll.u32 %v2058, 16
        %v2327 = vrot.slane %v2325, 5
        %v2328 = vsel %vm405, %v2323, %v2327
        %v2329 = vshrl.u32 %v2058, 16
        %v2331 = vrot.slane %v2329, 4
        %v2332 = vor.u32 %v2331, %v2327
        %v2333 = vrot.slane %v2332, 4
        %v2335 = vshll.u32 %v2059, 16
        %v2337 = vrot.slane %v2335, 5
        %v2338 = vsel %vm405, %v2333, %v2337
        %v2340 = vshrl.u32 %v2060, 16
        %v2342 = vrot.slane %v2340, 4
        %v2343 = vshll.u32 %v2060, 16
        %v2345 = vrot.slane %v2343, 5
        %v2346 = vor.u32 %v2342, %v2345
        %v2347 = vrot.slane %v2346, 4
        %v2349 = vshll.u32 %v2061, 16
        %v2351 = vrot.slane %v2349, 5
        %v2352 = vsel %vm405, %v2347, %v2351
        %v2353 = vshrl.u32 %v2061, 16
        %v2355 = vrot.slane %v2353, 4
        %v2356 = vor.u32 %v2355, %v2351
        %v2357 = vrot.slane %v2356, 4
        %v2359 = vshll.u32 %v2062, 16
        %v2361 = vrot.slane %v2359, 5
        %v2362 = vsel %vm405, %v2357, %v2361
        %v2364 = vshrl.u32 %v2063, 16
        %v2366 = vrot.slane %v2364, 4
        %v2367 = vshll.u32 %v2063, 16
        %v2369 = vrot.slane %v2367, 5
        %v2370 = vor.u32 %v2366, %v2369
        %v2371 = vrot.slane %v2370, 4
        %v2373 = vshll.u32 %v2064, 16
        %v2375 = vrot.slane %v2373, 5
        %v2376 = vsel %vm405, %v2371, %v2375
        %v2377 = vshrl.u32 %v2064, 16
        %v2379 = vrot.slane %v2377, 4
        %v2380 = vor.u32 %v2379, %v2375
        %v2381 = vrot.slane %v2380, 4
        %v2383 = vshll.u32 %v2065, 16
        %v2385 = vrot.slane %v2383, 5
        %v2386 = vsel %vm405, %v2381, %v2385
        %v2388 = vshrl.u32 %v2066, 16
        %v2390 = vrot.slane %v2388, 4
        %v2391 = vshll.u32 %v2066, 16
        %v2393 = vrot.slane %v2391, 5
        %v2394 = vor.u32 %v2390, %v2393
        %v2395 = vrot.slane %v2394, 4
        %v2397 = vshll.u32 %v2067, 16
        %v2399 = vrot.slane %v2397, 5
        %v2400 = vsel %vm405, %v2395, %v2399
        %v2401 = vshrl.u32 %v2067, 16
        %v2403 = vrot.slane %v2401, 4
        %v2404 = vor.u32 %v2403, %v2399
        %v2405 = vrot.slane %v2404, 4
        %v2407 = vshll.u32 %v2068, 16
        %v2409 = vrot.slane %v2407, 5
        %v2410 = vsel %vm405, %v2405, %v2409
        %v2412 = vshrl.u32 %v2069, 16
        %v2414 = vrot.slane %v2412, 4
        %v2415 = vshll.u32 %v2069, 16
        %v2417 = vrot.slane %v2415, 5
        %v2418 = vor.u32 %v2414, %v2417
        %v2419 = vrot.slane %v2418, 4
        %v2421 = vshll.u32 %v2070, 16
        %v2423 = vrot.slane %v2421, 5
        %v2424 = vsel %vm405, %v2419, %v2423
        %v2425 = vshrl.u32 %v2070, 16
        %v2427 = vrot.slane %v2425, 4
        %v2428 = vor.u32 %v2427, %v2423
        %v2429 = vrot.slane %v2428, 4
        %v2431 = vshll.u32 %v2071, 16
        %v2433 = vrot.slane %v2431, 5
        %v2434 = vsel %vm405, %v2429, %v2433
        %v2436 = vshrl.u32 %v2072, 16
        %v2438 = vrot.slane %v2436, 4
        %v2439 = vshll.u32 %v2072, 16
        %v2441 = vrot.slane %v2439, 5
        %v2442 = vor.u32 %v2438, %v2441
        %v2443 = vrot.slane %v2442, 4
        %v2445 = vshll.u32 %v2073, 16
        %v2447 = vrot.slane %v2445, 5
        %v2448 = vsel %vm405, %v2443, %v2447
        %v2449 = vshrl.u32 %v2073, 16
        %v2451 = vrot.slane %v2449, 4
        %v2452 = vor.u32 %v2451, %v2447
        %v2453 = vrot.slane %v2452, 4
        %v2455 = vshll.u32 %v2074, 16
        %v2457 = vrot.slane %v2455, 5
        %v2458 = vsel %vm405, %v2453, %v2457
        %2491 = vst [vmem:[#allocation2 + $0x1c] sm:$0xf] %v2088
        %2492 = vst [vmem:[#allocation2 + $0x40] sm:$0xf] %v2098
        %2493 = vst [vmem:[#allocation2 + $0x64] sm:$0xf] %v2112
        %2494 = vst [vmem:[#allocation2 + $0x88] sm:$0xf] %v2122
        %2495 = vst [vmem:[#allocation2 + $0xac] sm:$0xf] %v2136
        %2496 = vst [vmem:[#allocation2 + $0xd0] sm:$0xf] %v2146
        %2497 = vst [vmem:[#allocation2 + $0xf4] sm:$0xf] %v2160
        %2498 = vst [vmem:[#allocation2 + $0x118] sm:$0xf] %v2170
        %2499 = vst [vmem:[#allocation2 + $0x13c] sm:$0xf] %v2184
        %2500 = vst [vmem:[#allocation2 + $0x160] sm:$0xf] %v2194
        %2501 = vst [vmem:[#allocation2 + $0x184] sm:$0xf] %v2208
        %2502 = vst [vmem:[#allocation2 + $0x1a8] sm:$0xf] %v2218
        %2503 = vst [vmem:[#allocation2 + $0x1cc] sm:$0xf] %v2232
        %2504 = vst [vmem:[#allocation2 + $0x1f0] sm:$0xf] %v2242
        %2505 = vst [vmem:[#allocation2 + $0x214] sm:$0xf] %v2256
        %2506 = vst [vmem:[#allocation2 + $0x238] sm:$0xf] %v2266
        %2507 = vst [vmem:[#allocation2 + $0x25c] sm:$0xf] %v2280
        %2508 = vst [vmem:[#allocation2 + $0x280] sm:$0xf] %v2290
        %2509 = vst [vmem:[#allocation2 + $0x2a4] sm:$0xf] %v2304
        %2510 = vst [vmem:[#allocation2 + $0x2c8] sm:$0xf] %v2314
        %2511 = vst [vmem:[#allocation2 + $0x2ec] sm:$0xf] %v2328
        %2512 = vst [vmem:[#allocation2 + $0x310] sm:$0xf] %v2338
        %2513 = vst [vmem:[#allocation2 + $0x334] sm:$0xf] %v2352
        %2514 = vst [vmem:[#allocation2 + $0x358] sm:$0xf] %v2362
        %2515 = vst [vmem:[#allocation2 + $0x37c] sm:$0xf] %v2376
        %2516 = vst [vmem:[#allocation2 + $0x3a0] sm:$0xf] %v2386
        %2517 = vst [vmem:[#allocation2 + $0x3c4] sm:$0xf] %v2400
        %2518 = vst [vmem:[#allocation2 + $0x3e8] sm:$0xf] %v2410
        %2519 = vst [vmem:[#allocation2 + $0x40c] sm:$0xf] %v2424
        %2520 = vst [vmem:[#allocation2 + $0x430] sm:$0xf] %v2434
        %2521 = vst [vmem:[#allocation2 + $0x454] sm:$0xf] %v2448
        %2522 = vst [vmem:[#allocation2 + $0x478] sm:$0xf] %v2458
        %v2523 = vld [vmem:[%s1962] sm:$0xe]
        %v2524 = vld [vmem:[%s1962 + $0x4] sm:$0xf]
        %v2525 = vld [vmem:[%s1962 + $0x8] sm:$0x1]
        %v2526 = vld [vmem:[%s1962 + $0xc] sm:$0xe]
        %v2527 = vld [vmem:[%s1962 + $0x10] sm:$0xf]
        %v2528 = vld [vmem:[%s1962 + $0x14] sm:$0x1]
        %v2529 = vld [vmem:[%s1962 + $0x18] sm:$0xe]
        %v2530 = vld [vmem:[%s1962 + $0x1c] sm:$0xf]
        %v2531 = vld [vmem:[%s1962 + $0x20] sm:$0x1]
        %v2532 = vld [vmem:[%s1962 + $0x24] sm:$0xe]
        %v2533 = vld [vmem:[%s1962 + $0x28] sm:$0xf]
        %v2534 = vld [vmem:[%s1962 + $0x2c] sm:$0x1]
        %v2535 = vld [vmem:[%s1962 + $0x30] sm:$0xe]
        %v2536 = vld [vmem:[%s1962 + $0x34] sm:$0xf]
        %v2537 = vld [vmem:[%s1962 + $0x38] sm:$0x1]
        %v2538 = vld [vmem:[%s1962 + $0x3c] sm:$0xe]
        %v2539 = vld [vmem:[%s1962 + $0x40] sm:$0xf]
        %v2540 = vld [vmem:[%s1962 + $0x44] sm:$0x1]
        %v2541 = vld [vmem:[%s1962 + $0x48] sm:$0xe]
        %v2542 = vld [vmem:[%s1962 + $0x4c] sm:$0xf]
        %v2543 = vld [vmem:[%s1962 + $0x50] sm:$0x1]
        %v2544 = vld [vmem:[%s1962 + $0x54] sm:$0xe]
        %v2545 = vld [vmem:[%s1962 + $0x58] sm:$0xf]
        %v2546 = vld [vmem:[%s1962 + $0x5c] sm:$0x1]
        %v2547 = vld [vmem:[%s1962 + $0x60] sm:$0xe]
        %v2548 = vld [vmem:[%s1962 + $0x64] sm:$0xf]
        %v2549 = vld [vmem:[%s1962 + $0x68] sm:$0x1]
        %v2550 = vld [vmem:[%s1962 + $0x6c] sm:$0xe]
        %v2551 = vld [vmem:[%s1962 + $0x70] sm:$0xf]
        %v2552 = vld [vmem:[%s1962 + $0x74] sm:$0x1]
        %v2553 = vld [vmem:[%s1962 + $0x78] sm:$0xe]
        %v2554 = vld [vmem:[%s1962 + $0x7c] sm:$0xf]
        %v2555 = vld [vmem:[%s1962 + $0x80] sm:$0x1]
        %v2556 = vld [vmem:[%s1962 + $0x84] sm:$0xe]
        %v2557 = vld [vmem:[%s1962 + $0x88] sm:$0xf]
        %v2558 = vld [vmem:[%s1962 + $0x8c] sm:$0x1]
        %v2559 = vld [vmem:[%s1962 + $0x90] sm:$0xe]
        %v2560 = vld [vmem:[%s1962 + $0x94] sm:$0xf]
        %v2561 = vld [vmem:[%s1962 + $0x98] sm:$0x1]
        %v2562 = vld [vmem:[%s1962 + $0x9c] sm:$0xe]
        %v2563 = vld [vmem:[%s1962 + $0xa0] sm:$0xf]
        %v2564 = vld [vmem:[%s1962 + $0xa4] sm:$0x1]
        %v2565 = vld [vmem:[%s1962 + $0xa8] sm:$0xe]
        %v2566 = vld [vmem:[%s1962 + $0xac] sm:$0xf]
        %v2567 = vld [vmem:[%s1962 + $0xb0] sm:$0x1]
        %v2568 = vld [vmem:[%s1962 + $0xb4] sm:$0xe]
        %v2569 = vld [vmem:[%s1962 + $0xb8] sm:$0xf]
        %v2570 = vld [vmem:[%s1962 + $0xbc] sm:$0x1]
        %v2619 = vrot.slane %v2523, 5
        %v2620 = vrot.slane %v2619, 4
        %v2621 = vrot.slane %v2524, 5
        %v2622 = vsel %vm952, %v2620, %v2621
        %v2623 = vrot.slane %v2621, 4
        %v2624 = vrot.slane %v2525, 5
        %v2625 = vsel %vm952, %v2623, %v2624
        %v2626 = vrot.slane %v2526, 5
        %v2627 = vrot.slane %v2626, 4
        %v2628 = vrot.slane %v2527, 5
        %v2629 = vsel %vm952, %v2627, %v2628
        %v2630 = vrot.slane %v2628, 4
        %v2631 = vrot.slane %v2528, 5
        %v2632 = vsel %vm952, %v2630, %v2631
        %v2633 = vrot.slane %v2529, 5
        %v2634 = vrot.slane %v2633, 4
        %v2635 = vrot.slane %v2530, 5
        %v2636 = vsel %vm952, %v2634, %v2635
        %v2637 = vrot.slane %v2635, 4
        %v2638 = vrot.slane %v2531, 5
        %v2639 = vsel %vm952, %v2637, %v2638
        %v2640 = vrot.slane %v2532, 5
        %v2641 = vrot.slane %v2640, 4
        %v2642 = vrot.slane %v2533, 5
        %v2643 = vsel %vm952, %v2641, %v2642
        %v2644 = vrot.slane %v2642, 4
        %v2645 = vrot.slane %v2534, 5
        %v2646 = vsel %vm952, %v2644, %v2645
        %v2647 = vrot.slane %v2535, 5
        %v2648 = vrot.slane %v2647, 4
        %v2649 = vrot.slane %v2536, 5
        %v2650 = vsel %vm952, %v2648, %v2649
        %v2651 = vrot.slane %v2649, 4
        %v2652 = vrot.slane %v2537, 5
        %v2653 = vsel %vm952, %v2651, %v2652
        %v2654 = vrot.slane %v2538, 5
        %v2655 = vrot.slane %v2654, 4
        %v2656 = vrot.slane %v2539, 5
        %v2657 = vsel %vm952, %v2655, %v2656
        %v2658 = vrot.slane %v2656, 4
        %v2659 = vrot.slane %v2540, 5
        %v2660 = vsel %vm952, %v2658, %v2659
        %v2661 = vrot.slane %v2541, 5
        %v2662 = vrot.slane %v2661, 4
        %v2663 = vrot.slane %v2542, 5
        %v2664 = vsel %vm952, %v2662, %v2663
        %v2665 = vrot.slane %v2663, 4
        %v2666 = vrot.slane %v2543, 5
        %v2667 = vsel %vm952, %v2665, %v2666
        %v2668 = vrot.slane %v2544, 5
        %v2669 = vrot.slane %v2668, 4
        %v2670 = vrot.slane %v2545, 5
        %v2671 = vsel %vm952, %v2669, %v2670
        %v2672 = vrot.slane %v2670, 4
        %v2673 = vrot.slane %v2546, 5
        %v2674 = vsel %vm952, %v2672, %v2673
        %v2675 = vrot.slane %v2547, 5
        %v2676 = vrot.slane %v2675, 4
        %v2677 = vrot.slane %v2548, 5
        %v2678 = vsel %vm952, %v2676, %v2677
        %v2679 = vrot.slane %v2677, 4
        %v2680 = vrot.slane %v2549, 5
        %v2681 = vsel %vm952, %v2679, %v2680
        %v2682 = vrot.slane %v2550, 5
        %v2683 = vrot.slane %v2682, 4
        %v2684 = vrot.slane %v2551, 5
        %v2685 = vsel %vm952, %v2683, %v2684
        %v2686 = vrot.slane %v2684, 4
        %v2687 = vrot.slane %v2552, 5
        %v2688 = vsel %vm952, %v2686, %v2687
        %v2689 = vrot.slane %v2553, 5
        %v2690 = vrot.slane %v2689, 4
        %v2691 = vrot.slane %v2554, 5
        %v2692 = vsel %vm952, %v2690, %v2691
        %v2693 = vrot.slane %v2691, 4
        %v2694 = vrot.slane %v2555, 5
        %v2695 = vsel %vm952, %v2693, %v2694
        %v2696 = vrot.slane %v2556, 5
        %v2697 = vrot.slane %v2696, 4
        %v2698 = vrot.slane %v2557, 5
        %v2699 = vsel %vm952, %v2697, %v2698
        %v2700 = vrot.slane %v2698, 4
        %v2701 = vrot.slane %v2558, 5
        %v2702 = vsel %vm952, %v2700, %v2701
        %v2703 = vrot.slane %v2559, 5
        %v2704 = vrot.slane %v2703, 4
        %v2705 = vrot.slane %v2560, 5
        %v2706 = vsel %vm952, %v2704, %v2705
        %v2707 = vrot.slane %v2705, 4
        %v2708 = vrot.slane %v2561, 5
        %v2709 = vsel %vm952, %v2707, %v2708
        %v2710 = vrot.slane %v2562, 5
        %v2711 = vrot.slane %v2710, 4
        %v2712 = vrot.slane %v2563, 5
        %v2713 = vsel %vm952, %v2711, %v2712
        %v2714 = vrot.slane %v2712, 4
        %v2715 = vrot.slane %v2564, 5
        %v2716 = vsel %vm952, %v2714, %v2715
        %v2717 = vrot.slane %v2565, 5
        %v2718 = vrot.slane %v2717, 4
        %v2719 = vrot.slane %v2566, 5
        %v2720 = vsel %vm952, %v2718, %v2719
        %v2721 = vrot.slane %v2719, 4
        %v2722 = vrot.slane %v2567, 5
        %v2723 = vsel %vm952, %v2721, %v2722
        %v2724 = vrot.slane %v2568, 5
        %v2725 = vrot.slane %v2724, 4
        %v2726 = vrot.slane %v2569, 5
        %v2727 = vsel %vm952, %v2725, %v2726
        %v2728 = vrot.slane %v2726, 4
        %v2729 = vrot.slane %v2570, 5
        %v2730 = vsel %vm952, %v2728, %v2729
        %2763 = vst [vmem:[#allocation2 + $0x20] sm:$0xf] %v2622
        %2764 = vst [vmem:[#allocation2 + $0x44] sm:$0xf] %v2625
        %2765 = vst [vmem:[#allocation2 + $0x68] sm:$0xf] %v2629
        %2766 = vst [vmem:[#allocation2 + $0x8c] sm:$0xf] %v2632
        %2767 = vst [vmem:[#allocation2 + $0xb0] sm:$0xf] %v2636
        %2768 = vst [vmem:[#allocation2 + $0xd4] sm:$0xf] %v2639
        %2769 = vst [vmem:[#allocation2 + $0xf8] sm:$0xf] %v2643
        %2770 = vst [vmem:[#allocation2 + $0x11c] sm:$0xf] %v2646
        %2771 = vst [vmem:[#allocation2 + $0x140] sm:$0xf] %v2650
        %2772 = vst [vmem:[#allocation2 + $0x164] sm:$0xf] %v2653
        %2773 = vst [vmem:[#allocation2 + $0x188] sm:$0xf] %v2657
        %2774 = vst [vmem:[#allocation2 + $0x1ac] sm:$0xf] %v2660
        %2775 = vst [vmem:[#allocation2 + $0x1d0] sm:$0xf] %v2664
        %2776 = vst [vmem:[#allocation2 + $0x1f4] sm:$0xf] %v2667
        %2777 = vst [vmem:[#allocation2 + $0x218] sm:$0xf] %v2671
        %2778 = vst [vmem:[#allocation2 + $0x23c] sm:$0xf] %v2674
        %2779 = vst [vmem:[#allocation2 + $0x260] sm:$0xf] %v2678
        %2780 = vst [vmem:[#allocation2 + $0x284] sm:$0xf] %v2681
        %2781 = vst [vmem:[#allocation2 + $0x2a8] sm:$0xf] %v2685
        %2782 = vst [vmem:[#allocation2 + $0x2cc] sm:$0xf] %v2688
        %2783 = vst [vmem:[#allocation2 + $0x2f0] sm:$0xf] %v2692
        %2784 = vst [vmem:[#allocation2 + $0x314] sm:$0xf] %v2695
        %2785 = vst [vmem:[#allocation2 + $0x338] sm:$0xf] %v2699
        %2786 = vst [vmem:[#allocation2 + $0x35c] sm:$0xf] %v2702
        %2787 = vst [vmem:[#allocation2 + $0x380] sm:$0xf] %v2706
        %2788 = vst [vmem:[#allocation2 + $0x3a4] sm:$0xf] %v2709
        %2789 = vst [vmem:[#allocation2 + $0x3c8] sm:$0xf] %v2713
        %2790 = vst [vmem:[#allocation2 + $0x3ec] sm:$0xf] %v2716
        %2791 = vst [vmem:[#allocation2 + $0x410] sm:$0xf] %v2720
        %2792 = vst [vmem:[#allocation2 + $0x434] sm:$0xf] %v2723
        %2793 = vst [vmem:[#allocation2 + $0x458] sm:$0xf] %v2727
        %2794 = vst [vmem:[#allocation2 + $0x47c] sm:$0xf] %v2730
        %v2795 = vld [vmem:[#allocation2] sm:$0xff]
        %v2796 = vld [vmem:[#allocation2 + $0x8] sm:$0xff]
        %v2797 = vld [vmem:[#allocation2 + $0x10] sm:$0xff]
        %v2798 = vld [vmem:[#allocation2 + $0x18] sm:$0xff]
        %v2799 = vld [vmem:[#allocation2 + $0x20] sm:$0xf]
        %v2800 = vld [vmem:[#allocation2 + $0x24] sm:$0xff]
        %v2801 = vld [vmem:[#allocation2 + $0x2c] sm:$0xff]
        %v2802 = vld [vmem:[#allocation2 + $0x34] sm:$0xff]
        %v2803 = vld [vmem:[#allocation2 + $0x3c] sm:$0xff]
        %v2804 = vld [vmem:[#allocation2 + $0x44] sm:$0xf]
        %v2805 = vld [vmem:[#allocation2 + $0x48] sm:$0xff]
        %v2806 = vld [vmem:[#allocation2 + $0x50] sm:$0xff]
        %v2807 = vld [vmem:[#allocation2 + $0x58] sm:$0xff]
        %v2808 = vld [vmem:[#allocation2 + $0x60] sm:$0xff]
        %v2809 = vld [vmem:[#allocation2 + $0x68] sm:$0xf]
        %v2810 = vld [vmem:[#allocation2 + $0x6c] sm:$0xff]
        %v2811 = vld [vmem:[#allocation2 + $0x74] sm:$0xff]
        %v2812 = vld [vmem:[#allocation2 + $0x7c] sm:$0xff]
        %v2813 = vld [vmem:[#allocation2 + $0x84] sm:$0xff]
        %v2814 = vld [vmem:[#allocation2 + $0x8c] sm:$0xf]
        %v2815 = vld [vmem:[#allocation2 + $0x90] sm:$0xff]
        %v2816 = vld [vmem:[#allocation2 + $0x98] sm:$0xff]
        %v2817 = vld [vmem:[#allocation2 + $0xa0] sm:$0xff]
        %v2818 = vld [vmem:[#allocation2 + $0xa8] sm:$0xff]
        %v2819 = vld [vmem:[#allocation2 + $0xb0] sm:$0xf]
        %v2820 = vld [vmem:[#allocation2 + $0xb4] sm:$0xff]
        %v2821 = vld [vmem:[#allocation2 + $0xbc] sm:$0xff]
        %v2822 = vld [vmem:[#allocation2 + $0xc4] sm:$0xff]
        %v2823 = vld [vmem:[#allocation2 + $0xcc] sm:$0xff]
        %v2824 = vld [vmem:[#allocation2 + $0xd4] sm:$0xf]
        %v2825 = vld [vmem:[#allocation2 + $0xd8] sm:$0xff]
        %v2826 = vld [vmem:[#allocation2 + $0xe0] sm:$0xff]
        %v2827 = vld [vmem:[#allocation2 + $0xe8] sm:$0xff]
        %v2828 = vld [vmem:[#allocation2 + $0xf0] sm:$0xff]
        %v2829 = vld [vmem:[#allocation2 + $0xf8] sm:$0xf]
        %v2830 = vld [vmem:[#allocation2 + $0xfc] sm:$0xff]
        %v2831 = vld [vmem:[#allocation2 + $0x104] sm:$0xff]
        %v2832 = vld [vmem:[#allocation2 + $0x10c] sm:$0xff]
        %v2833 = vld [vmem:[#allocation2 + $0x114] sm:$0xff]
        %v2834 = vld [vmem:[#allocation2 + $0x11c] sm:$0xf]
        %v2835 = vld [vmem:[#allocation2 + $0x120] sm:$0xff]
        %v2836 = vld [vmem:[#allocation2 + $0x128] sm:$0xff]
        %v2837 = vld [vmem:[#allocation2 + $0x130] sm:$0xff]
        %v2838 = vld [vmem:[#allocation2 + $0x138] sm:$0xff]
        %v2839 = vld [vmem:[#allocation2 + $0x140] sm:$0xf]
        %v2840 = vld [vmem:[#allocation2 + $0x144] sm:$0xff]
        %v2841 = vld [vmem:[#allocation2 + $0x14c] sm:$0xff]
        %v2842 = vld [vmem:[#allocation2 + $0x154] sm:$0xff]
        %v2843 = vld [vmem:[#allocation2 + $0x15c] sm:$0xff]
        %v2844 = vld [vmem:[#allocation2 + $0x164] sm:$0xf]
        %v2845 = vld [vmem:[#allocation2 + $0x168] sm:$0xff]
        %v2846 = vld [vmem:[#allocation2 + $0x170] sm:$0xff]
        %v2847 = vld [vmem:[#allocation2 + $0x178] sm:$0xff]
        %v2848 = vld [vmem:[#allocation2 + $0x180] sm:$0xff]
        %v2849 = vld [vmem:[#allocation2 + $0x188] sm:$0xf]
        %v2850 = vld [vmem:[#allocation2 + $0x18c] sm:$0xff]
        %v2851 = vld [vmem:[#allocation2 + $0x194] sm:$0xff]
        %v2852 = vld [vmem:[#allocation2 + $0x19c] sm:$0xff]
        %v2853 = vld [vmem:[#allocation2 + $0x1a4] sm:$0xff]
        %v2854 = vld [vmem:[#allocation2 + $0x1ac] sm:$0xf]
        %v2855 = vld [vmem:[#allocation2 + $0x1b0] sm:$0xff]
        %v2856 = vld [vmem:[#allocation2 + $0x1b8] sm:$0xff]
        %v2857 = vld [vmem:[#allocation2 + $0x1c0] sm:$0xff]
        %v2858 = vld [vmem:[#allocation2 + $0x1c8] sm:$0xff]
        %v2859 = vld [vmem:[#allocation2 + $0x1d0] sm:$0xf]
        %v2860 = vld [vmem:[#allocation2 + $0x1d4] sm:$0xff]
        %v2861 = vld [vmem:[#allocation2 + $0x1dc] sm:$0xff]
        %v2862 = vld [vmem:[#allocation2 + $0x1e4] sm:$0xff]
        %v2863 = vld [vmem:[#allocation2 + $0x1ec] sm:$0xff]
        %v2864 = vld [vmem:[#allocation2 + $0x1f4] sm:$0xf]
        %v2865 = vld [vmem:[#allocation2 + $0x1f8] sm:$0xff]
        %v2866 = vld [vmem:[#allocation2 + $0x200] sm:$0xff]
        %v2867 = vld [vmem:[#allocation2 + $0x208] sm:$0xff]
        %v2868 = vld [vmem:[#allocation2 + $0x210] sm:$0xff]
        %v2869 = vld [vmem:[#allocation2 + $0x218] sm:$0xf]
        %v2870 = vld [vmem:[#allocation2 + $0x21c] sm:$0xff]
        %v2871 = vld [vmem:[#allocation2 + $0x224] sm:$0xff]
        %v2872 = vld [vmem:[#allocation2 + $0x22c] sm:$0xff]
        %v2873 = vld [vmem:[#allocation2 + $0x234] sm:$0xff]
        %v2874 = vld [vmem:[#allocation2 + $0x23c] sm:$0xf]
        %v2875 = vld [vmem:[#allocation2 + $0x240] sm:$0xff]
        %v2876 = vld [vmem:[#allocation2 + $0x248] sm:$0xff]
        %v2877 = vld [vmem:[#allocation2 + $0x250] sm:$0xff]
        %v2878 = vld [vmem:[#allocation2 + $0x258] sm:$0xff]
        %v2879 = vld [vmem:[#allocation2 + $0x260] sm:$0xf]
        %v2880 = vld [vmem:[#allocation2 + $0x264] sm:$0xff]
        %v2881 = vld [vmem:[#allocation2 + $0x26c] sm:$0xff]
        %v2882 = vld [vmem:[#allocation2 + $0x274] sm:$0xff]
        %v2883 = vld [vmem:[#allocation2 + $0x27c] sm:$0xff]
        %v2884 = vld [vmem:[#allocation2 + $0x284] sm:$0xf]
        %v2885 = vld [vmem:[#allocation2 + $0x288] sm:$0xff]
        %v2886 = vld [vmem:[#allocation2 + $0x290] sm:$0xff]
        %v2887 = vld [vmem:[#allocation2 + $0x298] sm:$0xff]
        %v2888 = vld [vmem:[#allocation2 + $0x2a0] sm:$0xff]
        %v2889 = vld [vmem:[#allocation2 + $0x2a8] sm:$0xf]
        %v2890 = vld [vmem:[#allocation2 + $0x2ac] sm:$0xff]
        %v2891 = vld [vmem:[#allocation2 + $0x2b4] sm:$0xff]
        %v2892 = vld [vmem:[#allocation2 + $0x2bc] sm:$0xff]
        %v2893 = vld [vmem:[#allocation2 + $0x2c4] sm:$0xff]
        %v2894 = vld [vmem:[#allocation2 + $0x2cc] sm:$0xf]
        %v2895 = vld [vmem:[#allocation2 + $0x2d0] sm:$0xff]
        %v2896 = vld [vmem:[#allocation2 + $0x2d8] sm:$0xff]
        %v2897 = vld [vmem:[#allocation2 + $0x2e0] sm:$0xff]
        %v2898 = vld [vmem:[#allocation2 + $0x2e8] sm:$0xff]
        %v2899 = vld [vmem:[#allocation2 + $0x2f0] sm:$0xf]
        %v2900 = vld [vmem:[#allocation2 + $0x2f4] sm:$0xff]
        %v2901 = vld [vmem:[#allocation2 + $0x2fc] sm:$0xff]
        %v2902 = vld [vmem:[#allocation2 + $0x304] sm:$0xff]
        %v2903 = vld [vmem:[#allocation2 + $0x30c] sm:$0xff]
        %v2904 = vld [vmem:[#allocation2 + $0x314] sm:$0xf]
        %v2905 = vld [vmem:[#allocation2 + $0x318] sm:$0xff]
        %v2906 = vld [vmem:[#allocation2 + $0x320] sm:$0xff]
        %v2907 = vld [vmem:[#allocation2 + $0x328] sm:$0xff]
        %v2908 = vld [vmem:[#allocation2 + $0x330] sm:$0xff]
        %v2909 = vld [vmem:[#allocation2 + $0x338] sm:$0xf]
        %v2910 = vld [vmem:[#allocation2 + $0x33c] sm:$0xff]
        %v2911 = vld [vmem:[#allocation2 + $0x344] sm:$0xff]
        %v2912 = vld [vmem:[#allocation2 + $0x34c] sm:$0xff]
        %v2913 = vld [vmem:[#allocation2 + $0x354] sm:$0xff]
        %v2914 = vld [vmem:[#allocation2 + $0x35c] sm:$0xf]
        %v2915 = vld [vmem:[#allocation2 + $0x360] sm:$0xff]
        %v2916 = vld [vmem:[#allocation2 + $0x368] sm:$0xff]
        %v2917 = vld [vmem:[#allocation2 + $0x370] sm:$0xff]
        %v2918 = vld [vmem:[#allocation2 + $0x378] sm:$0xff]
        %v2919 = vld [vmem:[#allocation2 + $0x380] sm:$0xf]
        %v2920 = vld [vmem:[#allocation2 + $0x384] sm:$0xff]
        %v2921 = vld [vmem:[#allocation2 + $0x38c] sm:$0xff]
        %v2922 = vld [vmem:[#allocation2 + $0x394] sm:$0xff]
        %v2923 = vld [vmem:[#allocation2 + $0x39c] sm:$0xff]
        %v2924 = vld [vmem:[#allocation2 + $0x3a4] sm:$0xf]
        %v2925 = vld [vmem:[#allocation2 + $0x3a8] sm:$0xff]
        %v2926 = vld [vmem:[#allocation2 + $0x3b0] sm:$0xff]
        %v2927 = vld [vmem:[#allocation2 + $0x3b8] sm:$0xff]
        %v2928 = vld [vmem:[#allocation2 + $0x3c0] sm:$0xff]
        %v2929 = vld [vmem:[#allocation2 + $0x3c8] sm:$0xf]
        %v2930 = vld [vmem:[#allocation2 + $0x3cc] sm:$0xff]
        %v2931 = vld [vmem:[#allocation2 + $0x3d4] sm:$0xff]
        %v2932 = vld [vmem:[#allocation2 + $0x3dc] sm:$0xff]
        %v2933 = vld [vmem:[#allocation2 + $0x3e4] sm:$0xff]
        %v2934 = vld [vmem:[#allocation2 + $0x3ec] sm:$0xf]
        %v2935 = vld [vmem:[#allocation2 + $0x3f0] sm:$0xff]
        %v2936 = vld [vmem:[#allocation2 + $0x3f8] sm:$0xff]
        %v2937 = vld [vmem:[#allocation2 + $0x400] sm:$0xff]
        %v2938 = vld [vmem:[#allocation2 + $0x408] sm:$0xff]
        %v2939 = vld [vmem:[#allocation2 + $0x410] sm:$0xf]
        %v2940 = vld [vmem:[#allocation2 + $0x414] sm:$0xff]
        %v2941 = vld [vmem:[#allocation2 + $0x41c] sm:$0xff]
        %v2942 = vld [vmem:[#allocation2 + $0x424] sm:$0xff]
        %v2943 = vld [vmem:[#allocation2 + $0x42c] sm:$0xff]
        %v2944 = vld [vmem:[#allocation2 + $0x434] sm:$0xf]
        %v2945 = vld [vmem:[#allocation2 + $0x438] sm:$0xff]
        %v2946 = vld [vmem:[#allocation2 + $0x440] sm:$0xff]
        %v2947 = vld [vmem:[#allocation2 + $0x448] sm:$0xff]
        %v2948 = vld [vmem:[#allocation2 + $0x450] sm:$0xff]
        %v2949 = vld [vmem:[#allocation2 + $0x458] sm:$0xf]
        %v2950 = vld [vmem:[#allocation2 + $0x45c] sm:$0xff]
        %v2951 = vld [vmem:[#allocation2 + $0x464] sm:$0xff]
        %v2952 = vld [vmem:[#allocation2 + $0x46c] sm:$0xff]
        %v2953 = vld [vmem:[#allocation2 + $0x474] sm:$0xff]
        %v2954 = vld [vmem:[#allocation2 + $0x47c] sm:$0xf]
        %v2955 = vld [vmem:[%s2] sm:$0xf]
        %v2956 = vld [vmem:[%s2 + $0x4] sm:$0xf]
        %v2957 = vld [vmem:[%s2 + $0x8] sm:$0xf]
        %v2958 = vld [vmem:[%s2 + $0xc] sm:$0xf]
        %v2959 = vld [vmem:[%s2 + $0x10] sm:$0xf]
        %v2960 = vld [vmem:[%s2 + $0x14] sm:$0xf]
        %v2961 = vld [vmem:[%s2 + $0x18] sm:$0xf]
        %v2962 = vld [vmem:[%s2 + $0x1c] sm:$0xf]
        %v2963 = vld [vmem:[%s2 + $0x20] sm:$0xf]
        %v2964 = vld [vmem:[%s2 + $0x24] sm:$0xf]
        %v2965 = vld [vmem:[%s2 + $0x28] sm:$0xf]
        %v2966 = vld [vmem:[%s2 + $0x2c] sm:$0xf]
        %v2967 = vld [vmem:[%s2 + $0x30] sm:$0xf]
        %v2968 = vld [vmem:[%s2 + $0x34] sm:$0xf]
        %v2969 = vld [vmem:[%s2 + $0x38] sm:$0xf]
        %v2970 = vld [vmem:[%s2 + $0x3c] sm:$0xf]
        %v2971 = vld [vmem:[%s2 + $0x40] sm:$0xf]
        %v2972 = vld [vmem:[%s2 + $0x44] sm:$0xf]
        %v2973 = vld [vmem:[%s2 + $0x48] sm:$0xf]
        %v2974 = vld [vmem:[%s2 + $0x4c] sm:$0xf]
        %v2975 = vld [vmem:[%s2 + $0x50] sm:$0xf]
        %v2976 = vld [vmem:[%s2 + $0x54] sm:$0xf]
        %v2977 = vld [vmem:[%s2 + $0x58] sm:$0xf]
        %v2978 = vld [vmem:[%s2 + $0x5c] sm:$0xf]
        %v2979 = vld [vmem:[%s2 + $0x60] sm:$0xf]
        %v2980 = vld [vmem:[%s2 + $0x64] sm:$0xf]
        %v2981 = vld [vmem:[%s2 + $0x68] sm:$0xf]
        %v2982 = vld [vmem:[%s2 + $0x6c] sm:$0xf]
        %v2983 = vld [vmem:[%s2 + $0x70] sm:$0xf]
        %v2984 = vld [vmem:[%s2 + $0x74] sm:$0xf]
        %v2985 = vld [vmem:[%s2 + $0x78] sm:$0xf]
        %v2986 = vld [vmem:[%s2 + $0x7c] sm:$0xf]
        %v2987 = vld [vmem:[%s2 + $0x80] sm:$0xf]
        %v2988 = vld [vmem:[%s2 + $0x84] sm:$0xf]
        %v2989 = vld [vmem:[%s2 + $0x88] sm:$0xf]
        %v2990 = vld [vmem:[%s2 + $0x8c] sm:$0xf]
        %v2991 = vld [vmem:[%s2 + $0x90] sm:$0xf]
        %v2992 = vld [vmem:[%s2 + $0x94] sm:$0xf]
        %v2993 = vld [vmem:[%s2 + $0x98] sm:$0xf]
        %v2994 = vld [vmem:[%s2 + $0x9c] sm:$0xf]
        %v2995 = vld [vmem:[%s2 + $0xa0] sm:$0xf]
        %v2996 = vld [vmem:[%s2 + $0xa4] sm:$0xf]
        %v2997 = vld [vmem:[%s2 + $0xa8] sm:$0xf]
        %v2998 = vld [vmem:[%s2 + $0xac] sm:$0xf]
        %v2999 = vld [vmem:[%s2 + $0xb0] sm:$0xf]
        %v3000 = vld [vmem:[%s2 + $0xb4] sm:$0xf]
        %v3001 = vld [vmem:[%s2 + $0xb8] sm:$0xf]
        %v3002 = vld [vmem:[%s2 + $0xbc] sm:$0xf]
        %v3003 = vld [vmem:[%s2 + $0xc0] sm:$0xf]
        %v3004 = vld [vmem:[%s2 + $0xc4] sm:$0xf]
        %v3005 = vld [vmem:[%s2 + $0xc8] sm:$0xf]
        %v3006 = vld [vmem:[%s2 + $0xcc] sm:$0xf]
        %v3007 = vld [vmem:[%s2 + $0xd0] sm:$0xf]
        %v3008 = vld [vmem:[%s2 + $0xd4] sm:$0xf]
        %v3009 = vld [vmem:[%s2 + $0xd8] sm:$0xf]
        %v3010 = vld [vmem:[%s2 + $0xdc] sm:$0xf]
        %v3011 = vld [vmem:[%s2 + $0xe0] sm:$0xf]
        %v3012 = vld [vmem:[%s2 + $0xe4] sm:$0xf]
        %v3013 = vld [vmem:[%s2 + $0xe8] sm:$0xf]
        %v3014 = vld [vmem:[%s2 + $0xec] sm:$0xf]
        %v3015 = vld [vmem:[%s2 + $0xf0] sm:$0xf]
        %v3016 = vld [vmem:[%s2 + $0xf4] sm:$0xf]
        %v3017 = vld [vmem:[%s2 + $0xf8] sm:$0xf]
        %v3018 = vld [vmem:[%s2 + $0xfc] sm:$0xf]
        %v3019 = vld [vmem:[%s2 + $0x100] sm:$0xf]
        %v3020 = vld [vmem:[%s2 + $0x104] sm:$0xf]
        %v3021 = vld [vmem:[%s2 + $0x108] sm:$0xf]
        %v3022 = vld [vmem:[%s2 + $0x10c] sm:$0xf]
        %v3023 = vld [vmem:[%s2 + $0x110] sm:$0xf]
        %v3024 = vld [vmem:[%s2 + $0x114] sm:$0xf]
        %v3025 = vld [vmem:[%s2 + $0x118] sm:$0xf]
        %v3026 = vld [vmem:[%s2 + $0x11c] sm:$0xf]
        %v3027 = vld [vmem:[%s2 + $0x120] sm:$0xf]
        %v3028 = vld [vmem:[%s2 + $0x124] sm:$0xf]
        %v3029 = vld [vmem:[%s2 + $0x128] sm:$0xf]
        %v3030 = vld [vmem:[%s2 + $0x12c] sm:$0xf]
        %v3031 = vld [vmem:[%s2 + $0x130] sm:$0xf]
        %v3032 = vld [vmem:[%s2 + $0x134] sm:$0xf]
        %v3033 = vld [vmem:[%s2 + $0x138] sm:$0xf]
        %v3034 = vld [vmem:[%s2 + $0x13c] sm:$0xf]
        %v3035 = vld [vmem:[%s2 + $0x140] sm:$0xf]
        %v3036 = vld [vmem:[%s2 + $0x144] sm:$0xf]
        %v3037 = vld [vmem:[%s2 + $0x148] sm:$0xf]
        %v3038 = vld [vmem:[%s2 + $0x14c] sm:$0xf]
        %v3039 = vld [vmem:[%s2 + $0x150] sm:$0xf]
        %v3040 = vld [vmem:[%s2 + $0x154] sm:$0xf]
        %v3041 = vld [vmem:[%s2 + $0x158] sm:$0xf]
        %v3042 = vld [vmem:[%s2 + $0x15c] sm:$0xf]
        %v3043 = vld [vmem:[%s2 + $0x160] sm:$0xf]
        %v3044 = vld [vmem:[%s2 + $0x164] sm:$0xf]
        %v3045 = vld [vmem:[%s2 + $0x168] sm:$0xf]
        %v3046 = vld [vmem:[%s2 + $0x16c] sm:$0xf]
        %v3047 = vld [vmem:[%s2 + $0x170] sm:$0xf]
        %v3048 = vld [vmem:[%s2 + $0x174] sm:$0xf]
        %v3049 = vld [vmem:[%s2 + $0x178] sm:$0xf]
        %v3050 = vld [vmem:[%s2 + $0x17c] sm:$0xf]
        %v3051 = vld [vmem:[%s2 + $0x180] sm:$0xf]
        %v3052 = vld [vmem:[%s2 + $0x184] sm:$0xf]
        %v3053 = vld [vmem:[%s2 + $0x188] sm:$0xf]
        %v3054 = vld [vmem:[%s2 + $0x18c] sm:$0xf]
        %v3055 = vld [vmem:[%s2 + $0x190] sm:$0xf]
        %v3056 = vld [vmem:[%s2 + $0x194] sm:$0xf]
        %v3057 = vld [vmem:[%s2 + $0x198] sm:$0xf]
        %v3058 = vld [vmem:[%s2 + $0x19c] sm:$0xf]
        %v3059 = vld [vmem:[%s2 + $0x1a0] sm:$0xf]
        %v3060 = vld [vmem:[%s2 + $0x1a4] sm:$0xf]
        %v3061 = vld [vmem:[%s2 + $0x1a8] sm:$0xf]
        %v3062 = vld [vmem:[%s2 + $0x1ac] sm:$0xf]
        %v3063 = vld [vmem:[%s2 + $0x1b0] sm:$0xf]
        %v3064 = vld [vmem:[%s2 + $0x1b4] sm:$0xf]
        %v3065 = vld [vmem:[%s2 + $0x1b8] sm:$0xf]
        %v3066 = vld [vmem:[%s2 + $0x1bc] sm:$0xf]
        %v3067 = vld [vmem:[%s2 + $0x1c0] sm:$0xf]
        %v3068 = vld [vmem:[%s2 + $0x1c4] sm:$0xf]
        %v3069 = vld [vmem:[%s2 + $0x1c8] sm:$0xf]
        %v3070 = vld [vmem:[%s2 + $0x1cc] sm:$0xf]
        %v3071 = vld [vmem:[%s2 + $0x1d0] sm:$0xf]
        %v3072 = vld [vmem:[%s2 + $0x1d4] sm:$0xf]
        %v3073 = vld [vmem:[%s2 + $0x1d8] sm:$0xf]
        %v3074 = vld [vmem:[%s2 + $0x1dc] sm:$0xf]
        %v3075 = vld [vmem:[%s2 + $0x1e0] sm:$0xf]
        %v3076 = vld [vmem:[%s2 + $0x1e4] sm:$0xf]
        %v3077 = vld [vmem:[%s2 + $0x1e8] sm:$0xf]
        %v3078 = vld [vmem:[%s2 + $0x1ec] sm:$0xf]
        %v3079 = vld [vmem:[%s2 + $0x1f0] sm:$0xf]
        %v3080 = vld [vmem:[%s2 + $0x1f4] sm:$0xf]
        %v3081 = vld [vmem:[%s2 + $0x1f8] sm:$0xf]
        %v3082 = vld [vmem:[%s2 + $0x1fc] sm:$0xf]
        %v3083 = vld [vmem:[%s2 + $0x200] sm:$0xf]
        %v3084 = vld [vmem:[%s2 + $0x204] sm:$0xf]
        %v3085 = vld [vmem:[%s2 + $0x208] sm:$0xf]
        %v3086 = vld [vmem:[%s2 + $0x20c] sm:$0xf]
        %v3087 = vld [vmem:[%s2 + $0x210] sm:$0xf]
        %v3088 = vld [vmem:[%s2 + $0x214] sm:$0xf]
        %v3089 = vld [vmem:[%s2 + $0x218] sm:$0xf]
        %v3090 = vld [vmem:[%s2 + $0x21c] sm:$0xf]
        %v3091 = vld [vmem:[%s2 + $0x220] sm:$0xf]
        %v3092 = vld [vmem:[%s2 + $0x224] sm:$0xf]
        %v3093 = vld [vmem:[%s2 + $0x228] sm:$0xf]
        %v3094 = vld [vmem:[%s2 + $0x22c] sm:$0xf]
        %v3095 = vld [vmem:[%s2 + $0x230] sm:$0xf]
        %v3096 = vld [vmem:[%s2 + $0x234] sm:$0xf]
        %v3097 = vld [vmem:[%s2 + $0x238] sm:$0xf]
        %v3098 = vld [vmem:[%s2 + $0x23c] sm:$0xf]
        %v3099 = vld [vmem:[%s3] sm:$0x1]
        %v3101 = vlaneseq
        %v3102 = vshrl.u32 %v3101, 7
        %v3103 = vsub.s32 0, %v3102
        %v3104 = vrot.slane %v3099, %v3103
        %v3266 = vunpack.c.l.b16 %v2795
        %v3267 = vunpack.c.h.b16 %v2795
        %v3268 = vunpack.c.l.b16 %v2796
        %v3269 = vunpack.c.h.b16 %v2796
        %v3270 = vunpack.c.l.b16 %v2797
        %v3271 = vunpack.c.h.b16 %v2797
        %v3272 = vunpack.c.l.b16 %v2798
        %v3273 = vunpack.c.h.b16 %v2798
        %v3274 = vunpack.c.l.b16 %v2799
        %v3275 = vunpack.c.l.b16 %v2800
        %v3276 = vunpack.c.h.b16 %v2800
        %v3277 = vunpack.c.l.b16 %v2801
        %v3278 = vunpack.c.h.b16 %v2801
        %v3279 = vunpack.c.l.b16 %v2802
        %v3280 = vunpack.c.h.b16 %v2802
        %v3281 = vunpack.c.l.b16 %v2803
        %v3282 = vunpack.c.h.b16 %v2803
        %v3283 = vunpack.c.l.b16 %v2804
        %v3284 = vunpack.c.l.b16 %v2805
        %v3285 = vunpack.c.h.b16 %v2805
        %v3286 = vunpack.c.l.b16 %v2806
        %v3287 = vunpack.c.h.b16 %v2806
        %v3288 = vunpack.c.l.b16 %v2807
        %v3289 = vunpack.c.h.b16 %v2807
        %v3290 = vunpack.c.l.b16 %v2808
        %v3291 = vunpack.c.h.b16 %v2808
        %v3292 = vunpack.c.l.b16 %v2809
        %v3293 = vunpack.c.l.b16 %v2810
        %v3294 = vunpack.c.h.b16 %v2810
        %v3295 = vunpack.c.l.b16 %v2811
        %v3296 = vunpack.c.h.b16 %v2811
        %v3297 = vunpack.c.l.b16 %v2812
        %v3298 = vunpack.c.h.b16 %v2812
        %v3299 = vunpack.c.l.b16 %v2813
        %v3300 = vunpack.c.h.b16 %v2813
        %v3301 = vunpack.c.l.b16 %v2814
        %v3302 = vunpack.c.l.b16 %v2815
        %v3303 = vunpack.c.h.b16 %v2815
        %v3304 = vunpack.c.l.b16 %v2816
        %v3305 = vunpack.c.h.b16 %v2816
        %v3306 = vunpack.c.l.b16 %v2817
        %v3307 = vunpack.c.h.b16 %v2817
        %v3308 = vunpack.c.l.b16 %v2818
        %v3309 = vunpack.c.h.b16 %v2818
        %v3310 = vunpack.c.l.b16 %v2819
        %v3311 = vunpack.c.l.b16 %v2820
        %v3312 = vunpack.c.h.b16 %v2820
        %v3313 = vunpack.c.l.b16 %v2821
        %v3314 = vunpack.c.h.b16 %v2821
        %v3315 = vunpack.c.l.b16 %v2822
        %v3316 = vunpack.c.h.b16 %v2822
        %v3317 = vunpack.c.l.b16 %v2823
        %v3318 = vunpack.c.h.b16 %v2823
        %v3319 = vunpack.c.l.b16 %v2824
        %v3320 = vunpack.c.l.b16 %v2825
        %v3321 = vunpack.c.h.b16 %v2825
        %v3322 = vunpack.c.l.b16 %v2826
        %v3323 = vunpack.c.h.b16 %v2826
        %v3324 = vunpack.c.l.b16 %v2827
        %v3325 = vunpack.c.h.b16 %v2827
        %v3326 = vunpack.c.l.b16 %v2828
        %v3327 = vunpack.c.h.b16 %v2828
        %v3328 = vunpack.c.l.b16 %v2829
        %v3329 = vunpack.c.l.b16 %v2830
        %v3330 = vunpack.c.h.b16 %v2830
        %v3331 = vunpack.c.l.b16 %v2831
        %v3332 = vunpack.c.h.b16 %v2831
        %v3333 = vunpack.c.l.b16 %v2832
        %v3334 = vunpack.c.h.b16 %v2832
        %v3335 = vunpack.c.l.b16 %v2833
        %v3336 = vunpack.c.h.b16 %v2833
        %v3337 = vunpack.c.l.b16 %v2834
        %v3338 = vunpack.c.l.b16 %v2835
        %v3339 = vunpack.c.h.b16 %v2835
        %v3340 = vunpack.c.l.b16 %v2836
        %v3341 = vunpack.c.h.b16 %v2836
        %v3342 = vunpack.c.l.b16 %v2837
        %v3343 = vunpack.c.h.b16 %v2837
        %v3344 = vunpack.c.l.b16 %v2838
        %v3345 = vunpack.c.h.b16 %v2838
        %v3346 = vunpack.c.l.b16 %v2839
        %v3347 = vunpack.c.l.b16 %v2840
        %v3348 = vunpack.c.h.b16 %v2840
        %v3349 = vunpack.c.l.b16 %v2841
        %v3350 = vunpack.c.h.b16 %v2841
        %v3351 = vunpack.c.l.b16 %v2842
        %v3352 = vunpack.c.h.b16 %v2842
        %v3353 = vunpack.c.l.b16 %v2843
        %v3354 = vunpack.c.h.b16 %v2843
        %v3355 = vunpack.c.l.b16 %v2844
        %v3356 = vunpack.c.l.b16 %v2845
        %v3357 = vunpack.c.h.b16 %v2845
        %v3358 = vunpack.c.l.b16 %v2846
        %v3359 = vunpack.c.h.b16 %v2846
        %v3360 = vunpack.c.l.b16 %v2847
        %v3361 = vunpack.c.h.b16 %v2847
        %v3362 = vunpack.c.l.b16 %v2848
        %v3363 = vunpack.c.h.b16 %v2848
        %v3364 = vunpack.c.l.b16 %v2849
        %v3365 = vunpack.c.l.b16 %v2850
        %v3366 = vunpack.c.h.b16 %v2850
        %v3367 = vunpack.c.l.b16 %v2851
        %v3368 = vunpack.c.h.b16 %v2851
        %v3369 = vunpack.c.l.b16 %v2852
        %v3370 = vunpack.c.h.b16 %v2852
        %v3371 = vunpack.c.l.b16 %v2853
        %v3372 = vunpack.c.h.b16 %v2853
        %v3373 = vunpack.c.l.b16 %v2854
        %v3374 = vunpack.c.l.b16 %v2855
        %v3375 = vunpack.c.h.b16 %v2855
        %v3376 = vunpack.c.l.b16 %v2856
        %v3377 = vunpack.c.h.b16 %v2856
        %v3378 = vunpack.c.l.b16 %v2857
        %v3379 = vunpack.c.h.b16 %v2857
        %v3380 = vunpack.c.l.b16 %v2858
        %v3381 = vunpack.c.h.b16 %v2858
        %v3382 = vunpack.c.l.b16 %v2859
        %v3383 = vunpack.c.l.b16 %v2860
        %v3384 = vunpack.c.h.b16 %v2860
        %v3385 = vunpack.c.l.b16 %v2861
        %v3386 = vunpack.c.h.b16 %v2861
        %v3387 = vunpack.c.l.b16 %v2862
        %v3388 = vunpack.c.h.b16 %v2862
        %v3389 = vunpack.c.l.b16 %v2863
        %v3390 = vunpack.c.h.b16 %v2863
        %v3391 = vunpack.c.l.b16 %v2864
        %v3392 = vunpack.c.l.b16 %v2865
        %v3393 = vunpack.c.h.b16 %v2865
        %v3394 = vunpack.c.l.b16 %v2866
        %v3395 = vunpack.c.h.b16 %v2866
        %v3396 = vunpack.c.l.b16 %v2867
        %v3397 = vunpack.c.h.b16 %v2867
        %v3398 = vunpack.c.l.b16 %v2868
        %v3399 = vunpack.c.h.b16 %v2868
        %v3400 = vunpack.c.l.b16 %v2869
        %v3401 = vunpack.c.l.b16 %v2870
        %v3402 = vunpack.c.h.b16 %v2870
        %v3403 = vunpack.c.l.b16 %v2871
        %v3404 = vunpack.c.h.b16 %v2871
        %v3405 = vunpack.c.l.b16 %v2872
        %v3406 = vunpack.c.h.b16 %v2872
        %v3407 = vunpack.c.l.b16 %v2873
        %v3408 = vunpack.c.h.b16 %v2873
        %v3409 = vunpack.c.l.b16 %v2874
        %v3410 = vunpack.c.l.b16 %v2875
        %v3411 = vunpack.c.h.b16 %v2875
        %v3412 = vunpack.c.l.b16 %v2876
        %v3413 = vunpack.c.h.b16 %v2876
        %v3414 = vunpack.c.l.b16 %v2877
        %v3415 = vunpack.c.h.b16 %v2877
        %v3416 = vunpack.c.l.b16 %v2878
        %v3417 = vunpack.c.h.b16 %v2878
        %v3418 = vunpack.c.l.b16 %v2879
        %v3419 = vunpack.c.l.b16 %v2880
        %v3420 = vunpack.c.h.b16 %v2880
        %v3421 = vunpack.c.l.b16 %v2881
        %v3422 = vunpack.c.h.b16 %v2881
        %v3423 = vunpack.c.l.b16 %v2882
        %v3424 = vunpack.c.h.b16 %v2882
        %v3425 = vunpack.c.l.b16 %v2883
        %v3426 = vunpack.c.h.b16 %v2883
        %v3427 = vunpack.c.l.b16 %v2884
        %v3428 = vunpack.c.l.b16 %v2885
        %v3429 = vunpack.c.h.b16 %v2885
        %v3430 = vunpack.c.l.b16 %v2886
        %v3431 = vunpack.c.h.b16 %v2886
        %v3432 = vunpack.c.l.b16 %v2887
        %v3433 = vunpack.c.h.b16 %v2887
        %v3434 = vunpack.c.l.b16 %v2888
        %v3435 = vunpack.c.h.b16 %v2888
        %v3436 = vunpack.c.l.b16 %v2889
        %v3437 = vunpack.c.l.b16 %v2890
        %v3438 = vunpack.c.h.b16 %v2890
        %v3439 = vunpack.c.l.b16 %v2891
        %v3440 = vunpack.c.h.b16 %v2891
        %v3441 = vunpack.c.l.b16 %v2892
        %v3442 = vunpack.c.h.b16 %v2892
        %v3443 = vunpack.c.l.b16 %v2893
        %v3444 = vunpack.c.h.b16 %v2893
        %v3445 = vunpack.c.l.b16 %v2894
        %v3446 = vunpack.c.l.b16 %v2895
        %v3447 = vunpack.c.h.b16 %v2895
        %v3448 = vunpack.c.l.b16 %v2896
        %v3449 = vunpack.c.h.b16 %v2896
        %v3450 = vunpack.c.l.b16 %v2897
        %v3451 = vunpack.c.h.b16 %v2897
        %v3452 = vunpack.c.l.b16 %v2898
        %v3453 = vunpack.c.h.b16 %v2898
        %v3454 = vunpack.c.l.b16 %v2899
        %v3455 = vunpack.c.l.b16 %v2900
        %v3456 = vunpack.c.h.b16 %v2900
        %v3457 = vunpack.c.l.b16 %v2901
        %v3458 = vunpack.c.h.b16 %v2901
        %v3459 = vunpack.c.l.b16 %v2902
        %v3460 = vunpack.c.h.b16 %v2902
        %v3461 = vunpack.c.l.b16 %v2903
        %v3462 = vunpack.c.h.b16 %v2903
        %v3463 = vunpack.c.l.b16 %v2904
        %v3464 = vunpack.c.l.b16 %v2905
        %v3465 = vunpack.c.h.b16 %v2905
        %v3466 = vunpack.c.l.b16 %v2906
        %v3467 = vunpack.c.h.b16 %v2906
        %v3468 = vunpack.c.l.b16 %v2907
        %v3469 = vunpack.c.h.b16 %v2907
        %v3470 = vunpack.c.l.b16 %v2908
        %v3471 = vunpack.c.h.b16 %v2908
        %v3472 = vunpack.c.l.b16 %v2909
        %v3473 = vunpack.c.l.b16 %v2910
        %v3474 = vunpack.c.h.b16 %v2910
        %v3475 = vunpack.c.l.b16 %v2911
        %v3476 = vunpack.c.h.b16 %v2911
        %v3477 = vunpack.c.l.b16 %v2912
        %v3478 = vunpack.c.h.b16 %v2912
        %v3479 = vunpack.c.l.b16 %v2913
        %v3480 = vunpack.c.h.b16 %v2913
        %v3481 = vunpack.c.l.b16 %v2914
        %v3482 = vunpack.c.l.b16 %v2915
        %v3483 = vunpack.c.h.b16 %v2915
        %v3484 = vunpack.c.l.b16 %v2916
        %v3485 = vunpack.c.h.b16 %v2916
        %v3486 = vunpack.c.l.b16 %v2917
        %v3487 = vunpack.c.h.b16 %v2917
        %v3488 = vunpack.c.l.b16 %v2918
        %v3489 = vunpack.c.h.b16 %v2918
        %v3490 = vunpack.c.l.b16 %v2919
        %v3491 = vunpack.c.l.b16 %v2920
        %v3492 = vunpack.c.h.b16 %v2920
        %v3493 = vunpack.c.l.b16 %v2921
        %v3494 = vunpack.c.h.b16 %v2921
        %v3495 = vunpack.c.l.b16 %v2922
        %v3496 = vunpack.c.h.b16 %v2922
        %v3497 = vunpack.c.l.b16 %v2923
        %v3498 = vunpack.c.h.b16 %v2923
        %v3499 = vunpack.c.l.b16 %v2924
        %v3500 = vunpack.c.l.b16 %v2925
        %v3501 = vunpack.c.h.b16 %v2925
        %v3502 = vunpack.c.l.b16 %v2926
        %v3503 = vunpack.c.h.b16 %v2926
        %v3504 = vunpack.c.l.b16 %v2927
        %v3505 = vunpack.c.h.b16 %v2927
        %v3506 = vunpack.c.l.b16 %v2928
        %v3507 = vunpack.c.h.b16 %v2928
        %v3508 = vunpack.c.l.b16 %v2929
        %v3509 = vunpack.c.l.b16 %v2930
        %v3510 = vunpack.c.h.b16 %v2930
        %v3511 = vunpack.c.l.b16 %v2931
        %v3512 = vunpack.c.h.b16 %v2931
        %v3513 = vunpack.c.l.b16 %v2932
        %v3514 = vunpack.c.h.b16 %v2932
        %v3515 = vunpack.c.l.b16 %v2933
        %v3516 = vunpack.c.h.b16 %v2933
        %v3517 = vunpack.c.l.b16 %v2934
        %v3518 = vunpack.c.l.b16 %v2935
        %v3519 = vunpack.c.h.b16 %v2935
        %v3520 = vunpack.c.l.b16 %v2936
        %v3521 = vunpack.c.h.b16 %v2936
        %v3522 = vunpack.c.l.b16 %v2937
        %v3523 = vunpack.c.h.b16 %v2937
        %v3524 = vunpack.c.l.b16 %v2938
        %v3525 = vunpack.c.h.b16 %v2938
        %v3526 = vunpack.c.l.b16 %v2939
        %v3527 = vunpack.c.l.b16 %v2940
        %v3528 = vunpack.c.h.b16 %v2940
        %v3529 = vunpack.c.l.b16 %v2941
        %v3530 = vunpack.c.h.b16 %v2941
        %v3531 = vunpack.c.l.b16 %v2942
        %v3532 = vunpack.c.h.b16 %v2942
        %v3533 = vunpack.c.l.b16 %v2943
        %v3534 = vunpack.c.h.b16 %v2943
        %v3535 = vunpack.c.l.b16 %v2944
        %v3536 = vunpack.c.l.b16 %v2945
        %v3537 = vunpack.c.h.b16 %v2945
        %v3538 = vunpack.c.l.b16 %v2946
        %v3539 = vunpack.c.h.b16 %v2946
        %v3540 = vunpack.c.l.b16 %v2947
        %v3541 = vunpack.c.h.b16 %v2947
        %v3542 = vunpack.c.l.b16 %v2948
        %v3543 = vunpack.c.h.b16 %v2948
        %v3544 = vunpack.c.l.b16 %v2949
        %v3545 = vunpack.c.l.b16 %v2950
        %v3546 = vunpack.c.h.b16 %v2950
        %v3547 = vunpack.c.l.b16 %v2951
        %v3548 = vunpack.c.h.b16 %v2951
        %v3549 = vunpack.c.l.b16 %v2952
        %v3550 = vunpack.c.h.b16 %v2952
        %v3551 = vunpack.c.l.b16 %v2953
        %v3552 = vunpack.c.h.b16 %v2953
        %v3553 = vunpack.c.l.b16 %v2954
        %v3554 = vpack.c.b16 %v3275, %v3266
        %v3555 = vpack.c.b16 %v3276, %v3267
        %v3556 = vpack.c.b16 %v3277, %v3268
        %v3557 = vpack.c.b16 %v3278, %v3269
        %v3558 = vpack.c.b16 %v3279, %v3270
        %v3559 = vpack.c.b16 %v3280, %v3271
        %v3560 = vpack.c.b16 %v3281, %v3272
        %v3561 = vpack.c.b16 %v3282, %v3273
        %v3562 = vpack.c.b16 %v3283, %v3274
        %v3563 = vpack.c.b16 %v3293, %v3284
        %v3564 = vpack.c.b16 %v3294, %v3285
        %v3565 = vpack.c.b16 %v3295, %v3286
        %v3566 = vpack.c.b16 %v3296, %v3287
        %v3567 = vpack.c.b16 %v3297, %v3288
        %v3568 = vpack.c.b16 %v3298, %v3289
        %v3569 = vpack.c.b16 %v3299, %v3290
        %v3570 = vpack.c.b16 %v3300, %v3291
        %v3571 = vpack.c.b16 %v3301, %v3292
        %v3572 = vpack.c.b16 %v3311, %v3302
        %v3573 = vpack.c.b16 %v3312, %v3303
        %v3574 = vpack.c.b16 %v3313, %v3304
        %v3575 = vpack.c.b16 %v3314, %v3305
        %v3576 = vpack.c.b16 %v3315, %v3306
        %v3577 = vpack.c.b16 %v3316, %v3307
        %v3578 = vpack.c.b16 %v3317, %v3308
        %v3579 = vpack.c.b16 %v3318, %v3309
        %v3580 = vpack.c.b16 %v3319, %v3310
        %v3581 = vpack.c.b16 %v3329, %v3320
        %v3582 = vpack.c.b16 %v3330, %v3321
        %v3583 = vpack.c.b16 %v3331, %v3322
        %v3584 = vpack.c.b16 %v3332, %v3323
        %v3585 = vpack.c.b16 %v3333, %v3324
        %v3586 = vpack.c.b16 %v3334, %v3325
        %v3587 = vpack.c.b16 %v3335, %v3326
        %v3588 = vpack.c.b16 %v3336, %v3327
        %v3589 = vpack.c.b16 %v3337, %v3328
        %v3590 = vpack.c.b16 %v3347, %v3338
        %v3591 = vpack.c.b16 %v3348, %v3339
        %v3592 = vpack.c.b16 %v3349, %v3340
        %v3593 = vpack.c.b16 %v3350, %v3341
        %v3594 = vpack.c.b16 %v3351, %v3342
        %v3595 = vpack.c.b16 %v3352, %v3343
        %v3596 = vpack.c.b16 %v3353, %v3344
        %v3597 = vpack.c.b16 %v3354, %v3345
        %v3598 = vpack.c.b16 %v3355, %v3346
        %v3599 = vpack.c.b16 %v3365, %v3356
        %v3600 = vpack.c.b16 %v3366, %v3357
        %v3601 = vpack.c.b16 %v3367, %v3358
        %v3602 = vpack.c.b16 %v3368, %v3359
        %v3603 = vpack.c.b16 %v3369, %v3360
        %v3604 = vpack.c.b16 %v3370, %v3361
        %v3605 = vpack.c.b16 %v3371, %v3362
        %v3606 = vpack.c.b16 %v3372, %v3363
        %v3607 = vpack.c.b16 %v3373, %v3364
        %v3608 = vpack.c.b16 %v3383, %v3374
        %v3609 = vpack.c.b16 %v3384, %v3375
        %v3610 = vpack.c.b16 %v3385, %v3376
        %v3611 = vpack.c.b16 %v3386, %v3377
        %v3612 = vpack.c.b16 %v3387, %v3378
        %v3613 = vpack.c.b16 %v3388, %v3379
        %v3614 = vpack.c.b16 %v3389, %v3380
        %v3615 = vpack.c.b16 %v3390, %v3381
        %v3616 = vpack.c.b16 %v3391, %v3382
        %v3617 = vpack.c.b16 %v3401, %v3392
        %v3618 = vpack.c.b16 %v3402, %v3393
        %v3619 = vpack.c.b16 %v3403, %v3394
        %v3620 = vpack.c.b16 %v3404, %v3395
        %v3621 = vpack.c.b16 %v3405, %v3396
        %v3622 = vpack.c.b16 %v3406, %v3397
        %v3623 = vpack.c.b16 %v3407, %v3398
        %v3624 = vpack.c.b16 %v3408, %v3399
        %v3625 = vpack.c.b16 %v3409, %v3400
        %v3626 = vpack.c.b16 %v3419, %v3410
        %v3627 = vpack.c.b16 %v3420, %v3411
        %v3628 = vpack.c.b16 %v3421, %v3412
        %v3629 = vpack.c.b16 %v3422, %v3413
        %v3630 = vpack.c.b16 %v3423, %v3414
        %v3631 = vpack.c.b16 %v3424, %v3415
        %v3632 = vpack.c.b16 %v3425, %v3416
        %v3633 = vpack.c.b16 %v3426, %v3417
        %v3634 = vpack.c.b16 %v3427, %v3418
        %v3635 = vpack.c.b16 %v3437, %v3428
        %v3636 = vpack.c.b16 %v3438, %v3429
        %v3637 = vpack.c.b16 %v3439, %v3430
        %v3638 = vpack.c.b16 %v3440, %v3431
        %v3639 = vpack.c.b16 %v3441, %v3432
        %v3640 = vpack.c.b16 %v3442, %v3433
        %v3641 = vpack.c.b16 %v3443, %v3434
        %v3642 = vpack.c.b16 %v3444, %v3435
        %v3643 = vpack.c.b16 %v3445, %v3436
        %v3644 = vpack.c.b16 %v3455, %v3446
        %v3645 = vpack.c.b16 %v3456, %v3447
        %v3646 = vpack.c.b16 %v3457, %v3448
        %v3647 = vpack.c.b16 %v3458, %v3449
        %v3648 = vpack.c.b16 %v3459, %v3450
        %v3649 = vpack.c.b16 %v3460, %v3451
        %v3650 = vpack.c.b16 %v3461, %v3452
        %v3651 = vpack.c.b16 %v3462, %v3453
        %v3652 = vpack.c.b16 %v3463, %v3454
        %v3653 = vpack.c.b16 %v3473, %v3464
        %v3654 = vpack.c.b16 %v3474, %v3465
        %v3655 = vpack.c.b16 %v3475, %v3466
        %v3656 = vpack.c.b16 %v3476, %v3467
        %v3657 = vpack.c.b16 %v3477, %v3468
        %v3658 = vpack.c.b16 %v3478, %v3469
        %v3659 = vpack.c.b16 %v3479, %v3470
        %v3660 = vpack.c.b16 %v3480, %v3471
        %v3661 = vpack.c.b16 %v3481, %v3472
        %v3662 = vpack.c.b16 %v3491, %v3482
        %v3663 = vpack.c.b16 %v3492, %v3483
        %v3664 = vpack.c.b16 %v3493, %v3484
        %v3665 = vpack.c.b16 %v3494, %v3485
        %v3666 = vpack.c.b16 %v3495, %v3486
        %v3667 = vpack.c.b16 %v3496, %v3487
        %v3668 = vpack.c.b16 %v3497, %v3488
        %v3669 = vpack.c.b16 %v3498, %v3489
        %v3670 = vpack.c.b16 %v3499, %v3490
        %v3671 = vpack.c.b16 %v3509, %v3500
        %v3672 = vpack.c.b16 %v3510, %v3501
        %v3673 = vpack.c.b16 %v3511, %v3502
        %v3674 = vpack.c.b16 %v3512, %v3503
        %v3675 = vpack.c.b16 %v3513, %v3504
        %v3676 = vpack.c.b16 %v3514, %v3505
        %v3677 = vpack.c.b16 %v3515, %v3506
        %v3678 = vpack.c.b16 %v3516, %v3507
        %v3679 = vpack.c.b16 %v3517, %v3508
        %v3680 = vpack.c.b16 %v3527, %v3518
        %v3681 = vpack.c.b16 %v3528, %v3519
        %v3682 = vpack.c.b16 %v3529, %v3520
        %v3683 = vpack.c.b16 %v3530, %v3521
        %v3684 = vpack.c.b16 %v3531, %v3522
        %v3685 = vpack.c.b16 %v3532, %v3523
        %v3686 = vpack.c.b16 %v3533, %v3524
        %v3687 = vpack.c.b16 %v3534, %v3525
        %v3688 = vpack.c.b16 %v3535, %v3526
        %v3689 = vpack.c.b16 %v3545, %v3536
        %v3690 = vpack.c.b16 %v3546, %v3537
        %v3691 = vpack.c.b16 %v3547, %v3538
        %v3692 = vpack.c.b16 %v3548, %v3539
        %v3693 = vpack.c.b16 %v3549, %v3540
        %v3694 = vpack.c.b16 %v3550, %v3541
        %v3695 = vpack.c.b16 %v3551, %v3542
        %v3696 = vpack.c.b16 %v3552, %v3543
        %v3697 = vpack.c.b16 %v3553, %v3544
        %v3986 = vunpack.c.l.b16 %v2955
        %v3987 = vunpack.c.l.b16 %v2956
        %v3988 = vunpack.c.l.b16 %v2957
        %v3989 = vunpack.c.l.b16 %v2958
        %v3990 = vunpack.c.l.b16 %v2959
        %v3991 = vunpack.c.l.b16 %v2960
        %v3992 = vunpack.c.l.b16 %v2961
        %v3993 = vunpack.c.l.b16 %v2962
        %v3994 = vunpack.c.l.b16 %v2963
        %v3995 = vunpack.c.l.b16 %v2964
        %v3996 = vunpack.c.l.b16 %v2965
        %v3997 = vunpack.c.l.b16 %v2966
        %v3998 = vunpack.c.l.b16 %v2967
        %v3999 = vunpack.c.l.b16 %v2968
        %v4000 = vunpack.c.l.b16 %v2969
        %v4001 = vunpack.c.l.b16 %v2970
        %v4002 = vunpack.c.l.b16 %v2971
        %v4003 = vunpack.c.l.b16 %v2972
        %v4004 = vunpack.c.l.b16 %v2973
        %v4005 = vunpack.c.l.b16 %v2974
        %v4006 = vunpack.c.l.b16 %v2975
        %v4007 = vunpack.c.l.b16 %v2976
        %v4008 = vunpack.c.l.b16 %v2977
        %v4009 = vunpack.c.l.b16 %v2978
        %v4010 = vunpack.c.l.b16 %v2979
        %v4011 = vunpack.c.l.b16 %v2980
        %v4012 = vunpack.c.l.b16 %v2981
        %v4013 = vunpack.c.l.b16 %v2982
        %v4014 = vunpack.c.l.b16 %v2983
        %v4015 = vunpack.c.l.b16 %v2984
        %v4016 = vunpack.c.l.b16 %v2985
        %v4017 = vunpack.c.l.b16 %v2986
        %v4018 = vunpack.c.l.b16 %v2987
        %v4019 = vunpack.c.l.b16 %v2988
        %v4020 = vunpack.c.l.b16 %v2989
        %v4021 = vunpack.c.l.b16 %v2990
        %v4022 = vunpack.c.l.b16 %v2991
        %v4023 = vunpack.c.l.b16 %v2992
        %v4024 = vunpack.c.l.b16 %v2993
        %v4025 = vunpack.c.l.b16 %v2994
        %v4026 = vunpack.c.l.b16 %v2995
        %v4027 = vunpack.c.l.b16 %v2996
        %v4028 = vunpack.c.l.b16 %v2997
        %v4029 = vunpack.c.l.b16 %v2998
        %v4030 = vunpack.c.l.b16 %v2999
        %v4031 = vunpack.c.l.b16 %v3000
        %v4032 = vunpack.c.l.b16 %v3001
        %v4033 = vunpack.c.l.b16 %v3002
        %v4034 = vunpack.c.l.b16 %v3003
        %v4035 = vunpack.c.l.b16 %v3004
        %v4036 = vunpack.c.l.b16 %v3005
        %v4037 = vunpack.c.l.b16 %v3006
        %v4038 = vunpack.c.l.b16 %v3007
        %v4039 = vunpack.c.l.b16 %v3008
        %v4040 = vunpack.c.l.b16 %v3009
        %v4041 = vunpack.c.l.b16 %v3010
        %v4042 = vunpack.c.l.b16 %v3011
        %v4043 = vunpack.c.l.b16 %v3012
        %v4044 = vunpack.c.l.b16 %v3013
        %v4045 = vunpack.c.l.b16 %v3014
        %v4046 = vunpack.c.l.b16 %v3015
        %v4047 = vunpack.c.l.b16 %v3016
        %v4048 = vunpack.c.l.b16 %v3017
        %v4049 = vunpack.c.l.b16 %v3018
        %v4050 = vunpack.c.l.b16 %v3019
        %v4051 = vunpack.c.l.b16 %v3020
        %v4052 = vunpack.c.l.b16 %v3021
        %v4053 = vunpack.c.l.b16 %v3022
        %v4054 = vunpack.c.l.b16 %v3023
        %v4055 = vunpack.c.l.b16 %v3024
        %v4056 = vunpack.c.l.b16 %v3025
        %v4057 = vunpack.c.l.b16 %v3026
        %v4058 = vunpack.c.l.b16 %v3027
        %v4059 = vunpack.c.l.b16 %v3028
        %v4060 = vunpack.c.l.b16 %v3029
        %v4061 = vunpack.c.l.b16 %v3030
        %v4062 = vunpack.c.l.b16 %v3031
        %v4063 = vunpack.c.l.b16 %v3032
        %v4064 = vunpack.c.l.b16 %v3033
        %v4065 = vunpack.c.l.b16 %v3034
        %v4066 = vunpack.c.l.b16 %v3035
        %v4067 = vunpack.c.l.b16 %v3036
        %v4068 = vunpack.c.l.b16 %v3037
        %v4069 = vunpack.c.l.b16 %v3038
        %v4070 = vunpack.c.l.b16 %v3039
        %v4071 = vunpack.c.l.b16 %v3040
        %v4072 = vunpack.c.l.b16 %v3041
        %v4073 = vunpack.c.l.b16 %v3042
        %v4074 = vunpack.c.l.b16 %v3043
        %v4075 = vunpack.c.l.b16 %v3044
        %v4076 = vunpack.c.l.b16 %v3045
        %v4077 = vunpack.c.l.b16 %v3046
        %v4078 = vunpack.c.l.b16 %v3047
        %v4079 = vunpack.c.l.b16 %v3048
        %v4080 = vunpack.c.l.b16 %v3049
        %v4081 = vunpack.c.l.b16 %v3050
        %v4082 = vunpack.c.l.b16 %v3051
        %v4083 = vunpack.c.l.b16 %v3052
        %v4084 = vunpack.c.l.b16 %v3053
        %v4085 = vunpack.c.l.b16 %v3054
        %v4086 = vunpack.c.l.b16 %v3055
        %v4087 = vunpack.c.l.b16 %v3056
        %v4088 = vunpack.c.l.b16 %v3057
        %v4089 = vunpack.c.l.b16 %v3058
        %v4090 = vunpack.c.l.b16 %v3059
        %v4091 = vunpack.c.l.b16 %v3060
        %v4092 = vunpack.c.l.b16 %v3061
        %v4093 = vunpack.c.l.b16 %v3062
        %v4094 = vunpack.c.l.b16 %v3063
        %v4095 = vunpack.c.l.b16 %v3064
        %v4096 = vunpack.c.l.b16 %v3065
        %v4097 = vunpack.c.l.b16 %v3066
        %v4098 = vunpack.c.l.b16 %v3067
        %v4099 = vunpack.c.l.b16 %v3068
        %v4100 = vunpack.c.l.b16 %v3069
        %v4101 = vunpack.c.l.b16 %v3070
        %v4102 = vunpack.c.l.b16 %v3071
        %v4103 = vunpack.c.l.b16 %v3072
        %v4104 = vunpack.c.l.b16 %v3073
        %v4105 = vunpack.c.l.b16 %v3074
        %v4106 = vunpack.c.l.b16 %v3075
        %v4107 = vunpack.c.l.b16 %v3076
        %v4108 = vunpack.c.l.b16 %v3077
        %v4109 = vunpack.c.l.b16 %v3078
        %v4110 = vunpack.c.l.b16 %v3079
        %v4111 = vunpack.c.l.b16 %v3080
        %v4112 = vunpack.c.l.b16 %v3081
        %v4113 = vunpack.c.l.b16 %v3082
        %v4114 = vunpack.c.l.b16 %v3083
        %v4115 = vunpack.c.l.b16 %v3084
        %v4116 = vunpack.c.l.b16 %v3085
        %v4117 = vunpack.c.l.b16 %v3086
        %v4118 = vunpack.c.l.b16 %v3087
        %v4119 = vunpack.c.l.b16 %v3088
        %v4120 = vunpack.c.l.b16 %v3089
        %v4121 = vunpack.c.l.b16 %v3090
        %v4122 = vunpack.c.l.b16 %v3091
        %v4123 = vunpack.c.l.b16 %v3092
        %v4124 = vunpack.c.l.b16 %v3093
        %v4125 = vunpack.c.l.b16 %v3094
        %v4126 = vunpack.c.l.b16 %v3095
        %v4127 = vunpack.c.l.b16 %v3096
        %v4128 = vunpack.c.l.b16 %v3097
        %v4129 = vunpack.c.l.b16 %v3098
        %v4130 = vpack.c.b16 %v3987, %v3986
        %v4131 = vpack.c.b16 %v3989, %v3988
        %v4132 = vpack.c.b16 %v3991, %v3990
        %v4133 = vpack.c.b16 %v3993, %v3992
        %v4134 = vpack.c.b16 %v3995, %v3994
        %v4135 = vpack.c.b16 %v3997, %v3996
        %v4136 = vpack.c.b16 %v3999, %v3998
        %v4137 = vpack.c.b16 %v4001, %v4000
        %v4138 = vpack.c.b16 %v4003, %v4002
        %v4139 = vpack.c.b16 %v4005, %v4004
        %v4140 = vpack.c.b16 %v4007, %v4006
        %v4141 = vpack.c.b16 %v4009, %v4008
        %v4142 = vpack.c.b16 %v4011, %v4010
        %v4143 = vpack.c.b16 %v4013, %v4012
        %v4144 = vpack.c.b16 %v4015, %v4014
        %v4145 = vpack.c.b16 %v4017, %v4016
        %v4146 = vpack.c.b16 %v4019, %v4018
        %v4147 = vpack.c.b16 %v4021, %v4020
        %v4148 = vpack.c.b16 %v4023, %v4022
        %v4149 = vpack.c.b16 %v4025, %v4024
        %v4150 = vpack.c.b16 %v4027, %v4026
        %v4151 = vpack.c.b16 %v4029, %v4028
        %v4152 = vpack.c.b16 %v4031, %v4030
        %v4153 = vpack.c.b16 %v4033, %v4032
        %v4154 = vpack.c.b16 %v4035, %v4034
        %v4155 = vpack.c.b16 %v4037, %v4036
        %v4156 = vpack.c.b16 %v4039, %v4038
        %v4157 = vpack.c.b16 %v4041, %v4040
        %v4158 = vpack.c.b16 %v4043, %v4042
        %v4159 = vpack.c.b16 %v4045, %v4044
        %v4160 = vpack.c.b16 %v4047, %v4046
        %v4161 = vpack.c.b16 %v4049, %v4048
        %v4162 = vpack.c.b16 %v4051, %v4050
        %v4163 = vpack.c.b16 %v4053, %v4052
        %v4164 = vpack.c.b16 %v4055, %v4054
        %v4165 = vpack.c.b16 %v4057, %v4056
        %v4166 = vpack.c.b16 %v4059, %v4058
        %v4167 = vpack.c.b16 %v4061, %v4060
        %v4168 = vpack.c.b16 %v4063, %v4062
        %v4169 = vpack.c.b16 %v4065, %v4064
        %v4170 = vpack.c.b16 %v4067, %v4066
        %v4171 = vpack.c.b16 %v4069, %v4068
        %v4172 = vpack.c.b16 %v4071, %v4070
        %v4173 = vpack.c.b16 %v4073, %v4072
        %v4174 = vpack.c.b16 %v4075, %v4074
        %v4175 = vpack.c.b16 %v4077, %v4076
        %v4176 = vpack.c.b16 %v4079, %v4078
        %v4177 = vpack.c.b16 %v4081, %v4080
        %v4178 = vpack.c.b16 %v4083, %v4082
        %v4179 = vpack.c.b16 %v4085, %v4084
        %v4180 = vpack.c.b16 %v4087, %v4086
        %v4181 = vpack.c.b16 %v4089, %v4088
        %v4182 = vpack.c.b16 %v4091, %v4090
        %v4183 = vpack.c.b16 %v4093, %v4092
        %v4184 = vpack.c.b16 %v4095, %v4094
        %v4185 = vpack.c.b16 %v4097, %v4096
        %v4186 = vpack.c.b16 %v4099, %v4098
        %v4187 = vpack.c.b16 %v4101, %v4100
        %v4188 = vpack.c.b16 %v4103, %v4102
        %v4189 = vpack.c.b16 %v4105, %v4104
        %v4190 = vpack.c.b16 %v4107, %v4106
        %v4191 = vpack.c.b16 %v4109, %v4108
        %v4192 = vpack.c.b16 %v4111, %v4110
        %v4193 = vpack.c.b16 %v4113, %v4112
        %v4194 = vpack.c.b16 %v4115, %v4114
        %v4195 = vpack.c.b16 %v4117, %v4116
        %v4196 = vpack.c.b16 %v4119, %v4118
        %v4197 = vpack.c.b16 %v4121, %v4120
        %v4198 = vpack.c.b16 %v4123, %v4122
        %v4199 = vpack.c.b16 %v4125, %v4124
        %v4200 = vpack.c.b16 %v4127, %v4126
        %v4201 = vpack.c.b16 %v4129, %v4128
        %4274 = vmatprep.subr.bf16.mxu0 0
        %4275 = vmatpush1.bf16.msra.mxu0 %v4137
        %4276 = vmatprep.subr.bf16.mxu0 0
        %4277 = vmatpush1.bf16.msra.mxu0 %v4136
        %4278 = vmatprep.subr.bf16.mxu0 0
        %4279 = vmatpush1.bf16.msra.mxu0 %v4135
        %4280 = vmatprep.subr.bf16.mxu0 0
        %4281 = vmatpush1.bf16.msra.mxu0 %v4134
        %4282 = vmatprep.subr.bf16.mxu0 0
        %4283 = vmatpush1.bf16.msra.mxu0 %v4133
        %4284 = vmatprep.subr.bf16.mxu0 0
        %4285 = vmatpush1.bf16.msra.mxu0 %v4132
        %4286 = vmatprep.subr.bf16.mxu0 0
        %4287 = vmatpush1.bf16.msra.mxu0 %v4131
        %4288 = vmatprep.subr.bf16.mxu0 0
        %4289 = vmatpush1.bf16.msra.mxu0 %v4130
        %4290 = vmatprep.subr.bf16.mxu0 0
        %4291 = vmatpush2.bf16.msra.mxu0 %v4145
        %4292 = vmatprep.subr.bf16.mxu0 0
        %4293 = vmatpush2.bf16.msra.mxu0 %v4144
        %4294 = vmatprep.subr.bf16.mxu0 0
        %4295 = vmatpush2.bf16.msra.mxu0 %v4143
        %4296 = vmatprep.subr.bf16.mxu0 0
        %4297 = vmatpush2.bf16.msra.mxu0 %v4142
        %4298 = vmatprep.subr.bf16.mxu0 0
        %4299 = vmatpush2.bf16.msra.mxu0 %v4141
        %4300 = vmatprep.subr.bf16.mxu0 0
        %4301 = vmatpush2.bf16.msra.mxu0 %v4140
        %4302 = vmatprep.subr.bf16.mxu0 0
        %4303 = vmatpush2.bf16.msra.mxu0 %v4139
        %4304 = vmatprep.subr.bf16.mxu0 0
        %4305 = vmatpush2.bf16.msra.mxu0 %v4138
        %4306 = vmatprep.mubr.bf16.mxu0 %v3555
        %4307 = vmatmul.mubr.bf16.gmra.mxu0 %v3554
        %v4308 = vpop.f32.mrf.mxu0
        %v4309 = vadd.f32 %v3104, %v4308
        %v4310 = vpop.f32.mrf.mxu0
        %v4311 = vpop.f32.mrf.mxu0
        %v4312 = vadd.f32 %v3104, %v4311
        %v4313 = vpop.f32.mrf.mxu0
        %4314 = vmatprep.mubr.bf16.mxu0 %v3564
        %4315 = vmatmul.mubr.bf16.gmra.mxu0 %v3563
        %v4316 = vpop.f32.mrf.mxu0
        %v4317 = vadd.f32 %v3104, %v4316
        %v4318 = vpop.f32.mrf.mxu0
        %v4319 = vpop.f32.mrf.mxu0
        %v4320 = vadd.f32 %v3104, %v4319
        %v4321 = vpop.f32.mrf.mxu0
        %4322 = vmatprep.mubr.bf16.mxu0 %v3573
        %4323 = vmatmul.mubr.bf16.gmra.mxu0 %v3572
        %v4324 = vpop.f32.mrf.mxu0
        %v4325 = vadd.f32 %v3104, %v4324
        %v4326 = vpop.f32.mrf.mxu0
        %v4327 = vpop.f32.mrf.mxu0
        %v4328 = vadd.f32 %v3104, %v4327
        %v4329 = vpop.f32.mrf.mxu0
        %4330 = vmatprep.mubr.bf16.mxu0 %v3582
        %4331 = vmatmul.mubr.bf16.gmra.mxu0 %v3581
        %v4332 = vpop.f32.mrf.mxu0
        %v4333 = vadd.f32 %v3104, %v4332
        %v4334 = vpop.f32.mrf.mxu0
        %v4335 = vpop.f32.mrf.mxu0
        %v4336 = vadd.f32 %v3104, %v4335
        %v4337 = vpop.f32.mrf.mxu0
        %4338 = vmatprep.mubr.bf16.mxu0 %v3591
        %4339 = vmatmul.mubr.bf16.gmra.mxu0 %v3590
        %v4340 = vpop.f32.mrf.mxu0
        %v4341 = vadd.f32 %v3104, %v4340
        %v4342 = vpop.f32.mrf.mxu0
        %v4343 = vpop.f32.mrf.mxu0
        %v4344 = vadd.f32 %v3104, %v4343
        %v4345 = vpop.f32.mrf.mxu0
        %4346 = vmatprep.mubr.bf16.mxu0 %v3600
        %4347 = vmatmul.mubr.bf16.gmra.mxu0 %v3599
        %v4348 = vpop.f32.mrf.mxu0
        %v4349 = vadd.f32 %v3104, %v4348
        %v4350 = vpop.f32.mrf.mxu0
        %v4351 = vpop.f32.mrf.mxu0
        %v4352 = vadd.f32 %v3104, %v4351
        %v4353 = vpop.f32.mrf.mxu0
        %4354 = vmatprep.mubr.bf16.mxu0 %v3609
        %4355 = vmatmul.mubr.bf16.gmra.mxu0 %v3608
        %v4356 = vpop.f32.mrf.mxu0
        %v4357 = vadd.f32 %v3104, %v4356
        %v4358 = vpop.f32.mrf.mxu0
        %v4359 = vpop.f32.mrf.mxu0
        %v4360 = vadd.f32 %v3104, %v4359
        %v4361 = vpop.f32.mrf.mxu0
        %4362 = vmatprep.mubr.bf16.mxu0 %v3618
        %4363 = vmatmul.mubr.bf16.gmra.mxu0 %v3617
        %v4364 = vpop.f32.mrf.mxu0
        %v4365 = vadd.f32 %v3104, %v4364
        %v4366 = vpop.f32.mrf.mxu0
        %v4367 = vpop.f32.mrf.mxu0
        %v4368 = vadd.f32 %v3104, %v4367
        %v4369 = vpop.f32.mrf.mxu0
        %4370 = vmatprep.mubr.bf16.mxu0 %v3627
        %4371 = vmatmul.mubr.bf16.gmra.mxu0 %v3626
        %v4372 = vpop.f32.mrf.mxu0
        %v4373 = vadd.f32 %v3104, %v4372
        %v4374 = vpop.f32.mrf.mxu0
        %v4375 = vpop.f32.mrf.mxu0
        %v4376 = vadd.f32 %v3104, %v4375
        %v4377 = vpop.f32.mrf.mxu0
        %4378 = vmatprep.mubr.bf16.mxu0 %v3636
        %4379 = vmatmul.mubr.bf16.gmra.mxu0 %v3635
        %v4380 = vpop.f32.mrf.mxu0
        %v4381 = vadd.f32 %v3104, %v4380
        %v4382 = vpop.f32.mrf.mxu0
        %v4383 = vpop.f32.mrf.mxu0
        %v4384 = vadd.f32 %v3104, %v4383
        %v4385 = vpop.f32.mrf.mxu0
        %4386 = vmatprep.mubr.bf16.mxu0 %v3645
        %4387 = vmatmul.mubr.bf16.gmra.mxu0 %v3644
        %v4388 = vpop.f32.mrf.mxu0
        %v4389 = vadd.f32 %v3104, %v4388
        %v4390 = vpop.f32.mrf.mxu0
        %v4391 = vpop.f32.mrf.mxu0
        %v4392 = vadd.f32 %v3104, %v4391
        %v4393 = vpop.f32.mrf.mxu0
        %4394 = vmatprep.mubr.bf16.mxu0 %v3654
        %4395 = vmatmul.mubr.bf16.gmra.mxu0 %v3653
        %v4396 = vpop.f32.mrf.mxu0
        %v4397 = vadd.f32 %v3104, %v4396
        %v4398 = vpop.f32.mrf.mxu0
        %v4399 = vpop.f32.mrf.mxu0
        %v4400 = vadd.f32 %v3104, %v4399
        %v4401 = vpop.f32.mrf.mxu0
        %4402 = vmatprep.mubr.bf16.mxu0 %v3663
        %4403 = vmatmul.mubr.bf16.gmra.mxu0 %v3662
        %v4404 = vpop.f32.mrf.mxu0
        %v4405 = vadd.f32 %v3104, %v4404
        %v4406 = vpop.f32.mrf.mxu0
        %v4407 = vpop.f32.mrf.mxu0
        %v4408 = vadd.f32 %v3104, %v4407
        %v4409 = vpop.f32.mrf.mxu0
        %4410 = vmatprep.mubr.bf16.mxu0 %v3672
        %4411 = vmatmul.mubr.bf16.gmra.mxu0 %v3671
        %v4412 = vpop.f32.mrf.mxu0
        %v4413 = vadd.f32 %v3104, %v4412
        %v4414 = vpop.f32.mrf.mxu0
        %v4415 = vpop.f32.mrf.mxu0
        %v4416 = vadd.f32 %v3104, %v4415
        %v4417 = vpop.f32.mrf.mxu0
        %4418 = vmatprep.mubr.bf16.mxu0 %v3681
        %4419 = vmatmul.mubr.bf16.gmra.mxu0 %v3680
        %v4420 = vpop.f32.mrf.mxu0
        %v4421 = vadd.f32 %v3104, %v4420
        %v4422 = vpop.f32.mrf.mxu0
        %v4423 = vpop.f32.mrf.mxu0
        %v4424 = vadd.f32 %v3104, %v4423
        %v4425 = vpop.f32.mrf.mxu0
        %4426 = vmatprep.mubr.bf16.mxu0 %v3690
        %4427 = vmatmul.mubr.bf16.gmra.mxu0 %v3689
        %v4428 = vpop.f32.mrf.mxu0
        %v4429 = vadd.f32 %v3104, %v4428
        %v4430 = vpop.f32.mrf.mxu0
        %v4431 = vpop.f32.mrf.mxu0
        %v4432 = vadd.f32 %v3104, %v4431
        %v4433 = vpop.f32.mrf.mxu0
        %4434 = vdwg.mxu0
        %4435 = vmatprep.subr.bf16.mxu0 0
        %4436 = vmatpush1.bf16.msra.mxu0 %v4153
        %4437 = vmatprep.subr.bf16.mxu0 0
        %4438 = vmatpush1.bf16.msra.mxu0 %v4152
        %4439 = vmatprep.subr.bf16.mxu0 0
        %4440 = vmatpush1.bf16.msra.mxu0 %v4151
        %4441 = vmatprep.subr.bf16.mxu0 0
        %4442 = vmatpush1.bf16.msra.mxu0 %v4150
        %4443 = vmatprep.subr.bf16.mxu0 0
        %4444 = vmatpush1.bf16.msra.mxu0 %v4149
        %4445 = vmatprep.subr.bf16.mxu0 0
        %4446 = vmatpush1.bf16.msra.mxu0 %v4148
        %4447 = vmatprep.subr.bf16.mxu0 0
        %4448 = vmatpush1.bf16.msra.mxu0 %v4147
        %4449 = vmatprep.subr.bf16.mxu0 0
        %4450 = vmatpush1.bf16.msra.mxu0 %v4146
        %4451 = vmatprep.subr.bf16.mxu0 0
        %4452 = vmatpush2.bf16.msra.mxu0 %v4161
        %4453 = vmatprep.subr.bf16.mxu0 0
        %4454 = vmatpush2.bf16.msra.mxu0 %v4160
        %4455 = vmatprep.subr.bf16.mxu0 0
        %4456 = vmatpush2.bf16.msra.mxu0 %v4159
        %4457 = vmatprep.subr.bf16.mxu0 0
        %4458 = vmatpush2.bf16.msra.mxu0 %v4158
        %4459 = vmatprep.subr.bf16.mxu0 0
        %4460 = vmatpush2.bf16.msra.mxu0 %v4157
        %4461 = vmatprep.subr.bf16.mxu0 0
        %4462 = vmatpush2.bf16.msra.mxu0 %v4156
        %4463 = vmatprep.subr.bf16.mxu0 0
        %4464 = vmatpush2.bf16.msra.mxu0 %v4155
        %4465 = vmatprep.subr.bf16.mxu0 0
        %4466 = vmatpush2.bf16.msra.mxu0 %v4154
        %4467 = vmatprep.mubr.bf16.mxu0 %v3557
        %4468 = vmatmul.mubr.bf16.gmra.mxu0 %v3556
        %v4469 = vpop.f32.mrf.mxu0
        %v4470 = vadd.f32 %v4309, %v4469
        %v4471 = vpop.f32.mrf.mxu0
        %v4472 = vpop.f32.mrf.mxu0
        %v4473 = vadd.f32 %v4312, %v4472
        %v4474 = vpop.f32.mrf.mxu0
        %4475 = vmatprep.mubr.bf16.mxu0 %v3566
        %4476 = vmatmul.mubr.bf16.gmra.mxu0 %v3565
        %v4477 = vpop.f32.mrf.mxu0
        %v4478 = vadd.f32 %v4317, %v4477
        %v4479 = vpop.f32.mrf.mxu0
        %v4480 = vpop.f32.mrf.mxu0
        %v4481 = vadd.f32 %v4320, %v4480
        %v4482 = vpop.f32.mrf.mxu0
        %4483 = vmatprep.mubr.bf16.mxu0 %v3575
        %4484 = vmatmul.mubr.bf16.gmra.mxu0 %v3574
        %v4485 = vpop.f32.mrf.mxu0
        %v4486 = vadd.f32 %v4325, %v4485
        %v4487 = vpop.f32.mrf.mxu0
        %v4488 = vpop.f32.mrf.mxu0
        %v4489 = vadd.f32 %v4328, %v4488
        %v4490 = vpop.f32.mrf.mxu0
        %4491 = vmatprep.mubr.bf16.mxu0 %v3584
        %4492 = vmatmul.mubr.bf16.gmra.mxu0 %v3583
        %v4493 = vpop.f32.mrf.mxu0
        %v4494 = vadd.f32 %v4333, %v4493
        %v4495 = vpop.f32.mrf.mxu0
        %v4496 = vpop.f32.mrf.mxu0
        %v4497 = vadd.f32 %v4336, %v4496
        %v4498 = vpop.f32.mrf.mxu0
        %4499 = vmatprep.mubr.bf16.mxu0 %v3593
        %4500 = vmatmul.mubr.bf16.gmra.mxu0 %v3592
        %v4501 = vpop.f32.mrf.mxu0
        %v4502 = vadd.f32 %v4341, %v4501
        %v4503 = vpop.f32.mrf.mxu0
        %v4504 = vpop.f32.mrf.mxu0
        %v4505 = vadd.f32 %v4344, %v4504
        %v4506 = vpop.f32.mrf.mxu0
        %4507 = vmatprep.mubr.bf16.mxu0 %v3602
        %4508 = vmatmul.mubr.bf16.gmra.mxu0 %v3601
        %v4509 = vpop.f32.mrf.mxu0
        %v4510 = vadd.f32 %v4349, %v4509
        %v4511 = vpop.f32.mrf.mxu0
        %v4512 = vpop.f32.mrf.mxu0
        %v4513 = vadd.f32 %v4352, %v4512
        %v4514 = vpop.f32.mrf.mxu0
        %4515 = vmatprep.mubr.bf16.mxu0 %v3611
        %4516 = vmatmul.mubr.bf16.gmra.mxu0 %v3610
        %v4517 = vpop.f32.mrf.mxu0
        %v4518 = vadd.f32 %v4357, %v4517
        %v4519 = vpop.f32.mrf.mxu0
        %v4520 = vpop.f32.mrf.mxu0
        %v4521 = vadd.f32 %v4360, %v4520
        %v4522 = vpop.f32.mrf.mxu0
        %4523 = vmatprep.mubr.bf16.mxu0 %v3620
        %4524 = vmatmul.mubr.bf16.gmra.mxu0 %v3619
        %v4525 = vpop.f32.mrf.mxu0
        %v4526 = vadd.f32 %v4365, %v4525
        %v4527 = vpop.f32.mrf.mxu0
        %v4528 = vpop.f32.mrf.mxu0
        %v4529 = vadd.f32 %v4368, %v4528
        %v4530 = vpop.f32.mrf.mxu0
        %4531 = vmatprep.mubr.bf16.mxu0 %v3629
        %4532 = vmatmul.mubr.bf16.gmra.mxu0 %v3628
        %v4533 = vpop.f32.mrf.mxu0
        %v4534 = vadd.f32 %v4373, %v4533
        %v4535 = vpop.f32.mrf.mxu0
        %v4536 = vpop.f32.mrf.mxu0
        %v4537 = vadd.f32 %v4376, %v4536
        %v4538 = vpop.f32.mrf.mxu0
        %4539 = vmatprep.mubr.bf16.mxu0 %v3638
        %4540 = vmatmul.mubr.bf16.gmra.mxu0 %v3637
        %v4541 = vpop.f32.mrf.mxu0
        %v4542 = vadd.f32 %v4381, %v4541
        %v4543 = vpop.f32.mrf.mxu0
        %v4544 = vpop.f32.mrf.mxu0
        %v4545 = vadd.f32 %v4384, %v4544
        %v4546 = vpop.f32.mrf.mxu0
        %4547 = vmatprep.mubr.bf16.mxu0 %v3647
        %4548 = vmatmul.mubr.bf16.gmra.mxu0 %v3646
        %v4549 = vpop.f32.mrf.mxu0
        %v4550 = vadd.f32 %v4389, %v4549
        %v4551 = vpop.f32.mrf.mxu0
        %v4552 = vpop.f32.mrf.mxu0
        %v4553 = vadd.f32 %v4392, %v4552
        %v4554 = vpop.f32.mrf.mxu0
        %4555 = vmatprep.mubr.bf16.mxu0 %v3656
        %4556 = vmatmul.mubr.bf16.gmra.mxu0 %v3655
        %v4557 = vpop.f32.mrf.mxu0
        %v4558 = vadd.f32 %v4397, %v4557
        %v4559 = vpop.f32.mrf.mxu0
        %v4560 = vpop.f32.mrf.mxu0
        %v4561 = vadd.f32 %v4400, %v4560
        %v4562 = vpop.f32.mrf.mxu0
        %4563 = vmatprep.mubr.bf16.mxu0 %v3665
        %4564 = vmatmul.mubr.bf16.gmra.mxu0 %v3664
        %v4565 = vpop.f32.mrf.mxu0
        %v4566 = vadd.f32 %v4405, %v4565
        %v4567 = vpop.f32.mrf.mxu0
        %v4568 = vpop.f32.mrf.mxu0
        %v4569 = vadd.f32 %v4408, %v4568
        %v4570 = vpop.f32.mrf.mxu0
        %4571 = vmatprep.mubr.bf16.mxu0 %v3674
        %4572 = vmatmul.mubr.bf16.gmra.mxu0 %v3673
        %v4573 = vpop.f32.mrf.mxu0
        %v4574 = vadd.f32 %v4413, %v4573
        %v4575 = vpop.f32.mrf.mxu0
        %v4576 = vpop.f32.mrf.mxu0
        %v4577 = vadd.f32 %v4416, %v4576
        %v4578 = vpop.f32.mrf.mxu0
        %4579 = vmatprep.mubr.bf16.mxu0 %v3683
        %4580 = vmatmul.mubr.bf16.gmra.mxu0 %v3682
        %v4581 = vpop.f32.mrf.mxu0
        %v4582 = vadd.f32 %v4421, %v4581
        %v4583 = vpop.f32.mrf.mxu0
        %v4584 = vpop.f32.mrf.mxu0
        %v4585 = vadd.f32 %v4424, %v4584
        %v4586 = vpop.f32.mrf.mxu0
        %4587 = vmatprep.mubr.bf16.mxu0 %v3692
        %4588 = vmatmul.mubr.bf16.gmra.mxu0 %v3691
        %v4589 = vpop.f32.mrf.mxu0
        %v4590 = vadd.f32 %v4429, %v4589
        %v4591 = vpop.f32.mrf.mxu0
        %v4592 = vpop.f32.mrf.mxu0
        %v4593 = vadd.f32 %v4432, %v4592
        %v4594 = vpop.f32.mrf.mxu0
        %4595 = vdwg.mxu0
        %4596 = vmatprep.subr.bf16.mxu0 0
        %4597 = vmatpush1.bf16.msra.mxu0 %v4169
        %4598 = vmatprep.subr.bf16.mxu0 0
        %4599 = vmatpush1.bf16.msra.mxu0 %v4168
        %4600 = vmatprep.subr.bf16.mxu0 0
        %4601 = vmatpush1.bf16.msra.mxu0 %v4167
        %4602 = vmatprep.subr.bf16.mxu0 0
        %4603 = vmatpush1.bf16.msra.mxu0 %v4166
        %4604 = vmatprep.subr.bf16.mxu0 0
        %4605 = vmatpush1.bf16.msra.mxu0 %v4165
        %4606 = vmatprep.subr.bf16.mxu0 0
        %4607 = vmatpush1.bf16.msra.mxu0 %v4164
        %4608 = vmatprep.subr.bf16.mxu0 0
        %4609 = vmatpush1.bf16.msra.mxu0 %v4163
        %4610 = vmatprep.subr.bf16.mxu0 0
        %4611 = vmatpush1.bf16.msra.mxu0 %v4162
        %4612 = vmatprep.subr.bf16.mxu0 0
        %4613 = vmatpush2.bf16.msra.mxu0 %v4177
        %4614 = vmatprep.subr.bf16.mxu0 0
        %4615 = vmatpush2.bf16.msra.mxu0 %v4176
        %4616 = vmatprep.subr.bf16.mxu0 0
        %4617 = vmatpush2.bf16.msra.mxu0 %v4175
        %4618 = vmatprep.subr.bf16.mxu0 0
        %4619 = vmatpush2.bf16.msra.mxu0 %v4174
        %4620 = vmatprep.subr.bf16.mxu0 0
        %4621 = vmatpush2.bf16.msra.mxu0 %v4173
        %4622 = vmatprep.subr.bf16.mxu0 0
        %4623 = vmatpush2.bf16.msra.mxu0 %v4172
        %4624 = vmatprep.subr.bf16.mxu0 0
        %4625 = vmatpush2.bf16.msra.mxu0 %v4171
        %4626 = vmatprep.subr.bf16.mxu0 0
        %4627 = vmatpush2.bf16.msra.mxu0 %v4170
        %4628 = vmatprep.mubr.bf16.mxu0 %v3559
        %4629 = vmatmul.mubr.bf16.gmra.mxu0 %v3558
        %v4630 = vpop.f32.mrf.mxu0
        %v4631 = vadd.f32 %v4470, %v4630
        %v4632 = vpop.f32.mrf.mxu0
        %v4633 = vpop.f32.mrf.mxu0
        %v4634 = vadd.f32 %v4473, %v4633
        %v4635 = vpop.f32.mrf.mxu0
        %4636 = vmatprep.mubr.bf16.mxu0 %v3568
        %4637 = vmatmul.mubr.bf16.gmra.mxu0 %v3567
        %v4638 = vpop.f32.mrf.mxu0
        %v4639 = vadd.f32 %v4478, %v4638
        %v4640 = vpop.f32.mrf.mxu0
        %v4641 = vpop.f32.mrf.mxu0
        %v4642 = vadd.f32 %v4481, %v4641
        %v4643 = vpop.f32.mrf.mxu0
        %4644 = vmatprep.mubr.bf16.mxu0 %v3577
        %4645 = vmatmul.mubr.bf16.gmra.mxu0 %v3576
        %v4646 = vpop.f32.mrf.mxu0
        %v4647 = vadd.f32 %v4486, %v4646
        %v4648 = vpop.f32.mrf.mxu0
        %v4649 = vpop.f32.mrf.mxu0
        %v4650 = vadd.f32 %v4489, %v4649
        %v4651 = vpop.f32.mrf.mxu0
        %4652 = vmatprep.mubr.bf16.mxu0 %v3586
        %4653 = vmatmul.mubr.bf16.gmra.mxu0 %v3585
        %v4654 = vpop.f32.mrf.mxu0
        %v4655 = vadd.f32 %v4494, %v4654
        %v4656 = vpop.f32.mrf.mxu0
        %v4657 = vpop.f32.mrf.mxu0
        %v4658 = vadd.f32 %v4497, %v4657
        %v4659 = vpop.f32.mrf.mxu0
        %4660 = vmatprep.mubr.bf16.mxu0 %v3595
        %4661 = vmatmul.mubr.bf16.gmra.mxu0 %v3594
        %v4662 = vpop.f32.mrf.mxu0
        %v4663 = vadd.f32 %v4502, %v4662
        %v4664 = vpop.f32.mrf.mxu0
        %v4665 = vpop.f32.mrf.mxu0
        %v4666 = vadd.f32 %v4505, %v4665
        %v4667 = vpop.f32.mrf.mxu0
        %4668 = vmatprep.mubr.bf16.mxu0 %v3604
        %4669 = vmatmul.mubr.bf16.gmra.mxu0 %v3603
        %v4670 = vpop.f32.mrf.mxu0
        %v4671 = vadd.f32 %v4510, %v4670
        %v4672 = vpop.f32.mrf.mxu0
        %v4673 = vpop.f32.mrf.mxu0
        %v4674 = vadd.f32 %v4513, %v4673
        %v4675 = vpop.f32.mrf.mxu0
        %4676 = vmatprep.mubr.bf16.mxu0 %v3613
        %4677 = vmatmul.mubr.bf16.gmra.mxu0 %v3612
        %v4678 = vpop.f32.mrf.mxu0
        %v4679 = vadd.f32 %v4518, %v4678
        %v4680 = vpop.f32.mrf.mxu0
        %v4681 = vpop.f32.mrf.mxu0
        %v4682 = vadd.f32 %v4521, %v4681
        %v4683 = vpop.f32.mrf.mxu0
        %4684 = vmatprep.mubr.bf16.mxu0 %v3622
        %4685 = vmatmul.mubr.bf16.gmra.mxu0 %v3621
        %v4686 = vpop.f32.mrf.mxu0
        %v4687 = vadd.f32 %v4526, %v4686
        %v4688 = vpop.f32.mrf.mxu0
        %v4689 = vpop.f32.mrf.mxu0
        %v4690 = vadd.f32 %v4529, %v4689
        %v4691 = vpop.f32.mrf.mxu0
        %4692 = vmatprep.mubr.bf16.mxu0 %v3631
        %4693 = vmatmul.mubr.bf16.gmra.mxu0 %v3630
        %v4694 = vpop.f32.mrf.mxu0
        %v4695 = vadd.f32 %v4534, %v4694
        %v4696 = vpop.f32.mrf.mxu0
        %v4697 = vpop.f32.mrf.mxu0
        %v4698 = vadd.f32 %v4537, %v4697
        %v4699 = vpop.f32.mrf.mxu0
        %4700 = vmatprep.mubr.bf16.mxu0 %v3640
        %4701 = vmatmul.mubr.bf16.gmra.mxu0 %v3639
        %v4702 = vpop.f32.mrf.mxu0
        %v4703 = vadd.f32 %v4542, %v4702
        %v4704 = vpop.f32.mrf.mxu0
        %v4705 = vpop.f32.mrf.mxu0
        %v4706 = vadd.f32 %v4545, %v4705
        %v4707 = vpop.f32.mrf.mxu0
        %4708 = vmatprep.mubr.bf16.mxu0 %v3649
        %4709 = vmatmul.mubr.bf16.gmra.mxu0 %v3648
        %v4710 = vpop.f32.mrf.mxu0
        %v4711 = vadd.f32 %v4550, %v4710
        %v4712 = vpop.f32.mrf.mxu0
        %v4713 = vpop.f32.mrf.mxu0
        %v4714 = vadd.f32 %v4553, %v4713
        %v4715 = vpop.f32.mrf.mxu0
        %4716 = vmatprep.mubr.bf16.mxu0 %v3658
        %4717 = vmatmul.mubr.bf16.gmra.mxu0 %v3657
        %v4718 = vpop.f32.mrf.mxu0
        %v4719 = vadd.f32 %v4558, %v4718
        %v4720 = vpop.f32.mrf.mxu0
        %v4721 = vpop.f32.mrf.mxu0
        %v4722 = vadd.f32 %v4561, %v4721
        %v4723 = vpop.f32.mrf.mxu0
        %4724 = vmatprep.mubr.bf16.mxu0 %v3667
        %4725 = vmatmul.mubr.bf16.gmra.mxu0 %v3666
        %v4726 = vpop.f32.mrf.mxu0
        %v4727 = vadd.f32 %v4566, %v4726
        %v4728 = vpop.f32.mrf.mxu0
        %v4729 = vpop.f32.mrf.mxu0
        %v4730 = vadd.f32 %v4569, %v4729
        %v4731 = vpop.f32.mrf.mxu0
        %4732 = vmatprep.mubr.bf16.mxu0 %v3676
        %4733 = vmatmul.mubr.bf16.gmra.mxu0 %v3675
        %v4734 = vpop.f32.mrf.mxu0
        %v4735 = vadd.f32 %v4574, %v4734
        %v4736 = vpop.f32.mrf.mxu0
        %v4737 = vpop.f32.mrf.mxu0
        %v4738 = vadd.f32 %v4577, %v4737
        %v4739 = vpop.f32.mrf.mxu0
        %4740 = vmatprep.mubr.bf16.mxu0 %v3685
        %4741 = vmatmul.mubr.bf16.gmra.mxu0 %v3684
        %v4742 = vpop.f32.mrf.mxu0
        %v4743 = vadd.f32 %v4582, %v4742
        %v4744 = vpop.f32.mrf.mxu0
        %v4745 = vpop.f32.mrf.mxu0
        %v4746 = vadd.f32 %v4585, %v4745
        %v4747 = vpop.f32.mrf.mxu0
        %4748 = vmatprep.mubr.bf16.mxu0 %v3694
        %4749 = vmatmul.mubr.bf16.gmra.mxu0 %v3693
        %v4750 = vpop.f32.mrf.mxu0
        %v4751 = vadd.f32 %v4590, %v4750
        %v4752 = vpop.f32.mrf.mxu0
        %v4753 = vpop.f32.mrf.mxu0
        %v4754 = vadd.f32 %v4593, %v4753
        %v4755 = vpop.f32.mrf.mxu0
        %4756 = vdwg.mxu0
        %4757 = vmatprep.subr.bf16.mxu0 0
        %4758 = vmatpush1.bf16.msra.mxu0 %v4185
        %4759 = vmatprep.subr.bf16.mxu0 0
        %4760 = vmatpush1.bf16.msra.mxu0 %v4184
        %4761 = vmatprep.subr.bf16.mxu0 0
        %4762 = vmatpush1.bf16.msra.mxu0 %v4183
        %4763 = vmatprep.subr.bf16.mxu0 0
        %4764 = vmatpush1.bf16.msra.mxu0 %v4182
        %4765 = vmatprep.subr.bf16.mxu0 0
        %4766 = vmatpush1.bf16.msra.mxu0 %v4181
        %4767 = vmatprep.subr.bf16.mxu0 0
        %4768 = vmatpush1.bf16.msra.mxu0 %v4180
        %4769 = vmatprep.subr.bf16.mxu0 0
        %4770 = vmatpush1.bf16.msra.mxu0 %v4179
        %4771 = vmatprep.subr.bf16.mxu0 0
        %4772 = vmatpush1.bf16.msra.mxu0 %v4178
        %4773 = vmatprep.subr.bf16.mxu0 0
        %4774 = vmatpush2.bf16.msra.mxu0 %v4193
        %4775 = vmatprep.subr.bf16.mxu0 0
        %4776 = vmatpush2.bf16.msra.mxu0 %v4192
        %4777 = vmatprep.subr.bf16.mxu0 0
        %4778 = vmatpush2.bf16.msra.mxu0 %v4191
        %4779 = vmatprep.subr.bf16.mxu0 0
        %4780 = vmatpush2.bf16.msra.mxu0 %v4190
        %4781 = vmatprep.subr.bf16.mxu0 0
        %4782 = vmatpush2.bf16.msra.mxu0 %v4189
        %4783 = vmatprep.subr.bf16.mxu0 0
        %4784 = vmatpush2.bf16.msra.mxu0 %v4188
        %4785 = vmatprep.subr.bf16.mxu0 0
        %4786 = vmatpush2.bf16.msra.mxu0 %v4187
        %4787 = vmatprep.subr.bf16.mxu0 0
        %4788 = vmatpush2.bf16.msra.mxu0 %v4186
        %4789 = vmatprep.mubr.bf16.mxu0 %v3561
        %4790 = vmatmul.mubr.bf16.gmra.mxu0 %v3560
        %v4791 = vpop.f32.mrf.mxu0
        %v4792 = vadd.f32 %v4631, %v4791
        %v4793 = vpop.f32.mrf.mxu0
        %v4794 = vpop.f32.mrf.mxu0
        %v4795 = vadd.f32 %v4634, %v4794
        %v4796 = vpop.f32.mrf.mxu0
        %4797 = vmatprep.mubr.bf16.mxu0 %v3570
        %4798 = vmatmul.mubr.bf16.gmra.mxu0 %v3569
        %v4799 = vpop.f32.mrf.mxu0
        %v4800 = vadd.f32 %v4639, %v4799
        %v4801 = vpop.f32.mrf.mxu0
        %v4802 = vpop.f32.mrf.mxu0
        %v4803 = vadd.f32 %v4642, %v4802
        %v4804 = vpop.f32.mrf.mxu0
        %4805 = vmatprep.mubr.bf16.mxu0 %v3579
        %4806 = vmatmul.mubr.bf16.gmra.mxu0 %v3578
        %v4807 = vpop.f32.mrf.mxu0
        %v4808 = vadd.f32 %v4647, %v4807
        %v4809 = vpop.f32.mrf.mxu0
        %v4810 = vpop.f32.mrf.mxu0
        %v4811 = vadd.f32 %v4650, %v4810
        %v4812 = vpop.f32.mrf.mxu0
        %4813 = vmatprep.mubr.bf16.mxu0 %v3588
        %4814 = vmatmul.mubr.bf16.gmra.mxu0 %v3587
        %v4815 = vpop.f32.mrf.mxu0
        %v4816 = vadd.f32 %v4655, %v4815
        %v4817 = vpop.f32.mrf.mxu0
        %v4818 = vpop.f32.mrf.mxu0
        %v4819 = vadd.f32 %v4658, %v4818
        %v4820 = vpop.f32.mrf.mxu0
        %4821 = vmatprep.mubr.bf16.mxu0 %v3597
        %4822 = vmatmul.mubr.bf16.gmra.mxu0 %v3596
        %v4823 = vpop.f32.mrf.mxu0
        %v4824 = vadd.f32 %v4663, %v4823
        %v4825 = vpop.f32.mrf.mxu0
        %v4826 = vpop.f32.mrf.mxu0
        %v4827 = vadd.f32 %v4666, %v4826
        %v4828 = vpop.f32.mrf.mxu0
        %4829 = vmatprep.mubr.bf16.mxu0 %v3606
        %4830 = vmatmul.mubr.bf16.gmra.mxu0 %v3605
        %v4831 = vpop.f32.mrf.mxu0
        %v4832 = vadd.f32 %v4671, %v4831
        %v4833 = vpop.f32.mrf.mxu0
        %v4834 = vpop.f32.mrf.mxu0
        %v4835 = vadd.f32 %v4674, %v4834
        %v4836 = vpop.f32.mrf.mxu0
        %4837 = vmatprep.mubr.bf16.mxu0 %v3615
        %4838 = vmatmul.mubr.bf16.gmra.mxu0 %v3614
        %v4839 = vpop.f32.mrf.mxu0
        %v4840 = vadd.f32 %v4679, %v4839
        %v4841 = vpop.f32.mrf.mxu0
        %v4842 = vpop.f32.mrf.mxu0
        %v4843 = vadd.f32 %v4682, %v4842
        %v4844 = vpop.f32.mrf.mxu0
        %4845 = vmatprep.mubr.bf16.mxu0 %v3624
        %4846 = vmatmul.mubr.bf16.gmra.mxu0 %v3623
        %v4847 = vpop.f32.mrf.mxu0
        %v4848 = vadd.f32 %v4687, %v4847
        %v4849 = vpop.f32.mrf.mxu0
        %v4850 = vpop.f32.mrf.mxu0
        %v4851 = vadd.f32 %v4690, %v4850
        %v4852 = vpop.f32.mrf.mxu0
        %4853 = vmatprep.mubr.bf16.mxu0 %v3633
        %4854 = vmatmul.mubr.bf16.gmra.mxu0 %v3632
        %v4855 = vpop.f32.mrf.mxu0
        %v4856 = vadd.f32 %v4695, %v4855
        %v4857 = vpop.f32.mrf.mxu0
        %v4858 = vpop.f32.mrf.mxu0
        %v4859 = vadd.f32 %v4698, %v4858
        %v4860 = vpop.f32.mrf.mxu0
        %4861 = vmatprep.mubr.bf16.mxu0 %v3642
        %4862 = vmatmul.mubr.bf16.gmra.mxu0 %v3641
        %v4863 = vpop.f32.mrf.mxu0
        %v4864 = vadd.f32 %v4703, %v4863
        %v4865 = vpop.f32.mrf.mxu0
        %v4866 = vpop.f32.mrf.mxu0
        %v4867 = vadd.f32 %v4706, %v4866
        %v4868 = vpop.f32.mrf.mxu0
        %4869 = vmatprep.mubr.bf16.mxu0 %v3651
        %4870 = vmatmul.mubr.bf16.gmra.mxu0 %v3650
        %v4871 = vpop.f32.mrf.mxu0
        %v4872 = vadd.f32 %v4711, %v4871
        %v4873 = vpop.f32.mrf.mxu0
        %v4874 = vpop.f32.mrf.mxu0
        %v4875 = vadd.f32 %v4714, %v4874
        %v4876 = vpop.f32.mrf.mxu0
        %4877 = vmatprep.mubr.bf16.mxu0 %v3660
        %4878 = vmatmul.mubr.bf16.gmra.mxu0 %v3659
        %v4879 = vpop.f32.mrf.mxu0
        %v4880 = vadd.f32 %v4719, %v4879
        %v4881 = vpop.f32.mrf.mxu0
        %v4882 = vpop.f32.mrf.mxu0
        %v4883 = vadd.f32 %v4722, %v4882
        %v4884 = vpop.f32.mrf.mxu0
        %4885 = vmatprep.mubr.bf16.mxu0 %v3669
        %4886 = vmatmul.mubr.bf16.gmra.mxu0 %v3668
        %v4887 = vpop.f32.mrf.mxu0
        %v4888 = vadd.f32 %v4727, %v4887
        %v4889 = vpop.f32.mrf.mxu0
        %v4890 = vpop.f32.mrf.mxu0
        %v4891 = vadd.f32 %v4730, %v4890
        %v4892 = vpop.f32.mrf.mxu0
        %4893 = vmatprep.mubr.bf16.mxu0 %v3678
        %4894 = vmatmul.mubr.bf16.gmra.mxu0 %v3677
        %v4895 = vpop.f32.mrf.mxu0
        %v4896 = vadd.f32 %v4735, %v4895
        %v4897 = vpop.f32.mrf.mxu0
        %v4898 = vpop.f32.mrf.mxu0
        %v4899 = vadd.f32 %v4738, %v4898
        %v4900 = vpop.f32.mrf.mxu0
        %4901 = vmatprep.mubr.bf16.mxu0 %v3687
        %4902 = vmatmul.mubr.bf16.gmra.mxu0 %v3686
        %v4903 = vpop.f32.mrf.mxu0
        %v4904 = vadd.f32 %v4743, %v4903
        %v4905 = vpop.f32.mrf.mxu0
        %v4906 = vpop.f32.mrf.mxu0
        %v4907 = vadd.f32 %v4746, %v4906
        %v4908 = vpop.f32.mrf.mxu0
        %4909 = vmatprep.mubr.bf16.mxu0 %v3696
        %4910 = vmatmul.mubr.bf16.gmra.mxu0 %v3695
        %v4911 = vpop.f32.mrf.mxu0
        %v4912 = vadd.f32 %v4751, %v4911
        %v4913 = vpop.f32.mrf.mxu0
        %v4914 = vpop.f32.mrf.mxu0
        %v4915 = vadd.f32 %v4754, %v4914
        %v4916 = vpop.f32.mrf.mxu0
        %4917 = vdwg.mxu0
        %4918 = vmatprep.subr.bf16.mxu0 0
        %4919 = vmatpush1.bf16.msra.mxu0 %v4201
        %4920 = vmatprep.subr.bf16.mxu0 0
        %4921 = vmatpush1.bf16.msra.mxu0 %v4200
        %4922 = vmatprep.subr.bf16.mxu0 0
        %4923 = vmatpush1.bf16.msra.mxu0 %v4199
        %4924 = vmatprep.subr.bf16.mxu0 0
        %4925 = vmatpush1.bf16.msra.mxu0 %v4198
        %4926 = vmatprep.subr.bf16.mxu0 0
        %4927 = vmatpush1.bf16.msra.mxu0 %v4197
        %4928 = vmatprep.subr.bf16.mxu0 0
        %4929 = vmatpush1.bf16.msra.mxu0 %v4196
        %4930 = vmatprep.subr.bf16.mxu0 0
        %4931 = vmatpush1.bf16.msra.mxu0 %v4195
        %4932 = vmatprep.subr.bf16.mxu0 0
        %4933 = vmatpush1.bf16.msra.mxu0 %v4194
        %4934 = vmatprep.subr.bf16.mxu0 0
        %4935 = vmatpush2.bf16.msra.mxu0 0
        %4936 = vmatprep.subr.bf16.mxu0 0
        %4937 = vmatpush2.bf16.msra.mxu0 0
        %4938 = vmatprep.subr.bf16.mxu0 0
        %4939 = vmatpush2.bf16.msra.mxu0 0
        %4940 = vmatprep.subr.bf16.mxu0 0
        %4941 = vmatpush2.bf16.msra.mxu0 0
        %4942 = vmatprep.subr.bf16.mxu0 0
        %4943 = vmatpush2.bf16.msra.mxu0 0
        %4944 = vmatprep.subr.bf16.mxu0 0
        %4945 = vmatpush2.bf16.msra.mxu0 0
        %4946 = vmatprep.subr.bf16.mxu0 0
        %4947 = vmatpush2.bf16.msra.mxu0 0
        %4948 = vmatprep.subr.bf16.mxu0 0
        %4949 = vmatpush2.bf16.msra.mxu0 0
        %4950 = vmatprep.mubr.bf16.mxu0 0
        %4951 = vmatmul.mubr.bf16.gmra.mxu0 %v3562
        %v4952 = vpop.f32.mrf.mxu0
        %v4953 = vadd.f32 %v4792, %v4952
        %v4954 = vpop.f32.mrf.mxu0
        %v4955 = vpop.f32.mrf.mxu0
        %v4956 = vadd.f32 %v4795, %v4955
        %v4957 = vpop.f32.mrf.mxu0
        %4958 = vmatprep.mubr.bf16.mxu0 0
        %4959 = vmatmul.mubr.bf16.gmra.mxu0 %v3571
        %v4960 = vpop.f32.mrf.mxu0
        %v4961 = vadd.f32 %v4800, %v4960
        %v4962 = vpop.f32.mrf.mxu0
        %v4963 = vpop.f32.mrf.mxu0
        %v4964 = vadd.f32 %v4803, %v4963
        %v4965 = vpop.f32.mrf.mxu0
        %4966 = vmatprep.mubr.bf16.mxu0 0
        %4967 = vmatmul.mubr.bf16.gmra.mxu0 %v3580
        %v4968 = vpop.f32.mrf.mxu0
        %v4969 = vadd.f32 %v4808, %v4968
        %v4970 = vpop.f32.mrf.mxu0
        %v4971 = vpop.f32.mrf.mxu0
        %v4972 = vadd.f32 %v4811, %v4971
        %v4973 = vpop.f32.mrf.mxu0
        %4974 = vmatprep.mubr.bf16.mxu0 0
        %4975 = vmatmul.mubr.bf16.gmra.mxu0 %v3589
        %v4976 = vpop.f32.mrf.mxu0
        %v4977 = vadd.f32 %v4816, %v4976
        %v4978 = vpop.f32.mrf.mxu0
        %v4979 = vpop.f32.mrf.mxu0
        %v4980 = vadd.f32 %v4819, %v4979
        %v4981 = vpop.f32.mrf.mxu0
        %4982 = vmatprep.mubr.bf16.mxu0 0
        %4983 = vmatmul.mubr.bf16.gmra.mxu0 %v3598
        %v4984 = vpop.f32.mrf.mxu0
        %v4985 = vadd.f32 %v4824, %v4984
        %v4986 = vpop.f32.mrf.mxu0
        %v4987 = vpop.f32.mrf.mxu0
        %v4988 = vadd.f32 %v4827, %v4987
        %v4989 = vpop.f32.mrf.mxu0
        %4990 = vmatprep.mubr.bf16.mxu0 0
        %4991 = vmatmul.mubr.bf16.gmra.mxu0 %v3607
        %v4992 = vpop.f32.mrf.mxu0
        %v4993 = vadd.f32 %v4832, %v4992
        %v4994 = vpop.f32.mrf.mxu0
        %v4995 = vpop.f32.mrf.mxu0
        %v4996 = vadd.f32 %v4835, %v4995
        %v4997 = vpop.f32.mrf.mxu0
        %4998 = vmatprep.mubr.bf16.mxu0 0
        %4999 = vmatmul.mubr.bf16.gmra.mxu0 %v3616
        %v5000 = vpop.f32.mrf.mxu0
        %v5001 = vadd.f32 %v4840, %v5000
        %v5002 = vpop.f32.mrf.mxu0
        %v5003 = vpop.f32.mrf.mxu0
        %v5004 = vadd.f32 %v4843, %v5003
        %v5005 = vpop.f32.mrf.mxu0
        %5006 = vmatprep.mubr.bf16.mxu0 0
        %5007 = vmatmul.mubr.bf16.gmra.mxu0 %v3625
        %v5008 = vpop.f32.mrf.mxu0
        %v5009 = vadd.f32 %v4848, %v5008
        %v5010 = vpop.f32.mrf.mxu0
        %v5011 = vpop.f32.mrf.mxu0
        %v5012 = vadd.f32 %v4851, %v5011
        %v5013 = vpop.f32.mrf.mxu0
        %5014 = vmatprep.mubr.bf16.mxu0 0
        %5015 = vmatmul.mubr.bf16.gmra.mxu0 %v3634
        %v5016 = vpop.f32.mrf.mxu0
        %v5017 = vadd.f32 %v4856, %v5016
        %v5018 = vpop.f32.mrf.mxu0
        %v5019 = vpop.f32.mrf.mxu0
        %v5020 = vadd.f32 %v4859, %v5019
        %v5021 = vpop.f32.mrf.mxu0
        %5022 = vmatprep.mubr.bf16.mxu0 0
        %5023 = vmatmul.mubr.bf16.gmra.mxu0 %v3643
        %v5024 = vpop.f32.mrf.mxu0
        %v5025 = vadd.f32 %v4864, %v5024
        %v5026 = vpop.f32.mrf.mxu0
        %v5027 = vpop.f32.mrf.mxu0
        %v5028 = vadd.f32 %v4867, %v5027
        %v5029 = vpop.f32.mrf.mxu0
        %5030 = vmatprep.mubr.bf16.mxu0 0
        %5031 = vmatmul.mubr.bf16.gmra.mxu0 %v3652
        %v5032 = vpop.f32.mrf.mxu0
        %v5033 = vadd.f32 %v4872, %v5032
        %v5034 = vpop.f32.mrf.mxu0
        %v5035 = vpop.f32.mrf.mxu0
        %v5036 = vadd.f32 %v4875, %v5035
        %v5037 = vpop.f32.mrf.mxu0
        %5038 = vmatprep.mubr.bf16.mxu0 0
        %5039 = vmatmul.mubr.bf16.gmra.mxu0 %v3661
        %v5040 = vpop.f32.mrf.mxu0
        %v5041 = vadd.f32 %v4880, %v5040
        %v5042 = vpop.f32.mrf.mxu0
        %v5043 = vpop.f32.mrf.mxu0
        %v5044 = vadd.f32 %v4883, %v5043
        %v5045 = vpop.f32.mrf.mxu0
        %5046 = vmatprep.mubr.bf16.mxu0 0
        %5047 = vmatmul.mubr.bf16.gmra.mxu0 %v3670
        %v5048 = vpop.f32.mrf.mxu0
        %v5049 = vadd.f32 %v4888, %v5048
        %v5050 = vpop.f32.mrf.mxu0
        %v5051 = vpop.f32.mrf.mxu0
        %v5052 = vadd.f32 %v4891, %v5051
        %v5053 = vpop.f32.mrf.mxu0
        %5054 = vmatprep.mubr.bf16.mxu0 0
        %5055 = vmatmul.mubr.bf16.gmra.mxu0 %v3679
        %v5056 = vpop.f32.mrf.mxu0
        %v5057 = vadd.f32 %v4896, %v5056
        %v5058 = vpop.f32.mrf.mxu0
        %v5059 = vpop.f32.mrf.mxu0
        %v5060 = vadd.f32 %v4899, %v5059
        %v5061 = vpop.f32.mrf.mxu0
        %5062 = vmatprep.mubr.bf16.mxu0 0
        %5063 = vmatmul.mubr.bf16.gmra.mxu0 %v3688
        %v5064 = vpop.f32.mrf.mxu0
        %v5065 = vadd.f32 %v4904, %v5064
        %v5066 = vpop.f32.mrf.mxu0
        %v5067 = vpop.f32.mrf.mxu0
        %v5068 = vadd.f32 %v4907, %v5067
        %v5069 = vpop.f32.mrf.mxu0
        %5070 = vmatprep.mubr.bf16.mxu0 0
        %5071 = vmatmul.mubr.bf16.gmra.mxu0 %v3697
        %v5072 = vpop.f32.mrf.mxu0
        %v5073 = vadd.f32 %v4912, %v5072
        %v5074 = vpop.f32.mrf.mxu0
        %v5075 = vpop.f32.mrf.mxu0
        %v5076 = vadd.f32 %v4915, %v5075
        %v5077 = vpop.f32.mrf.mxu0
        %5078 = vdwg.mxu0
        %v5079 = vsub.f32 0.0, %v4953
        %v5080 = vsub.f32 0.0, %v4956
        %v5081 = vsub.f32 0.0, %v4961
        %v5082 = vsub.f32 0.0, %v4964
        %v5083 = vsub.f32 0.0, %v4969
        %v5084 = vsub.f32 0.0, %v4972
        %v5085 = vsub.f32 0.0, %v4977
        %v5086 = vsub.f32 0.0, %v4980
        %v5087 = vsub.f32 0.0, %v4985
        %v5088 = vsub.f32 0.0, %v4988
        %v5089 = vsub.f32 0.0, %v4993
        %v5090 = vsub.f32 0.0, %v4996
        %v5091 = vsub.f32 0.0, %v5001
        %v5092 = vsub.f32 0.0, %v5004
        %v5093 = vsub.f32 0.0, %v5009
        %v5094 = vsub.f32 0.0, %v5012
        %v5095 = vsub.f32 0.0, %v5017
        %v5096 = vsub.f32 0.0, %v5020
        %v5097 = vsub.f32 0.0, %v5025
        %v5098 = vsub.f32 0.0, %v5028
        %v5099 = vsub.f32 0.0, %v5033
        %v5100 = vsub.f32 0.0, %v5036
        %v5101 = vsub.f32 0.0, %v5041
        %v5102 = vsub.f32 0.0, %v5044
        %v5103 = vsub.f32 0.0, %v5049
        %v5104 = vsub.f32 0.0, %v5052
        %v5105 = vsub.f32 0.0, %v5057
        %v5106 = vsub.f32 0.0, %v5060
        %v5107 = vsub.f32 0.0, %v5065
        %v5108 = vsub.f32 0.0, %v5068
        %v5109 = vsub.f32 0.0, %v5073
        %v5110 = vsub.f32 0.0, %v5076
        %v5111 = vmul.f32 %v5079, 1.442695
        %v5112 = vpow.pop %v5111
        %v5113 = vmul.f32 %v5080, 1.442695
        %v5114 = vpow.pop %v5113
        %v5115 = vmul.f32 %v5081, 1.442695
        %v5116 = vpow.pop %v5115
        %v5117 = vmul.f32 %v5082, 1.442695
        %v5118 = vpow.pop %v5117
        %v5119 = vmul.f32 %v5083, 1.442695
        %v5120 = vpow.pop %v5119
        %v5121 = vmul.f32 %v5084, 1.442695
        %v5122 = vpow.pop %v5121
        %v5123 = vmul.f32 %v5085, 1.442695
        %v5124 = vpow.pop %v5123
        %v5125 = vmul.f32 %v5086, 1.442695
        %v5126 = vpow.pop %v5125
        %v5127 = vmul.f32 %v5087, 1.442695
        %v5128 = vpow.pop %v5127
        %v5129 = vmul.f32 %v5088, 1.442695
        %v5130 = vpow.pop %v5129
        %v5131 = vmul.f32 %v5089, 1.442695
        %v5132 = vpow.pop %v5131
        %v5133 = vmul.f32 %v5090, 1.442695
        %v5134 = vpow.pop %v5133
        %v5135 = vmul.f32 %v5091, 1.442695
        %v5136 = vpow.pop %v5135
        %v5137 = vmul.f32 %v5092, 1.442695
        %v5138 = vpow.pop %v5137
        %v5139 = vmul.f32 %v5093, 1.442695
        %v5140 = vpow.pop %v5139
        %v5141 = vmul.f32 %v5094, 1.442695
        %v5142 = vpow.pop %v5141
        %v5143 = vmul.f32 %v5095, 1.442695
        %v5144 = vpow.pop %v5143
        %v5145 = vmul.f32 %v5096, 1.442695
        %v5146 = vpow.pop %v5145
        %v5147 = vmul.f32 %v5097, 1.442695
        %v5148 = vpow.pop %v5147
        %v5149 = vmul.f32 %v5098, 1.442695
        %v5150 = vpow.pop %v5149
        %v5151 = vmul.f32 %v5099, 1.442695
        %v5152 = vpow.pop %v5151
        %v5153 = vmul.f32 %v5100, 1.442695
        %v5154 = vpow.pop %v5153
        %v5155 = vmul.f32 %v5101, 1.442695
        %v5156 = vpow.pop %v5155
        %v5157 = vmul.f32 %v5102, 1.442695
        %v5158 = vpow.pop %v5157
        %v5159 = vmul.f32 %v5103, 1.442695
        %v5160 = vpow.pop %v5159
        %v5161 = vmul.f32 %v5104, 1.442695
        %v5162 = vpow.pop %v5161
        %v5163 = vmul.f32 %v5105, 1.442695
        %v5164 = vpow.pop %v5163
        %v5165 = vmul.f32 %v5106, 1.442695
        %v5166 = vpow.pop %v5165
        %v5167 = vmul.f32 %v5107, 1.442695
        %v5168 = vpow.pop %v5167
        %v5169 = vmul.f32 %v5108, 1.442695
        %v5170 = vpow.pop %v5169
        %v5171 = vmul.f32 %v5109, 1.442695
        %v5172 = vpow.pop %v5171
        %v5173 = vmul.f32 %v5110, 1.442695
        %v5174 = vpow.pop %v5173
        %v5175 = vadd.f32 %v5112, 1.0
        %v5176 = vadd.f32 %v5114, 1.0
        %v5177 = vadd.f32 %v5116, 1.0
        %v5178 = vadd.f32 %v5118, 1.0
        %v5179 = vadd.f32 %v5120, 1.0
        %v5180 = vadd.f32 %v5122, 1.0
        %v5181 = vadd.f32 %v5124, 1.0
        %v5182 = vadd.f32 %v5126, 1.0
        %v5183 = vadd.f32 %v5128, 1.0
        %v5184 = vadd.f32 %v5130, 1.0
        %v5185 = vadd.f32 %v5132, 1.0
        %v5186 = vadd.f32 %v5134, 1.0
        %v5187 = vadd.f32 %v5136, 1.0
        %v5188 = vadd.f32 %v5138, 1.0
        %v5189 = vadd.f32 %v5140, 1.0
        %v5190 = vadd.f32 %v5142, 1.0
        %v5191 = vadd.f32 %v5144, 1.0
        %v5192 = vadd.f32 %v5146, 1.0
        %v5193 = vadd.f32 %v5148, 1.0
        %v5194 = vadd.f32 %v5150, 1.0
        %v5195 = vadd.f32 %v5152, 1.0
        %v5196 = vadd.f32 %v5154, 1.0
        %v5197 = vadd.f32 %v5156, 1.0
        %v5198 = vadd.f32 %v5158, 1.0
        %v5199 = vadd.f32 %v5160, 1.0
        %v5200 = vadd.f32 %v5162, 1.0
        %v5201 = vadd.f32 %v5164, 1.0
        %v5202 = vadd.f32 %v5166, 1.0
        %v5203 = vadd.f32 %v5168, 1.0
        %v5204 = vadd.f32 %v5170, 1.0
        %v5205 = vadd.f32 %v5172, 1.0
        %v5206 = vadd.f32 %v5174, 1.0
        %v5207 = vrcp.pop %v5175
        %v5208 = vrcp.pop %v5176
        %v5209 = vrcp.pop %v5177
        %v5210 = vrcp.pop %v5178
        %v5211 = vrcp.pop %v5179
        %v5212 = vrcp.pop %v5180
        %v5213 = vrcp.pop %v5181
        %v5214 = vrcp.pop %v5182
        %v5215 = vrcp.pop %v5183
        %v5216 = vrcp.pop %v5184
        %v5217 = vrcp.pop %v5185
        %v5218 = vrcp.pop %v5186
        %v5219 = vrcp.pop %v5187
        %v5220 = vrcp.pop %v5188
        %v5221 = vrcp.pop %v5189
        %v5222 = vrcp.pop %v5190
        %v5223 = vrcp.pop %v5191
        %v5224 = vrcp.pop %v5192
        %v5225 = vrcp.pop %v5193
        %v5226 = vrcp.pop %v5194
        %v5227 = vrcp.pop %v5195
        %v5228 = vrcp.pop %v5196
        %v5229 = vrcp.pop %v5197
        %v5230 = vrcp.pop %v5198
        %v5231 = vrcp.pop %v5199
        %v5232 = vrcp.pop %v5200
        %v5233 = vrcp.pop %v5201
        %v5234 = vrcp.pop %v5202
        %v5235 = vrcp.pop %v5203
        %v5236 = vrcp.pop %v5204
        %v5237 = vrcp.pop %v5205
        %v5238 = vrcp.pop %v5206
        %v5239 = vmul.f32 %v4953, %v5207
        %v5240 = vmul.f32 %v4956, %v5208
        %v5241 = vmul.f32 %v4961, %v5209
        %v5242 = vmul.f32 %v4964, %v5210
        %v5243 = vmul.f32 %v4969, %v5211
        %v5244 = vmul.f32 %v4972, %v5212
        %v5245 = vmul.f32 %v4977, %v5213
        %v5246 = vmul.f32 %v4980, %v5214
        %v5247 = vmul.f32 %v4985, %v5215
        %v5248 = vmul.f32 %v4988, %v5216
        %v5249 = vmul.f32 %v4993, %v5217
        %v5250 = vmul.f32 %v4996, %v5218
        %v5251 = vmul.f32 %v5001, %v5219
        %v5252 = vmul.f32 %v5004, %v5220
        %v5253 = vmul.f32 %v5009, %v5221
        %v5254 = vmul.f32 %v5012, %v5222
        %v5255 = vmul.f32 %v5017, %v5223
        %v5256 = vmul.f32 %v5020, %v5224
        %v5257 = vmul.f32 %v5025, %v5225
        %v5258 = vmul.f32 %v5028, %v5226
        %v5259 = vmul.f32 %v5033, %v5227
        %v5260 = vmul.f32 %v5036, %v5228
        %v5261 = vmul.f32 %v5041, %v5229
        %v5262 = vmul.f32 %v5044, %v5230
        %v5263 = vmul.f32 %v5049, %v5231
        %v5264 = vmul.f32 %v5052, %v5232
        %v5265 = vmul.f32 %v5057, %v5233
        %v5266 = vmul.f32 %v5060, %v5234
        %v5267 = vmul.f32 %v5065, %v5235
        %v5268 = vmul.f32 %v5068, %v5236
        %v5269 = vmul.f32 %v5073, %v5237
        %v5270 = vmul.f32 %v5076, %v5238
        %vm5271 = vcmask 519168
        %5272 = vst.msk [vmem:[#allocation3] sm:$0xf] %vm5271, 0
        %5273 = vst.msk [vmem:[#allocation3 + $0x4] sm:$0xf] %vm5271, 0
        %5274 = vst.msk [vmem:[#allocation3 + $0x8] sm:$0xf] %vm5271, 0
        %5275 = vst.msk [vmem:[#allocation3 + $0xc] sm:$0xf] %vm5271, 0
        %5276 = vst.msk [vmem:[#allocation3 + $0x10] sm:$0xf] %vm5271, 0
        %5277 = vst.msk [vmem:[#allocation3 + $0x14] sm:$0xf] %vm5271, 0
        %5278 = vst.msk [vmem:[#allocation3 + $0x18] sm:$0xf] %vm5271, 0
        %5279 = vst.msk [vmem:[#allocation3 + $0x1c] sm:$0xf] %vm5271, 0
        %5280 = vst.msk [vmem:[#allocation3 + $0x20] sm:$0xf] %vm5271, 0
        %5281 = vst.msk [vmem:[#allocation3 + $0x24] sm:$0xf] %vm5271, 0
        %5282 = vst.msk [vmem:[#allocation3 + $0x28] sm:$0xf] %vm5271, 0
        %5283 = vst.msk [vmem:[#allocation3 + $0x2c] sm:$0xf] %vm5271, 0
        %5284 = vst.msk [vmem:[#allocation3 + $0x30] sm:$0xf] %vm5271, 0
        %5285 = vst.msk [vmem:[#allocation3 + $0x34] sm:$0xf] %vm5271, 0
        %5286 = vst.msk [vmem:[#allocation3 + $0x38] sm:$0xf] %vm5271, 0
        %5287 = vst.msk [vmem:[#allocation3 + $0x3c] sm:$0xf] %vm5271, 0
        %5288 = vst.msk [vmem:[#allocation3 + $0x40] sm:$0xf] %vm5271, 0
        %5289 = vst.msk [vmem:[#allocation3 + $0x44] sm:$0xf] %vm5271, 0
        %5290 = vst.msk [vmem:[#allocation3 + $0x48] sm:$0xf] %vm5271, 0
        %5291 = vst.msk [vmem:[#allocation3 + $0x4c] sm:$0xf] %vm5271, 0
        %5292 = vst.msk [vmem:[#allocation3 + $0x50] sm:$0xf] %vm5271, 0
        %5293 = vst.msk [vmem:[#allocation3 + $0x54] sm:$0xf] %vm5271, 0
        %5294 = vst.msk [vmem:[#allocation3 + $0x58] sm:$0xf] %vm5271, 0
        %5295 = vst.msk [vmem:[#allocation3 + $0x5c] sm:$0xf] %vm5271, 0
        %5296 = vst.msk [vmem:[#allocation3 + $0x60] sm:$0xf] %vm5271, 0
        %5297 = vst.msk [vmem:[#allocation3 + $0x64] sm:$0xf] %vm5271, 0
        %5298 = vst.msk [vmem:[#allocation3 + $0x68] sm:$0xf] %vm5271, 0
        %5299 = vst.msk [vmem:[#allocation3 + $0x6c] sm:$0xf] %vm5271, 0
        %5300 = vst.msk [vmem:[#allocation3 + $0x70] sm:$0xf] %vm5271, 0
        %5301 = vst.msk [vmem:[#allocation3 + $0x74] sm:$0xf] %vm5271, 0
        %5302 = vst.msk [vmem:[#allocation3 + $0x78] sm:$0xf] %vm5271, 0
        %5303 = vst.msk [vmem:[#allocation3 + $0x7c] sm:$0xf] %vm5271, 0
        %5304 = vst.msk [vmem:[#allocation3 + $0x80] sm:$0xf] %vm5271, 0
        %5305 = vst.msk [vmem:[#allocation3 + $0x84] sm:$0xf] %vm5271, 0
        %5306 = vst.msk [vmem:[#allocation3 + $0x88] sm:$0xf] %vm5271, 0
        %5307 = vst.msk [vmem:[#allocation3 + $0x8c] sm:$0xf] %vm5271, 0
        %5308 = vst.msk [vmem:[#allocation3 + $0x90] sm:$0xf] %vm5271, 0
        %5309 = vst.msk [vmem:[#allocation3 + $0x94] sm:$0xf] %vm5271, 0
        %5310 = vst.msk [vmem:[#allocation3 + $0x98] sm:$0xf] %vm5271, 0
        %5311 = vst.msk [vmem:[#allocation3 + $0x9c] sm:$0xf] %vm5271, 0
        %5312 = vst.msk [vmem:[#allocation3 + $0xa0] sm:$0xf] %vm5271, 0
        %5313 = vst.msk [vmem:[#allocation3 + $0xa4] sm:$0xf] %vm5271, 0
        %5314 = vst.msk [vmem:[#allocation3 + $0xa8] sm:$0xf] %vm5271, 0
        %5315 = vst.msk [vmem:[#allocation3 + $0xac] sm:$0xf] %vm5271, 0
        %5316 = vst.msk [vmem:[#allocation3 + $0xb0] sm:$0xf] %vm5271, 0
        %5317 = vst.msk [vmem:[#allocation3 + $0xb4] sm:$0xf] %vm5271, 0
        %5318 = vst.msk [vmem:[#allocation3 + $0xb8] sm:$0xf] %vm5271, 0
        %5319 = vst.msk [vmem:[#allocation3 + $0xbc] sm:$0xf] %vm5271, 0
        %5320 = vst.msk [vmem:[#allocation3 + $0xc0] sm:$0xf] %vm5271, 0
        %5321 = vst.msk [vmem:[#allocation3 + $0xc4] sm:$0xf] %vm5271, 0
        %5322 = vst.msk [vmem:[#allocation3 + $0xc8] sm:$0xf] %vm5271, 0
        %5323 = vst.msk [vmem:[#allocation3 + $0xcc] sm:$0xf] %vm5271, 0
        %5324 = vst.msk [vmem:[#allocation3 + $0xd0] sm:$0xf] %vm5271, 0
        %5325 = vst.msk [vmem:[#allocation3 + $0xd4] sm:$0xf] %vm5271, 0
        %v5326 = vpack.c.bf16 %v5240, %v5239
        %v5327 = vpack.c.bf16 %v5242, %v5241
        %v5328 = vpack.c.bf16 %v5244, %v5243
        %v5329 = vpack.c.bf16 %v5246, %v5245
        %v5330 = vpack.c.bf16 %v5248, %v5247
        %v5331 = vpack.c.bf16 %v5250, %v5249
        %v5332 = vpack.c.bf16 %v5252, %v5251
        %v5333 = vpack.c.bf16 %v5254, %v5253
        %v5334 = vpack.c.bf16 %v5256, %v5255
        %v5335 = vpack.c.bf16 %v5258, %v5257
        %v5336 = vpack.c.bf16 %v5260, %v5259
        %v5337 = vpack.c.bf16 %v5262, %v5261
        %v5338 = vpack.c.bf16 %v5264, %v5263
        %v5339 = vpack.c.bf16 %v5266, %v5265
        %v5340 = vpack.c.bf16 %v5268, %v5267
        %v5341 = vpack.c.bf16 %v5270, %v5269
        %v5358 = vunpack.c.l.b16 %v5326
        %v5359 = vunpack.c.h.b16 %v5326
        %v5360 = vunpack.c.l.b16 %v5327
        %v5361 = vunpack.c.h.b16 %v5327
        %v5362 = vunpack.c.l.b16 %v5328
        %v5363 = vunpack.c.h.b16 %v5328
        %v5364 = vunpack.c.l.b16 %v5329
        %v5365 = vunpack.c.h.b16 %v5329
        %v5366 = vunpack.c.l.b16 %v5330
        %v5367 = vunpack.c.h.b16 %v5330
        %v5368 = vunpack.c.l.b16 %v5331
        %v5369 = vunpack.c.h.b16 %v5331
        %v5370 = vunpack.c.l.b16 %v5332
        %v5371 = vunpack.c.h.b16 %v5332
        %v5372 = vunpack.c.l.b16 %v5333
        %v5373 = vunpack.c.h.b16 %v5333
        %v5374 = vunpack.c.l.b16 %v5334
        %v5375 = vunpack.c.h.b16 %v5334
        %v5376 = vunpack.c.l.b16 %v5335
        %v5377 = vunpack.c.h.b16 %v5335
        %v5378 = vunpack.c.l.b16 %v5336
        %v5379 = vunpack.c.h.b16 %v5336
        %v5380 = vunpack.c.l.b16 %v5337
        %v5381 = vunpack.c.h.b16 %v5337
        %v5382 = vunpack.c.l.b16 %v5338
        %v5383 = vunpack.c.h.b16 %v5338
        %v5384 = vunpack.c.l.b16 %v5339
        %v5385 = vunpack.c.h.b16 %v5339
        %v5386 = vunpack.c.l.b16 %v5340
        %v5387 = vunpack.c.h.b16 %v5340
        %v5388 = vunpack.c.l.b16 %v5341
        %v5389 = vunpack.c.h.b16 %v5341
        %v5390 = vpack.c.b16 %v5358, %v5358
        %v5391 = vpack.c.b16 %v5359, %v5359
        %v5392 = vpack.c.b16 %v5360, %v5360
        %v5393 = vpack.c.b16 %v5361, %v5361
        %v5394 = vpack.c.b16 %v5362, %v5362
        %v5395 = vpack.c.b16 %v5363, %v5363
        %v5396 = vpack.c.b16 %v5364, %v5364
        %v5397 = vpack.c.b16 %v5365, %v5365
        %v5398 = vpack.c.b16 %v5366, %v5366
        %v5399 = vpack.c.b16 %v5367, %v5367
        %v5400 = vpack.c.b16 %v5368, %v5368
        %v5401 = vpack.c.b16 %v5369, %v5369
        %v5402 = vpack.c.b16 %v5370, %v5370
        %v5403 = vpack.c.b16 %v5371, %v5371
        %v5404 = vpack.c.b16 %v5372, %v5372
        %v5405 = vpack.c.b16 %v5373, %v5373
        %v5406 = vpack.c.b16 %v5374, %v5374
        %v5407 = vpack.c.b16 %v5375, %v5375
        %v5408 = vpack.c.b16 %v5376, %v5376
        %v5409 = vpack.c.b16 %v5377, %v5377
        %v5410 = vpack.c.b16 %v5378, %v5378
        %v5411 = vpack.c.b16 %v5379, %v5379
        %v5412 = vpack.c.b16 %v5380, %v5380
        %v5413 = vpack.c.b16 %v5381, %v5381
        %v5414 = vpack.c.b16 %v5382, %v5382
        %v5415 = vpack.c.b16 %v5383, %v5383
        %v5416 = vpack.c.b16 %v5384, %v5384
        %v5417 = vpack.c.b16 %v5385, %v5385
        %v5418 = vpack.c.b16 %v5386, %v5386
        %v5419 = vpack.c.b16 %v5387, %v5387
        %v5420 = vpack.c.b16 %v5388, %v5388
        %v5421 = vpack.c.b16 %v5389, %v5389
        %vm5422 = vsmask.f32 256
        %vm5423 = vsmask.f32 4368
        %vm5424 = vmor %vm5422, %vm5423
        %v5426 = vshrl.u32 %v5390, 16
        %v5428 = vrot.slane %v5426, 7
        %v5429 = vshll.u32 %v5390, 16
        %v5431 = vor.u32 %v5428, %v5429
        %v5432 = vrot.slane %v5428, 4
        %v5434 = vshrl.u32 %v5391, 16
        %v5436 = vrot.slane %v5434, 7
        %v5437 = vshll.u32 %v5391, 16
        %v5439 = vor.u32 %v5436, %v5437
        %v5440 = vsel %vm5424, %v5432, %v5439
        %v5441 = vrot.slane %v5436, 4
        %v5443 = vshrl.u32 %v5392, 16
        %v5445 = vrot.slane %v5443, 7
        %v5446 = vshll.u32 %v5392, 16
        %v5448 = vor.u32 %v5445, %v5446
        %v5449 = vrot.slane %v5445, 4
        %v5451 = vshrl.u32 %v5393, 16
        %v5453 = vrot.slane %v5451, 7
        %v5454 = vshll.u32 %v5393, 16
        %v5456 = vor.u32 %v5453, %v5454
        %v5457 = vsel %vm5424, %v5449, %v5456
        %v5458 = vrot.slane %v5453, 4
        %v5460 = vshrl.u32 %v5394, 16
        %v5462 = vrot.slane %v5460, 7
        %v5463 = vshll.u32 %v5394, 16
        %v5465 = vor.u32 %v5462, %v5463
        %v5466 = vrot.slane %v5462, 4
        %v5468 = vshrl.u32 %v5395, 16
        %v5470 = vrot.slane %v5468, 7
        %v5471 = vshll.u32 %v5395, 16
        %v5473 = vor.u32 %v5470, %v5471
        %v5474 = vsel %vm5424, %v5466, %v5473
        %v5475 = vrot.slane %v5470, 4
        %v5477 = vshrl.u32 %v5396, 16
        %v5479 = vrot.slane %v5477, 7
        %v5480 = vshll.u32 %v5396, 16
        %v5482 = vor.u32 %v5479, %v5480
        %v5483 = vrot.slane %v5479, 4
        %v5485 = vshrl.u32 %v5397, 16
        %v5487 = vrot.slane %v5485, 7
        %v5488 = vshll.u32 %v5397, 16
        %v5490 = vor.u32 %v5487, %v5488
        %v5491 = vsel %vm5424, %v5483, %v5490
        %v5492 = vrot.slane %v5487, 4
        %v5494 = vshrl.u32 %v5398, 16
        %v5496 = vrot.slane %v5494, 7
        %v5497 = vshll.u32 %v5398, 16
        %v5499 = vor.u32 %v5496, %v5497
        %v5500 = vrot.slane %v5496, 4
        %v5502 = vshrl.u32 %v5399, 16
        %v5504 = vrot.slane %v5502, 7
        %v5505 = vshll.u32 %v5399, 16
        %v5507 = vor.u32 %v5504, %v5505
        %v5508 = vsel %vm5424, %v5500, %v5507
        %v5509 = vrot.slane %v5504, 4
        %v5511 = vshrl.u32 %v5400, 16
        %v5513 = vrot.slane %v5511, 7
        %v5514 = vshll.u32 %v5400, 16
        %v5516 = vor.u32 %v5513, %v5514
        %v5517 = vrot.slane %v5513, 4
        %v5519 = vshrl.u32 %v5401, 16
        %v5521 = vrot.slane %v5519, 7
        %v5522 = vshll.u32 %v5401, 16
        %v5524 = vor.u32 %v5521, %v5522
        %v5525 = vsel %vm5424, %v5517, %v5524
        %v5526 = vrot.slane %v5521, 4
        %v5528 = vshrl.u32 %v5402, 16
        %v5530 = vrot.slane %v5528, 7
        %v5531 = vshll.u32 %v5402, 16
        %v5533 = vor.u32 %v5530, %v5531
        %v5534 = vrot.slane %v5530, 4
        %v5536 = vshrl.u32 %v5403, 16
        %v5538 = vrot.slane %v5536, 7
        %v5539 = vshll.u32 %v5403, 16
        %v5541 = vor.u32 %v5538, %v5539
        %v5542 = vsel %vm5424, %v5534, %v5541
        %v5543 = vrot.slane %v5538, 4
        %v5545 = vshrl.u32 %v5404, 16
        %v5547 = vrot.slane %v5545, 7
        %v5548 = vshll.u32 %v5404, 16
        %v5550 = vor.u32 %v5547, %v5548
        %v5551 = vrot.slane %v5547, 4
        %v5553 = vshrl.u32 %v5405, 16
        %v5555 = vrot.slane %v5553, 7
        %v5556 = vshll.u32 %v5405, 16
        %v5558 = vor.u32 %v5555, %v5556
        %v5559 = vsel %vm5424, %v5551, %v5558
        %v5560 = vrot.slane %v5555, 4
        %v5562 = vshrl.u32 %v5406, 16
        %v5564 = vrot.slane %v5562, 7
        %v5565 = vshll.u32 %v5406, 16
        %v5567 = vor.u32 %v5564, %v5565
        %v5568 = vrot.slane %v5564, 4
        %v5570 = vshrl.u32 %v5407, 16
        %v5572 = vrot.slane %v5570, 7
        %v5573 = vshll.u32 %v5407, 16
        %v5575 = vor.u32 %v5572, %v5573
        %v5576 = vsel %vm5424, %v5568, %v5575
        %v5577 = vrot.slane %v5572, 4
        %v5579 = vshrl.u32 %v5408, 16
        %v5581 = vrot.slane %v5579, 7
        %v5582 = vshll.u32 %v5408, 16
        %v5584 = vor.u32 %v5581, %v5582
        %v5585 = vrot.slane %v5581, 4
        %v5587 = vshrl.u32 %v5409, 16
        %v5589 = vrot.slane %v5587, 7
        %v5590 = vshll.u32 %v5409, 16
        %v5592 = vor.u32 %v5589, %v5590
        %v5593 = vsel %vm5424, %v5585, %v5592
        %v5594 = vrot.slane %v5589, 4
        %v5596 = vshrl.u32 %v5410, 16
        %v5598 = vrot.slane %v5596, 7
        %v5599 = vshll.u32 %v5410, 16
        %v5601 = vor.u32 %v5598, %v5599
        %v5602 = vrot.slane %v5598, 4
        %v5604 = vshrl.u32 %v5411, 16
        %v5606 = vrot.slane %v5604, 7
        %v5607 = vshll.u32 %v5411, 16
        %v5609 = vor.u32 %v5606, %v5607
        %v5610 = vsel %vm5424, %v5602, %v5609
        %v5611 = vrot.slane %v5606, 4
        %v5613 = vshrl.u32 %v5412, 16
        %v5615 = vrot.slane %v5613, 7
        %v5616 = vshll.u32 %v5412, 16
        %v5618 = vor.u32 %v5615, %v5616
        %v5619 = vrot.slane %v5615, 4
        %v5621 = vshrl.u32 %v5413, 16
        %v5623 = vrot.slane %v5621, 7
        %v5624 = vshll.u32 %v5413, 16
        %v5626 = vor.u32 %v5623, %v5624
        %v5627 = vsel %vm5424, %v5619, %v5626
        %v5628 = vrot.slane %v5623, 4
        %v5630 = vshrl.u32 %v5414, 16
        %v5632 = vrot.slane %v5630, 7
        %v5633 = vshll.u32 %v5414, 16
        %v5635 = vor.u32 %v5632, %v5633
        %v5636 = vrot.slane %v5632, 4
        %v5638 = vshrl.u32 %v5415, 16
        %v5640 = vrot.slane %v5638, 7
        %v5641 = vshll.u32 %v5415, 16
        %v5643 = vor.u32 %v5640, %v5641
        %v5644 = vsel %vm5424, %v5636, %v5643
        %v5645 = vrot.slane %v5640, 4
        %v5647 = vshrl.u32 %v5416, 16
        %v5649 = vrot.slane %v5647, 7
        %v5650 = vshll.u32 %v5416, 16
        %v5652 = vor.u32 %v5649, %v5650
        %v5653 = vrot.slane %v5649, 4
        %v5655 = vshrl.u32 %v5417, 16
        %v5657 = vrot.slane %v5655, 7
        %v5658 = vshll.u32 %v5417, 16
        %v5660 = vor.u32 %v5657, %v5658
        %v5661 = vsel %vm5424, %v5653, %v5660
        %v5662 = vrot.slane %v5657, 4
        %v5664 = vshrl.u32 %v5418, 16
        %v5666 = vrot.slane %v5664, 7
        %v5667 = vshll.u32 %v5418, 16
        %v5669 = vor.u32 %v5666, %v5667
        %v5670 = vrot.slane %v5666, 4
        %v5672 = vshrl.u32 %v5419, 16
        %v5674 = vrot.slane %v5672, 7
        %v5675 = vshll.u32 %v5419, 16
        %v5677 = vor.u32 %v5674, %v5675
        %v5678 = vsel %vm5424, %v5670, %v5677
        %v5679 = vrot.slane %v5674, 4
        %v5681 = vshrl.u32 %v5420, 16
        %v5683 = vrot.slane %v5681, 7
        %v5684 = vshll.u32 %v5420, 16
        %v5686 = vor.u32 %v5683, %v5684
        %v5687 = vrot.slane %v5683, 4
        %v5689 = vshrl.u32 %v5421, 16
        %v5691 = vrot.slane %v5689, 7
        %v5692 = vshll.u32 %v5421, 16
        %v5694 = vor.u32 %v5691, %v5692
        %v5695 = vsel %vm5424, %v5687, %v5694
        %v5696 = vrot.slane %v5691, 4
        %s5745 = scalar_lea.vmem [#allocation3], 12
        %vm5746 = vcmask 519168
        %vm5747 = vsmask.f32 7938
        %vm5748 = vmand %vm5746, %vm5747
        %v5749 = vld [vmem:[%s5745] sm:$0xf]
        %v5750 = vsel %vm5748, %v5431, %v5749
        %5751 = vst [vmem:[%s5745] sm:$0xf] %v5750
        %5752 = vst.msk [vmem:[%s5745 + $0x4] sm:$0xf] %vm5271, %v5440
        %vm5753 = vcmask 516096
        %vm5754 = vmand %vm5753, %vm5422
        %v5755 = vld [vmem:[%s5745 + $0x8] sm:$0x1]
        %v5756 = vsel %vm5754, %v5441, %v5755
        %5757 = vst [vmem:[%s5745 + $0x8] sm:$0x1] %v5756
        %v5758 = vld [vmem:[%s5745 + $0xc] sm:$0xf]
        %v5759 = vsel %vm5748, %v5448, %v5758
        %5760 = vst [vmem:[%s5745 + $0xc] sm:$0xf] %v5759
        %5761 = vst.msk [vmem:[%s5745 + $0x10] sm:$0xf] %vm5271, %v5457
        %v5762 = vld [vmem:[%s5745 + $0x14] sm:$0x1]
        %v5763 = vsel %vm5754, %v5458, %v5762
        %5764 = vst [vmem:[%s5745 + $0x14] sm:$0x1] %v5763
        %v5765 = vld [vmem:[%s5745 + $0x18] sm:$0xf]
        %v5766 = vsel %vm5748, %v5465, %v5765
        %5767 = vst [vmem:[%s5745 + $0x18] sm:$0xf] %v5766
        %5768 = vst.msk [vmem:[%s5745 + $0x1c] sm:$0xf] %vm5271, %v5474
        %v5769 = vld [vmem:[%s5745 + $0x20] sm:$0x1]
        %v5770 = vsel %vm5754, %v5475, %v5769
        %5771 = vst [vmem:[%s5745 + $0x20] sm:$0x1] %v5770
        %v5772 = vld [vmem:[%s5745 + $0x24] sm:$0xf]
        %v5773 = vsel %vm5748, %v5482, %v5772
        %5774 = vst [vmem:[%s5745 + $0x24] sm:$0xf] %v5773
        %5775 = vst.msk [vmem:[%s5745 + $0x28] sm:$0xf] %vm5271, %v5491
        %v5776 = vld [vmem:[%s5745 + $0x2c] sm:$0x1]
        %v5777 = vsel %vm5754, %v5492, %v5776
        %5778 = vst [vmem:[%s5745 + $0x2c] sm:$0x1] %v5777
        %v5779 = vld [vmem:[%s5745 + $0x30] sm:$0xf]
        %v5780 = vsel %vm5748, %v5499, %v5779
        %5781 = vst [vmem:[%s5745 + $0x30] sm:$0xf] %v5780
        %5782 = vst.msk [vmem:[%s5745 + $0x34] sm:$0xf] %vm5271, %v5508
        %v5783 = vld [vmem:[%s5745 + $0x38] sm:$0x1]
        %v5784 = vsel %vm5754, %v5509, %v5783
        %5785 = vst [vmem:[%s5745 + $0x38] sm:$0x1] %v5784
        %v5786 = vld [vmem:[%s5745 + $0x3c] sm:$0xf]
        %v5787 = vsel %vm5748, %v5516, %v5786
        %5788 = vst [vmem:[%s5745 + $0x3c] sm:$0xf] %v5787
        %5789 = vst.msk [vmem:[%s5745 + $0x40] sm:$0xf] %vm5271, %v5525
        %v5790 = vld [vmem:[%s5745 + $0x44] sm:$0x1]
        %v5791 = vsel %vm5754, %v5526, %v5790
        %5792 = vst [vmem:[%s5745 + $0x44] sm:$0x1] %v5791
        %v5793 = vld [vmem:[%s5745 + $0x48] sm:$0xf]
        %v5794 = vsel %vm5748, %v5533, %v5793
        %5795 = vst [vmem:[%s5745 + $0x48] sm:$0xf] %v5794
        %5796 = vst.msk [vmem:[%s5745 + $0x4c] sm:$0xf] %vm5271, %v5542
        %v5797 = vld [vmem:[%s5745 + $0x50] sm:$0x1]
        %v5798 = vsel %vm5754, %v5543, %v5797
        %5799 = vst [vmem:[%s5745 + $0x50] sm:$0x1] %v5798
        %v5800 = vld [vmem:[%s5745 + $0x54] sm:$0xf]
        %v5801 = vsel %vm5748, %v5550, %v5800
        %5802 = vst [vmem:[%s5745 + $0x54] sm:$0xf] %v5801
        %5803 = vst.msk [vmem:[%s5745 + $0x58] sm:$0xf] %vm5271, %v5559
        %v5804 = vld [vmem:[%s5745 + $0x5c] sm:$0x1]
        %v5805 = vsel %vm5754, %v5560, %v5804
        %5806 = vst [vmem:[%s5745 + $0x5c] sm:$0x1] %v5805
        %v5807 = vld [vmem:[%s5745 + $0x60] sm:$0xf]
        %v5808 = vsel %vm5748, %v5567, %v5807
        %5809 = vst [vmem:[%s5745 + $0x60] sm:$0xf] %v5808
        %5810 = vst.msk [vmem:[%s5745 + $0x64] sm:$0xf] %vm5271, %v5576
        %v5811 = vld [vmem:[%s5745 + $0x68] sm:$0x1]
        %v5812 = vsel %vm5754, %v5577, %v5811
        %5813 = vst [vmem:[%s5745 + $0x68] sm:$0x1] %v5812
        %v5814 = vld [vmem:[%s5745 + $0x6c] sm:$0xf]
        %v5815 = vsel %vm5748, %v5584, %v5814
        %5816 = vst [vmem:[%s5745 + $0x6c] sm:$0xf] %v5815
        %5817 = vst.msk [vmem:[%s5745 + $0x70] sm:$0xf] %vm5271, %v5593
        %v5818 = vld [vmem:[%s5745 + $0x74] sm:$0x1]
        %v5819 = vsel %vm5754, %v5594, %v5818
        %5820 = vst [vmem:[%s5745 + $0x74] sm:$0x1] %v5819
        %v5821 = vld [vmem:[%s5745 + $0x78] sm:$0xf]
        %v5822 = vsel %vm5748, %v5601, %v5821
        %5823 = vst [vmem:[%s5745 + $0x78] sm:$0xf] %v5822
        %5824 = vst.msk [vmem:[%s5745 + $0x7c] sm:$0xf] %vm5271, %v5610
        %v5825 = vld [vmem:[%s5745 + $0x80] sm:$0x1]
        %v5826 = vsel %vm5754, %v5611, %v5825
        %5827 = vst [vmem:[%s5745 + $0x80] sm:$0x1] %v5826
        %v5828 = vld [vmem:[%s5745 + $0x84] sm:$0xf]
        %v5829 = vsel %vm5748, %v5618, %v5828
        %5830 = vst [vmem:[%s5745 + $0x84] sm:$0xf] %v5829
        %5831 = vst.msk [vmem:[%s5745 + $0x88] sm:$0xf] %vm5271, %v5627
        %v5832 = vld [vmem:[%s5745 + $0x8c] sm:$0x1]
        %v5833 = vsel %vm5754, %v5628, %v5832
        %5834 = vst [vmem:[%s5745 + $0x8c] sm:$0x1] %v5833
        %v5835 = vld [vmem:[%s5745 + $0x90] sm:$0xf]
        %v5836 = vsel %vm5748, %v5635, %v5835
        %5837 = vst [vmem:[%s5745 + $0x90] sm:$0xf] %v5836
        %5838 = vst.msk [vmem:[%s5745 + $0x94] sm:$0xf] %vm5271, %v5644
        %v5839 = vld [vmem:[%s5745 + $0x98] sm:$0x1]
        %v5840 = vsel %vm5754, %v5645, %v5839
        %5841 = vst [vmem:[%s5745 + $0x98] sm:$0x1] %v5840
        %v5842 = vld [vmem:[%s5745 + $0x9c] sm:$0xf]
        %v5843 = vsel %vm5748, %v5652, %v5842
        %5844 = vst [vmem:[%s5745 + $0x9c] sm:$0xf] %v5843
        %5845 = vst.msk [vmem:[%s5745 + $0xa0] sm:$0xf] %vm5271, %v5661
        %v5846 = vld [vmem:[%s5745 + $0xa4] sm:$0x1]
        %v5847 = vsel %vm5754, %v5662, %v5846
        %5848 = vst [vmem:[%s5745 + $0xa4] sm:$0x1] %v5847
        %v5849 = vld [vmem:[%s5745 + $0xa8] sm:$0xf]
        %v5850 = vsel %vm5748, %v5669, %v5849
        %5851 = vst [vmem:[%s5745 + $0xa8] sm:$0xf] %v5850
        %5852 = vst.msk [vmem:[%s5745 + $0xac] sm:$0xf] %vm5271, %v5678
        %v5853 = vld [vmem:[%s5745 + $0xb0] sm:$0x1]
        %v5854 = vsel %vm5754, %v5679, %v5853
        %5855 = vst [vmem:[%s5745 + $0xb0] sm:$0x1] %v5854
        %v5856 = vld [vmem:[%s5745 + $0xb4] sm:$0xf]
        %v5857 = vsel %vm5748, %v5686, %v5856
        %5858 = vst [vmem:[%s5745 + $0xb4] sm:$0xf] %v5857
        %5859 = vst.msk [vmem:[%s5745 + $0xb8] sm:$0xf] %vm5271, %v5695
        %v5860 = vld [vmem:[%s5745 + $0xbc] sm:$0x1]
        %v5861 = vsel %vm5754, %v5696, %v5860
        %5862 = vst [vmem:[%s5745 + $0xbc] sm:$0x1] %v5861
        %v5863 = vld [vmem:[#allocation3] sm:$0xf]
        %v5864 = vld [vmem:[#allocation3 + $0x4] sm:$0xf]
        %v5865 = vld [vmem:[#allocation3 + $0xc] sm:$0xf]
        %v5866 = vld [vmem:[#allocation3 + $0x10] sm:$0xf]
        %v5867 = vld [vmem:[#allocation3 + $0x18] sm:$0xf]
        %v5868 = vld [vmem:[#allocation3 + $0x1c] sm:$0xf]
        %v5869 = vld [vmem:[#allocation3 + $0x24] sm:$0xf]
        %v5870 = vld [vmem:[#allocation3 + $0x28] sm:$0xf]
        %v5871 = vld [vmem:[#allocation3 + $0x30] sm:$0xf]
        %v5872 = vld [vmem:[#allocation3 + $0x34] sm:$0xf]
        %v5873 = vld [vmem:[#allocation3 + $0x3c] sm:$0xf]
        %v5874 = vld [vmem:[#allocation3 + $0x40] sm:$0xf]
        %v5875 = vld [vmem:[#allocation3 + $0x48] sm:$0xf]
        %v5876 = vld [vmem:[#allocation3 + $0x4c] sm:$0xf]
        %v5877 = vld [vmem:[#allocation3 + $0x54] sm:$0xf]
        %v5878 = vld [vmem:[#allocation3 + $0x58] sm:$0xf]
        %v5879 = vld [vmem:[#allocation3 + $0x60] sm:$0xf]
        %v5880 = vld [vmem:[#allocation3 + $0x64] sm:$0xf]
        %v5881 = vld [vmem:[#allocation3 + $0x6c] sm:$0xf]
        %v5882 = vld [vmem:[#allocation3 + $0x70] sm:$0xf]
        %v5883 = vld [vmem:[#allocation3 + $0x78] sm:$0xf]
        %v5884 = vld [vmem:[#allocation3 + $0x7c] sm:$0xf]
        %v5885 = vld [vmem:[#allocation3 + $0x84] sm:$0xf]
        %v5886 = vld [vmem:[#allocation3 + $0x88] sm:$0xf]
        %v5887 = vld [vmem:[#allocation3 + $0x90] sm:$0xf]
        %v5888 = vld [vmem:[#allocation3 + $0x94] sm:$0xf]
        %v5889 = vld [vmem:[#allocation3 + $0x9c] sm:$0xf]
        %v5890 = vld [vmem:[#allocation3 + $0xa0] sm:$0xf]
        %v5891 = vld [vmem:[#allocation3 + $0xa8] sm:$0xf]
        %v5892 = vld [vmem:[#allocation3 + $0xac] sm:$0xf]
        %v5893 = vld [vmem:[#allocation3 + $0xb4] sm:$0xf]
        %v5894 = vld [vmem:[#allocation3 + $0xb8] sm:$0xf]
        %5895 = vst.msk [vmem:[#allocation4] sm:$0xf] %vm5271, %v5863
        %5896 = vst.msk [vmem:[#allocation4 + $0x14] sm:$0xf] %vm5271, %v5864
        %5897 = vst.msk [vmem:[#allocation4 + $0x28] sm:$0xf] %vm5271, %v5865
        %5898 = vst.msk [vmem:[#allocation4 + $0x3c] sm:$0xf] %vm5271, %v5866
        %5899 = vst.msk [vmem:[#allocation4 + $0x50] sm:$0xf] %vm5271, %v5867
        %5900 = vst.msk [vmem:[#allocation4 + $0x64] sm:$0xf] %vm5271, %v5868
        %5901 = vst.msk [vmem:[#allocation4 + $0x78] sm:$0xf] %vm5271, %v5869
        %5902 = vst.msk [vmem:[#allocation4 + $0x8c] sm:$0xf] %vm5271, %v5870
        %5903 = vst.msk [vmem:[#allocation4 + $0xa0] sm:$0xf] %vm5271, %v5871
        %5904 = vst.msk [vmem:[#allocation4 + $0xb4] sm:$0xf] %vm5271, %v5872
        %5905 = vst.msk [vmem:[#allocation4 + $0xc8] sm:$0xf] %vm5271, %v5873
        %5906 = vst.msk [vmem:[#allocation4 + $0xdc] sm:$0xf] %vm5271, %v5874
        %5907 = vst.msk [vmem:[#allocation4 + $0xf0] sm:$0xf] %vm5271, %v5875
        %5908 = vst.msk [vmem:[#allocation4 + $0x104] sm:$0xf] %vm5271, %v5876
        %5909 = vst.msk [vmem:[#allocation4 + $0x118] sm:$0xf] %vm5271, %v5877
        %5910 = vst.msk [vmem:[#allocation4 + $0x12c] sm:$0xf] %vm5271, %v5878
        %5911 = vst.msk [vmem:[#allocation4 + $0x140] sm:$0xf] %vm5271, %v5879
        %5912 = vst.msk [vmem:[#allocation4 + $0x154] sm:$0xf] %vm5271, %v5880
        %5913 = vst.msk [vmem:[#allocation4 + $0x168] sm:$0xf] %vm5271, %v5881
        %5914 = vst.msk [vmem:[#allocation4 + $0x17c] sm:$0xf] %vm5271, %v5882
        %5915 = vst.msk [vmem:[#allocation4 + $0x190] sm:$0xf] %vm5271, %v5883
        %5916 = vst.msk [vmem:[#allocation4 + $0x1a4] sm:$0xf] %vm5271, %v5884
        %5917 = vst.msk [vmem:[#allocation4 + $0x1b8] sm:$0xf] %vm5271, %v5885
        %5918 = vst.msk [vmem:[#allocation4 + $0x1cc] sm:$0xf] %vm5271, %v5886
        %5919 = vst.msk [vmem:[#allocation4 + $0x1e0] sm:$0xf] %vm5271, %v5887
        %5920 = vst.msk [vmem:[#allocation4 + $0x1f4] sm:$0xf] %vm5271, %v5888
        %5921 = vst.msk [vmem:[#allocation4 + $0x208] sm:$0xf] %vm5271, %v5889
        %5922 = vst.msk [vmem:[#allocation4 + $0x21c] sm:$0xf] %vm5271, %v5890
        %5923 = vst.msk [vmem:[#allocation4 + $0x230] sm:$0xf] %vm5271, %v5891
        %5924 = vst.msk [vmem:[#allocation4 + $0x244] sm:$0xf] %vm5271, %v5892
        %5925 = vst.msk [vmem:[#allocation4 + $0x258] sm:$0xf] %vm5271, %v5893
        %5926 = vst.msk [vmem:[#allocation4 + $0x26c] sm:$0xf] %vm5271, %v5894
        %v5927 = vld [vmem:[#allocation3] sm:$0xf]
        %v5928 = vld [vmem:[#allocation3 + $0x4] sm:$0xf]
        %v5929 = vld [vmem:[#allocation3 + $0x8] sm:$0x1]
        %v5930 = vld [vmem:[#allocation3 + $0xc] sm:$0xf]
        %v5931 = vld [vmem:[#allocation3 + $0x10] sm:$0xf]
        %v5932 = vld [vmem:[#allocation3 + $0x14] sm:$0x1]
        %v5933 = vld [vmem:[#allocation3 + $0x18] sm:$0xf]
        %v5934 = vld [vmem:[#allocation3 + $0x1c] sm:$0xf]
        %v5935 = vld [vmem:[#allocation3 + $0x20] sm:$0x1]
        %v5936 = vld [vmem:[#allocation3 + $0x24] sm:$0xf]
        %v5937 = vld [vmem:[#allocation3 + $0x28] sm:$0xf]
        %v5938 = vld [vmem:[#allocation3 + $0x2c] sm:$0x1]
        %v5939 = vld [vmem:[#allocation3 + $0x30] sm:$0xf]
        %v5940 = vld [vmem:[#allocation3 + $0x34] sm:$0xf]
        %v5941 = vld [vmem:[#allocation3 + $0x38] sm:$0x1]
        %v5942 = vld [vmem:[#allocation3 + $0x3c] sm:$0xf]
        %v5943 = vld [vmem:[#allocation3 + $0x40] sm:$0xf]
        %v5944 = vld [vmem:[#allocation3 + $0x44] sm:$0x1]
        %v5945 = vld [vmem:[#allocation3 + $0x48] sm:$0xf]
        %v5946 = vld [vmem:[#allocation3 + $0x4c] sm:$0xf]
        %v5947 = vld [vmem:[#allocation3 + $0x50] sm:$0x1]
        %v5948 = vld [vmem:[#allocation3 + $0x54] sm:$0xf]
        %v5949 = vld [vmem:[#allocation3 + $0x58] sm:$0xf]
        %v5950 = vld [vmem:[#allocation3 + $0x5c] sm:$0x1]
        %v5951 = vld [vmem:[#allocation3 + $0x60] sm:$0xf]
        %v5952 = vld [vmem:[#allocation3 + $0x64] sm:$0xf]
        %v5953 = vld [vmem:[#allocation3 + $0x68] sm:$0x1]
        %v5954 = vld [vmem:[#allocation3 + $0x6c] sm:$0xf]
        %v5955 = vld [vmem:[#allocation3 + $0x70] sm:$0xf]
        %v5956 = vld [vmem:[#allocation3 + $0x74] sm:$0x1]
        %v5957 = vld [vmem:[#allocation3 + $0x78] sm:$0xf]
        %v5958 = vld [vmem:[#allocation3 + $0x7c] sm:$0xf]
        %v5959 = vld [vmem:[#allocation3 + $0x80] sm:$0x1]
        %v5960 = vld [vmem:[#allocation3 + $0x84] sm:$0xf]
        %v5961 = vld [vmem:[#allocation3 + $0x88] sm:$0xf]
        %v5962 = vld [vmem:[#allocation3 + $0x8c] sm:$0x1]
        %v5963 = vld [vmem:[#allocation3 + $0x90] sm:$0xf]
        %v5964 = vld [vmem:[#allocation3 + $0x94] sm:$0xf]
        %v5965 = vld [vmem:[#allocation3 + $0x98] sm:$0x1]
        %v5966 = vld [vmem:[#allocation3 + $0x9c] sm:$0xf]
        %v5967 = vld [vmem:[#allocation3 + $0xa0] sm:$0xf]
        %v5968 = vld [vmem:[#allocation3 + $0xa4] sm:$0x1]
        %v5969 = vld [vmem:[#allocation3 + $0xa8] sm:$0xf]
        %v5970 = vld [vmem:[#allocation3 + $0xac] sm:$0xf]
        %v5971 = vld [vmem:[#allocation3 + $0xb0] sm:$0x1]
        %v5972 = vld [vmem:[#allocation3 + $0xb4] sm:$0xf]
        %v5973 = vld [vmem:[#allocation3 + $0xb8] sm:$0xf]
        %v5974 = vld [vmem:[#allocation3 + $0xbc] sm:$0x1]
        %v5976 = vshrl.u32 %v5927, 16
        %v5978 = vrot.slane %v5976, 4
        %v5979 = vshll.u32 %v5927, 16
        %v5981 = vrot.slane %v5979, 5
        %v5982 = vor.u32 %v5978, %v5981
        %v5983 = vrot.slane %v5982, 4
        %v5985 = vshll.u32 %v5928, 16
        %v5987 = vrot.slane %v5985, 5
        %v5988 = vsel %vm405, %v5983, %v5987
        %v5989 = vshrl.u32 %v5928, 16
        %v5991 = vrot.slane %v5989, 4
        %v5992 = vor.u32 %v5991, %v5987
        %v5993 = vrot.slane %v5992, 4
        %v5995 = vshll.u32 %v5929, 16
        %v5997 = vrot.slane %v5995, 5
        %v5998 = vsel %vm405, %v5993, %v5997
        %v6000 = vshrl.u32 %v5930, 16
        %v6002 = vrot.slane %v6000, 4
        %v6003 = vshll.u32 %v5930, 16
        %v6005 = vrot.slane %v6003, 5
        %v6006 = vor.u32 %v6002, %v6005
        %v6007 = vrot.slane %v6006, 4
        %v6009 = vshll.u32 %v5931, 16
        %v6011 = vrot.slane %v6009, 5
        %v6012 = vsel %vm405, %v6007, %v6011
        %v6013 = vshrl.u32 %v5931, 16
        %v6015 = vrot.slane %v6013, 4
        %v6016 = vor.u32 %v6015, %v6011
        %v6017 = vrot.slane %v6016, 4
        %v6019 = vshll.u32 %v5932, 16
        %v6021 = vrot.slane %v6019, 5
        %v6022 = vsel %vm405, %v6017, %v6021
        %v6024 = vshrl.u32 %v5933, 16
        %v6026 = vrot.slane %v6024, 4
        %v6027 = vshll.u32 %v5933, 16
        %v6029 = vrot.slane %v6027, 5
        %v6030 = vor.u32 %v6026, %v6029
        %v6031 = vrot.slane %v6030, 4
        %v6033 = vshll.u32 %v5934, 16
        %v6035 = vrot.slane %v6033, 5
        %v6036 = vsel %vm405, %v6031, %v6035
        %v6037 = vshrl.u32 %v5934, 16
        %v6039 = vrot.slane %v6037, 4
        %v6040 = vor.u32 %v6039, %v6035
        %v6041 = vrot.slane %v6040, 4
        %v6043 = vshll.u32 %v5935, 16
        %v6045 = vrot.slane %v6043, 5
        %v6046 = vsel %vm405, %v6041, %v6045
        %v6048 = vshrl.u32 %v5936, 16
        %v6050 = vrot.slane %v6048, 4
        %v6051 = vshll.u32 %v5936, 16
        %v6053 = vrot.slane %v6051, 5
        %v6054 = vor.u32 %v6050, %v6053
        %v6055 = vrot.slane %v6054, 4
        %v6057 = vshll.u32 %v5937, 16
        %v6059 = vrot.slane %v6057, 5
        %v6060 = vsel %vm405, %v6055, %v6059
        %v6061 = vshrl.u32 %v5937, 16
        %v6063 = vrot.slane %v6061, 4
        %v6064 = vor.u32 %v6063, %v6059
        %v6065 = vrot.slane %v6064, 4
        %v6067 = vshll.u32 %v5938, 16
        %v6069 = vrot.slane %v6067, 5
        %v6070 = vsel %vm405, %v6065, %v6069
        %v6072 = vshrl.u32 %v5939, 16
        %v6074 = vrot.slane %v6072, 4
        %v6075 = vshll.u32 %v5939, 16
        %v6077 = vrot.slane %v6075, 5
        %v6078 = vor.u32 %v6074, %v6077
        %v6079 = vrot.slane %v6078, 4
        %v6081 = vshll.u32 %v5940, 16
        %v6083 = vrot.slane %v6081, 5
        %v6084 = vsel %vm405, %v6079, %v6083
        %v6085 = vshrl.u32 %v5940, 16
        %v6087 = vrot.slane %v6085, 4
        %v6088 = vor.u32 %v6087, %v6083
        %v6089 = vrot.slane %v6088, 4
        %v6091 = vshll.u32 %v5941, 16
        %v6093 = vrot.slane %v6091, 5
        %v6094 = vsel %vm405, %v6089, %v6093
        %v6096 = vshrl.u32 %v5942, 16
        %v6098 = vrot.slane %v6096, 4
        %v6099 = vshll.u32 %v5942, 16
        %v6101 = vrot.slane %v6099, 5
        %v6102 = vor.u32 %v6098, %v6101
        %v6103 = vrot.slane %v6102, 4
        %v6105 = vshll.u32 %v5943, 16
        %v6107 = vrot.slane %v6105, 5
        %v6108 = vsel %vm405, %v6103, %v6107
        %v6109 = vshrl.u32 %v5943, 16
        %v6111 = vrot.slane %v6109, 4
        %v6112 = vor.u32 %v6111, %v6107
        %v6113 = vrot.slane %v6112, 4
        %v6115 = vshll.u32 %v5944, 16
        %v6117 = vrot.slane %v6115, 5
        %v6118 = vsel %vm405, %v6113, %v6117
        %v6120 = vshrl.u32 %v5945, 16
        %v6122 = vrot.slane %v6120, 4
        %v6123 = vshll.u32 %v5945, 16
        %v6125 = vrot.slane %v6123, 5
        %v6126 = vor.u32 %v6122, %v6125
        %v6127 = vrot.slane %v6126, 4
        %v6129 = vshll.u32 %v5946, 16
        %v6131 = vrot.slane %v6129, 5
        %v6132 = vsel %vm405, %v6127, %v6131
        %v6133 = vshrl.u32 %v5946, 16
        %v6135 = vrot.slane %v6133, 4
        %v6136 = vor.u32 %v6135, %v6131
        %v6137 = vrot.slane %v6136, 4
        %v6139 = vshll.u32 %v5947, 16
        %v6141 = vrot.slane %v6139, 5
        %v6142 = vsel %vm405, %v6137, %v6141
        %v6144 = vshrl.u32 %v5948, 16
        %v6146 = vrot.slane %v6144, 4
        %v6147 = vshll.u32 %v5948, 16
        %v6149 = vrot.slane %v6147, 5
        %v6150 = vor.u32 %v6146, %v6149
        %v6151 = vrot.slane %v6150, 4
        %v6153 = vshll.u32 %v5949, 16
        %v6155 = vrot.slane %v6153, 5
        %v6156 = vsel %vm405, %v6151, %v6155
        %v6157 = vshrl.u32 %v5949, 16
        %v6159 = vrot.slane %v6157, 4
        %v6160 = vor.u32 %v6159, %v6155
        %v6161 = vrot.slane %v6160, 4
        %v6163 = vshll.u32 %v5950, 16
        %v6165 = vrot.slane %v6163, 5
        %v6166 = vsel %vm405, %v6161, %v6165
        %v6168 = vshrl.u32 %v5951, 16
        %v6170 = vrot.slane %v6168, 4
        %v6171 = vshll.u32 %v5951, 16
        %v6173 = vrot.slane %v6171, 5
        %v6174 = vor.u32 %v6170, %v6173
        %v6175 = vrot.slane %v6174, 4
        %v6177 = vshll.u32 %v5952, 16
        %v6179 = vrot.slane %v6177, 5
        %v6180 = vsel %vm405, %v6175, %v6179
        %v6181 = vshrl.u32 %v5952, 16
        %v6183 = vrot.slane %v6181, 4
        %v6184 = vor.u32 %v6183, %v6179
        %v6185 = vrot.slane %v6184, 4
        %v6187 = vshll.u32 %v5953, 16
        %v6189 = vrot.slane %v6187, 5
        %v6190 = vsel %vm405, %v6185, %v6189
        %v6192 = vshrl.u32 %v5954, 16
        %v6194 = vrot.slane %v6192, 4
        %v6195 = vshll.u32 %v5954, 16
        %v6197 = vrot.slane %v6195, 5
        %v6198 = vor.u32 %v6194, %v6197
        %v6199 = vrot.slane %v6198, 4
        %v6201 = vshll.u32 %v5955, 16
        %v6203 = vrot.slane %v6201, 5
        %v6204 = vsel %vm405, %v6199, %v6203
        %v6205 = vshrl.u32 %v5955, 16
        %v6207 = vrot.slane %v6205, 4
        %v6208 = vor.u32 %v6207, %v6203
        %v6209 = vrot.slane %v6208, 4
        %v6211 = vshll.u32 %v5956, 16
        %v6213 = vrot.slane %v6211, 5
        %v6214 = vsel %vm405, %v6209, %v6213
        %v6216 = vshrl.u32 %v5957, 16
        %v6218 = vrot.slane %v6216, 4
        %v6219 = vshll.u32 %v5957, 16
        %v6221 = vrot.slane %v6219, 5
        %v6222 = vor.u32 %v6218, %v6221
        %v6223 = vrot.slane %v6222, 4
        %v6225 = vshll.u32 %v5958, 16
        %v6227 = vrot.slane %v6225, 5
        %v6228 = vsel %vm405, %v6223, %v6227
        %v6229 = vshrl.u32 %v5958, 16
        %v6231 = vrot.slane %v6229, 4
        %v6232 = vor.u32 %v6231, %v6227
        %v6233 = vrot.slane %v6232, 4
        %v6235 = vshll.u32 %v5959, 16
        %v6237 = vrot.slane %v6235, 5
        %v6238 = vsel %vm405, %v6233, %v6237
        %v6240 = vshrl.u32 %v5960, 16
        %v6242 = vrot.slane %v6240, 4
        %v6243 = vshll.u32 %v5960, 16
        %v6245 = vrot.slane %v6243, 5
        %v6246 = vor.u32 %v6242, %v6245
        %v6247 = vrot.slane %v6246, 4
        %v6249 = vshll.u32 %v5961, 16
        %v6251 = vrot.slane %v6249, 5
        %v6252 = vsel %vm405, %v6247, %v6251
        %v6253 = vshrl.u32 %v5961, 16
        %v6255 = vrot.slane %v6253, 4
        %v6256 = vor.u32 %v6255, %v6251
        %v6257 = vrot.slane %v6256, 4
        %v6259 = vshll.u32 %v5962, 16
        %v6261 = vrot.slane %v6259, 5
        %v6262 = vsel %vm405, %v6257, %v6261
        %v6264 = vshrl.u32 %v5963, 16
        %v6266 = vrot.slane %v6264, 4
        %v6267 = vshll.u32 %v5963, 16
        %v6269 = vrot.slane %v6267, 5
        %v6270 = vor.u32 %v6266, %v6269
        %v6271 = vrot.slane %v6270, 4
        %v6273 = vshll.u32 %v5964, 16
        %v6275 = vrot.slane %v6273, 5
        %v6276 = vsel %vm405, %v6271, %v6275
        %v6277 = vshrl.u32 %v5964, 16
        %v6279 = vrot.slane %v6277, 4
        %v6280 = vor.u32 %v6279, %v6275
        %v6281 = vrot.slane %v6280, 4
        %v6283 = vshll.u32 %v5965, 16
        %v6285 = vrot.slane %v6283, 5
        %v6286 = vsel %vm405, %v6281, %v6285
        %v6288 = vshrl.u32 %v5966, 16
        %v6290 = vrot.slane %v6288, 4
        %v6291 = vshll.u32 %v5966, 16
        %v6293 = vrot.slane %v6291, 5
        %v6294 = vor.u32 %v6290, %v6293
        %v6295 = vrot.slane %v6294, 4
        %v6297 = vshll.u32 %v5967, 16
        %v6299 = vrot.slane %v6297, 5
        %v6300 = vsel %vm405, %v6295, %v6299
        %v6301 = vshrl.u32 %v5967, 16
        %v6303 = vrot.slane %v6301, 4
        %v6304 = vor.u32 %v6303, %v6299
        %v6305 = vrot.slane %v6304, 4
        %v6307 = vshll.u32 %v5968, 16
        %v6309 = vrot.slane %v6307, 5
        %v6310 = vsel %vm405, %v6305, %v6309
        %v6312 = vshrl.u32 %v5969, 16
        %v6314 = vrot.slane %v6312, 4
        %v6315 = vshll.u32 %v5969, 16
        %v6317 = vrot.slane %v6315, 5
        %v6318 = vor.u32 %v6314, %v6317
        %v6319 = vrot.slane %v6318, 4
        %v6321 = vshll.u32 %v5970, 16
        %v6323 = vrot.slane %v6321, 5
        %v6324 = vsel %vm405, %v6319, %v6323
        %v6325 = vshrl.u32 %v5970, 16
        %v6327 = vrot.slane %v6325, 4
        %v6328 = vor.u32 %v6327, %v6323
        %v6329 = vrot.slane %v6328, 4
        %v6331 = vshll.u32 %v5971, 16
        %v6333 = vrot.slane %v6331, 5
        %v6334 = vsel %vm405, %v6329, %v6333
        %v6336 = vshrl.u32 %v5972, 16
        %v6338 = vrot.slane %v6336, 4
        %v6339 = vshll.u32 %v5972, 16
        %v6341 = vrot.slane %v6339, 5
        %v6342 = vor.u32 %v6338, %v6341
        %v6343 = vrot.slane %v6342, 4
        %v6345 = vshll.u32 %v5973, 16
        %v6347 = vrot.slane %v6345, 5
        %v6348 = vsel %vm405, %v6343, %v6347
        %v6349 = vshrl.u32 %v5973, 16
        %v6351 = vrot.slane %v6349, 4
        %v6352 = vor.u32 %v6351, %v6347
        %v6353 = vrot.slane %v6352, 4
        %v6355 = vshll.u32 %v5974, 16
        %v6357 = vrot.slane %v6355, 5
        %v6358 = vsel %vm405, %v6353, %v6357
        %6359 = vrot.lane.b32.xlu0 %v5988, 64
        %v6360 = vpop.permute.xlu0 %6359
        %6361 = vrot.lane.b32.xlu0 %v5998, 64
        %v6362 = vpop.permute.xlu0 %6361
        %6363 = vrot.lane.b32.xlu0 %v6012, 64
        %v6364 = vpop.permute.xlu0 %6363
        %6365 = vrot.lane.b32.xlu0 %v6022, 64
        %v6366 = vpop.permute.xlu0 %6365
        %6367 = vrot.lane.b32.xlu0 %v6036, 64
        %v6368 = vpop.permute.xlu0 %6367
        %6369 = vrot.lane.b32.xlu0 %v6046, 64
        %v6370 = vpop.permute.xlu0 %6369
        %6371 = vrot.lane.b32.xlu0 %v6060, 64
        %v6372 = vpop.permute.xlu0 %6371
        %6373 = vrot.lane.b32.xlu0 %v6070, 64
        %v6374 = vpop.permute.xlu0 %6373
        %6375 = vrot.lane.b32.xlu0 %v6084, 64
        %v6376 = vpop.permute.xlu0 %6375
        %6377 = vrot.lane.b32.xlu0 %v6094, 64
        %v6378 = vpop.permute.xlu0 %6377
        %6379 = vrot.lane.b32.xlu0 %v6108, 64
        %v6380 = vpop.permute.xlu0 %6379
        %6381 = vrot.lane.b32.xlu0 %v6118, 64
        %v6382 = vpop.permute.xlu0 %6381
        %6383 = vrot.lane.b32.xlu0 %v6132, 64
        %v6384 = vpop.permute.xlu0 %6383
        %6385 = vrot.lane.b32.xlu0 %v6142, 64
        %v6386 = vpop.permute.xlu0 %6385
        %6387 = vrot.lane.b32.xlu0 %v6156, 64
        %v6388 = vpop.permute.xlu0 %6387
        %6389 = vrot.lane.b32.xlu0 %v6166, 64
        %v6390 = vpop.permute.xlu0 %6389
        %6391 = vrot.lane.b32.xlu0 %v6180, 64
        %v6392 = vpop.permute.xlu0 %6391
        %6393 = vrot.lane.b32.xlu0 %v6190, 64
        %v6394 = vpop.permute.xlu0 %6393
        %6395 = vrot.lane.b32.xlu0 %v6204, 64
        %v6396 = vpop.permute.xlu0 %6395
        %6397 = vrot.lane.b32.xlu0 %v6214, 64
        %v6398 = vpop.permute.xlu0 %6397
        %6399 = vrot.lane.b32.xlu0 %v6228, 64
        %v6400 = vpop.permute.xlu0 %6399
        %6401 = vrot.lane.b32.xlu0 %v6238, 64
        %v6402 = vpop.permute.xlu0 %6401
        %6403 = vrot.lane.b32.xlu0 %v6252, 64
        %v6404 = vpop.permute.xlu0 %6403
        %6405 = vrot.lane.b32.xlu0 %v6262, 64
        %v6406 = vpop.permute.xlu0 %6405
        %6407 = vrot.lane.b32.xlu0 %v6276, 64
        %v6408 = vpop.permute.xlu0 %6407
        %6409 = vrot.lane.b32.xlu0 %v6286, 64
        %v6410 = vpop.permute.xlu0 %6409
        %6411 = vrot.lane.b32.xlu0 %v6300, 64
        %v6412 = vpop.permute.xlu0 %6411
        %6413 = vrot.lane.b32.xlu0 %v6310, 64
        %v6414 = vpop.permute.xlu0 %6413
        %6415 = vrot.lane.b32.xlu0 %v6324, 64
        %v6416 = vpop.permute.xlu0 %6415
        %6417 = vrot.lane.b32.xlu0 %v6334, 64
        %v6418 = vpop.permute.xlu0 %6417
        %6419 = vrot.lane.b32.xlu0 %v6348, 64
        %v6420 = vpop.permute.xlu0 %6419
        %6421 = vrot.lane.b32.xlu0 %v6358, 64
        %v6422 = vpop.permute.xlu0 %6421
        %vm6455 = vcmask 1043968
        %6456 = vst.msk [vmem:[#allocation4] sm:$0xf] %vm6455, %v6360
        %6457 = vst.msk [vmem:[#allocation4 + $0x14] sm:$0xf] %vm6455, %v6362
        %6458 = vst.msk [vmem:[#allocation4 + $0x28] sm:$0xf] %vm6455, %v6364
        %6459 = vst.msk [vmem:[#allocation4 + $0x3c] sm:$0xf] %vm6455, %v6366
        %6460 = vst.msk [vmem:[#allocation4 + $0x50] sm:$0xf] %vm6455, %v6368
        %6461 = vst.msk [vmem:[#allocation4 + $0x64] sm:$0xf] %vm6455, %v6370
        %6462 = vst.msk [vmem:[#allocation4 + $0x78] sm:$0xf] %vm6455, %v6372
        %6463 = vst.msk [vmem:[#allocation4 + $0x8c] sm:$0xf] %vm6455, %v6374
        %6464 = vst.msk [vmem:[#allocation4 + $0xa0] sm:$0xf] %vm6455, %v6376
        %6465 = vst.msk [vmem:[#allocation4 + $0xb4] sm:$0xf] %vm6455, %v6378
        %6466 = vst.msk [vmem:[#allocation4 + $0xc8] sm:$0xf] %vm6455, %v6380
        %6467 = vst.msk [vmem:[#allocation4 + $0xdc] sm:$0xf] %vm6455, %v6382
        %6468 = vst.msk [vmem:[#allocation4 + $0xf0] sm:$0xf] %vm6455, %v6384
        %6469 = vst.msk [vmem:[#allocation4 + $0x104] sm:$0xf] %vm6455, %v6386
        %6470 = vst.msk [vmem:[#allocation4 + $0x118] sm:$0xf] %vm6455, %v6388
        %6471 = vst.msk [vmem:[#allocation4 + $0x12c] sm:$0xf] %vm6455, %v6390
        %6472 = vst.msk [vmem:[#allocation4 + $0x140] sm:$0xf] %vm6455, %v6392
        %6473 = vst.msk [vmem:[#allocation4 + $0x154] sm:$0xf] %vm6455, %v6394
        %6474 = vst.msk [vmem:[#allocation4 + $0x168] sm:$0xf] %vm6455, %v6396
        %6475 = vst.msk [vmem:[#allocation4 + $0x17c] sm:$0xf] %vm6455, %v6398
        %6476 = vst.msk [vmem:[#allocation4 + $0x190] sm:$0xf] %vm6455, %v6400
        %6477 = vst.msk [vmem:[#allocation4 + $0x1a4] sm:$0xf] %vm6455, %v6402
        %6478 = vst.msk [vmem:[#allocation4 + $0x1b8] sm:$0xf] %vm6455, %v6404
        %6479 = vst.msk [vmem:[#allocation4 + $0x1cc] sm:$0xf] %vm6455, %v6406
        %6480 = vst.msk [vmem:[#allocation4 + $0x1e0] sm:$0xf] %vm6455, %v6408
        %6481 = vst.msk [vmem:[#allocation4 + $0x1f4] sm:$0xf] %vm6455, %v6410
        %6482 = vst.msk [vmem:[#allocation4 + $0x208] sm:$0xf] %vm6455, %v6412
        %6483 = vst.msk [vmem:[#allocation4 + $0x21c] sm:$0xf] %vm6455, %v6414
        %6484 = vst.msk [vmem:[#allocation4 + $0x230] sm:$0xf] %vm6455, %v6416
        %6485 = vst.msk [vmem:[#allocation4 + $0x244] sm:$0xf] %vm6455, %v6418
        %6486 = vst.msk [vmem:[#allocation4 + $0x258] sm:$0xf] %vm6455, %v6420
        %6487 = vst.msk [vmem:[#allocation4 + $0x26c] sm:$0xf] %vm6455, %v6422
        %v6488 = vld [vmem:[#allocation3] sm:$0xe]
        %v6489 = vld [vmem:[#allocation3 + $0x4] sm:$0xf]
        %v6490 = vld [vmem:[#allocation3 + $0x8] sm:$0x1]
        %v6491 = vld [vmem:[#allocation3 + $0xc] sm:$0xe]
        %v6492 = vld [vmem:[#allocation3 + $0x10] sm:$0xf]
        %v6493 = vld [vmem:[#allocation3 + $0x14] sm:$0x1]
        %v6494 = vld [vmem:[#allocation3 + $0x18] sm:$0xe]
        %v6495 = vld [vmem:[#allocation3 + $0x1c] sm:$0xf]
        %v6496 = vld [vmem:[#allocation3 + $0x20] sm:$0x1]
        %v6497 = vld [vmem:[#allocation3 + $0x24] sm:$0xe]
        %v6498 = vld [vmem:[#allocation3 + $0x28] sm:$0xf]
        %v6499 = vld [vmem:[#allocation3 + $0x2c] sm:$0x1]
        %v6500 = vld [vmem:[#allocation3 + $0x30] sm:$0xe]
        %v6501 = vld [vmem:[#allocation3 + $0x34] sm:$0xf]
        %v6502 = vld [vmem:[#allocation3 + $0x38] sm:$0x1]
        %v6503 = vld [vmem:[#allocation3 + $0x3c] sm:$0xe]
        %v6504 = vld [vmem:[#allocation3 + $0x40] sm:$0xf]
        %v6505 = vld [vmem:[#allocation3 + $0x44] sm:$0x1]
        %v6506 = vld [vmem:[#allocation3 + $0x48] sm:$0xe]
        %v6507 = vld [vmem:[#allocation3 + $0x4c] sm:$0xf]
        %v6508 = vld [vmem:[#allocation3 + $0x50] sm:$0x1]
        %v6509 = vld [vmem:[#allocation3 + $0x54] sm:$0xe]
        %v6510 = vld [vmem:[#allocation3 + $0x58] sm:$0xf]
        %v6511 = vld [vmem:[#allocation3 + $0x5c] sm:$0x1]
        %v6512 = vld [vmem:[#allocation3 + $0x60] sm:$0xe]
        %v6513 = vld [vmem:[#allocation3 + $0x64] sm:$0xf]
        %v6514 = vld [vmem:[#allocation3 + $0x68] sm:$0x1]
        %v6515 = vld [vmem:[#allocation3 + $0x6c] sm:$0xe]
        %v6516 = vld [vmem:[#allocation3 + $0x70] sm:$0xf]
        %v6517 = vld [vmem:[#allocation3 + $0x74] sm:$0x1]
        %v6518 = vld [vmem:[#allocation3 + $0x78] sm:$0xe]
        %v6519 = vld [vmem:[#allocation3 + $0x7c] sm:$0xf]
        %v6520 = vld [vmem:[#allocation3 + $0x80] sm:$0x1]
        %v6521 = vld [vmem:[#allocation3 + $0x84] sm:$0xe]
        %v6522 = vld [vmem:[#allocation3 + $0x88] sm:$0xf]
        %v6523 = vld [vmem:[#allocation3 + $0x8c] sm:$0x1]
        %v6524 = vld [vmem:[#allocation3 + $0x90] sm:$0xe]
        %v6525 = vld [vmem:[#allocation3 + $0x94] sm:$0xf]
        %v6526 = vld [vmem:[#allocation3 + $0x98] sm:$0x1]
        %v6527 = vld [vmem:[#allocation3 + $0x9c] sm:$0xe]
        %v6528 = vld [vmem:[#allocation3 + $0xa0] sm:$0xf]
        %v6529 = vld [vmem:[#allocation3 + $0xa4] sm:$0x1]
        %v6530 = vld [vmem:[#allocation3 + $0xa8] sm:$0xe]
        %v6531 = vld [vmem:[#allocation3 + $0xac] sm:$0xf]
        %v6532 = vld [vmem:[#allocation3 + $0xb0] sm:$0x1]
        %v6533 = vld [vmem:[#allocation3 + $0xb4] sm:$0xe]
        %v6534 = vld [vmem:[#allocation3 + $0xb8] sm:$0xf]
        %v6535 = vld [vmem:[#allocation3 + $0xbc] sm:$0x1]
        %v6584 = vrot.slane %v6488, 5
        %v6585 = vrot.slane %v6584, 4
        %v6586 = vrot.slane %v6489, 5
        %v6587 = vsel %vm952, %v6585, %v6586
        %v6588 = vrot.slane %v6586, 4
        %v6589 = vrot.slane %v6490, 5
        %v6590 = vsel %vm952, %v6588, %v6589
        %v6591 = vrot.slane %v6491, 5
        %v6592 = vrot.slane %v6591, 4
        %v6593 = vrot.slane %v6492, 5
        %v6594 = vsel %vm952, %v6592, %v6593
        %v6595 = vrot.slane %v6593, 4
        %v6596 = vrot.slane %v6493, 5
        %v6597 = vsel %vm952, %v6595, %v6596
        %v6598 = vrot.slane %v6494, 5
        %v6599 = vrot.slane %v6598, 4
        %v6600 = vrot.slane %v6495, 5
        %v6601 = vsel %vm952, %v6599, %v6600
        %v6602 = vrot.slane %v6600, 4
        %v6603 = vrot.slane %v6496, 5
        %v6604 = vsel %vm952, %v6602, %v6603
        %v6605 = vrot.slane %v6497, 5
        %v6606 = vrot.slane %v6605, 4
        %v6607 = vrot.slane %v6498, 5
        %v6608 = vsel %vm952, %v6606, %v6607
        %v6609 = vrot.slane %v6607, 4
        %v6610 = vrot.slane %v6499, 5
        %v6611 = vsel %vm952, %v6609, %v6610
        %v6612 = vrot.slane %v6500, 5
        %v6613 = vrot.slane %v6612, 4
        %v6614 = vrot.slane %v6501, 5
        %v6615 = vsel %vm952, %v6613, %v6614
        %v6616 = vrot.slane %v6614, 4
        %v6617 = vrot.slane %v6502, 5
        %v6618 = vsel %vm952, %v6616, %v6617
        %v6619 = vrot.slane %v6503, 5
        %v6620 = vrot.slane %v6619, 4
        %v6621 = vrot.slane %v6504, 5
        %v6622 = vsel %vm952, %v6620, %v6621
        %v6623 = vrot.slane %v6621, 4
        %v6624 = vrot.slane %v6505, 5
        %v6625 = vsel %vm952, %v6623, %v6624
        %v6626 = vrot.slane %v6506, 5
        %v6627 = vrot.slane %v6626, 4
        %v6628 = vrot.slane %v6507, 5
        %v6629 = vsel %vm952, %v6627, %v6628
        %v6630 = vrot.slane %v6628, 4
        %v6631 = vrot.slane %v6508, 5
        %v6632 = vsel %vm952, %v6630, %v6631
        %v6633 = vrot.slane %v6509, 5
        %v6634 = vrot.slane %v6633, 4
        %v6635 = vrot.slane %v6510, 5
        %v6636 = vsel %vm952, %v6634, %v6635
        %v6637 = vrot.slane %v6635, 4
        %v6638 = vrot.slane %v6511, 5
        %v6639 = vsel %vm952, %v6637, %v6638
        %v6640 = vrot.slane %v6512, 5
        %v6641 = vrot.slane %v6640, 4
        %v6642 = vrot.slane %v6513, 5
        %v6643 = vsel %vm952, %v6641, %v6642
        %v6644 = vrot.slane %v6642, 4
        %v6645 = vrot.slane %v6514, 5
        %v6646 = vsel %vm952, %v6644, %v6645
        %v6647 = vrot.slane %v6515, 5
        %v6648 = vrot.slane %v6647, 4
        %v6649 = vrot.slane %v6516, 5
        %v6650 = vsel %vm952, %v6648, %v6649
        %v6651 = vrot.slane %v6649, 4
        %v6652 = vrot.slane %v6517, 5
        %v6653 = vsel %vm952, %v6651, %v6652
        %v6654 = vrot.slane %v6518, 5
        %v6655 = vrot.slane %v6654, 4
        %v6656 = vrot.slane %v6519, 5
        %v6657 = vsel %vm952, %v6655, %v6656
        %v6658 = vrot.slane %v6656, 4
        %v6659 = vrot.slane %v6520, 5
        %v6660 = vsel %vm952, %v6658, %v6659
        %v6661 = vrot.slane %v6521, 5
        %v6662 = vrot.slane %v6661, 4
        %v6663 = vrot.slane %v6522, 5
        %v6664 = vsel %vm952, %v6662, %v6663
        %v6665 = vrot.slane %v6663, 4
        %v6666 = vrot.slane %v6523, 5
        %v6667 = vsel %vm952, %v6665, %v6666
        %v6668 = vrot.slane %v6524, 5
        %v6669 = vrot.slane %v6668, 4
        %v6670 = vrot.slane %v6525, 5
        %v6671 = vsel %vm952, %v6669, %v6670
        %v6672 = vrot.slane %v6670, 4
        %v6673 = vrot.slane %v6526, 5
        %v6674 = vsel %vm952, %v6672, %v6673
        %v6675 = vrot.slane %v6527, 5
        %v6676 = vrot.slane %v6675, 4
        %v6677 = vrot.slane %v6528, 5
        %v6678 = vsel %vm952, %v6676, %v6677
        %v6679 = vrot.slane %v6677, 4
        %v6680 = vrot.slane %v6529, 5
        %v6681 = vsel %vm952, %v6679, %v6680
        %v6682 = vrot.slane %v6530, 5
        %v6683 = vrot.slane %v6682, 4
        %v6684 = vrot.slane %v6531, 5
        %v6685 = vsel %vm952, %v6683, %v6684
        %v6686 = vrot.slane %v6684, 4
        %v6687 = vrot.slane %v6532, 5
        %v6688 = vsel %vm952, %v6686, %v6687
        %v6689 = vrot.slane %v6533, 5
        %v6690 = vrot.slane %v6689, 4
        %v6691 = vrot.slane %v6534, 5
        %v6692 = vsel %vm952, %v6690, %v6691
        %v6693 = vrot.slane %v6691, 4
        %v6694 = vrot.slane %v6535, 5
        %v6695 = vsel %vm952, %v6693, %v6694
        %6728 = vst.msk [vmem:[#allocation4 + $0x4] sm:$0xf] %vm5271, %v6587
        %6729 = vst.msk [vmem:[#allocation4 + $0x18] sm:$0xf] %vm5271, %v6590
        %6730 = vst.msk [vmem:[#allocation4 + $0x2c] sm:$0xf] %vm5271, %v6594
        %6731 = vst.msk [vmem:[#allocation4 + $0x40] sm:$0xf] %vm5271, %v6597
        %6732 = vst.msk [vmem:[#allocation4 + $0x54] sm:$0xf] %vm5271, %v6601
        %6733 = vst.msk [vmem:[#allocation4 + $0x68] sm:$0xf] %vm5271, %v6604
        %6734 = vst.msk [vmem:[#allocation4 + $0x7c] sm:$0xf] %vm5271, %v6608
        %6735 = vst.msk [vmem:[#allocation4 + $0x90] sm:$0xf] %vm5271, %v6611
        %6736 = vst.msk [vmem:[#allocation4 + $0xa4] sm:$0xf] %vm5271, %v6615
        %6737 = vst.msk [vmem:[#allocation4 + $0xb8] sm:$0xf] %vm5271, %v6618
        %6738 = vst.msk [vmem:[#allocation4 + $0xcc] sm:$0xf] %vm5271, %v6622
        %6739 = vst.msk [vmem:[#allocation4 + $0xe0] sm:$0xf] %vm5271, %v6625
        %6740 = vst.msk [vmem:[#allocation4 + $0xf4] sm:$0xf] %vm5271, %v6629
        %6741 = vst.msk [vmem:[#allocation4 + $0x108] sm:$0xf] %vm5271, %v6632
        %6742 = vst.msk [vmem:[#allocation4 + $0x11c] sm:$0xf] %vm5271, %v6636
        %6743 = vst.msk [vmem:[#allocation4 + $0x130] sm:$0xf] %vm5271, %v6639
        %6744 = vst.msk [vmem:[#allocation4 + $0x144] sm:$0xf] %vm5271, %v6643
        %6745 = vst.msk [vmem:[#allocation4 + $0x158] sm:$0xf] %vm5271, %v6646
        %6746 = vst.msk [vmem:[#allocation4 + $0x16c] sm:$0xf] %vm5271, %v6650
        %6747 = vst.msk [vmem:[#allocation4 + $0x180] sm:$0xf] %vm5271, %v6653
        %6748 = vst.msk [vmem:[#allocation4 + $0x194] sm:$0xf] %vm5271, %v6657
        %6749 = vst.msk [vmem:[#allocation4 + $0x1a8] sm:$0xf] %vm5271, %v6660
        %6750 = vst.msk [vmem:[#allocation4 + $0x1bc] sm:$0xf] %vm5271, %v6664
        %6751 = vst.msk [vmem:[#allocation4 + $0x1d0] sm:$0xf] %vm5271, %v6667
        %6752 = vst.msk [vmem:[#allocation4 + $0x1e4] sm:$0xf] %vm5271, %v6671
        %6753 = vst.msk [vmem:[#allocation4 + $0x1f8] sm:$0xf] %vm5271, %v6674
        %6754 = vst.msk [vmem:[#allocation4 + $0x20c] sm:$0xf] %vm5271, %v6678
        %6755 = vst.msk [vmem:[#allocation4 + $0x220] sm:$0xf] %vm5271, %v6681
        %6756 = vst.msk [vmem:[#allocation4 + $0x234] sm:$0xf] %vm5271, %v6685
        %6757 = vst.msk [vmem:[#allocation4 + $0x248] sm:$0xf] %vm5271, %v6688
        %6758 = vst.msk [vmem:[#allocation4 + $0x25c] sm:$0xf] %vm5271, %v6692
        %6759 = vst.msk [vmem:[#allocation4 + $0x270] sm:$0xf] %vm5271, %v6695
        %v6760 = vld [vmem:[%s5745] sm:$0xf]
        %v6761 = vld [vmem:[%s5745 + $0x4] sm:$0xf]
        %v6762 = vld [vmem:[%s5745 + $0xc] sm:$0xf]
        %v6763 = vld [vmem:[%s5745 + $0x10] sm:$0xf]
        %v6764 = vld [vmem:[%s5745 + $0x18] sm:$0xf]
        %v6765 = vld [vmem:[%s5745 + $0x1c] sm:$0xf]
        %v6766 = vld [vmem:[%s5745 + $0x24] sm:$0xf]
        %v6767 = vld [vmem:[%s5745 + $0x28] sm:$0xf]
        %v6768 = vld [vmem:[%s5745 + $0x30] sm:$0xf]
        %v6769 = vld [vmem:[%s5745 + $0x34] sm:$0xf]
        %v6770 = vld [vmem:[%s5745 + $0x3c] sm:$0xf]
        %v6771 = vld [vmem:[%s5745 + $0x40] sm:$0xf]
        %v6772 = vld [vmem:[%s5745 + $0x48] sm:$0xf]
        %v6773 = vld [vmem:[%s5745 + $0x4c] sm:$0xf]
        %v6774 = vld [vmem:[%s5745 + $0x54] sm:$0xf]
        %v6775 = vld [vmem:[%s5745 + $0x58] sm:$0xf]
        %v6776 = vld [vmem:[%s5745 + $0x60] sm:$0xf]
        %v6777 = vld [vmem:[%s5745 + $0x64] sm:$0xf]
        %v6778 = vld [vmem:[%s5745 + $0x6c] sm:$0xf]
        %v6779 = vld [vmem:[%s5745 + $0x70] sm:$0xf]
        %v6780 = vld [vmem:[%s5745 + $0x78] sm:$0xf]
        %v6781 = vld [vmem:[%s5745 + $0x7c] sm:$0xf]
        %v6782 = vld [vmem:[%s5745 + $0x84] sm:$0xf]
        %v6783 = vld [vmem:[%s5745 + $0x88] sm:$0xf]
        %v6784 = vld [vmem:[%s5745 + $0x90] sm:$0xf]
        %v6785 = vld [vmem:[%s5745 + $0x94] sm:$0xf]
        %v6786 = vld [vmem:[%s5745 + $0x9c] sm:$0xf]
        %v6787 = vld [vmem:[%s5745 + $0xa0] sm:$0xf]
        %v6788 = vld [vmem:[%s5745 + $0xa8] sm:$0xf]
        %v6789 = vld [vmem:[%s5745 + $0xac] sm:$0xf]
        %v6790 = vld [vmem:[%s5745 + $0xb4] sm:$0xf]
        %v6791 = vld [vmem:[%s5745 + $0xb8] sm:$0xf]
        %6824 = vrot.lane.b32.xlu0 %v6760, 64
        %v6825 = vpop.permute.xlu0 %6824
        %6826 = vrot.lane.b32.xlu0 %v6761, 64
        %v6827 = vpop.permute.xlu0 %6826
        %6828 = vrot.lane.b32.xlu0 %v6762, 64
        %v6829 = vpop.permute.xlu0 %6828
        %6830 = vrot.lane.b32.xlu0 %v6763, 64
        %v6831 = vpop.permute.xlu0 %6830
        %6832 = vrot.lane.b32.xlu0 %v6764, 64
        %v6833 = vpop.permute.xlu0 %6832
        %6834 = vrot.lane.b32.xlu0 %v6765, 64
        %v6835 = vpop.permute.xlu0 %6834
        %6836 = vrot.lane.b32.xlu0 %v6766, 64
        %v6837 = vpop.permute.xlu0 %6836
        %6838 = vrot.lane.b32.xlu0 %v6767, 64
        %v6839 = vpop.permute.xlu0 %6838
        %6840 = vrot.lane.b32.xlu0 %v6768, 64
        %v6841 = vpop.permute.xlu0 %6840
        %6842 = vrot.lane.b32.xlu0 %v6769, 64
        %v6843 = vpop.permute.xlu0 %6842
        %6844 = vrot.lane.b32.xlu0 %v6770, 64
        %v6845 = vpop.permute.xlu0 %6844
        %6846 = vrot.lane.b32.xlu0 %v6771, 64
        %v6847 = vpop.permute.xlu0 %6846
        %6848 = vrot.lane.b32.xlu0 %v6772, 64
        %v6849 = vpop.permute.xlu0 %6848
        %6850 = vrot.lane.b32.xlu0 %v6773, 64
        %v6851 = vpop.permute.xlu0 %6850
        %6852 = vrot.lane.b32.xlu0 %v6774, 64
        %v6853 = vpop.permute.xlu0 %6852
        %6854 = vrot.lane.b32.xlu0 %v6775, 64
        %v6855 = vpop.permute.xlu0 %6854
        %6856 = vrot.lane.b32.xlu0 %v6776, 64
        %v6857 = vpop.permute.xlu0 %6856
        %6858 = vrot.lane.b32.xlu0 %v6777, 64
        %v6859 = vpop.permute.xlu0 %6858
        %6860 = vrot.lane.b32.xlu0 %v6778, 64
        %v6861 = vpop.permute.xlu0 %6860
        %6862 = vrot.lane.b32.xlu0 %v6779, 64
        %v6863 = vpop.permute.xlu0 %6862
        %6864 = vrot.lane.b32.xlu0 %v6780, 64
        %v6865 = vpop.permute.xlu0 %6864
        %6866 = vrot.lane.b32.xlu0 %v6781, 64
        %v6867 = vpop.permute.xlu0 %6866
        %6868 = vrot.lane.b32.xlu0 %v6782, 64
        %v6869 = vpop.permute.xlu0 %6868
        %6870 = vrot.lane.b32.xlu0 %v6783, 64
        %v6871 = vpop.permute.xlu0 %6870
        %6872 = vrot.lane.b32.xlu0 %v6784, 64
        %v6873 = vpop.permute.xlu0 %6872
        %6874 = vrot.lane.b32.xlu0 %v6785, 64
        %v6875 = vpop.permute.xlu0 %6874
        %6876 = vrot.lane.b32.xlu0 %v6786, 64
        %v6877 = vpop.permute.xlu0 %6876
        %6878 = vrot.lane.b32.xlu0 %v6787, 64
        %v6879 = vpop.permute.xlu0 %6878
        %6880 = vrot.lane.b32.xlu0 %v6788, 64
        %v6881 = vpop.permute.xlu0 %6880
        %6882 = vrot.lane.b32.xlu0 %v6789, 64
        %v6883 = vpop.permute.xlu0 %6882
        %6884 = vrot.lane.b32.xlu0 %v6790, 64
        %v6885 = vpop.permute.xlu0 %6884
        %6886 = vrot.lane.b32.xlu0 %v6791, 64
        %v6887 = vpop.permute.xlu0 %6886
        %6920 = vst.msk [vmem:[#allocation4 + $0x4] sm:$0xf] %vm6455, %v6825
        %6921 = vst.msk [vmem:[#allocation4 + $0x18] sm:$0xf] %vm6455, %v6827
        %6922 = vst.msk [vmem:[#allocation4 + $0x2c] sm:$0xf] %vm6455, %v6829
        %6923 = vst.msk [vmem:[#allocation4 + $0x40] sm:$0xf] %vm6455, %v6831
        %6924 = vst.msk [vmem:[#allocation4 + $0x54] sm:$0xf] %vm6455, %v6833
        %6925 = vst.msk [vmem:[#allocation4 + $0x68] sm:$0xf] %vm6455, %v6835
        %6926 = vst.msk [vmem:[#allocation4 + $0x7c] sm:$0xf] %vm6455, %v6837
        %6927 = vst.msk [vmem:[#allocation4 + $0x90] sm:$0xf] %vm6455, %v6839
        %6928 = vst.msk [vmem:[#allocation4 + $0xa4] sm:$0xf] %vm6455, %v6841
        %6929 = vst.msk [vmem:[#allocation4 + $0xb8] sm:$0xf] %vm6455, %v6843
        %6930 = vst.msk [vmem:[#allocation4 + $0xcc] sm:$0xf] %vm6455, %v6845
        %6931 = vst.msk [vmem:[#allocation4 + $0xe0] sm:$0xf] %vm6455, %v6847
        %6932 = vst.msk [vmem:[#allocation4 + $0xf4] sm:$0xf] %vm6455, %v6849
        %6933 = vst.msk [vmem:[#allocation4 + $0x108] sm:$0xf] %vm6455, %v6851
        %6934 = vst.msk [vmem:[#allocation4 + $0x11c] sm:$0xf] %vm6455, %v6853
        %6935 = vst.msk [vmem:[#allocation4 + $0x130] sm:$0xf] %vm6455, %v6855
        %6936 = vst.msk [vmem:[#allocation4 + $0x144] sm:$0xf] %vm6455, %v6857
        %6937 = vst.msk [vmem:[#allocation4 + $0x158] sm:$0xf] %vm6455, %v6859
        %6938 = vst.msk [vmem:[#allocation4 + $0x16c] sm:$0xf] %vm6455, %v6861
        %6939 = vst.msk [vmem:[#allocation4 + $0x180] sm:$0xf] %vm6455, %v6863
        %6940 = vst.msk [vmem:[#allocation4 + $0x194] sm:$0xf] %vm6455, %v6865
        %6941 = vst.msk [vmem:[#allocation4 + $0x1a8] sm:$0xf] %vm6455, %v6867
        %6942 = vst.msk [vmem:[#allocation4 + $0x1bc] sm:$0xf] %vm6455, %v6869
        %6943 = vst.msk [vmem:[#allocation4 + $0x1d0] sm:$0xf] %vm6455, %v6871
        %6944 = vst.msk [vmem:[#allocation4 + $0x1e4] sm:$0xf] %vm6455, %v6873
        %6945 = vst.msk [vmem:[#allocation4 + $0x1f8] sm:$0xf] %vm6455, %v6875
        %6946 = vst.msk [vmem:[#allocation4 + $0x20c] sm:$0xf] %vm6455, %v6877
        %6947 = vst.msk [vmem:[#allocation4 + $0x220] sm:$0xf] %vm6455, %v6879
        %6948 = vst.msk [vmem:[#allocation4 + $0x234] sm:$0xf] %vm6455, %v6881
        %6949 = vst.msk [vmem:[#allocation4 + $0x248] sm:$0xf] %vm6455, %v6883
        %6950 = vst.msk [vmem:[#allocation4 + $0x25c] sm:$0xf] %vm6455, %v6885
        %6951 = vst.msk [vmem:[#allocation4 + $0x270] sm:$0xf] %vm6455, %v6887
        %v6952 = vld [vmem:[%s5745] sm:$0xf]
        %v6953 = vld [vmem:[%s5745 + $0x4] sm:$0xf]
        %v6954 = vld [vmem:[%s5745 + $0x8] sm:$0x1]
        %v6955 = vld [vmem:[%s5745 + $0xc] sm:$0xf]
        %v6956 = vld [vmem:[%s5745 + $0x10] sm:$0xf]
        %v6957 = vld [vmem:[%s5745 + $0x14] sm:$0x1]
        %v6958 = vld [vmem:[%s5745 + $0x18] sm:$0xf]
        %v6959 = vld [vmem:[%s5745 + $0x1c] sm:$0xf]
        %v6960 = vld [vmem:[%s5745 + $0x20] sm:$0x1]
        %v6961 = vld [vmem:[%s5745 + $0x24] sm:$0xf]
        %v6962 = vld [vmem:[%s5745 + $0x28] sm:$0xf]
        %v6963 = vld [vmem:[%s5745 + $0x2c] sm:$0x1]
        %v6964 = vld [vmem:[%s5745 + $0x30] sm:$0xf]
        %v6965 = vld [vmem:[%s5745 + $0x34] sm:$0xf]
        %v6966 = vld [vmem:[%s5745 + $0x38] sm:$0x1]
        %v6967 = vld [vmem:[%s5745 + $0x3c] sm:$0xf]
        %v6968 = vld [vmem:[%s5745 + $0x40] sm:$0xf]
        %v6969 = vld [vmem:[%s5745 + $0x44] sm:$0x1]
        %v6970 = vld [vmem:[%s5745 + $0x48] sm:$0xf]
        %v6971 = vld [vmem:[%s5745 + $0x4c] sm:$0xf]
        %v6972 = vld [vmem:[%s5745 + $0x50] sm:$0x1]
        %v6973 = vld [vmem:[%s5745 + $0x54] sm:$0xf]
        %v6974 = vld [vmem:[%s5745 + $0x58] sm:$0xf]
        %v6975 = vld [vmem:[%s5745 + $0x5c] sm:$0x1]
        %v6976 = vld [vmem:[%s5745 + $0x60] sm:$0xf]
        %v6977 = vld [vmem:[%s5745 + $0x64] sm:$0xf]
        %v6978 = vld [vmem:[%s5745 + $0x68] sm:$0x1]
        %v6979 = vld [vmem:[%s5745 + $0x6c] sm:$0xf]
        %v6980 = vld [vmem:[%s5745 + $0x70] sm:$0xf]
        %v6981 = vld [vmem:[%s5745 + $0x74] sm:$0x1]
        %v6982 = vld [vmem:[%s5745 + $0x78] sm:$0xf]
        %v6983 = vld [vmem:[%s5745 + $0x7c] sm:$0xf]
        %v6984 = vld [vmem:[%s5745 + $0x80] sm:$0x1]
        %v6985 = vld [vmem:[%s5745 + $0x84] sm:$0xf]
        %v6986 = vld [vmem:[%s5745 + $0x88] sm:$0xf]
        %v6987 = vld [vmem:[%s5745 + $0x8c] sm:$0x1]
        %v6988 = vld [vmem:[%s5745 + $0x90] sm:$0xf]
        %v6989 = vld [vmem:[%s5745 + $0x94] sm:$0xf]
        %v6990 = vld [vmem:[%s5745 + $0x98] sm:$0x1]
        %v6991 = vld [vmem:[%s5745 + $0x9c] sm:$0xf]
        %v6992 = vld [vmem:[%s5745 + $0xa0] sm:$0xf]
        %v6993 = vld [vmem:[%s5745 + $0xa4] sm:$0x1]
        %v6994 = vld [vmem:[%s5745 + $0xa8] sm:$0xf]
        %v6995 = vld [vmem:[%s5745 + $0xac] sm:$0xf]
        %v6996 = vld [vmem:[%s5745 + $0xb0] sm:$0x1]
        %v6997 = vld [vmem:[%s5745 + $0xb4] sm:$0xf]
        %v6998 = vld [vmem:[%s5745 + $0xb8] sm:$0xf]
        %v6999 = vld [vmem:[%s5745 + $0xbc] sm:$0x1]
        %v7001 = vshrl.u32 %v6952, 16
        %v7003 = vrot.slane %v7001, 4
        %v7004 = vshll.u32 %v6952, 16
        %v7006 = vrot.slane %v7004, 5
        %v7007 = vor.u32 %v7003, %v7006
        %v7008 = vrot.slane %v7007, 4
        %v7010 = vshll.u32 %v6953, 16
        %v7012 = vrot.slane %v7010, 5
        %v7013 = vsel %vm405, %v7008, %v7012
        %v7014 = vshrl.u32 %v6953, 16
        %v7016 = vrot.slane %v7014, 4
        %v7017 = vor.u32 %v7016, %v7012
        %v7018 = vrot.slane %v7017, 4
        %v7020 = vshll.u32 %v6954, 16
        %v7022 = vrot.slane %v7020, 5
        %v7023 = vsel %vm405, %v7018, %v7022
        %v7025 = vshrl.u32 %v6955, 16
        %v7027 = vrot.slane %v7025, 4
        %v7028 = vshll.u32 %v6955, 16
        %v7030 = vrot.slane %v7028, 5
        %v7031 = vor.u32 %v7027, %v7030
        %v7032 = vrot.slane %v7031, 4
        %v7034 = vshll.u32 %v6956, 16
        %v7036 = vrot.slane %v7034, 5
        %v7037 = vsel %vm405, %v7032, %v7036
        %v7038 = vshrl.u32 %v6956, 16
        %v7040 = vrot.slane %v7038, 4
        %v7041 = vor.u32 %v7040, %v7036
        %v7042 = vrot.slane %v7041, 4
        %v7044 = vshll.u32 %v6957, 16
        %v7046 = vrot.slane %v7044, 5
        %v7047 = vsel %vm405, %v7042, %v7046
        %v7049 = vshrl.u32 %v6958, 16
        %v7051 = vrot.slane %v7049, 4
        %v7052 = vshll.u32 %v6958, 16
        %v7054 = vrot.slane %v7052, 5
        %v7055 = vor.u32 %v7051, %v7054
        %v7056 = vrot.slane %v7055, 4
        %v7058 = vshll.u32 %v6959, 16
        %v7060 = vrot.slane %v7058, 5
        %v7061 = vsel %vm405, %v7056, %v7060
        %v7062 = vshrl.u32 %v6959, 16
        %v7064 = vrot.slane %v7062, 4
        %v7065 = vor.u32 %v7064, %v7060
        %v7066 = vrot.slane %v7065, 4
        %v7068 = vshll.u32 %v6960, 16
        %v7070 = vrot.slane %v7068, 5
        %v7071 = vsel %vm405, %v7066, %v7070
        %v7073 = vshrl.u32 %v6961, 16
        %v7075 = vrot.slane %v7073, 4
        %v7076 = vshll.u32 %v6961, 16
        %v7078 = vrot.slane %v7076, 5
        %v7079 = vor.u32 %v7075, %v7078
        %v7080 = vrot.slane %v7079, 4
        %v7082 = vshll.u32 %v6962, 16
        %v7084 = vrot.slane %v7082, 5
        %v7085 = vsel %vm405, %v7080, %v7084
        %v7086 = vshrl.u32 %v6962, 16
        %v7088 = vrot.slane %v7086, 4
        %v7089 = vor.u32 %v7088, %v7084
        %v7090 = vrot.slane %v7089, 4
        %v7092 = vshll.u32 %v6963, 16
        %v7094 = vrot.slane %v7092, 5
        %v7095 = vsel %vm405, %v7090, %v7094
        %v7097 = vshrl.u32 %v6964, 16
        %v7099 = vrot.slane %v7097, 4
        %v7100 = vshll.u32 %v6964, 16
        %v7102 = vrot.slane %v7100, 5
        %v7103 = vor.u32 %v7099, %v7102
        %v7104 = vrot.slane %v7103, 4
        %v7106 = vshll.u32 %v6965, 16
        %v7108 = vrot.slane %v7106, 5
        %v7109 = vsel %vm405, %v7104, %v7108
        %v7110 = vshrl.u32 %v6965, 16
        %v7112 = vrot.slane %v7110, 4
        %v7113 = vor.u32 %v7112, %v7108
        %v7114 = vrot.slane %v7113, 4
        %v7116 = vshll.u32 %v6966, 16
        %v7118 = vrot.slane %v7116, 5
        %v7119 = vsel %vm405, %v7114, %v7118
        %v7121 = vshrl.u32 %v6967, 16
        %v7123 = vrot.slane %v7121, 4
        %v7124 = vshll.u32 %v6967, 16
        %v7126 = vrot.slane %v7124, 5
        %v7127 = vor.u32 %v7123, %v7126
        %v7128 = vrot.slane %v7127, 4
        %v7130 = vshll.u32 %v6968, 16
        %v7132 = vrot.slane %v7130, 5
        %v7133 = vsel %vm405, %v7128, %v7132
        %v7134 = vshrl.u32 %v6968, 16
        %v7136 = vrot.slane %v7134, 4
        %v7137 = vor.u32 %v7136, %v7132
        %v7138 = vrot.slane %v7137, 4
        %v7140 = vshll.u32 %v6969, 16
        %v7142 = vrot.slane %v7140, 5
        %v7143 = vsel %vm405, %v7138, %v7142
        %v7145 = vshrl.u32 %v6970, 16
        %v7147 = vrot.slane %v7145, 4
        %v7148 = vshll.u32 %v6970, 16
        %v7150 = vrot.slane %v7148, 5
        %v7151 = vor.u32 %v7147, %v7150
        %v7152 = vrot.slane %v7151, 4
        %v7154 = vshll.u32 %v6971, 16
        %v7156 = vrot.slane %v7154, 5
        %v7157 = vsel %vm405, %v7152, %v7156
        %v7158 = vshrl.u32 %v6971, 16
        %v7160 = vrot.slane %v7158, 4
        %v7161 = vor.u32 %v7160, %v7156
        %v7162 = vrot.slane %v7161, 4
        %v7164 = vshll.u32 %v6972, 16
        %v7166 = vrot.slane %v7164, 5
        %v7167 = vsel %vm405, %v7162, %v7166
        %v7169 = vshrl.u32 %v6973, 16
        %v7171 = vrot.slane %v7169, 4
        %v7172 = vshll.u32 %v6973, 16
        %v7174 = vrot.slane %v7172, 5
        %v7175 = vor.u32 %v7171, %v7174
        %v7176 = vrot.slane %v7175, 4
        %v7178 = vshll.u32 %v6974, 16
        %v7180 = vrot.slane %v7178, 5
        %v7181 = vsel %vm405, %v7176, %v7180
        %v7182 = vshrl.u32 %v6974, 16
        %v7184 = vrot.slane %v7182, 4
        %v7185 = vor.u32 %v7184, %v7180
        %v7186 = vrot.slane %v7185, 4
        %v7188 = vshll.u32 %v6975, 16
        %v7190 = vrot.slane %v7188, 5
        %v7191 = vsel %vm405, %v7186, %v7190
        %v7193 = vshrl.u32 %v6976, 16
        %v7195 = vrot.slane %v7193, 4
        %v7196 = vshll.u32 %v6976, 16
        %v7198 = vrot.slane %v7196, 5
        %v7199 = vor.u32 %v7195, %v7198
        %v7200 = vrot.slane %v7199, 4
        %v7202 = vshll.u32 %v6977, 16
        %v7204 = vrot.slane %v7202, 5
        %v7205 = vsel %vm405, %v7200, %v7204
        %v7206 = vshrl.u32 %v6977, 16
        %v7208 = vrot.slane %v7206, 4
        %v7209 = vor.u32 %v7208, %v7204
        %v7210 = vrot.slane %v7209, 4
        %v7212 = vshll.u32 %v6978, 16
        %v7214 = vrot.slane %v7212, 5
        %v7215 = vsel %vm405, %v7210, %v7214
        %v7217 = vshrl.u32 %v6979, 16
        %v7219 = vrot.slane %v7217, 4
        %v7220 = vshll.u32 %v6979, 16
        %v7222 = vrot.slane %v7220, 5
        %v7223 = vor.u32 %v7219, %v7222
        %v7224 = vrot.slane %v7223, 4
        %v7226 = vshll.u32 %v6980, 16
        %v7228 = vrot.slane %v7226, 5
        %v7229 = vsel %vm405, %v7224, %v7228
        %v7230 = vshrl.u32 %v6980, 16
        %v7232 = vrot.slane %v7230, 4
        %v7233 = vor.u32 %v7232, %v7228
        %v7234 = vrot.slane %v7233, 4
        %v7236 = vshll.u32 %v6981, 16
        %v7238 = vrot.slane %v7236, 5
        %v7239 = vsel %vm405, %v7234, %v7238
        %v7241 = vshrl.u32 %v6982, 16
        %v7243 = vrot.slane %v7241, 4
        %v7244 = vshll.u32 %v6982, 16
        %v7246 = vrot.slane %v7244, 5
        %v7247 = vor.u32 %v7243, %v7246
        %v7248 = vrot.slane %v7247, 4
        %v7250 = vshll.u32 %v6983, 16
        %v7252 = vrot.slane %v7250, 5
        %v7253 = vsel %vm405, %v7248, %v7252
        %v7254 = vshrl.u32 %v6983, 16
        %v7256 = vrot.slane %v7254, 4
        %v7257 = vor.u32 %v7256, %v7252
        %v7258 = vrot.slane %v7257, 4
        %v7260 = vshll.u32 %v6984, 16
        %v7262 = vrot.slane %v7260, 5
        %v7263 = vsel %vm405, %v7258, %v7262
        %v7265 = vshrl.u32 %v6985, 16
        %v7267 = vrot.slane %v7265, 4
        %v7268 = vshll.u32 %v6985, 16
        %v7270 = vrot.slane %v7268, 5
        %v7271 = vor.u32 %v7267, %v7270
        %v7272 = vrot.slane %v7271, 4
        %v7274 = vshll.u32 %v6986, 16
        %v7276 = vrot.slane %v7274, 5
        %v7277 = vsel %vm405, %v7272, %v7276
        %v7278 = vshrl.u32 %v6986, 16
        %v7280 = vrot.slane %v7278, 4
        %v7281 = vor.u32 %v7280, %v7276
        %v7282 = vrot.slane %v7281, 4
        %v7284 = vshll.u32 %v6987, 16
        %v7286 = vrot.slane %v7284, 5
        %v7287 = vsel %vm405, %v7282, %v7286
        %v7289 = vshrl.u32 %v6988, 16
        %v7291 = vrot.slane %v7289, 4
        %v7292 = vshll.u32 %v6988, 16
        %v7294 = vrot.slane %v7292, 5
        %v7295 = vor.u32 %v7291, %v7294
        %v7296 = vrot.slane %v7295, 4
        %v7298 = vshll.u32 %v6989, 16
        %v7300 = vrot.slane %v7298, 5
        %v7301 = vsel %vm405, %v7296, %v7300
        %v7302 = vshrl.u32 %v6989, 16
        %v7304 = vrot.slane %v7302, 4
        %v7305 = vor.u32 %v7304, %v7300
        %v7306 = vrot.slane %v7305, 4
        %v7308 = vshll.u32 %v6990, 16
        %v7310 = vrot.slane %v7308, 5
        %v7311 = vsel %vm405, %v7306, %v7310
        %v7313 = vshrl.u32 %v6991, 16
        %v7315 = vrot.slane %v7313, 4
        %v7316 = vshll.u32 %v6991, 16
        %v7318 = vrot.slane %v7316, 5
        %v7319 = vor.u32 %v7315, %v7318
        %v7320 = vrot.slane %v7319, 4
        %v7322 = vshll.u32 %v6992, 16
        %v7324 = vrot.slane %v7322, 5
        %v7325 = vsel %vm405, %v7320, %v7324
        %v7326 = vshrl.u32 %v6992, 16
        %v7328 = vrot.slane %v7326, 4
        %v7329 = vor.u32 %v7328, %v7324
        %v7330 = vrot.slane %v7329, 4
        %v7332 = vshll.u32 %v6993, 16
        %v7334 = vrot.slane %v7332, 5
        %v7335 = vsel %vm405, %v7330, %v7334
        %v7337 = vshrl.u32 %v6994, 16
        %v7339 = vrot.slane %v7337, 4
        %v7340 = vshll.u32 %v6994, 16
        %v7342 = vrot.slane %v7340, 5
        %v7343 = vor.u32 %v7339, %v7342
        %v7344 = vrot.slane %v7343, 4
        %v7346 = vshll.u32 %v6995, 16
        %v7348 = vrot.slane %v7346, 5
        %v7349 = vsel %vm405, %v7344, %v7348
        %v7350 = vshrl.u32 %v6995, 16
        %v7352 = vrot.slane %v7350, 4
        %v7353 = vor.u32 %v7352, %v7348
        %v7354 = vrot.slane %v7353, 4
        %v7356 = vshll.u32 %v6996, 16
        %v7358 = vrot.slane %v7356, 5
        %v7359 = vsel %vm405, %v7354, %v7358
        %v7361 = vshrl.u32 %v6997, 16
        %v7363 = vrot.slane %v7361, 4
        %v7364 = vshll.u32 %v6997, 16
        %v7366 = vrot.slane %v7364, 5
        %v7367 = vor.u32 %v7363, %v7366
        %v7368 = vrot.slane %v7367, 4
        %v7370 = vshll.u32 %v6998, 16
        %v7372 = vrot.slane %v7370, 5
        %v7373 = vsel %vm405, %v7368, %v7372
        %v7374 = vshrl.u32 %v6998, 16
        %v7376 = vrot.slane %v7374, 4
        %v7377 = vor.u32 %v7376, %v7372
        %v7378 = vrot.slane %v7377, 4
        %v7380 = vshll.u32 %v6999, 16
        %v7382 = vrot.slane %v7380, 5
        %v7383 = vsel %vm405, %v7378, %v7382
        %7416 = vst.msk [vmem:[#allocation4 + $0x8] sm:$0xf] %vm5271, %v7013
        %7417 = vst.msk [vmem:[#allocation4 + $0x1c] sm:$0xf] %vm5271, %v7023
        %7418 = vst.msk [vmem:[#allocation4 + $0x30] sm:$0xf] %vm5271, %v7037
        %7419 = vst.msk [vmem:[#allocation4 + $0x44] sm:$0xf] %vm5271, %v7047
        %7420 = vst.msk [vmem:[#allocation4 + $0x58] sm:$0xf] %vm5271, %v7061
        %7421 = vst.msk [vmem:[#allocation4 + $0x6c] sm:$0xf] %vm5271, %v7071
        %7422 = vst.msk [vmem:[#allocation4 + $0x80] sm:$0xf] %vm5271, %v7085
        %7423 = vst.msk [vmem:[#allocation4 + $0x94] sm:$0xf] %vm5271, %v7095
        %7424 = vst.msk [vmem:[#allocation4 + $0xa8] sm:$0xf] %vm5271, %v7109
        %7425 = vst.msk [vmem:[#allocation4 + $0xbc] sm:$0xf] %vm5271, %v7119
        %7426 = vst.msk [vmem:[#allocation4 + $0xd0] sm:$0xf] %vm5271, %v7133
        %7427 = vst.msk [vmem:[#allocation4 + $0xe4] sm:$0xf] %vm5271, %v7143
        %7428 = vst.msk [vmem:[#allocation4 + $0xf8] sm:$0xf] %vm5271, %v7157
        %7429 = vst.msk [vmem:[#allocation4 + $0x10c] sm:$0xf] %vm5271, %v7167
        %7430 = vst.msk [vmem:[#allocation4 + $0x120] sm:$0xf] %vm5271, %v7181
        %7431 = vst.msk [vmem:[#allocation4 + $0x134] sm:$0xf] %vm5271, %v7191
        %7432 = vst.msk [vmem:[#allocation4 + $0x148] sm:$0xf] %vm5271, %v7205
        %7433 = vst.msk [vmem:[#allocation4 + $0x15c] sm:$0xf] %vm5271, %v7215
        %7434 = vst.msk [vmem:[#allocation4 + $0x170] sm:$0xf] %vm5271, %v7229
        %7435 = vst.msk [vmem:[#allocation4 + $0x184] sm:$0xf] %vm5271, %v7239
        %7436 = vst.msk [vmem:[#allocation4 + $0x198] sm:$0xf] %vm5271, %v7253
        %7437 = vst.msk [vmem:[#allocation4 + $0x1ac] sm:$0xf] %vm5271, %v7263
        %7438 = vst.msk [vmem:[#allocation4 + $0x1c0] sm:$0xf] %vm5271, %v7277
        %7439 = vst.msk [vmem:[#allocation4 + $0x1d4] sm:$0xf] %vm5271, %v7287
        %7440 = vst.msk [vmem:[#allocation4 + $0x1e8] sm:$0xf] %vm5271, %v7301
        %7441 = vst.msk [vmem:[#allocation4 + $0x1fc] sm:$0xf] %vm5271, %v7311
        %7442 = vst.msk [vmem:[#allocation4 + $0x210] sm:$0xf] %vm5271, %v7325
        %7443 = vst.msk [vmem:[#allocation4 + $0x224] sm:$0xf] %vm5271, %v7335
        %7444 = vst.msk [vmem:[#allocation4 + $0x238] sm:$0xf] %vm5271, %v7349
        %7445 = vst.msk [vmem:[#allocation4 + $0x24c] sm:$0xf] %vm5271, %v7359
        %7446 = vst.msk [vmem:[#allocation4 + $0x260] sm:$0xf] %vm5271, %v7373
        %7447 = vst.msk [vmem:[#allocation4 + $0x274] sm:$0xf] %vm5271, %v7383
        %v7448 = vld [vmem:[%s5745] sm:$0xe]
        %v7449 = vld [vmem:[%s5745 + $0x4] sm:$0xf]
        %v7450 = vld [vmem:[%s5745 + $0x8] sm:$0x1]
        %v7451 = vld [vmem:[%s5745 + $0xc] sm:$0xe]
        %v7452 = vld [vmem:[%s5745 + $0x10] sm:$0xf]
        %v7453 = vld [vmem:[%s5745 + $0x14] sm:$0x1]
        %v7454 = vld [vmem:[%s5745 + $0x18] sm:$0xe]
        %v7455 = vld [vmem:[%s5745 + $0x1c] sm:$0xf]
        %v7456 = vld [vmem:[%s5745 + $0x20] sm:$0x1]
        %v7457 = vld [vmem:[%s5745 + $0x24] sm:$0xe]
        %v7458 = vld [vmem:[%s5745 + $0x28] sm:$0xf]
        %v7459 = vld [vmem:[%s5745 + $0x2c] sm:$0x1]
        %v7460 = vld [vmem:[%s5745 + $0x30] sm:$0xe]
        %v7461 = vld [vmem:[%s5745 + $0x34] sm:$0xf]
        %v7462 = vld [vmem:[%s5745 + $0x38] sm:$0x1]
        %v7463 = vld [vmem:[%s5745 + $0x3c] sm:$0xe]
        %v7464 = vld [vmem:[%s5745 + $0x40] sm:$0xf]
        %v7465 = vld [vmem:[%s5745 + $0x44] sm:$0x1]
        %v7466 = vld [vmem:[%s5745 + $0x48] sm:$0xe]
        %v7467 = vld [vmem:[%s5745 + $0x4c] sm:$0xf]
        %v7468 = vld [vmem:[%s5745 + $0x50] sm:$0x1]
        %v7469 = vld [vmem:[%s5745 + $0x54] sm:$0xe]
        %v7470 = vld [vmem:[%s5745 + $0x58] sm:$0xf]
        %v7471 = vld [vmem:[%s5745 + $0x5c] sm:$0x1]
        %v7472 = vld [vmem:[%s5745 + $0x60] sm:$0xe]
        %v7473 = vld [vmem:[%s5745 + $0x64] sm:$0xf]
        %v7474 = vld [vmem:[%s5745 + $0x68] sm:$0x1]
        %v7475 = vld [vmem:[%s5745 + $0x6c] sm:$0xe]
        %v7476 = vld [vmem:[%s5745 + $0x70] sm:$0xf]
        %v7477 = vld [vmem:[%s5745 + $0x74] sm:$0x1]
        %v7478 = vld [vmem:[%s5745 + $0x78] sm:$0xe]
        %v7479 = vld [vmem:[%s5745 + $0x7c] sm:$0xf]
        %v7480 = vld [vmem:[%s5745 + $0x80] sm:$0x1]
        %v7481 = vld [vmem:[%s5745 + $0x84] sm:$0xe]
        %v7482 = vld [vmem:[%s5745 + $0x88] sm:$0xf]
        %v7483 = vld [vmem:[%s5745 + $0x8c] sm:$0x1]
        %v7484 = vld [vmem:[%s5745 + $0x90] sm:$0xe]
        %v7485 = vld [vmem:[%s5745 + $0x94] sm:$0xf]
        %v7486 = vld [vmem:[%s5745 + $0x98] sm:$0x1]
        %v7487 = vld [vmem:[%s5745 + $0x9c] sm:$0xe]
        %v7488 = vld [vmem:[%s5745 + $0xa0] sm:$0xf]
        %v7489 = vld [vmem:[%s5745 + $0xa4] sm:$0x1]
        %v7490 = vld [vmem:[%s5745 + $0xa8] sm:$0xe]
        %v7491 = vld [vmem:[%s5745 + $0xac] sm:$0xf]
        %v7492 = vld [vmem:[%s5745 + $0xb0] sm:$0x1]
        %v7493 = vld [vmem:[%s5745 + $0xb4] sm:$0xe]
        %v7494 = vld [vmem:[%s5745 + $0xb8] sm:$0xf]
        %v7495 = vld [vmem:[%s5745 + $0xbc] sm:$0x1]
        %v7544 = vrot.slane %v7448, 5
        %v7545 = vrot.slane %v7544, 4
        %v7546 = vrot.slane %v7449, 5
        %v7547 = vsel %vm952, %v7545, %v7546
        %v7548 = vrot.slane %v7546, 4
        %v7549 = vrot.slane %v7450, 5
        %v7550 = vsel %vm952, %v7548, %v7549
        %v7551 = vrot.slane %v7451, 5
        %v7552 = vrot.slane %v7551, 4
        %v7553 = vrot.slane %v7452, 5
        %v7554 = vsel %vm952, %v7552, %v7553
        %v7555 = vrot.slane %v7553, 4
        %v7556 = vrot.slane %v7453, 5
        %v7557 = vsel %vm952, %v7555, %v7556
        %v7558 = vrot.slane %v7454, 5
        %v7559 = vrot.slane %v7558, 4
        %v7560 = vrot.slane %v7455, 5
        %v7561 = vsel %vm952, %v7559, %v7560
        %v7562 = vrot.slane %v7560, 4
        %v7563 = vrot.slane %v7456, 5
        %v7564 = vsel %vm952, %v7562, %v7563
        %v7565 = vrot.slane %v7457, 5
        %v7566 = vrot.slane %v7565, 4
        %v7567 = vrot.slane %v7458, 5
        %v7568 = vsel %vm952, %v7566, %v7567
        %v7569 = vrot.slane %v7567, 4
        %v7570 = vrot.slane %v7459, 5
        %v7571 = vsel %vm952, %v7569, %v7570
        %v7572 = vrot.slane %v7460, 5
        %v7573 = vrot.slane %v7572, 4
        %v7574 = vrot.slane %v7461, 5
        %v7575 = vsel %vm952, %v7573, %v7574
        %v7576 = vrot.slane %v7574, 4
        %v7577 = vrot.slane %v7462, 5
        %v7578 = vsel %vm952, %v7576, %v7577
        %v7579 = vrot.slane %v7463, 5
        %v7580 = vrot.slane %v7579, 4
        %v7581 = vrot.slane %v7464, 5
        %v7582 = vsel %vm952, %v7580, %v7581
        %v7583 = vrot.slane %v7581, 4
        %v7584 = vrot.slane %v7465, 5
        %v7585 = vsel %vm952, %v7583, %v7584
        %v7586 = vrot.slane %v7466, 5
        %v7587 = vrot.slane %v7586, 4
        %v7588 = vrot.slane %v7467, 5
        %v7589 = vsel %vm952, %v7587, %v7588
        %v7590 = vrot.slane %v7588, 4
        %v7591 = vrot.slane %v7468, 5
        %v7592 = vsel %vm952, %v7590, %v7591
        %v7593 = vrot.slane %v7469, 5
        %v7594 = vrot.slane %v7593, 4
        %v7595 = vrot.slane %v7470, 5
        %v7596 = vsel %vm952, %v7594, %v7595
        %v7597 = vrot.slane %v7595, 4
        %v7598 = vrot.slane %v7471, 5
        %v7599 = vsel %vm952, %v7597, %v7598
        %v7600 = vrot.slane %v7472, 5
        %v7601 = vrot.slane %v7600, 4
        %v7602 = vrot.slane %v7473, 5
        %v7603 = vsel %vm952, %v7601, %v7602
        %v7604 = vrot.slane %v7602, 4
        %v7605 = vrot.slane %v7474, 5
        %v7606 = vsel %vm952, %v7604, %v7605
        %v7607 = vrot.slane %v7475, 5
        %v7608 = vrot.slane %v7607, 4
        %v7609 = vrot.slane %v7476, 5
        %v7610 = vsel %vm952, %v7608, %v7609
        %v7611 = vrot.slane %v7609, 4
        %v7612 = vrot.slane %v7477, 5
        %v7613 = vsel %vm952, %v7611, %v7612
        %v7614 = vrot.slane %v7478, 5
        %v7615 = vrot.slane %v7614, 4
        %v7616 = vrot.slane %v7479, 5
        %v7617 = vsel %vm952, %v7615, %v7616
        %v7618 = vrot.slane %v7616, 4
        %v7619 = vrot.slane %v7480, 5
        %v7620 = vsel %vm952, %v7618, %v7619
        %v7621 = vrot.slane %v7481, 5
        %v7622 = vrot.slane %v7621, 4
        %v7623 = vrot.slane %v7482, 5
        %v7624 = vsel %vm952, %v7622, %v7623
        %v7625 = vrot.slane %v7623, 4
        %v7626 = vrot.slane %v7483, 5
        %v7627 = vsel %vm952, %v7625, %v7626
        %v7628 = vrot.slane %v7484, 5
        %v7629 = vrot.slane %v7628, 4
        %v7630 = vrot.slane %v7485, 5
        %v7631 = vsel %vm952, %v7629, %v7630
        %v7632 = vrot.slane %v7630, 4
        %v7633 = vrot.slane %v7486, 5
        %v7634 = vsel %vm952, %v7632, %v7633
        %v7635 = vrot.slane %v7487, 5
        %v7636 = vrot.slane %v7635, 4
        %v7637 = vrot.slane %v7488, 5
        %v7638 = vsel %vm952, %v7636, %v7637
        %v7639 = vrot.slane %v7637, 4
        %v7640 = vrot.slane %v7489, 5
        %v7641 = vsel %vm952, %v7639, %v7640
        %v7642 = vrot.slane %v7490, 5
        %v7643 = vrot.slane %v7642, 4
        %v7644 = vrot.slane %v7491, 5
        %v7645 = vsel %vm952, %v7643, %v7644
        %v7646 = vrot.slane %v7644, 4
        %v7647 = vrot.slane %v7492, 5
        %v7648 = vsel %vm952, %v7646, %v7647
        %v7649 = vrot.slane %v7493, 5
        %v7650 = vrot.slane %v7649, 4
        %v7651 = vrot.slane %v7494, 5
        %v7652 = vsel %vm952, %v7650, %v7651
        %v7653 = vrot.slane %v7651, 4
        %v7654 = vrot.slane %v7495, 5
        %v7655 = vsel %vm952, %v7653, %v7654
        %7656 = vrot.lane.b32.xlu0 %v7547, 64
        %v7657 = vpop.permute.xlu0 %7656
        %7658 = vrot.lane.b32.xlu0 %v7550, 64
        %v7659 = vpop.permute.xlu0 %7658
        %7660 = vrot.lane.b32.xlu0 %v7554, 64
        %v7661 = vpop.permute.xlu0 %7660
        %7662 = vrot.lane.b32.xlu0 %v7557, 64
        %v7663 = vpop.permute.xlu0 %7662
        %7664 = vrot.lane.b32.xlu0 %v7561, 64
        %v7665 = vpop.permute.xlu0 %7664
        %7666 = vrot.lane.b32.xlu0 %v7564, 64
        %v7667 = vpop.permute.xlu0 %7666
        %7668 = vrot.lane.b32.xlu0 %v7568, 64
        %v7669 = vpop.permute.xlu0 %7668
        %7670 = vrot.lane.b32.xlu0 %v7571, 64
        %v7671 = vpop.permute.xlu0 %7670
        %7672 = vrot.lane.b32.xlu0 %v7575, 64
        %v7673 = vpop.permute.xlu0 %7672
        %7674 = vrot.lane.b32.xlu0 %v7578, 64
        %v7675 = vpop.permute.xlu0 %7674
        %7676 = vrot.lane.b32.xlu0 %v7582, 64
        %v7677 = vpop.permute.xlu0 %7676
        %7678 = vrot.lane.b32.xlu0 %v7585, 64
        %v7679 = vpop.permute.xlu0 %7678
        %7680 = vrot.lane.b32.xlu0 %v7589, 64
        %v7681 = vpop.permute.xlu0 %7680
        %7682 = vrot.lane.b32.xlu0 %v7592, 64
        %v7683 = vpop.permute.xlu0 %7682
        %7684 = vrot.lane.b32.xlu0 %v7596, 64
        %v7685 = vpop.permute.xlu0 %7684
        %7686 = vrot.lane.b32.xlu0 %v7599, 64
        %v7687 = vpop.permute.xlu0 %7686
        %7688 = vrot.lane.b32.xlu0 %v7603, 64
        %v7689 = vpop.permute.xlu0 %7688
        %7690 = vrot.lane.b32.xlu0 %v7606, 64
        %v7691 = vpop.permute.xlu0 %7690
        %7692 = vrot.lane.b32.xlu0 %v7610, 64
        %v7693 = vpop.permute.xlu0 %7692
        %7694 = vrot.lane.b32.xlu0 %v7613, 64
        %v7695 = vpop.permute.xlu0 %7694
        %7696 = vrot.lane.b32.xlu0 %v7617, 64
        %v7697 = vpop.permute.xlu0 %7696
        %7698 = vrot.lane.b32.xlu0 %v7620, 64
        %v7699 = vpop.permute.xlu0 %7698
        %7700 = vrot.lane.b32.xlu0 %v7624, 64
        %v7701 = vpop.permute.xlu0 %7700
        %7702 = vrot.lane.b32.xlu0 %v7627, 64
        %v7703 = vpop.permute.xlu0 %7702
        %7704 = vrot.lane.b32.xlu0 %v7631, 64
        %v7705 = vpop.permute.xlu0 %7704
        %7706 = vrot.lane.b32.xlu0 %v7634, 64
        %v7707 = vpop.permute.xlu0 %7706
        %7708 = vrot.lane.b32.xlu0 %v7638, 64
        %v7709 = vpop.permute.xlu0 %7708
        %7710 = vrot.lane.b32.xlu0 %v7641, 64
        %v7711 = vpop.permute.xlu0 %7710
        %7712 = vrot.lane.b32.xlu0 %v7645, 64
        %v7713 = vpop.permute.xlu0 %7712
        %7714 = vrot.lane.b32.xlu0 %v7648, 64
        %v7715 = vpop.permute.xlu0 %7714
        %7716 = vrot.lane.b32.xlu0 %v7652, 64
        %v7717 = vpop.permute.xlu0 %7716
        %7718 = vrot.lane.b32.xlu0 %v7655, 64
        %v7719 = vpop.permute.xlu0 %7718
        %7752 = vst.msk [vmem:[#allocation4 + $0x8] sm:$0xf] %vm6455, %v7657
        %7753 = vst.msk [vmem:[#allocation4 + $0x1c] sm:$0xf] %vm6455, %v7659
        %7754 = vst.msk [vmem:[#allocation4 + $0x30] sm:$0xf] %vm6455, %v7661
        %7755 = vst.msk [vmem:[#allocation4 + $0x44] sm:$0xf] %vm6455, %v7663
        %7756 = vst.msk [vmem:[#allocation4 + $0x58] sm:$0xf] %vm6455, %v7665
        %7757 = vst.msk [vmem:[#allocation4 + $0x6c] sm:$0xf] %vm6455, %v7667
        %7758 = vst.msk [vmem:[#allocation4 + $0x80] sm:$0xf] %vm6455, %v7669
        %7759 = vst.msk [vmem:[#allocation4 + $0x94] sm:$0xf] %vm6455, %v7671
        %7760 = vst.msk [vmem:[#allocation4 + $0xa8] sm:$0xf] %vm6455, %v7673
        %7761 = vst.msk [vmem:[#allocation4 + $0xbc] sm:$0xf] %vm6455, %v7675
        %7762 = vst.msk [vmem:[#allocation4 + $0xd0] sm:$0xf] %vm6455, %v7677
        %7763 = vst.msk [vmem:[#allocation4 + $0xe4] sm:$0xf] %vm6455, %v7679
        %7764 = vst.msk [vmem:[#allocation4 + $0xf8] sm:$0xf] %vm6455, %v7681
        %7765 = vst.msk [vmem:[#allocation4 + $0x10c] sm:$0xf] %vm6455, %v7683
        %7766 = vst.msk [vmem:[#allocation4 + $0x120] sm:$0xf] %vm6455, %v7685
        %7767 = vst.msk [vmem:[#allocation4 + $0x134] sm:$0xf] %vm6455, %v7687
        %7768 = vst.msk [vmem:[#allocation4 + $0x148] sm:$0xf] %vm6455, %v7689
        %7769 = vst.msk [vmem:[#allocation4 + $0x15c] sm:$0xf] %vm6455, %v7691
        %7770 = vst.msk [vmem:[#allocation4 + $0x170] sm:$0xf] %vm6455, %v7693
        %7771 = vst.msk [vmem:[#allocation4 + $0x184] sm:$0xf] %vm6455, %v7695
        %7772 = vst.msk [vmem:[#allocation4 + $0x198] sm:$0xf] %vm6455, %v7697
        %7773 = vst.msk [vmem:[#allocation4 + $0x1ac] sm:$0xf] %vm6455, %v7699
        %7774 = vst.msk [vmem:[#allocation4 + $0x1c0] sm:$0xf] %vm6455, %v7701
        %7775 = vst.msk [vmem:[#allocation4 + $0x1d4] sm:$0xf] %vm6455, %v7703
        %7776 = vst.msk [vmem:[#allocation4 + $0x1e8] sm:$0xf] %vm6455, %v7705
        %7777 = vst.msk [vmem:[#allocation4 + $0x1fc] sm:$0xf] %vm6455, %v7707
        %7778 = vst.msk [vmem:[#allocation4 + $0x210] sm:$0xf] %vm6455, %v7709
        %7779 = vst.msk [vmem:[#allocation4 + $0x224] sm:$0xf] %vm6455, %v7711
        %7780 = vst.msk [vmem:[#allocation4 + $0x238] sm:$0xf] %vm6455, %v7713
        %7781 = vst.msk [vmem:[#allocation4 + $0x24c] sm:$0xf] %vm6455, %v7715
        %7782 = vst.msk [vmem:[#allocation4 + $0x260] sm:$0xf] %vm6455, %v7717
        %7783 = vst.msk [vmem:[#allocation4 + $0x274] sm:$0xf] %vm6455, %v7719
        %s7784 = scalar_lea.vmem [#allocation3], 24
        %v7785 = vld [vmem:[%s7784] sm:$0xf]
        %v7786 = vld [vmem:[%s7784 + $0x4] sm:$0xf]
        %v7787 = vld [vmem:[%s7784 + $0xc] sm:$0xf]
        %v7788 = vld [vmem:[%s7784 + $0x10] sm:$0xf]
        %v7789 = vld [vmem:[%s7784 + $0x18] sm:$0xf]
        %v7790 = vld [vmem:[%s7784 + $0x1c] sm:$0xf]
        %v7791 = vld [vmem:[%s7784 + $0x24] sm:$0xf]
        %v7792 = vld [vmem:[%s7784 + $0x28] sm:$0xf]
        %v7793 = vld [vmem:[%s7784 + $0x30] sm:$0xf]
        %v7794 = vld [vmem:[%s7784 + $0x34] sm:$0xf]
        %v7795 = vld [vmem:[%s7784 + $0x3c] sm:$0xf]
        %v7796 = vld [vmem:[%s7784 + $0x40] sm:$0xf]
        %v7797 = vld [vmem:[%s7784 + $0x48] sm:$0xf]
        %v7798 = vld [vmem:[%s7784 + $0x4c] sm:$0xf]
        %v7799 = vld [vmem:[%s7784 + $0x54] sm:$0xf]
        %v7800 = vld [vmem:[%s7784 + $0x58] sm:$0xf]
        %v7801 = vld [vmem:[%s7784 + $0x60] sm:$0xf]
        %v7802 = vld [vmem:[%s7784 + $0x64] sm:$0xf]
        %v7803 = vld [vmem:[%s7784 + $0x6c] sm:$0xf]
        %v7804 = vld [vmem:[%s7784 + $0x70] sm:$0xf]
        %v7805 = vld [vmem:[%s7784 + $0x78] sm:$0xf]
        %v7806 = vld [vmem:[%s7784 + $0x7c] sm:$0xf]
        %v7807 = vld [vmem:[%s7784 + $0x84] sm:$0xf]
        %v7808 = vld [vmem:[%s7784 + $0x88] sm:$0xf]
        %v7809 = vld [vmem:[%s7784 + $0x90] sm:$0xf]
        %v7810 = vld [vmem:[%s7784 + $0x94] sm:$0xf]
        %v7811 = vld [vmem:[%s7784 + $0x9c] sm:$0xf]
        %v7812 = vld [vmem:[%s7784 + $0xa0] sm:$0xf]
        %v7813 = vld [vmem:[%s7784 + $0xa8] sm:$0xf]
        %v7814 = vld [vmem:[%s7784 + $0xac] sm:$0xf]
        %v7815 = vld [vmem:[%s7784 + $0xb4] sm:$0xf]
        %v7816 = vld [vmem:[%s7784 + $0xb8] sm:$0xf]
        %7817 = vst.msk [vmem:[#allocation4 + $0xc] sm:$0xf] %vm5271, %v7785
        %7818 = vst.msk [vmem:[#allocation4 + $0x20] sm:$0xf] %vm5271, %v7786
        %7819 = vst.msk [vmem:[#allocation4 + $0x34] sm:$0xf] %vm5271, %v7787
        %7820 = vst.msk [vmem:[#allocation4 + $0x48] sm:$0xf] %vm5271, %v7788
        %7821 = vst.msk [vmem:[#allocation4 + $0x5c] sm:$0xf] %vm5271, %v7789
        %7822 = vst.msk [vmem:[#allocation4 + $0x70] sm:$0xf] %vm5271, %v7790
        %7823 = vst.msk [vmem:[#allocation4 + $0x84] sm:$0xf] %vm5271, %v7791
        %7824 = vst.msk [vmem:[#allocation4 + $0x98] sm:$0xf] %vm5271, %v7792
        %7825 = vst.msk [vmem:[#allocation4 + $0xac] sm:$0xf] %vm5271, %v7793
        %7826 = vst.msk [vmem:[#allocation4 + $0xc0] sm:$0xf] %vm5271, %v7794
        %7827 = vst.msk [vmem:[#allocation4 + $0xd4] sm:$0xf] %vm5271, %v7795
        %7828 = vst.msk [vmem:[#allocation4 + $0xe8] sm:$0xf] %vm5271, %v7796
        %7829 = vst.msk [vmem:[#allocation4 + $0xfc] sm:$0xf] %vm5271, %v7797
        %7830 = vst.msk [vmem:[#allocation4 + $0x110] sm:$0xf] %vm5271, %v7798
        %7831 = vst.msk [vmem:[#allocation4 + $0x124] sm:$0xf] %vm5271, %v7799
        %7832 = vst.msk [vmem:[#allocation4 + $0x138] sm:$0xf] %vm5271, %v7800
        %7833 = vst.msk [vmem:[#allocation4 + $0x14c] sm:$0xf] %vm5271, %v7801
        %7834 = vst.msk [vmem:[#allocation4 + $0x160] sm:$0xf] %vm5271, %v7802
        %7835 = vst.msk [vmem:[#allocation4 + $0x174] sm:$0xf] %vm5271, %v7803
        %7836 = vst.msk [vmem:[#allocation4 + $0x188] sm:$0xf] %vm5271, %v7804
        %7837 = vst.msk [vmem:[#allocation4 + $0x19c] sm:$0xf] %vm5271, %v7805
        %7838 = vst.msk [vmem:[#allocation4 + $0x1b0] sm:$0xf] %vm5271, %v7806
        %7839 = vst.msk [vmem:[#allocation4 + $0x1c4] sm:$0xf] %vm5271, %v7807
        %7840 = vst.msk [vmem:[#allocation4 + $0x1d8] sm:$0xf] %vm5271, %v7808
        %7841 = vst.msk [vmem:[#allocation4 + $0x1ec] sm:$0xf] %vm5271, %v7809
        %7842 = vst.msk [vmem:[#allocation4 + $0x200] sm:$0xf] %vm5271, %v7810
        %7843 = vst.msk [vmem:[#allocation4 + $0x214] sm:$0xf] %vm5271, %v7811
        %7844 = vst.msk [vmem:[#allocation4 + $0x228] sm:$0xf] %vm5271, %v7812
        %7845 = vst.msk [vmem:[#allocation4 + $0x23c] sm:$0xf] %vm5271, %v7813
        %7846 = vst.msk [vmem:[#allocation4 + $0x250] sm:$0xf] %vm5271, %v7814
        %7847 = vst.msk [vmem:[#allocation4 + $0x264] sm:$0xf] %vm5271, %v7815
        %7848 = vst.msk [vmem:[#allocation4 + $0x278] sm:$0xf] %vm5271, %v7816
        %v7849 = vld [vmem:[%s7784] sm:$0xf]
        %v7850 = vld [vmem:[%s7784 + $0x4] sm:$0xf]
        %v7851 = vld [vmem:[%s7784 + $0x8] sm:$0x1]
        %v7852 = vld [vmem:[%s7784 + $0xc] sm:$0xf]
        %v7853 = vld [vmem:[%s7784 + $0x10] sm:$0xf]
        %v7854 = vld [vmem:[%s7784 + $0x14] sm:$0x1]
        %v7855 = vld [vmem:[%s7784 + $0x18] sm:$0xf]
        %v7856 = vld [vmem:[%s7784 + $0x1c] sm:$0xf]
        %v7857 = vld [vmem:[%s7784 + $0x20] sm:$0x1]
        %v7858 = vld [vmem:[%s7784 + $0x24] sm:$0xf]
        %v7859 = vld [vmem:[%s7784 + $0x28] sm:$0xf]
        %v7860 = vld [vmem:[%s7784 + $0x2c] sm:$0x1]
        %v7861 = vld [vmem:[%s7784 + $0x30] sm:$0xf]
        %v7862 = vld [vmem:[%s7784 + $0x34] sm:$0xf]
        %v7863 = vld [vmem:[%s7784 + $0x38] sm:$0x1]
        %v7864 = vld [vmem:[%s7784 + $0x3c] sm:$0xf]
        %v7865 = vld [vmem:[%s7784 + $0x40] sm:$0xf]
        %v7866 = vld [vmem:[%s7784 + $0x44] sm:$0x1]
        %v7867 = vld [vmem:[%s7784 + $0x48] sm:$0xf]
        %v7868 = vld [vmem:[%s7784 + $0x4c] sm:$0xf]
        %v7869 = vld [vmem:[%s7784 + $0x50] sm:$0x1]
        %v7870 = vld [vmem:[%s7784 + $0x54] sm:$0xf]
        %v7871 = vld [vmem:[%s7784 + $0x58] sm:$0xf]
        %v7872 = vld [vmem:[%s7784 + $0x5c] sm:$0x1]
        %v7873 = vld [vmem:[%s7784 + $0x60] sm:$0xf]
        %v7874 = vld [vmem:[%s7784 + $0x64] sm:$0xf]
        %v7875 = vld [vmem:[%s7784 + $0x68] sm:$0x1]
        %v7876 = vld [vmem:[%s7784 + $0x6c] sm:$0xf]
        %v7877 = vld [vmem:[%s7784 + $0x70] sm:$0xf]
        %v7878 = vld [vmem:[%s7784 + $0x74] sm:$0x1]
        %v7879 = vld [vmem:[%s7784 + $0x78] sm:$0xf]
        %v7880 = vld [vmem:[%s7784 + $0x7c] sm:$0xf]
        %v7881 = vld [vmem:[%s7784 + $0x80] sm:$0x1]
        %v7882 = vld [vmem:[%s7784 + $0x84] sm:$0xf]
        %v7883 = vld [vmem:[%s7784 + $0x88] sm:$0xf]
        %v7884 = vld [vmem:[%s7784 + $0x8c] sm:$0x1]
        %v7885 = vld [vmem:[%s7784 + $0x90] sm:$0xf]
        %v7886 = vld [vmem:[%s7784 + $0x94] sm:$0xf]
        %v7887 = vld [vmem:[%s7784 + $0x98] sm:$0x1]
        %v7888 = vld [vmem:[%s7784 + $0x9c] sm:$0xf]
        %v7889 = vld [vmem:[%s7784 + $0xa0] sm:$0xf]
        %v7890 = vld [vmem:[%s7784 + $0xa4] sm:$0x1]
        %v7891 = vld [vmem:[%s7784 + $0xa8] sm:$0xf]
        %v7892 = vld [vmem:[%s7784 + $0xac] sm:$0xf]
        %v7893 = vld [vmem:[%s7784 + $0xb0] sm:$0x1]
        %v7894 = vld [vmem:[%s7784 + $0xb4] sm:$0xf]
        %v7895 = vld [vmem:[%s7784 + $0xb8] sm:$0xf]
        %v7896 = vld [vmem:[%s7784 + $0xbc] sm:$0x1]
        %v7898 = vshrl.u32 %v7849, 16
        %v7900 = vrot.slane %v7898, 4
        %v7901 = vshll.u32 %v7849, 16
        %v7903 = vrot.slane %v7901, 5
        %v7904 = vor.u32 %v7900, %v7903
        %v7905 = vrot.slane %v7904, 4
        %v7907 = vshll.u32 %v7850, 16
        %v7909 = vrot.slane %v7907, 5
        %v7910 = vsel %vm405, %v7905, %v7909
        %v7911 = vshrl.u32 %v7850, 16
        %v7913 = vrot.slane %v7911, 4
        %v7914 = vor.u32 %v7913, %v7909
        %v7915 = vrot.slane %v7914, 4
        %v7917 = vshll.u32 %v7851, 16
        %v7919 = vrot.slane %v7917, 5
        %v7920 = vsel %vm405, %v7915, %v7919
        %v7922 = vshrl.u32 %v7852, 16
        %v7924 = vrot.slane %v7922, 4
        %v7925 = vshll.u32 %v7852, 16
        %v7927 = vrot.slane %v7925, 5
        %v7928 = vor.u32 %v7924, %v7927
        %v7929 = vrot.slane %v7928, 4
        %v7931 = vshll.u32 %v7853, 16
        %v7933 = vrot.slane %v7931, 5
        %v7934 = vsel %vm405, %v7929, %v7933
        %v7935 = vshrl.u32 %v7853, 16
        %v7937 = vrot.slane %v7935, 4
        %v7938 = vor.u32 %v7937, %v7933
        %v7939 = vrot.slane %v7938, 4
        %v7941 = vshll.u32 %v7854, 16
        %v7943 = vrot.slane %v7941, 5
        %v7944 = vsel %vm405, %v7939, %v7943
        %v7946 = vshrl.u32 %v7855, 16
        %v7948 = vrot.slane %v7946, 4
        %v7949 = vshll.u32 %v7855, 16
        %v7951 = vrot.slane %v7949, 5
        %v7952 = vor.u32 %v7948, %v7951
        %v7953 = vrot.slane %v7952, 4
        %v7955 = vshll.u32 %v7856, 16
        %v7957 = vrot.slane %v7955, 5
        %v7958 = vsel %vm405, %v7953, %v7957
        %v7959 = vshrl.u32 %v7856, 16
        %v7961 = vrot.slane %v7959, 4
        %v7962 = vor.u32 %v7961, %v7957
        %v7963 = vrot.slane %v7962, 4
        %v7965 = vshll.u32 %v7857, 16
        %v7967 = vrot.slane %v7965, 5
        %v7968 = vsel %vm405, %v7963, %v7967
        %v7970 = vshrl.u32 %v7858, 16
        %v7972 = vrot.slane %v7970, 4
        %v7973 = vshll.u32 %v7858, 16
        %v7975 = vrot.slane %v7973, 5
        %v7976 = vor.u32 %v7972, %v7975
        %v7977 = vrot.slane %v7976, 4
        %v7979 = vshll.u32 %v7859, 16
        %v7981 = vrot.slane %v7979, 5
        %v7982 = vsel %vm405, %v7977, %v7981
        %v7983 = vshrl.u32 %v7859, 16
        %v7985 = vrot.slane %v7983, 4
        %v7986 = vor.u32 %v7985, %v7981
        %v7987 = vrot.slane %v7986, 4
        %v7989 = vshll.u32 %v7860, 16
        %v7991 = vrot.slane %v7989, 5
        %v7992 = vsel %vm405, %v7987, %v7991
        %v7994 = vshrl.u32 %v7861, 16
        %v7996 = vrot.slane %v7994, 4
        %v7997 = vshll.u32 %v7861, 16
        %v7999 = vrot.slane %v7997, 5
        %v8000 = vor.u32 %v7996, %v7999
        %v8001 = vrot.slane %v8000, 4
        %v8003 = vshll.u32 %v7862, 16
        %v8005 = vrot.slane %v8003, 5
        %v8006 = vsel %vm405, %v8001, %v8005
        %v8007 = vshrl.u32 %v7862, 16
        %v8009 = vrot.slane %v8007, 4
        %v8010 = vor.u32 %v8009, %v8005
        %v8011 = vrot.slane %v8010, 4
        %v8013 = vshll.u32 %v7863, 16
        %v8015 = vrot.slane %v8013, 5
        %v8016 = vsel %vm405, %v8011, %v8015
        %v8018 = vshrl.u32 %v7864, 16
        %v8020 = vrot.slane %v8018, 4
        %v8021 = vshll.u32 %v7864, 16
        %v8023 = vrot.slane %v8021, 5
        %v8024 = vor.u32 %v8020, %v8023
        %v8025 = vrot.slane %v8024, 4
        %v8027 = vshll.u32 %v7865, 16
        %v8029 = vrot.slane %v8027, 5
        %v8030 = vsel %vm405, %v8025, %v8029
        %v8031 = vshrl.u32 %v7865, 16
        %v8033 = vrot.slane %v8031, 4
        %v8034 = vor.u32 %v8033, %v8029
        %v8035 = vrot.slane %v8034, 4
        %v8037 = vshll.u32 %v7866, 16
        %v8039 = vrot.slane %v8037, 5
        %v8040 = vsel %vm405, %v8035, %v8039
        %v8042 = vshrl.u32 %v7867, 16
        %v8044 = vrot.slane %v8042, 4
        %v8045 = vshll.u32 %v7867, 16
        %v8047 = vrot.slane %v8045, 5
        %v8048 = vor.u32 %v8044, %v8047
        %v8049 = vrot.slane %v8048, 4
        %v8051 = vshll.u32 %v7868, 16
        %v8053 = vrot.slane %v8051, 5
        %v8054 = vsel %vm405, %v8049, %v8053
        %v8055 = vshrl.u32 %v7868, 16
        %v8057 = vrot.slane %v8055, 4
        %v8058 = vor.u32 %v8057, %v8053
        %v8059 = vrot.slane %v8058, 4
        %v8061 = vshll.u32 %v7869, 16
        %v8063 = vrot.slane %v8061, 5
        %v8064 = vsel %vm405, %v8059, %v8063
        %v8066 = vshrl.u32 %v7870, 16
        %v8068 = vrot.slane %v8066, 4
        %v8069 = vshll.u32 %v7870, 16
        %v8071 = vrot.slane %v8069, 5
        %v8072 = vor.u32 %v8068, %v8071
        %v8073 = vrot.slane %v8072, 4
        %v8075 = vshll.u32 %v7871, 16
        %v8077 = vrot.slane %v8075, 5
        %v8078 = vsel %vm405, %v8073, %v8077
        %v8079 = vshrl.u32 %v7871, 16
        %v8081 = vrot.slane %v8079, 4
        %v8082 = vor.u32 %v8081, %v8077
        %v8083 = vrot.slane %v8082, 4
        %v8085 = vshll.u32 %v7872, 16
        %v8087 = vrot.slane %v8085, 5
        %v8088 = vsel %vm405, %v8083, %v8087
        %v8090 = vshrl.u32 %v7873, 16
        %v8092 = vrot.slane %v8090, 4
        %v8093 = vshll.u32 %v7873, 16
        %v8095 = vrot.slane %v8093, 5
        %v8096 = vor.u32 %v8092, %v8095
        %v8097 = vrot.slane %v8096, 4
        %v8099 = vshll.u32 %v7874, 16
        %v8101 = vrot.slane %v8099, 5
        %v8102 = vsel %vm405, %v8097, %v8101
        %v8103 = vshrl.u32 %v7874, 16
        %v8105 = vrot.slane %v8103, 4
        %v8106 = vor.u32 %v8105, %v8101
        %v8107 = vrot.slane %v8106, 4
        %v8109 = vshll.u32 %v7875, 16
        %v8111 = vrot.slane %v8109, 5
        %v8112 = vsel %vm405, %v8107, %v8111
        %v8114 = vshrl.u32 %v7876, 16
        %v8116 = vrot.slane %v8114, 4
        %v8117 = vshll.u32 %v7876, 16
        %v8119 = vrot.slane %v8117, 5
        %v8120 = vor.u32 %v8116, %v8119
        %v8121 = vrot.slane %v8120, 4
        %v8123 = vshll.u32 %v7877, 16
        %v8125 = vrot.slane %v8123, 5
        %v8126 = vsel %vm405, %v8121, %v8125
        %v8127 = vshrl.u32 %v7877, 16
        %v8129 = vrot.slane %v8127, 4
        %v8130 = vor.u32 %v8129, %v8125
        %v8131 = vrot.slane %v8130, 4
        %v8133 = vshll.u32 %v7878, 16
        %v8135 = vrot.slane %v8133, 5
        %v8136 = vsel %vm405, %v8131, %v8135
        %v8138 = vshrl.u32 %v7879, 16
        %v8140 = vrot.slane %v8138, 4
        %v8141 = vshll.u32 %v7879, 16
        %v8143 = vrot.slane %v8141, 5
        %v8144 = vor.u32 %v8140, %v8143
        %v8145 = vrot.slane %v8144, 4
        %v8147 = vshll.u32 %v7880, 16
        %v8149 = vrot.slane %v8147, 5
        %v8150 = vsel %vm405, %v8145, %v8149
        %v8151 = vshrl.u32 %v7880, 16
        %v8153 = vrot.slane %v8151, 4
        %v8154 = vor.u32 %v8153, %v8149
        %v8155 = vrot.slane %v8154, 4
        %v8157 = vshll.u32 %v7881, 16
        %v8159 = vrot.slane %v8157, 5
        %v8160 = vsel %vm405, %v8155, %v8159
        %v8162 = vshrl.u32 %v7882, 16
        %v8164 = vrot.slane %v8162, 4
        %v8165 = vshll.u32 %v7882, 16
        %v8167 = vrot.slane %v8165, 5
        %v8168 = vor.u32 %v8164, %v8167
        %v8169 = vrot.slane %v8168, 4
        %v8171 = vshll.u32 %v7883, 16
        %v8173 = vrot.slane %v8171, 5
        %v8174 = vsel %vm405, %v8169, %v8173
        %v8175 = vshrl.u32 %v7883, 16
        %v8177 = vrot.slane %v8175, 4
        %v8178 = vor.u32 %v8177, %v8173
        %v8179 = vrot.slane %v8178, 4
        %v8181 = vshll.u32 %v7884, 16
        %v8183 = vrot.slane %v8181, 5
        %v8184 = vsel %vm405, %v8179, %v8183
        %v8186 = vshrl.u32 %v7885, 16
        %v8188 = vrot.slane %v8186, 4
        %v8189 = vshll.u32 %v7885, 16
        %v8191 = vrot.slane %v8189, 5
        %v8192 = vor.u32 %v8188, %v8191
        %v8193 = vrot.slane %v8192, 4
        %v8195 = vshll.u32 %v7886, 16
        %v8197 = vrot.slane %v8195, 5
        %v8198 = vsel %vm405, %v8193, %v8197
        %v8199 = vshrl.u32 %v7886, 16
        %v8201 = vrot.slane %v8199, 4
        %v8202 = vor.u32 %v8201, %v8197
        %v8203 = vrot.slane %v8202, 4
        %v8205 = vshll.u32 %v7887, 16
        %v8207 = vrot.slane %v8205, 5
        %v8208 = vsel %vm405, %v8203, %v8207
        %v8210 = vshrl.u32 %v7888, 16
        %v8212 = vrot.slane %v8210, 4
        %v8213 = vshll.u32 %v7888, 16
        %v8215 = vrot.slane %v8213, 5
        %v8216 = vor.u32 %v8212, %v8215
        %v8217 = vrot.slane %v8216, 4
        %v8219 = vshll.u32 %v7889, 16
        %v8221 = vrot.slane %v8219, 5
        %v8222 = vsel %vm405, %v8217, %v8221
        %v8223 = vshrl.u32 %v7889, 16
        %v8225 = vrot.slane %v8223, 4
        %v8226 = vor.u32 %v8225, %v8221
        %v8227 = vrot.slane %v8226, 4
        %v8229 = vshll.u32 %v7890, 16
        %v8231 = vrot.slane %v8229, 5
        %v8232 = vsel %vm405, %v8227, %v8231
        %v8234 = vshrl.u32 %v7891, 16
        %v8236 = vrot.slane %v8234, 4
        %v8237 = vshll.u32 %v7891, 16
        %v8239 = vrot.slane %v8237, 5
        %v8240 = vor.u32 %v8236, %v8239
        %v8241 = vrot.slane %v8240, 4
        %v8243 = vshll.u32 %v7892, 16
        %v8245 = vrot.slane %v8243, 5
        %v8246 = vsel %vm405, %v8241, %v8245
        %v8247 = vshrl.u32 %v7892, 16
        %v8249 = vrot.slane %v8247, 4
        %v8250 = vor.u32 %v8249, %v8245
        %v8251 = vrot.slane %v8250, 4
        %v8253 = vshll.u32 %v7893, 16
        %v8255 = vrot.slane %v8253, 5
        %v8256 = vsel %vm405, %v8251, %v8255
        %v8258 = vshrl.u32 %v7894, 16
        %v8260 = vrot.slane %v8258, 4
        %v8261 = vshll.u32 %v7894, 16
        %v8263 = vrot.slane %v8261, 5
        %v8264 = vor.u32 %v8260, %v8263
        %v8265 = vrot.slane %v8264, 4
        %v8267 = vshll.u32 %v7895, 16
        %v8269 = vrot.slane %v8267, 5
        %v8270 = vsel %vm405, %v8265, %v8269
        %v8271 = vshrl.u32 %v7895, 16
        %v8273 = vrot.slane %v8271, 4
        %v8274 = vor.u32 %v8273, %v8269
        %v8275 = vrot.slane %v8274, 4
        %v8277 = vshll.u32 %v7896, 16
        %v8279 = vrot.slane %v8277, 5
        %v8280 = vsel %vm405, %v8275, %v8279
        %8281 = vrot.lane.b32.xlu0 %v7910, 64
        %v8282 = vpop.permute.xlu0 %8281
        %8283 = vrot.lane.b32.xlu0 %v7920, 64
        %v8284 = vpop.permute.xlu0 %8283
        %8285 = vrot.lane.b32.xlu0 %v7934, 64
        %v8286 = vpop.permute.xlu0 %8285
        %8287 = vrot.lane.b32.xlu0 %v7944, 64
        %v8288 = vpop.permute.xlu0 %8287
        %8289 = vrot.lane.b32.xlu0 %v7958, 64
        %v8290 = vpop.permute.xlu0 %8289
        %8291 = vrot.lane.b32.xlu0 %v7968, 64
        %v8292 = vpop.permute.xlu0 %8291
        %8293 = vrot.lane.b32.xlu0 %v7982, 64
        %v8294 = vpop.permute.xlu0 %8293
        %8295 = vrot.lane.b32.xlu0 %v7992, 64
        %v8296 = vpop.permute.xlu0 %8295
        %8297 = vrot.lane.b32.xlu0 %v8006, 64
        %v8298 = vpop.permute.xlu0 %8297
        %8299 = vrot.lane.b32.xlu0 %v8016, 64
        %v8300 = vpop.permute.xlu0 %8299
        %8301 = vrot.lane.b32.xlu0 %v8030, 64
        %v8302 = vpop.permute.xlu0 %8301
        %8303 = vrot.lane.b32.xlu0 %v8040, 64
        %v8304 = vpop.permute.xlu0 %8303
        %8305 = vrot.lane.b32.xlu0 %v8054, 64
        %v8306 = vpop.permute.xlu0 %8305
        %8307 = vrot.lane.b32.xlu0 %v8064, 64
        %v8308 = vpop.permute.xlu0 %8307
        %8309 = vrot.lane.b32.xlu0 %v8078, 64
        %v8310 = vpop.permute.xlu0 %8309
        %8311 = vrot.lane.b32.xlu0 %v8088, 64
        %v8312 = vpop.permute.xlu0 %8311
        %8313 = vrot.lane.b32.xlu0 %v8102, 64
        %v8314 = vpop.permute.xlu0 %8313
        %8315 = vrot.lane.b32.xlu0 %v8112, 64
        %v8316 = vpop.permute.xlu0 %8315
        %8317 = vrot.lane.b32.xlu0 %v8126, 64
        %v8318 = vpop.permute.xlu0 %8317
        %8319 = vrot.lane.b32.xlu0 %v8136, 64
        %v8320 = vpop.permute.xlu0 %8319
        %8321 = vrot.lane.b32.xlu0 %v8150, 64
        %v8322 = vpop.permute.xlu0 %8321
        %8323 = vrot.lane.b32.xlu0 %v8160, 64
        %v8324 = vpop.permute.xlu0 %8323
        %8325 = vrot.lane.b32.xlu0 %v8174, 64
        %v8326 = vpop.permute.xlu0 %8325
        %8327 = vrot.lane.b32.xlu0 %v8184, 64
        %v8328 = vpop.permute.xlu0 %8327
        %8329 = vrot.lane.b32.xlu0 %v8198, 64
        %v8330 = vpop.permute.xlu0 %8329
        %8331 = vrot.lane.b32.xlu0 %v8208, 64
        %v8332 = vpop.permute.xlu0 %8331
        %8333 = vrot.lane.b32.xlu0 %v8222, 64
        %v8334 = vpop.permute.xlu0 %8333
        %8335 = vrot.lane.b32.xlu0 %v8232, 64
        %v8336 = vpop.permute.xlu0 %8335
        %8337 = vrot.lane.b32.xlu0 %v8246, 64
        %v8338 = vpop.permute.xlu0 %8337
        %8339 = vrot.lane.b32.xlu0 %v8256, 64
        %v8340 = vpop.permute.xlu0 %8339
        %8341 = vrot.lane.b32.xlu0 %v8270, 64
        %v8342 = vpop.permute.xlu0 %8341
        %8343 = vrot.lane.b32.xlu0 %v8280, 64
        %v8344 = vpop.permute.xlu0 %8343
        %8377 = vst.msk [vmem:[#allocation4 + $0xc] sm:$0xf] %vm6455, %v8282
        %8378 = vst.msk [vmem:[#allocation4 + $0x20] sm:$0xf] %vm6455, %v8284
        %8379 = vst.msk [vmem:[#allocation4 + $0x34] sm:$0xf] %vm6455, %v8286
        %8380 = vst.msk [vmem:[#allocation4 + $0x48] sm:$0xf] %vm6455, %v8288
        %8381 = vst.msk [vmem:[#allocation4 + $0x5c] sm:$0xf] %vm6455, %v8290
        %8382 = vst.msk [vmem:[#allocation4 + $0x70] sm:$0xf] %vm6455, %v8292
        %8383 = vst.msk [vmem:[#allocation4 + $0x84] sm:$0xf] %vm6455, %v8294
        %8384 = vst.msk [vmem:[#allocation4 + $0x98] sm:$0xf] %vm6455, %v8296
        %8385 = vst.msk [vmem:[#allocation4 + $0xac] sm:$0xf] %vm6455, %v8298
        %8386 = vst.msk [vmem:[#allocation4 + $0xc0] sm:$0xf] %vm6455, %v8300
        %8387 = vst.msk [vmem:[#allocation4 + $0xd4] sm:$0xf] %vm6455, %v8302
        %8388 = vst.msk [vmem:[#allocation4 + $0xe8] sm:$0xf] %vm6455, %v8304
        %8389 = vst.msk [vmem:[#allocation4 + $0xfc] sm:$0xf] %vm6455, %v8306
        %8390 = vst.msk [vmem:[#allocation4 + $0x110] sm:$0xf] %vm6455, %v8308
        %8391 = vst.msk [vmem:[#allocation4 + $0x124] sm:$0xf] %vm6455, %v8310
        %8392 = vst.msk [vmem:[#allocation4 + $0x138] sm:$0xf] %vm6455, %v8312
        %8393 = vst.msk [vmem:[#allocation4 + $0x14c] sm:$0xf] %vm6455, %v8314
        %8394 = vst.msk [vmem:[#allocation4 + $0x160] sm:$0xf] %vm6455, %v8316
        %8395 = vst.msk [vmem:[#allocation4 + $0x174] sm:$0xf] %vm6455, %v8318
        %8396 = vst.msk [vmem:[#allocation4 + $0x188] sm:$0xf] %vm6455, %v8320
        %8397 = vst.msk [vmem:[#allocation4 + $0x19c] sm:$0xf] %vm6455, %v8322
        %8398 = vst.msk [vmem:[#allocation4 + $0x1b0] sm:$0xf] %vm6455, %v8324
        %8399 = vst.msk [vmem:[#allocation4 + $0x1c4] sm:$0xf] %vm6455, %v8326
        %8400 = vst.msk [vmem:[#allocation4 + $0x1d8] sm:$0xf] %vm6455, %v8328
        %8401 = vst.msk [vmem:[#allocation4 + $0x1ec] sm:$0xf] %vm6455, %v8330
        %8402 = vst.msk [vmem:[#allocation4 + $0x200] sm:$0xf] %vm6455, %v8332
        %8403 = vst.msk [vmem:[#allocation4 + $0x214] sm:$0xf] %vm6455, %v8334
        %8404 = vst.msk [vmem:[#allocation4 + $0x228] sm:$0xf] %vm6455, %v8336
        %8405 = vst.msk [vmem:[#allocation4 + $0x23c] sm:$0xf] %vm6455, %v8338
        %8406 = vst.msk [vmem:[#allocation4 + $0x250] sm:$0xf] %vm6455, %v8340
        %8407 = vst.msk [vmem:[#allocation4 + $0x264] sm:$0xf] %vm6455, %v8342
        %8408 = vst.msk [vmem:[#allocation4 + $0x278] sm:$0xf] %vm6455, %v8344
        %v8409 = vld [vmem:[%s7784] sm:$0xe]
        %v8410 = vld [vmem:[%s7784 + $0x4] sm:$0xf]
        %v8411 = vld [vmem:[%s7784 + $0x8] sm:$0x1]
        %v8412 = vld [vmem:[%s7784 + $0xc] sm:$0xe]
        %v8413 = vld [vmem:[%s7784 + $0x10] sm:$0xf]
        %v8414 = vld [vmem:[%s7784 + $0x14] sm:$0x1]
        %v8415 = vld [vmem:[%s7784 + $0x18] sm:$0xe]
        %v8416 = vld [vmem:[%s7784 + $0x1c] sm:$0xf]
        %v8417 = vld [vmem:[%s7784 + $0x20] sm:$0x1]
        %v8418 = vld [vmem:[%s7784 + $0x24] sm:$0xe]
        %v8419 = vld [vmem:[%s7784 + $0x28] sm:$0xf]
        %v8420 = vld [vmem:[%s7784 + $0x2c] sm:$0x1]
        %v8421 = vld [vmem:[%s7784 + $0x30] sm:$0xe]
        %v8422 = vld [vmem:[%s7784 + $0x34] sm:$0xf]
        %v8423 = vld [vmem:[%s7784 + $0x38] sm:$0x1]
        %v8424 = vld [vmem:[%s7784 + $0x3c] sm:$0xe]
        %v8425 = vld [vmem:[%s7784 + $0x40] sm:$0xf]
        %v8426 = vld [vmem:[%s7784 + $0x44] sm:$0x1]
        %v8427 = vld [vmem:[%s7784 + $0x48] sm:$0xe]
        %v8428 = vld [vmem:[%s7784 + $0x4c] sm:$0xf]
        %v8429 = vld [vmem:[%s7784 + $0x50] sm:$0x1]
        %v8430 = vld [vmem:[%s7784 + $0x54] sm:$0xe]
        %v8431 = vld [vmem:[%s7784 + $0x58] sm:$0xf]
        %v8432 = vld [vmem:[%s7784 + $0x5c] sm:$0x1]
        %v8433 = vld [vmem:[%s7784 + $0x60] sm:$0xe]
        %v8434 = vld [vmem:[%s7784 + $0x64] sm:$0xf]
        %v8435 = vld [vmem:[%s7784 + $0x68] sm:$0x1]
        %v8436 = vld [vmem:[%s7784 + $0x6c] sm:$0xe]
        %v8437 = vld [vmem:[%s7784 + $0x70] sm:$0xf]
        %v8438 = vld [vmem:[%s7784 + $0x74] sm:$0x1]
        %v8439 = vld [vmem:[%s7784 + $0x78] sm:$0xe]
        %v8440 = vld [vmem:[%s7784 + $0x7c] sm:$0xf]
        %v8441 = vld [vmem:[%s7784 + $0x80] sm:$0x1]
        %v8442 = vld [vmem:[%s7784 + $0x84] sm:$0xe]
        %v8443 = vld [vmem:[%s7784 + $0x88] sm:$0xf]
        %v8444 = vld [vmem:[%s7784 + $0x8c] sm:$0x1]
        %v8445 = vld [vmem:[%s7784 + $0x90] sm:$0xe]
        %v8446 = vld [vmem:[%s7784 + $0x94] sm:$0xf]
        %v8447 = vld [vmem:[%s7784 + $0x98] sm:$0x1]
        %v8448 = vld [vmem:[%s7784 + $0x9c] sm:$0xe]
        %v8449 = vld [vmem:[%s7784 + $0xa0] sm:$0xf]
        %v8450 = vld [vmem:[%s7784 + $0xa4] sm:$0x1]
        %v8451 = vld [vmem:[%s7784 + $0xa8] sm:$0xe]
        %v8452 = vld [vmem:[%s7784 + $0xac] sm:$0xf]
        %v8453 = vld [vmem:[%s7784 + $0xb0] sm:$0x1]
        %v8454 = vld [vmem:[%s7784 + $0xb4] sm:$0xe]
        %v8455 = vld [vmem:[%s7784 + $0xb8] sm:$0xf]
        %v8456 = vld [vmem:[%s7784 + $0xbc] sm:$0x1]
        %v8505 = vrot.slane %v8409, 5
        %v8506 = vrot.slane %v8505, 4
        %v8507 = vrot.slane %v8410, 5
        %v8508 = vsel %vm952, %v8506, %v8507
        %v8509 = vrot.slane %v8507, 4
        %v8510 = vrot.slane %v8411, 5
        %v8511 = vsel %vm952, %v8509, %v8510
        %v8512 = vrot.slane %v8412, 5
        %v8513 = vrot.slane %v8512, 4
        %v8514 = vrot.slane %v8413, 5
        %v8515 = vsel %vm952, %v8513, %v8514
        %v8516 = vrot.slane %v8514, 4
        %v8517 = vrot.slane %v8414, 5
        %v8518 = vsel %vm952, %v8516, %v8517
        %v8519 = vrot.slane %v8415, 5
        %v8520 = vrot.slane %v8519, 4
        %v8521 = vrot.slane %v8416, 5
        %v8522 = vsel %vm952, %v8520, %v8521
        %v8523 = vrot.slane %v8521, 4
        %v8524 = vrot.slane %v8417, 5
        %v8525 = vsel %vm952, %v8523, %v8524
        %v8526 = vrot.slane %v8418, 5
        %v8527 = vrot.slane %v8526, 4
        %v8528 = vrot.slane %v8419, 5
        %v8529 = vsel %vm952, %v8527, %v8528
        %v8530 = vrot.slane %v8528, 4
        %v8531 = vrot.slane %v8420, 5
        %v8532 = vsel %vm952, %v8530, %v8531
        %v8533 = vrot.slane %v8421, 5
        %v8534 = vrot.slane %v8533, 4
        %v8535 = vrot.slane %v8422, 5
        %v8536 = vsel %vm952, %v8534, %v8535
        %v8537 = vrot.slane %v8535, 4
        %v8538 = vrot.slane %v8423, 5
        %v8539 = vsel %vm952, %v8537, %v8538
        %v8540 = vrot.slane %v8424, 5
        %v8541 = vrot.slane %v8540, 4
        %v8542 = vrot.slane %v8425, 5
        %v8543 = vsel %vm952, %v8541, %v8542
        %v8544 = vrot.slane %v8542, 4
        %v8545 = vrot.slane %v8426, 5
        %v8546 = vsel %vm952, %v8544, %v8545
        %v8547 = vrot.slane %v8427, 5
        %v8548 = vrot.slane %v8547, 4
        %v8549 = vrot.slane %v8428, 5
        %v8550 = vsel %vm952, %v8548, %v8549
        %v8551 = vrot.slane %v8549, 4
        %v8552 = vrot.slane %v8429, 5
        %v8553 = vsel %vm952, %v8551, %v8552
        %v8554 = vrot.slane %v8430, 5
        %v8555 = vrot.slane %v8554, 4
        %v8556 = vrot.slane %v8431, 5
        %v8557 = vsel %vm952, %v8555, %v8556
        %v8558 = vrot.slane %v8556, 4
        %v8559 = vrot.slane %v8432, 5
        %v8560 = vsel %vm952, %v8558, %v8559
        %v8561 = vrot.slane %v8433, 5
        %v8562 = vrot.slane %v8561, 4
        %v8563 = vrot.slane %v8434, 5
        %v8564 = vsel %vm952, %v8562, %v8563
        %v8565 = vrot.slane %v8563, 4
        %v8566 = vrot.slane %v8435, 5
        %v8567 = vsel %vm952, %v8565, %v8566
        %v8568 = vrot.slane %v8436, 5
        %v8569 = vrot.slane %v8568, 4
        %v8570 = vrot.slane %v8437, 5
        %v8571 = vsel %vm952, %v8569, %v8570
        %v8572 = vrot.slane %v8570, 4
        %v8573 = vrot.slane %v8438, 5
        %v8574 = vsel %vm952, %v8572, %v8573
        %v8575 = vrot.slane %v8439, 5
        %v8576 = vrot.slane %v8575, 4
        %v8577 = vrot.slane %v8440, 5
        %v8578 = vsel %vm952, %v8576, %v8577
        %v8579 = vrot.slane %v8577, 4
        %v8580 = vrot.slane %v8441, 5
        %v8581 = vsel %vm952, %v8579, %v8580
        %v8582 = vrot.slane %v8442, 5
        %v8583 = vrot.slane %v8582, 4
        %v8584 = vrot.slane %v8443, 5
        %v8585 = vsel %vm952, %v8583, %v8584
        %v8586 = vrot.slane %v8584, 4
        %v8587 = vrot.slane %v8444, 5
        %v8588 = vsel %vm952, %v8586, %v8587
        %v8589 = vrot.slane %v8445, 5
        %v8590 = vrot.slane %v8589, 4
        %v8591 = vrot.slane %v8446, 5
        %v8592 = vsel %vm952, %v8590, %v8591
        %v8593 = vrot.slane %v8591, 4
        %v8594 = vrot.slane %v8447, 5
        %v8595 = vsel %vm952, %v8593, %v8594
        %v8596 = vrot.slane %v8448, 5
        %v8597 = vrot.slane %v8596, 4
        %v8598 = vrot.slane %v8449, 5
        %v8599 = vsel %vm952, %v8597, %v8598
        %v8600 = vrot.slane %v8598, 4
        %v8601 = vrot.slane %v8450, 5
        %v8602 = vsel %vm952, %v8600, %v8601
        %v8603 = vrot.slane %v8451, 5
        %v8604 = vrot.slane %v8603, 4
        %v8605 = vrot.slane %v8452, 5
        %v8606 = vsel %vm952, %v8604, %v8605
        %v8607 = vrot.slane %v8605, 4
        %v8608 = vrot.slane %v8453, 5
        %v8609 = vsel %vm952, %v8607, %v8608
        %v8610 = vrot.slane %v8454, 5
        %v8611 = vrot.slane %v8610, 4
        %v8612 = vrot.slane %v8455, 5
        %v8613 = vsel %vm952, %v8611, %v8612
        %v8614 = vrot.slane %v8612, 4
        %v8615 = vrot.slane %v8456, 5
        %v8616 = vsel %vm952, %v8614, %v8615
        %8649 = vst.msk [vmem:[#allocation4 + $0x10] sm:$0xf] %vm5271, %v8508
        %8650 = vst.msk [vmem:[#allocation4 + $0x24] sm:$0xf] %vm5271, %v8511
        %8651 = vst.msk [vmem:[#allocation4 + $0x38] sm:$0xf] %vm5271, %v8515
        %8652 = vst.msk [vmem:[#allocation4 + $0x4c] sm:$0xf] %vm5271, %v8518
        %8653 = vst.msk [vmem:[#allocation4 + $0x60] sm:$0xf] %vm5271, %v8522
        %8654 = vst.msk [vmem:[#allocation4 + $0x74] sm:$0xf] %vm5271, %v8525
        %8655 = vst.msk [vmem:[#allocation4 + $0x88] sm:$0xf] %vm5271, %v8529
        %8656 = vst.msk [vmem:[#allocation4 + $0x9c] sm:$0xf] %vm5271, %v8532
        %8657 = vst.msk [vmem:[#allocation4 + $0xb0] sm:$0xf] %vm5271, %v8536
        %8658 = vst.msk [vmem:[#allocation4 + $0xc4] sm:$0xf] %vm5271, %v8539
        %8659 = vst.msk [vmem:[#allocation4 + $0xd8] sm:$0xf] %vm5271, %v8543
        %8660 = vst.msk [vmem:[#allocation4 + $0xec] sm:$0xf] %vm5271, %v8546
        %8661 = vst.msk [vmem:[#allocation4 + $0x100] sm:$0xf] %vm5271, %v8550
        %8662 = vst.msk [vmem:[#allocation4 + $0x114] sm:$0xf] %vm5271, %v8553
        %8663 = vst.msk [vmem:[#allocation4 + $0x128] sm:$0xf] %vm5271, %v8557
        %8664 = vst.msk [vmem:[#allocation4 + $0x13c] sm:$0xf] %vm5271, %v8560
        %8665 = vst.msk [vmem:[#allocation4 + $0x150] sm:$0xf] %vm5271, %v8564
        %8666 = vst.msk [vmem:[#allocation4 + $0x164] sm:$0xf] %vm5271, %v8567
        %8667 = vst.msk [vmem:[#allocation4 + $0x178] sm:$0xf] %vm5271, %v8571
        %8668 = vst.msk [vmem:[#allocation4 + $0x18c] sm:$0xf] %vm5271, %v8574
        %8669 = vst.msk [vmem:[#allocation4 + $0x1a0] sm:$0xf] %vm5271, %v8578
        %8670 = vst.msk [vmem:[#allocation4 + $0x1b4] sm:$0xf] %vm5271, %v8581
        %8671 = vst.msk [vmem:[#allocation4 + $0x1c8] sm:$0xf] %vm5271, %v8585
        %8672 = vst.msk [vmem:[#allocation4 + $0x1dc] sm:$0xf] %vm5271, %v8588
        %8673 = vst.msk [vmem:[#allocation4 + $0x1f0] sm:$0xf] %vm5271, %v8592
        %8674 = vst.msk [vmem:[#allocation4 + $0x204] sm:$0xf] %vm5271, %v8595
        %8675 = vst.msk [vmem:[#allocation4 + $0x218] sm:$0xf] %vm5271, %v8599
        %8676 = vst.msk [vmem:[#allocation4 + $0x22c] sm:$0xf] %vm5271, %v8602
        %8677 = vst.msk [vmem:[#allocation4 + $0x240] sm:$0xf] %vm5271, %v8606
        %8678 = vst.msk [vmem:[#allocation4 + $0x254] sm:$0xf] %vm5271, %v8609
        %8679 = vst.msk [vmem:[#allocation4 + $0x268] sm:$0xf] %vm5271, %v8613
        %8680 = vst.msk [vmem:[#allocation4 + $0x27c] sm:$0xf] %vm5271, %v8616
        %v8681 = vld [vmem:[#allocation4] sm:$0xff]
        %v8682 = vld [vmem:[#allocation4 + $0x8] sm:$0xff]
        %v8683 = vld [vmem:[#allocation4 + $0x10] sm:$0xf]
        %v8684 = vld [vmem:[#allocation4 + $0x14] sm:$0xff]
        %v8685 = vld [vmem:[#allocation4 + $0x1c] sm:$0xff]
        %v8686 = vld [vmem:[#allocation4 + $0x24] sm:$0xf]
        %v8687 = vld [vmem:[#allocation4 + $0x28] sm:$0xff]
        %v8688 = vld [vmem:[#allocation4 + $0x30] sm:$0xff]
        %v8689 = vld [vmem:[#allocation4 + $0x38] sm:$0xf]
        %v8690 = vld [vmem:[#allocation4 + $0x3c] sm:$0xff]
        %v8691 = vld [vmem:[#allocation4 + $0x44] sm:$0xff]
        %v8692 = vld [vmem:[#allocation4 + $0x4c] sm:$0xf]
        %v8693 = vld [vmem:[#allocation4 + $0x50] sm:$0xff]
        %v8694 = vld [vmem:[#allocation4 + $0x58] sm:$0xff]
        %v8695 = vld [vmem:[#allocation4 + $0x60] sm:$0xf]
        %v8696 = vld [vmem:[#allocation4 + $0x64] sm:$0xff]
        %v8697 = vld [vmem:[#allocation4 + $0x6c] sm:$0xff]
        %v8698 = vld [vmem:[#allocation4 + $0x74] sm:$0xf]
        %v8699 = vld [vmem:[#allocation4 + $0x78] sm:$0xff]
        %v8700 = vld [vmem:[#allocation4 + $0x80] sm:$0xff]
        %v8701 = vld [vmem:[#allocation4 + $0x88] sm:$0xf]
        %v8702 = vld [vmem:[#allocation4 + $0x8c] sm:$0xff]
        %v8703 = vld [vmem:[#allocation4 + $0x94] sm:$0xff]
        %v8704 = vld [vmem:[#allocation4 + $0x9c] sm:$0xf]
        %v8705 = vld [vmem:[#allocation4 + $0xa0] sm:$0xff]
        %v8706 = vld [vmem:[#allocation4 + $0xa8] sm:$0xff]
        %v8707 = vld [vmem:[#allocation4 + $0xb0] sm:$0xf]
        %v8708 = vld [vmem:[#allocation4 + $0xb4] sm:$0xff]
        %v8709 = vld [vmem:[#allocation4 + $0xbc] sm:$0xff]
        %v8710 = vld [vmem:[#allocation4 + $0xc4] sm:$0xf]
        %v8711 = vld [vmem:[#allocation4 + $0xc8] sm:$0xff]
        %v8712 = vld [vmem:[#allocation4 + $0xd0] sm:$0xff]
        %v8713 = vld [vmem:[#allocation4 + $0xd8] sm:$0xf]
        %v8714 = vld [vmem:[#allocation4 + $0xdc] sm:$0xff]
        %v8715 = vld [vmem:[#allocation4 + $0xe4] sm:$0xff]
        %v8716 = vld [vmem:[#allocation4 + $0xec] sm:$0xf]
        %v8717 = vld [vmem:[#allocation4 + $0xf0] sm:$0xff]
        %v8718 = vld [vmem:[#allocation4 + $0xf8] sm:$0xff]
        %v8719 = vld [vmem:[#allocation4 + $0x100] sm:$0xf]
        %v8720 = vld [vmem:[#allocation4 + $0x104] sm:$0xff]
        %v8721 = vld [vmem:[#allocation4 + $0x10c] sm:$0xff]
        %v8722 = vld [vmem:[#allocation4 + $0x114] sm:$0xf]
        %v8723 = vld [vmem:[#allocation4 + $0x118] sm:$0xff]
        %v8724 = vld [vmem:[#allocation4 + $0x120] sm:$0xff]
        %v8725 = vld [vmem:[#allocation4 + $0x128] sm:$0xf]
        %v8726 = vld [vmem:[#allocation4 + $0x12c] sm:$0xff]
        %v8727 = vld [vmem:[#allocation4 + $0x134] sm:$0xff]
        %v8728 = vld [vmem:[#allocation4 + $0x13c] sm:$0xf]
        %v8729 = vld [vmem:[#allocation4 + $0x140] sm:$0xff]
        %v8730 = vld [vmem:[#allocation4 + $0x148] sm:$0xff]
        %v8731 = vld [vmem:[#allocation4 + $0x150] sm:$0xf]
        %v8732 = vld [vmem:[#allocation4 + $0x154] sm:$0xff]
        %v8733 = vld [vmem:[#allocation4 + $0x15c] sm:$0xff]
        %v8734 = vld [vmem:[#allocation4 + $0x164] sm:$0xf]
        %v8735 = vld [vmem:[#allocation4 + $0x168] sm:$0xff]
        %v8736 = vld [vmem:[#allocation4 + $0x170] sm:$0xff]
        %v8737 = vld [vmem:[#allocation4 + $0x178] sm:$0xf]
        %v8738 = vld [vmem:[#allocation4 + $0x17c] sm:$0xff]
        %v8739 = vld [vmem:[#allocation4 + $0x184] sm:$0xff]
        %v8740 = vld [vmem:[#allocation4 + $0x18c] sm:$0xf]
        %v8741 = vld [vmem:[#allocation4 + $0x190] sm:$0xff]
        %v8742 = vld [vmem:[#allocation4 + $0x198] sm:$0xff]
        %v8743 = vld [vmem:[#allocation4 + $0x1a0] sm:$0xf]
        %v8744 = vld [vmem:[#allocation4 + $0x1a4] sm:$0xff]
        %v8745 = vld [vmem:[#allocation4 + $0x1ac] sm:$0xff]
        %v8746 = vld [vmem:[#allocation4 + $0x1b4] sm:$0xf]
        %v8747 = vld [vmem:[#allocation4 + $0x1b8] sm:$0xff]
        %v8748 = vld [vmem:[#allocation4 + $0x1c0] sm:$0xff]
        %v8749 = vld [vmem:[#allocation4 + $0x1c8] sm:$0xf]
        %v8750 = vld [vmem:[#allocation4 + $0x1cc] sm:$0xff]
        %v8751 = vld [vmem:[#allocation4 + $0x1d4] sm:$0xff]
        %v8752 = vld [vmem:[#allocation4 + $0x1dc] sm:$0xf]
        %v8753 = vld [vmem:[#allocation4 + $0x1e0] sm:$0xff]
        %v8754 = vld [vmem:[#allocation4 + $0x1e8] sm:$0xff]
        %v8755 = vld [vmem:[#allocation4 + $0x1f0] sm:$0xf]
        %v8756 = vld [vmem:[#allocation4 + $0x1f4] sm:$0xff]
        %v8757 = vld [vmem:[#allocation4 + $0x1fc] sm:$0xff]
        %v8758 = vld [vmem:[#allocation4 + $0x204] sm:$0xf]
        %v8759 = vld [vmem:[#allocation4 + $0x208] sm:$0xff]
        %v8760 = vld [vmem:[#allocation4 + $0x210] sm:$0xff]
        %v8761 = vld [vmem:[#allocation4 + $0x218] sm:$0xf]
        %v8762 = vld [vmem:[#allocation4 + $0x21c] sm:$0xff]
        %v8763 = vld [vmem:[#allocation4 + $0x224] sm:$0xff]
        %v8764 = vld [vmem:[#allocation4 + $0x22c] sm:$0xf]
        %v8765 = vld [vmem:[#allocation4 + $0x230] sm:$0xff]
        %v8766 = vld [vmem:[#allocation4 + $0x238] sm:$0xff]
        %v8767 = vld [vmem:[#allocation4 + $0x240] sm:$0xf]
        %v8768 = vld [vmem:[#allocation4 + $0x244] sm:$0xff]
        %v8769 = vld [vmem:[#allocation4 + $0x24c] sm:$0xff]
        %v8770 = vld [vmem:[#allocation4 + $0x254] sm:$0xf]
        %v8771 = vld [vmem:[#allocation4 + $0x258] sm:$0xff]
        %v8772 = vld [vmem:[#allocation4 + $0x260] sm:$0xff]
        %v8773 = vld [vmem:[#allocation4 + $0x268] sm:$0xf]
        %v8774 = vld [vmem:[#allocation4 + $0x26c] sm:$0xff]
        %v8775 = vld [vmem:[#allocation4 + $0x274] sm:$0xff]
        %v8776 = vld [vmem:[#allocation4 + $0x27c] sm:$0xf]
        %v8777 = vld [vmem:[%s4] sm:$0xf]
        %v8778 = vld [vmem:[%s4 + $0x4] sm:$0xf]
        %v8779 = vld [vmem:[%s4 + $0x8] sm:$0xf]
        %v8780 = vld [vmem:[%s4 + $0xc] sm:$0xf]
        %v8781 = vld [vmem:[%s4 + $0x10] sm:$0xf]
        %v8782 = vld [vmem:[%s4 + $0x14] sm:$0xf]
        %v8783 = vld [vmem:[%s4 + $0x18] sm:$0xf]
        %v8784 = vld [vmem:[%s4 + $0x1c] sm:$0xf]
        %v8785 = vld [vmem:[%s4 + $0x20] sm:$0xf]
        %v8786 = vld [vmem:[%s4 + $0x24] sm:$0xf]
        %v8787 = vld [vmem:[%s4 + $0x28] sm:$0xf]
        %v8788 = vld [vmem:[%s4 + $0x2c] sm:$0xf]
        %v8789 = vld [vmem:[%s4 + $0x30] sm:$0xf]
        %v8790 = vld [vmem:[%s4 + $0x34] sm:$0xf]
        %v8791 = vld [vmem:[%s4 + $0x38] sm:$0xf]
        %v8792 = vld [vmem:[%s4 + $0x3c] sm:$0xf]
        %v8793 = vld [vmem:[%s4 + $0x40] sm:$0xf]
        %v8794 = vld [vmem:[%s4 + $0x44] sm:$0xf]
        %v8795 = vld [vmem:[%s4 + $0x48] sm:$0xf]
        %v8796 = vld [vmem:[%s4 + $0x4c] sm:$0xf]
        %v8797 = vld [vmem:[%s4 + $0x50] sm:$0xf]
        %v8798 = vld [vmem:[%s4 + $0x54] sm:$0xf]
        %v8799 = vld [vmem:[%s4 + $0x58] sm:$0xf]
        %v8800 = vld [vmem:[%s4 + $0x5c] sm:$0xf]
        %v8801 = vld [vmem:[%s4 + $0x60] sm:$0xf]
        %v8802 = vld [vmem:[%s4 + $0x64] sm:$0xf]
        %v8803 = vld [vmem:[%s4 + $0x68] sm:$0xf]
        %v8804 = vld [vmem:[%s4 + $0x6c] sm:$0xf]
        %v8805 = vld [vmem:[%s4 + $0x70] sm:$0xf]
        %v8806 = vld [vmem:[%s4 + $0x74] sm:$0xf]
        %v8807 = vld [vmem:[%s4 + $0x78] sm:$0xf]
        %v8808 = vld [vmem:[%s4 + $0x7c] sm:$0xf]
        %v8809 = vld [vmem:[%s4 + $0x80] sm:$0xf]
        %v8810 = vld [vmem:[%s4 + $0x84] sm:$0xf]
        %v8811 = vld [vmem:[%s4 + $0x88] sm:$0xf]
        %v8812 = vld [vmem:[%s4 + $0x8c] sm:$0xf]
        %v8813 = vld [vmem:[%s4 + $0x90] sm:$0xf]
        %v8814 = vld [vmem:[%s4 + $0x94] sm:$0xf]
        %v8815 = vld [vmem:[%s4 + $0x98] sm:$0xf]
        %v8816 = vld [vmem:[%s4 + $0x9c] sm:$0xf]
        %v8817 = vld [vmem:[%s4 + $0xa0] sm:$0xf]
        %v8818 = vld [vmem:[%s4 + $0xa4] sm:$0xf]
        %v8819 = vld [vmem:[%s4 + $0xa8] sm:$0xf]
        %v8820 = vld [vmem:[%s4 + $0xac] sm:$0xf]
        %v8821 = vld [vmem:[%s4 + $0xb0] sm:$0xf]
        %v8822 = vld [vmem:[%s4 + $0xb4] sm:$0xf]
        %v8823 = vld [vmem:[%s4 + $0xb8] sm:$0xf]
        %v8824 = vld [vmem:[%s4 + $0xbc] sm:$0xf]
        %v8825 = vld [vmem:[%s4 + $0xc0] sm:$0xf]
        %v8826 = vld [vmem:[%s4 + $0xc4] sm:$0xf]
        %v8827 = vld [vmem:[%s4 + $0xc8] sm:$0xf]
        %v8828 = vld [vmem:[%s4 + $0xcc] sm:$0xf]
        %v8829 = vld [vmem:[%s4 + $0xd0] sm:$0xf]
        %v8830 = vld [vmem:[%s4 + $0xd4] sm:$0xf]
        %v8831 = vld [vmem:[%s4 + $0xd8] sm:$0xf]
        %v8832 = vld [vmem:[%s4 + $0xdc] sm:$0xf]
        %v8833 = vld [vmem:[%s4 + $0xe0] sm:$0xf]
        %v8834 = vld [vmem:[%s4 + $0xe4] sm:$0xf]
        %v8835 = vld [vmem:[%s4 + $0xe8] sm:$0xf]
        %v8836 = vld [vmem:[%s4 + $0xec] sm:$0xf]
        %v8837 = vld [vmem:[%s4 + $0xf0] sm:$0xf]
        %v8838 = vld [vmem:[%s4 + $0xf4] sm:$0xf]
        %v8839 = vld [vmem:[%s4 + $0xf8] sm:$0xf]
        %v8840 = vld [vmem:[%s4 + $0xfc] sm:$0xf]
        %v8841 = vld [vmem:[%s4 + $0x100] sm:$0xf]
        %v8842 = vld [vmem:[%s4 + $0x104] sm:$0xf]
        %v8843 = vld [vmem:[%s4 + $0x108] sm:$0xf]
        %v8844 = vld [vmem:[%s4 + $0x10c] sm:$0xf]
        %v8845 = vld [vmem:[%s4 + $0x110] sm:$0xf]
        %v8846 = vld [vmem:[%s4 + $0x114] sm:$0xf]
        %v8847 = vld [vmem:[%s4 + $0x118] sm:$0xf]
        %v8848 = vld [vmem:[%s4 + $0x11c] sm:$0xf]
        %v8849 = vld [vmem:[%s5] sm:$0x1]
        %v8851 = vlaneseq
        %v8852 = vshrl.u32 %v8851, 7
        %v8853 = vsub.s32 0, %v8852
        %v8854 = vrot.slane %v8849, %v8853
        %v8952 = vunpack.c.l.b16 %v8681
        %v8953 = vunpack.c.h.b16 %v8681
        %v8954 = vunpack.c.l.b16 %v8682
        %v8955 = vunpack.c.h.b16 %v8682
        %v8956 = vunpack.c.l.b16 %v8683
        %v8957 = vunpack.c.l.b16 %v8684
        %v8958 = vunpack.c.h.b16 %v8684
        %v8959 = vunpack.c.l.b16 %v8685
        %v8960 = vunpack.c.h.b16 %v8685
        %v8961 = vunpack.c.l.b16 %v8686
        %v8962 = vunpack.c.l.b16 %v8687
        %v8963 = vunpack.c.h.b16 %v8687
        %v8964 = vunpack.c.l.b16 %v8688
        %v8965 = vunpack.c.h.b16 %v8688
        %v8966 = vunpack.c.l.b16 %v8689
        %v8967 = vunpack.c.l.b16 %v8690
        %v8968 = vunpack.c.h.b16 %v8690
        %v8969 = vunpack.c.l.b16 %v8691
        %v8970 = vunpack.c.h.b16 %v8691
        %v8971 = vunpack.c.l.b16 %v8692
        %v8972 = vunpack.c.l.b16 %v8693
        %v8973 = vunpack.c.h.b16 %v8693
        %v8974 = vunpack.c.l.b16 %v8694
        %v8975 = vunpack.c.h.b16 %v8694
        %v8976 = vunpack.c.l.b16 %v8695
        %v8977 = vunpack.c.l.b16 %v8696
        %v8978 = vunpack.c.h.b16 %v8696
        %v8979 = vunpack.c.l.b16 %v8697
        %v8980 = vunpack.c.h.b16 %v8697
        %v8981 = vunpack.c.l.b16 %v8698
        %v8982 = vunpack.c.l.b16 %v8699
        %v8983 = vunpack.c.h.b16 %v8699
        %v8984 = vunpack.c.l.b16 %v8700
        %v8985 = vunpack.c.h.b16 %v8700
        %v8986 = vunpack.c.l.b16 %v8701
        %v8987 = vunpack.c.l.b16 %v8702
        %v8988 = vunpack.c.h.b16 %v8702
        %v8989 = vunpack.c.l.b16 %v8703
        %v8990 = vunpack.c.h.b16 %v8703
        %v8991 = vunpack.c.l.b16 %v8704
        %v8992 = vunpack.c.l.b16 %v8705
        %v8993 = vunpack.c.h.b16 %v8705
        %v8994 = vunpack.c.l.b16 %v8706
        %v8995 = vunpack.c.h.b16 %v8706
        %v8996 = vunpack.c.l.b16 %v8707
        %v8997 = vunpack.c.l.b16 %v8708
        %v8998 = vunpack.c.h.b16 %v8708
        %v8999 = vunpack.c.l.b16 %v8709
        %v9000 = vunpack.c.h.b16 %v8709
        %v9001 = vunpack.c.l.b16 %v8710
        %v9002 = vunpack.c.l.b16 %v8711
        %v9003 = vunpack.c.h.b16 %v8711
        %v9004 = vunpack.c.l.b16 %v8712
        %v9005 = vunpack.c.h.b16 %v8712
        %v9006 = vunpack.c.l.b16 %v8713
        %v9007 = vunpack.c.l.b16 %v8714
        %v9008 = vunpack.c.h.b16 %v8714
        %v9009 = vunpack.c.l.b16 %v8715
        %v9010 = vunpack.c.h.b16 %v8715
        %v9011 = vunpack.c.l.b16 %v8716
        %v9012 = vunpack.c.l.b16 %v8717
        %v9013 = vunpack.c.h.b16 %v8717
        %v9014 = vunpack.c.l.b16 %v8718
        %v9015 = vunpack.c.h.b16 %v8718
        %v9016 = vunpack.c.l.b16 %v8719
        %v9017 = vunpack.c.l.b16 %v8720
        %v9018 = vunpack.c.h.b16 %v8720
        %v9019 = vunpack.c.l.b16 %v8721
        %v9020 = vunpack.c.h.b16 %v8721
        %v9021 = vunpack.c.l.b16 %v8722
        %v9022 = vunpack.c.l.b16 %v8723
        %v9023 = vunpack.c.h.b16 %v8723
        %v9024 = vunpack.c.l.b16 %v8724
        %v9025 = vunpack.c.h.b16 %v8724
        %v9026 = vunpack.c.l.b16 %v8725
        %v9027 = vunpack.c.l.b16 %v8726
        %v9028 = vunpack.c.h.b16 %v8726
        %v9029 = vunpack.c.l.b16 %v8727
        %v9030 = vunpack.c.h.b16 %v8727
        %v9031 = vunpack.c.l.b16 %v8728
        %v9032 = vunpack.c.l.b16 %v8729
        %v9033 = vunpack.c.h.b16 %v8729
        %v9034 = vunpack.c.l.b16 %v8730
        %v9035 = vunpack.c.h.b16 %v8730
        %v9036 = vunpack.c.l.b16 %v8731
        %v9037 = vunpack.c.l.b16 %v8732
        %v9038 = vunpack.c.h.b16 %v8732
        %v9039 = vunpack.c.l.b16 %v8733
        %v9040 = vunpack.c.h.b16 %v8733
        %v9041 = vunpack.c.l.b16 %v8734
        %v9042 = vunpack.c.l.b16 %v8735
        %v9043 = vunpack.c.h.b16 %v8735
        %v9044 = vunpack.c.l.b16 %v8736
        %v9045 = vunpack.c.h.b16 %v8736
        %v9046 = vunpack.c.l.b16 %v8737
        %v9047 = vunpack.c.l.b16 %v8738
        %v9048 = vunpack.c.h.b16 %v8738
        %v9049 = vunpack.c.l.b16 %v8739
        %v9050 = vunpack.c.h.b16 %v8739
        %v9051 = vunpack.c.l.b16 %v8740
        %v9052 = vunpack.c.l.b16 %v8741
        %v9053 = vunpack.c.h.b16 %v8741
        %v9054 = vunpack.c.l.b16 %v8742
        %v9055 = vunpack.c.h.b16 %v8742
        %v9056 = vunpack.c.l.b16 %v8743
        %v9057 = vunpack.c.l.b16 %v8744
        %v9058 = vunpack.c.h.b16 %v8744
        %v9059 = vunpack.c.l.b16 %v8745
        %v9060 = vunpack.c.h.b16 %v8745
        %v9061 = vunpack.c.l.b16 %v8746
        %v9062 = vunpack.c.l.b16 %v8747
        %v9063 = vunpack.c.h.b16 %v8747
        %v9064 = vunpack.c.l.b16 %v8748
        %v9065 = vunpack.c.h.b16 %v8748
        %v9066 = vunpack.c.l.b16 %v8749
        %v9067 = vunpack.c.l.b16 %v8750
        %v9068 = vunpack.c.h.b16 %v8750
        %v9069 = vunpack.c.l.b16 %v8751
        %v9070 = vunpack.c.h.b16 %v8751
        %v9071 = vunpack.c.l.b16 %v8752
        %v9072 = vunpack.c.l.b16 %v8753
        %v9073 = vunpack.c.h.b16 %v8753
        %v9074 = vunpack.c.l.b16 %v8754
        %v9075 = vunpack.c.h.b16 %v8754
        %v9076 = vunpack.c.l.b16 %v8755
        %v9077 = vunpack.c.l.b16 %v8756
        %v9078 = vunpack.c.h.b16 %v8756
        %v9079 = vunpack.c.l.b16 %v8757
        %v9080 = vunpack.c.h.b16 %v8757
        %v9081 = vunpack.c.l.b16 %v8758
        %v9082 = vunpack.c.l.b16 %v8759
        %v9083 = vunpack.c.h.b16 %v8759
        %v9084 = vunpack.c.l.b16 %v8760
        %v9085 = vunpack.c.h.b16 %v8760
        %v9086 = vunpack.c.l.b16 %v8761
        %v9087 = vunpack.c.l.b16 %v8762
        %v9088 = vunpack.c.h.b16 %v8762
        %v9089 = vunpack.c.l.b16 %v8763
        %v9090 = vunpack.c.h.b16 %v8763
        %v9091 = vunpack.c.l.b16 %v8764
        %v9092 = vunpack.c.l.b16 %v8765
        %v9093 = vunpack.c.h.b16 %v8765
        %v9094 = vunpack.c.l.b16 %v8766
        %v9095 = vunpack.c.h.b16 %v8766
        %v9096 = vunpack.c.l.b16 %v8767
        %v9097 = vunpack.c.l.b16 %v8768
        %v9098 = vunpack.c.h.b16 %v8768
        %v9099 = vunpack.c.l.b16 %v8769
        %v9100 = vunpack.c.h.b16 %v8769
        %v9101 = vunpack.c.l.b16 %v8770
        %v9102 = vunpack.c.l.b16 %v8771
        %v9103 = vunpack.c.h.b16 %v8771
        %v9104 = vunpack.c.l.b16 %v8772
        %v9105 = vunpack.c.h.b16 %v8772
        %v9106 = vunpack.c.l.b16 %v8773
        %v9107 = vunpack.c.l.b16 %v8774
        %v9108 = vunpack.c.h.b16 %v8774
        %v9109 = vunpack.c.l.b16 %v8775
        %v9110 = vunpack.c.h.b16 %v8775
        %v9111 = vunpack.c.l.b16 %v8776
        %v9112 = vpack.c.b16 %v8957, %v8952
        %v9113 = vpack.c.b16 %v8958, %v8953
        %v9114 = vpack.c.b16 %v8959, %v8954
        %v9115 = vpack.c.b16 %v8960, %v8955
        %v9116 = vpack.c.b16 %v8961, %v8956
        %v9117 = vpack.c.b16 %v8967, %v8962
        %v9118 = vpack.c.b16 %v8968, %v8963
        %v9119 = vpack.c.b16 %v8969, %v8964
        %v9120 = vpack.c.b16 %v8970, %v8965
        %v9121 = vpack.c.b16 %v8971, %v8966
        %v9122 = vpack.c.b16 %v8977, %v8972
        %v9123 = vpack.c.b16 %v8978, %v8973
        %v9124 = vpack.c.b16 %v8979, %v8974
        %v9125 = vpack.c.b16 %v8980, %v8975
        %v9126 = vpack.c.b16 %v8981, %v8976
        %v9127 = vpack.c.b16 %v8987, %v8982
        %v9128 = vpack.c.b16 %v8988, %v8983
        %v9129 = vpack.c.b16 %v8989, %v8984
        %v9130 = vpack.c.b16 %v8990, %v8985
        %v9131 = vpack.c.b16 %v8991, %v8986
        %v9132 = vpack.c.b16 %v8997, %v8992
        %v9133 = vpack.c.b16 %v8998, %v8993
        %v9134 = vpack.c.b16 %v8999, %v8994
        %v9135 = vpack.c.b16 %v9000, %v8995
        %v9136 = vpack.c.b16 %v9001, %v8996
        %v9137 = vpack.c.b16 %v9007, %v9002
        %v9138 = vpack.c.b16 %v9008, %v9003
        %v9139 = vpack.c.b16 %v9009, %v9004
        %v9140 = vpack.c.b16 %v9010, %v9005
        %v9141 = vpack.c.b16 %v9011, %v9006
        %v9142 = vpack.c.b16 %v9017, %v9012
        %v9143 = vpack.c.b16 %v9018, %v9013
        %v9144 = vpack.c.b16 %v9019, %v9014
        %v9145 = vpack.c.b16 %v9020, %v9015
        %v9146 = vpack.c.b16 %v9021, %v9016
        %v9147 = vpack.c.b16 %v9027, %v9022
        %v9148 = vpack.c.b16 %v9028, %v9023
        %v9149 = vpack.c.b16 %v9029, %v9024
        %v9150 = vpack.c.b16 %v9030, %v9025
        %v9151 = vpack.c.b16 %v9031, %v9026
        %v9152 = vpack.c.b16 %v9037, %v9032
        %v9153 = vpack.c.b16 %v9038, %v9033
        %v9154 = vpack.c.b16 %v9039, %v9034
        %v9155 = vpack.c.b16 %v9040, %v9035
        %v9156 = vpack.c.b16 %v9041, %v9036
        %v9157 = vpack.c.b16 %v9047, %v9042
        %v9158 = vpack.c.b16 %v9048, %v9043
        %v9159 = vpack.c.b16 %v9049, %v9044
        %v9160 = vpack.c.b16 %v9050, %v9045
        %v9161 = vpack.c.b16 %v9051, %v9046
        %v9162 = vpack.c.b16 %v9057, %v9052
        %v9163 = vpack.c.b16 %v9058, %v9053
        %v9164 = vpack.c.b16 %v9059, %v9054
        %v9165 = vpack.c.b16 %v9060, %v9055
        %v9166 = vpack.c.b16 %v9061, %v9056
        %v9167 = vpack.c.b16 %v9067, %v9062
        %v9168 = vpack.c.b16 %v9068, %v9063
        %v9169 = vpack.c.b16 %v9069, %v9064
        %v9170 = vpack.c.b16 %v9070, %v9065
        %v9171 = vpack.c.b16 %v9071, %v9066
        %v9172 = vpack.c.b16 %v9077, %v9072
        %v9173 = vpack.c.b16 %v9078, %v9073
        %v9174 = vpack.c.b16 %v9079, %v9074
        %v9175 = vpack.c.b16 %v9080, %v9075
        %v9176 = vpack.c.b16 %v9081, %v9076
        %v9177 = vpack.c.b16 %v9087, %v9082
        %v9178 = vpack.c.b16 %v9088, %v9083
        %v9179 = vpack.c.b16 %v9089, %v9084
        %v9180 = vpack.c.b16 %v9090, %v9085
        %v9181 = vpack.c.b16 %v9091, %v9086
        %v9182 = vpack.c.b16 %v9097, %v9092
        %v9183 = vpack.c.b16 %v9098, %v9093
        %v9184 = vpack.c.b16 %v9099, %v9094
        %v9185 = vpack.c.b16 %v9100, %v9095
        %v9186 = vpack.c.b16 %v9101, %v9096
        %v9187 = vpack.c.b16 %v9107, %v9102
        %v9188 = vpack.c.b16 %v9108, %v9103
        %v9189 = vpack.c.b16 %v9109, %v9104
        %v9190 = vpack.c.b16 %v9110, %v9105
        %v9191 = vpack.c.b16 %v9111, %v9106
        %v9328 = vunpack.c.l.b16 %v8777
        %v9329 = vunpack.c.l.b16 %v8778
        %v9330 = vunpack.c.l.b16 %v8779
        %v9331 = vunpack.c.l.b16 %v8780
        %v9332 = vunpack.c.l.b16 %v8781
        %v9333 = vunpack.c.l.b16 %v8782
        %v9334 = vunpack.c.l.b16 %v8783
        %v9335 = vunpack.c.l.b16 %v8784
        %v9336 = vunpack.c.l.b16 %v8785
        %v9337 = vunpack.c.l.b16 %v8786
        %v9338 = vunpack.c.l.b16 %v8787
        %v9339 = vunpack.c.l.b16 %v8788
        %v9340 = vunpack.c.l.b16 %v8789
        %v9341 = vunpack.c.l.b16 %v8790
        %v9342 = vunpack.c.l.b16 %v8791
        %v9343 = vunpack.c.l.b16 %v8792
        %v9344 = vunpack.c.l.b16 %v8793
        %v9345 = vunpack.c.l.b16 %v8794
        %v9346 = vunpack.c.l.b16 %v8795
        %v9347 = vunpack.c.l.b16 %v8796
        %v9348 = vunpack.c.l.b16 %v8797
        %v9349 = vunpack.c.l.b16 %v8798
        %v9350 = vunpack.c.l.b16 %v8799
        %v9351 = vunpack.c.l.b16 %v8800
        %v9352 = vunpack.c.l.b16 %v8801
        %v9353 = vunpack.c.l.b16 %v8802
        %v9354 = vunpack.c.l.b16 %v8803
        %v9355 = vunpack.c.l.b16 %v8804
        %v9356 = vunpack.c.l.b16 %v8805
        %v9357 = vunpack.c.l.b16 %v8806
        %v9358 = vunpack.c.l.b16 %v8807
        %v9359 = vunpack.c.l.b16 %v8808
        %v9360 = vunpack.c.l.b16 %v8809
        %v9361 = vunpack.c.l.b16 %v8810
        %v9362 = vunpack.c.l.b16 %v8811
        %v9363 = vunpack.c.l.b16 %v8812
        %v9364 = vunpack.c.l.b16 %v8813
        %v9365 = vunpack.c.l.b16 %v8814
        %v9366 = vunpack.c.l.b16 %v8815
        %v9367 = vunpack.c.l.b16 %v8816
        %v9368 = vunpack.c.l.b16 %v8817
        %v9369 = vunpack.c.l.b16 %v8818
        %v9370 = vunpack.c.l.b16 %v8819
        %v9371 = vunpack.c.l.b16 %v8820
        %v9372 = vunpack.c.l.b16 %v8821
        %v9373 = vunpack.c.l.b16 %v8822
        %v9374 = vunpack.c.l.b16 %v8823
        %v9375 = vunpack.c.l.b16 %v8824
        %v9376 = vunpack.c.l.b16 %v8825
        %v9377 = vunpack.c.l.b16 %v8826
        %v9378 = vunpack.c.l.b16 %v8827
        %v9379 = vunpack.c.l.b16 %v8828
        %v9380 = vunpack.c.l.b16 %v8829
        %v9381 = vunpack.c.l.b16 %v8830
        %v9382 = vunpack.c.l.b16 %v8831
        %v9383 = vunpack.c.l.b16 %v8832
        %v9384 = vunpack.c.l.b16 %v8833
        %v9385 = vunpack.c.l.b16 %v8834
        %v9386 = vunpack.c.l.b16 %v8835
        %v9387 = vunpack.c.l.b16 %v8836
        %v9388 = vunpack.c.l.b16 %v8837
        %v9389 = vunpack.c.l.b16 %v8838
        %v9390 = vunpack.c.l.b16 %v8839
        %v9391 = vunpack.c.l.b16 %v8840
        %v9392 = vunpack.c.l.b16 %v8841
        %v9393 = vunpack.c.l.b16 %v8842
        %v9394 = vunpack.c.l.b16 %v8843
        %v9395 = vunpack.c.l.b16 %v8844
        %v9396 = vunpack.c.l.b16 %v8845
        %v9397 = vunpack.c.l.b16 %v8846
        %v9398 = vunpack.c.l.b16 %v8847
        %v9399 = vunpack.c.l.b16 %v8848
        %v9400 = vpack.c.b16 %v9329, %v9328
        %v9401 = vpack.c.b16 %v9331, %v9330
        %v9402 = vpack.c.b16 %v9333, %v9332
        %v9403 = vpack.c.b16 %v9335, %v9334
        %v9404 = vpack.c.b16 %v9337, %v9336
        %v9405 = vpack.c.b16 %v9339, %v9338
        %v9406 = vpack.c.b16 %v9341, %v9340
        %v9407 = vpack.c.b16 %v9343, %v9342
        %v9408 = vpack.c.b16 %v9345, %v9344
        %v9409 = vpack.c.b16 %v9347, %v9346
        %v9410 = vpack.c.b16 %v9349, %v9348
        %v9411 = vpack.c.b16 %v9351, %v9350
        %v9412 = vpack.c.b16 %v9353, %v9352
        %v9413 = vpack.c.b16 %v9355, %v9354
        %v9414 = vpack.c.b16 %v9357, %v9356
        %v9415 = vpack.c.b16 %v9359, %v9358
        %v9416 = vpack.c.b16 %v9361, %v9360
        %v9417 = vpack.c.b16 %v9363, %v9362
        %v9418 = vpack.c.b16 %v9365, %v9364
        %v9419 = vpack.c.b16 %v9367, %v9366
        %v9420 = vpack.c.b16 %v9369, %v9368
        %v9421 = vpack.c.b16 %v9371, %v9370
        %v9422 = vpack.c.b16 %v9373, %v9372
        %v9423 = vpack.c.b16 %v9375, %v9374
        %v9424 = vpack.c.b16 %v9377, %v9376
        %v9425 = vpack.c.b16 %v9379, %v9378
        %v9426 = vpack.c.b16 %v9381, %v9380
        %v9427 = vpack.c.b16 %v9383, %v9382
        %v9428 = vpack.c.b16 %v9385, %v9384
        %v9429 = vpack.c.b16 %v9387, %v9386
        %v9430 = vpack.c.b16 %v9389, %v9388
        %v9431 = vpack.c.b16 %v9391, %v9390
        %v9432 = vpack.c.b16 %v9393, %v9392
        %v9433 = vpack.c.b16 %v9395, %v9394
        %v9434 = vpack.c.b16 %v9397, %v9396
        %v9435 = vpack.c.b16 %v9399, %v9398
        %vm9472 = vcmask 523264
        %v9474 = vsel %vm9472, %v9116, 0
        %v9477 = vsel %vm9472, %v9121, 0
        %v9480 = vsel %vm9472, %v9126, 0
        %v9483 = vsel %vm9472, %v9131, 0
        %v9486 = vsel %vm9472, %v9136, 0
        %v9489 = vsel %vm9472, %v9141, 0
        %v9492 = vsel %vm9472, %v9146, 0
        %v9495 = vsel %vm9472, %v9151, 0
        %v9498 = vsel %vm9472, %v9156, 0
        %v9501 = vsel %vm9472, %v9161, 0
        %v9504 = vsel %vm9472, %v9166, 0
        %v9507 = vsel %vm9472, %v9171, 0
        %v9510 = vsel %vm9472, %v9176, 0
        %v9513 = vsel %vm9472, %v9181, 0
        %v9516 = vsel %vm9472, %v9186, 0
        %v9519 = vsel %vm9472, %v9191, 0
        %9521 = vmatprep.subr.bf16.mxu0 0
        %9522 = vmatpush1.bf16.msra.mxu0 %v9407
        %9523 = vmatprep.subr.bf16.mxu0 0
        %9524 = vmatpush1.bf16.msra.mxu0 %v9406
        %9525 = vmatprep.subr.bf16.mxu0 0
        %9526 = vmatpush1.bf16.msra.mxu0 %v9405
        %9527 = vmatprep.subr.bf16.mxu0 0
        %9528 = vmatpush1.bf16.msra.mxu0 %v9404
        %9529 = vmatprep.subr.bf16.mxu0 0
        %9530 = vmatpush1.bf16.msra.mxu0 %v9403
        %9531 = vmatprep.subr.bf16.mxu0 0
        %9532 = vmatpush1.bf16.msra.mxu0 %v9402
        %9533 = vmatprep.subr.bf16.mxu0 0
        %9534 = vmatpush1.bf16.msra.mxu0 %v9401
        %9535 = vmatprep.subr.bf16.mxu0 0
        %9536 = vmatpush1.bf16.msra.mxu0 %v9400
        %9537 = vmatprep.subr.bf16.mxu0 0
        %9538 = vmatpush2.bf16.msra.mxu0 %v9415
        %9539 = vmatprep.subr.bf16.mxu0 0
        %9540 = vmatpush2.bf16.msra.mxu0 %v9414
        %9541 = vmatprep.subr.bf16.mxu0 0
        %9542 = vmatpush2.bf16.msra.mxu0 %v9413
        %9543 = vmatprep.subr.bf16.mxu0 0
        %9544 = vmatpush2.bf16.msra.mxu0 %v9412
        %9545 = vmatprep.subr.bf16.mxu0 0
        %9546 = vmatpush2.bf16.msra.mxu0 %v9411
        %9547 = vmatprep.subr.bf16.mxu0 0
        %9548 = vmatpush2.bf16.msra.mxu0 %v9410
        %9549 = vmatprep.subr.bf16.mxu0 0
        %9550 = vmatpush2.bf16.msra.mxu0 %v9409
        %9551 = vmatprep.subr.bf16.mxu0 0
        %9552 = vmatpush2.bf16.msra.mxu0 %v9408
        %9553 = vmatprep.mubr.bf16.mxu0 %v9113
        %9554 = vmatmul.mubr.bf16.gmra.mxu0 %v9112
        %v9555 = vpop.f32.mrf.mxu0
        %v9556 = vadd.f32 %v8854, %v9555
        %v9557 = vpop.f32.mrf.mxu0
        %v9558 = vpop.f32.mrf.mxu0
        %v9559 = vadd.f32 %v8854, %v9558
        %v9560 = vpop.f32.mrf.mxu0
        %9561 = vmatprep.mubr.bf16.mxu0 %v9118
        %9562 = vmatmul.mubr.bf16.gmra.mxu0 %v9117
        %v9563 = vpop.f32.mrf.mxu0
        %v9564 = vadd.f32 %v8854, %v9563
        %v9565 = vpop.f32.mrf.mxu0
        %v9566 = vpop.f32.mrf.mxu0
        %v9567 = vadd.f32 %v8854, %v9566
        %v9568 = vpop.f32.mrf.mxu0
        %9569 = vmatprep.mubr.bf16.mxu0 %v9123
        %9570 = vmatmul.mubr.bf16.gmra.mxu0 %v9122
        %v9571 = vpop.f32.mrf.mxu0
        %v9572 = vadd.f32 %v8854, %v9571
        %v9573 = vpop.f32.mrf.mxu0
        %v9574 = vpop.f32.mrf.mxu0
        %v9575 = vadd.f32 %v8854, %v9574
        %v9576 = vpop.f32.mrf.mxu0
        %9577 = vmatprep.mubr.bf16.mxu0 %v9128
        %9578 = vmatmul.mubr.bf16.gmra.mxu0 %v9127
        %v9579 = vpop.f32.mrf.mxu0
        %v9580 = vadd.f32 %v8854, %v9579
        %v9581 = vpop.f32.mrf.mxu0
        %v9582 = vpop.f32.mrf.mxu0
        %v9583 = vadd.f32 %v8854, %v9582
        %v9584 = vpop.f32.mrf.mxu0
        %9585 = vmatprep.mubr.bf16.mxu0 %v9133
        %9586 = vmatmul.mubr.bf16.gmra.mxu0 %v9132
        %v9587 = vpop.f32.mrf.mxu0
        %v9588 = vadd.f32 %v8854, %v9587
        %v9589 = vpop.f32.mrf.mxu0
        %v9590 = vpop.f32.mrf.mxu0
        %v9591 = vadd.f32 %v8854, %v9590
        %v9592 = vpop.f32.mrf.mxu0
        %9593 = vmatprep.mubr.bf16.mxu0 %v9138
        %9594 = vmatmul.mubr.bf16.gmra.mxu0 %v9137
        %v9595 = vpop.f32.mrf.mxu0
        %v9596 = vadd.f32 %v8854, %v9595
        %v9597 = vpop.f32.mrf.mxu0
        %v9598 = vpop.f32.mrf.mxu0
        %v9599 = vadd.f32 %v8854, %v9598
        %v9600 = vpop.f32.mrf.mxu0
        %9601 = vmatprep.mubr.bf16.mxu0 %v9143
        %9602 = vmatmul.mubr.bf16.gmra.mxu0 %v9142
        %v9603 = vpop.f32.mrf.mxu0
        %v9604 = vadd.f32 %v8854, %v9603
        %v9605 = vpop.f32.mrf.mxu0
        %v9606 = vpop.f32.mrf.mxu0
        %v9607 = vadd.f32 %v8854, %v9606
        %v9608 = vpop.f32.mrf.mxu0
        %9609 = vmatprep.mubr.bf16.mxu0 %v9148
        %9610 = vmatmul.mubr.bf16.gmra.mxu0 %v9147
        %v9611 = vpop.f32.mrf.mxu0
        %v9612 = vadd.f32 %v8854, %v9611
        %v9613 = vpop.f32.mrf.mxu0
        %v9614 = vpop.f32.mrf.mxu0
        %v9615 = vadd.f32 %v8854, %v9614
        %v9616 = vpop.f32.mrf.mxu0
        %9617 = vmatprep.mubr.bf16.mxu0 %v9153
        %9618 = vmatmul.mubr.bf16.gmra.mxu0 %v9152
        %v9619 = vpop.f32.mrf.mxu0
        %v9620 = vadd.f32 %v8854, %v9619
        %v9621 = vpop.f32.mrf.mxu0
        %v9622 = vpop.f32.mrf.mxu0
        %v9623 = vadd.f32 %v8854, %v9622
        %v9624 = vpop.f32.mrf.mxu0
        %9625 = vmatprep.mubr.bf16.mxu0 %v9158
        %9626 = vmatmul.mubr.bf16.gmra.mxu0 %v9157
        %v9627 = vpop.f32.mrf.mxu0
        %v9628 = vadd.f32 %v8854, %v9627
        %v9629 = vpop.f32.mrf.mxu0
        %v9630 = vpop.f32.mrf.mxu0
        %v9631 = vadd.f32 %v8854, %v9630
        %v9632 = vpop.f32.mrf.mxu0
        %9633 = vmatprep.mubr.bf16.mxu0 %v9163
        %9634 = vmatmul.mubr.bf16.gmra.mxu0 %v9162
        %v9635 = vpop.f32.mrf.mxu0
        %v9636 = vadd.f32 %v8854, %v9635
        %v9637 = vpop.f32.mrf.mxu0
        %v9638 = vpop.f32.mrf.mxu0
        %v9639 = vadd.f32 %v8854, %v9638
        %v9640 = vpop.f32.mrf.mxu0
        %9641 = vmatprep.mubr.bf16.mxu0 %v9168
        %9642 = vmatmul.mubr.bf16.gmra.mxu0 %v9167
        %v9643 = vpop.f32.mrf.mxu0
        %v9644 = vadd.f32 %v8854, %v9643
        %v9645 = vpop.f32.mrf.mxu0
        %v9646 = vpop.f32.mrf.mxu0
        %v9647 = vadd.f32 %v8854, %v9646
        %v9648 = vpop.f32.mrf.mxu0
        %9649 = vmatprep.mubr.bf16.mxu0 %v9173
        %9650 = vmatmul.mubr.bf16.gmra.mxu0 %v9172
        %v9651 = vpop.f32.mrf.mxu0
        %v9652 = vadd.f32 %v8854, %v9651
        %v9653 = vpop.f32.mrf.mxu0
        %v9654 = vpop.f32.mrf.mxu0
        %v9655 = vadd.f32 %v8854, %v9654
        %v9656 = vpop.f32.mrf.mxu0
        %9657 = vmatprep.mubr.bf16.mxu0 %v9178
        %9658 = vmatmul.mubr.bf16.gmra.mxu0 %v9177
        %v9659 = vpop.f32.mrf.mxu0
        %v9660 = vadd.f32 %v8854, %v9659
        %v9661 = vpop.f32.mrf.mxu0
        %v9662 = vpop.f32.mrf.mxu0
        %v9663 = vadd.f32 %v8854, %v9662
        %v9664 = vpop.f32.mrf.mxu0
        %9665 = vmatprep.mubr.bf16.mxu0 %v9183
        %9666 = vmatmul.mubr.bf16.gmra.mxu0 %v9182
        %v9667 = vpop.f32.mrf.mxu0
        %v9668 = vadd.f32 %v8854, %v9667
        %v9669 = vpop.f32.mrf.mxu0
        %v9670 = vpop.f32.mrf.mxu0
        %v9671 = vadd.f32 %v8854, %v9670
        %v9672 = vpop.f32.mrf.mxu0
        %9673 = vmatprep.mubr.bf16.mxu0 %v9188
        %9674 = vmatmul.mubr.bf16.gmra.mxu0 %v9187
        %v9675 = vpop.f32.mrf.mxu0
        %v9676 = vadd.f32 %v8854, %v9675
        %v9677 = vpop.f32.mrf.mxu0
        %v9678 = vpop.f32.mrf.mxu0
        %v9679 = vadd.f32 %v8854, %v9678
        %v9680 = vpop.f32.mrf.mxu0
        %9681 = vdwg.mxu0
        %9682 = vmatprep.subr.bf16.mxu0 0
        %9683 = vmatpush1.bf16.msra.mxu0 %v9423
        %9684 = vmatprep.subr.bf16.mxu0 0
        %9685 = vmatpush1.bf16.msra.mxu0 %v9422
        %9686 = vmatprep.subr.bf16.mxu0 0
        %9687 = vmatpush1.bf16.msra.mxu0 %v9421
        %9688 = vmatprep.subr.bf16.mxu0 0
        %9689 = vmatpush1.bf16.msra.mxu0 %v9420
        %9690 = vmatprep.subr.bf16.mxu0 0
        %9691 = vmatpush1.bf16.msra.mxu0 %v9419
        %9692 = vmatprep.subr.bf16.mxu0 0
        %9693 = vmatpush1.bf16.msra.mxu0 %v9418
        %9694 = vmatprep.subr.bf16.mxu0 0
        %9695 = vmatpush1.bf16.msra.mxu0 %v9417
        %9696 = vmatprep.subr.bf16.mxu0 0
        %9697 = vmatpush1.bf16.msra.mxu0 %v9416
        %9698 = vmatprep.subr.bf16.mxu0 0
        %9699 = vmatpush2.bf16.msra.mxu0 %v9431
        %9700 = vmatprep.subr.bf16.mxu0 0
        %9701 = vmatpush2.bf16.msra.mxu0 %v9430
        %9702 = vmatprep.subr.bf16.mxu0 0
        %9703 = vmatpush2.bf16.msra.mxu0 %v9429
        %9704 = vmatprep.subr.bf16.mxu0 0
        %9705 = vmatpush2.bf16.msra.mxu0 %v9428
        %9706 = vmatprep.subr.bf16.mxu0 0
        %9707 = vmatpush2.bf16.msra.mxu0 %v9427
        %9708 = vmatprep.subr.bf16.mxu0 0
        %9709 = vmatpush2.bf16.msra.mxu0 %v9426
        %9710 = vmatprep.subr.bf16.mxu0 0
        %9711 = vmatpush2.bf16.msra.mxu0 %v9425
        %9712 = vmatprep.subr.bf16.mxu0 0
        %9713 = vmatpush2.bf16.msra.mxu0 %v9424
        %9714 = vmatprep.mubr.bf16.mxu0 %v9115
        %9715 = vmatmul.mubr.bf16.gmra.mxu0 %v9114
        %v9716 = vpop.f32.mrf.mxu0
        %v9717 = vadd.f32 %v9556, %v9716
        %v9718 = vpop.f32.mrf.mxu0
        %v9719 = vpop.f32.mrf.mxu0
        %v9720 = vadd.f32 %v9559, %v9719
        %v9721 = vpop.f32.mrf.mxu0
        %9722 = vmatprep.mubr.bf16.mxu0 %v9120
        %9723 = vmatmul.mubr.bf16.gmra.mxu0 %v9119
        %v9724 = vpop.f32.mrf.mxu0
        %v9725 = vadd.f32 %v9564, %v9724
        %v9726 = vpop.f32.mrf.mxu0
        %v9727 = vpop.f32.mrf.mxu0
        %v9728 = vadd.f32 %v9567, %v9727
        %v9729 = vpop.f32.mrf.mxu0
        %9730 = vmatprep.mubr.bf16.mxu0 %v9125
        %9731 = vmatmul.mubr.bf16.gmra.mxu0 %v9124
        %v9732 = vpop.f32.mrf.mxu0
        %v9733 = vadd.f32 %v9572, %v9732
        %v9734 = vpop.f32.mrf.mxu0
        %v9735 = vpop.f32.mrf.mxu0
        %v9736 = vadd.f32 %v9575, %v9735
        %v9737 = vpop.f32.mrf.mxu0
        %9738 = vmatprep.mubr.bf16.mxu0 %v9130
        %9739 = vmatmul.mubr.bf16.gmra.mxu0 %v9129
        %v9740 = vpop.f32.mrf.mxu0
        %v9741 = vadd.f32 %v9580, %v9740
        %v9742 = vpop.f32.mrf.mxu0
        %v9743 = vpop.f32.mrf.mxu0
        %v9744 = vadd.f32 %v9583, %v9743
        %v9745 = vpop.f32.mrf.mxu0
        %9746 = vmatprep.mubr.bf16.mxu0 %v9135
        %9747 = vmatmul.mubr.bf16.gmra.mxu0 %v9134
        %v9748 = vpop.f32.mrf.mxu0
        %v9749 = vadd.f32 %v9588, %v9748
        %v9750 = vpop.f32.mrf.mxu0
        %v9751 = vpop.f32.mrf.mxu0
        %v9752 = vadd.f32 %v9591, %v9751
        %v9753 = vpop.f32.mrf.mxu0
        %9754 = vmatprep.mubr.bf16.mxu0 %v9140
        %9755 = vmatmul.mubr.bf16.gmra.mxu0 %v9139
        %v9756 = vpop.f32.mrf.mxu0
        %v9757 = vadd.f32 %v9596, %v9756
        %v9758 = vpop.f32.mrf.mxu0
        %v9759 = vpop.f32.mrf.mxu0
        %v9760 = vadd.f32 %v9599, %v9759
        %v9761 = vpop.f32.mrf.mxu0
        %9762 = vmatprep.mubr.bf16.mxu0 %v9145
        %9763 = vmatmul.mubr.bf16.gmra.mxu0 %v9144
        %v9764 = vpop.f32.mrf.mxu0
        %v9765 = vadd.f32 %v9604, %v9764
        %v9766 = vpop.f32.mrf.mxu0
        %v9767 = vpop.f32.mrf.mxu0
        %v9768 = vadd.f32 %v9607, %v9767
        %v9769 = vpop.f32.mrf.mxu0
        %9770 = vmatprep.mubr.bf16.mxu0 %v9150
        %9771 = vmatmul.mubr.bf16.gmra.mxu0 %v9149
        %v9772 = vpop.f32.mrf.mxu0
        %v9773 = vadd.f32 %v9612, %v9772
        %v9774 = vpop.f32.mrf.mxu0
        %v9775 = vpop.f32.mrf.mxu0
        %v9776 = vadd.f32 %v9615, %v9775
        %v9777 = vpop.f32.mrf.mxu0
        %9778 = vmatprep.mubr.bf16.mxu0 %v9155
        %9779 = vmatmul.mubr.bf16.gmra.mxu0 %v9154
        %v9780 = vpop.f32.mrf.mxu0
        %v9781 = vadd.f32 %v9620, %v9780
        %v9782 = vpop.f32.mrf.mxu0
        %v9783 = vpop.f32.mrf.mxu0
        %v9784 = vadd.f32 %v9623, %v9783
        %v9785 = vpop.f32.mrf.mxu0
        %9786 = vmatprep.mubr.bf16.mxu0 %v9160
        %9787 = vmatmul.mubr.bf16.gmra.mxu0 %v9159
        %v9788 = vpop.f32.mrf.mxu0
        %v9789 = vadd.f32 %v9628, %v9788
        %v9790 = vpop.f32.mrf.mxu0
        %v9791 = vpop.f32.mrf.mxu0
        %v9792 = vadd.f32 %v9631, %v9791
        %v9793 = vpop.f32.mrf.mxu0
        %9794 = vmatprep.mubr.bf16.mxu0 %v9165
        %9795 = vmatmul.mubr.bf16.gmra.mxu0 %v9164
        %v9796 = vpop.f32.mrf.mxu0
        %v9797 = vadd.f32 %v9636, %v9796
        %v9798 = vpop.f32.mrf.mxu0
        %v9799 = vpop.f32.mrf.mxu0
        %v9800 = vadd.f32 %v9639, %v9799
        %v9801 = vpop.f32.mrf.mxu0
        %9802 = vmatprep.mubr.bf16.mxu0 %v9170
        %9803 = vmatmul.mubr.bf16.gmra.mxu0 %v9169
        %v9804 = vpop.f32.mrf.mxu0
        %v9805 = vadd.f32 %v9644, %v9804
        %v9806 = vpop.f32.mrf.mxu0
        %v9807 = vpop.f32.mrf.mxu0
        %v9808 = vadd.f32 %v9647, %v9807
        %v9809 = vpop.f32.mrf.mxu0
        %9810 = vmatprep.mubr.bf16.mxu0 %v9175
        %9811 = vmatmul.mubr.bf16.gmra.mxu0 %v9174
        %v9812 = vpop.f32.mrf.mxu0
        %v9813 = vadd.f32 %v9652, %v9812
        %v9814 = vpop.f32.mrf.mxu0
        %v9815 = vpop.f32.mrf.mxu0
        %v9816 = vadd.f32 %v9655, %v9815
        %v9817 = vpop.f32.mrf.mxu0
        %9818 = vmatprep.mubr.bf16.mxu0 %v9180
        %9819 = vmatmul.mubr.bf16.gmra.mxu0 %v9179
        %v9820 = vpop.f32.mrf.mxu0
        %v9821 = vadd.f32 %v9660, %v9820
        %v9822 = vpop.f32.mrf.mxu0
        %v9823 = vpop.f32.mrf.mxu0
        %v9824 = vadd.f32 %v9663, %v9823
        %v9825 = vpop.f32.mrf.mxu0
        %9826 = vmatprep.mubr.bf16.mxu0 %v9185
        %9827 = vmatmul.mubr.bf16.gmra.mxu0 %v9184
        %v9828 = vpop.f32.mrf.mxu0
        %v9829 = vadd.f32 %v9668, %v9828
        %v9830 = vpop.f32.mrf.mxu0
        %v9831 = vpop.f32.mrf.mxu0
        %v9832 = vadd.f32 %v9671, %v9831
        %v9833 = vpop.f32.mrf.mxu0
        %9834 = vmatprep.mubr.bf16.mxu0 %v9190
        %9835 = vmatmul.mubr.bf16.gmra.mxu0 %v9189
        %v9836 = vpop.f32.mrf.mxu0
        %v9837 = vadd.f32 %v9676, %v9836
        %v9838 = vpop.f32.mrf.mxu0
        %v9839 = vpop.f32.mrf.mxu0
        %v9840 = vadd.f32 %v9679, %v9839
        %v9841 = vpop.f32.mrf.mxu0
        %9842 = vdwg.mxu0
        %9843 = vmatprep.subr.bf16.mxu0 0
        %9844 = vmatpush1.bf16.msra.mxu0 0
        %9845 = vmatprep.subr.bf16.mxu0 0
        %9846 = vmatpush1.bf16.msra.mxu0 0
        %9847 = vmatprep.subr.bf16.mxu0 0
        %9848 = vmatpush1.bf16.msra.mxu0 0
        %9849 = vmatprep.subr.bf16.mxu0 0
        %9850 = vmatpush1.bf16.msra.mxu0 0
        %9851 = vmatprep.subr.bf16.mxu0 0
        %9852 = vmatpush1.bf16.msra.mxu0 %v9435
        %9853 = vmatprep.subr.bf16.mxu0 0
        %9854 = vmatpush1.bf16.msra.mxu0 %v9434
        %9855 = vmatprep.subr.bf16.mxu0 0
        %9856 = vmatpush1.bf16.msra.mxu0 %v9433
        %9857 = vmatprep.subr.bf16.mxu0 0
        %9858 = vmatpush1.bf16.msra.mxu0 %v9432
        %9859 = vmatprep.subr.bf16.mxu0 0
        %9860 = vmatpush2.bf16.msra.mxu0 0
        %9861 = vmatprep.subr.bf16.mxu0 0
        %9862 = vmatpush2.bf16.msra.mxu0 0
        %9863 = vmatprep.subr.bf16.mxu0 0
        %9864 = vmatpush2.bf16.msra.mxu0 0
        %9865 = vmatprep.subr.bf16.mxu0 0
        %9866 = vmatpush2.bf16.msra.mxu0 0
        %9867 = vmatprep.subr.bf16.mxu0 0
        %9868 = vmatpush2.bf16.msra.mxu0 0
        %9869 = vmatprep.subr.bf16.mxu0 0
        %9870 = vmatpush2.bf16.msra.mxu0 0
        %9871 = vmatprep.subr.bf16.mxu0 0
        %9872 = vmatpush2.bf16.msra.mxu0 0
        %9873 = vmatprep.subr.bf16.mxu0 0
        %9874 = vmatpush2.bf16.msra.mxu0 0
        %9875 = vmatprep.mubr.bf16.mxu0 0
        %9876 = vmatmul.mubr.bf16.gmra.mxu0 %v9474
        %v9877 = vpop.f32.mrf.mxu0
        %v9878 = vadd.f32 %v9717, %v9877
        %v9879 = vpop.f32.mrf.mxu0
        %v9880 = vpop.f32.mrf.mxu0
        %v9881 = vadd.f32 %v9720, %v9880
        %v9882 = vpop.f32.mrf.mxu0
        %9883 = vmatprep.mubr.bf16.mxu0 0
        %9884 = vmatmul.mubr.bf16.gmra.mxu0 %v9477
        %v9885 = vpop.f32.mrf.mxu0
        %v9886 = vadd.f32 %v9725, %v9885
        %v9887 = vpop.f32.mrf.mxu0
        %v9888 = vpop.f32.mrf.mxu0
        %v9889 = vadd.f32 %v9728, %v9888
        %v9890 = vpop.f32.mrf.mxu0
        %9891 = vmatprep.mubr.bf16.mxu0 0
        %9892 = vmatmul.mubr.bf16.gmra.mxu0 %v9480
        %v9893 = vpop.f32.mrf.mxu0
        %v9894 = vadd.f32 %v9733, %v9893
        %v9895 = vpop.f32.mrf.mxu0
        %v9896 = vpop.f32.mrf.mxu0
        %v9897 = vadd.f32 %v9736, %v9896
        %v9898 = vpop.f32.mrf.mxu0
        %9899 = vmatprep.mubr.bf16.mxu0 0
        %9900 = vmatmul.mubr.bf16.gmra.mxu0 %v9483
        %v9901 = vpop.f32.mrf.mxu0
        %v9902 = vadd.f32 %v9741, %v9901
        %v9903 = vpop.f32.mrf.mxu0
        %v9904 = vpop.f32.mrf.mxu0
        %v9905 = vadd.f32 %v9744, %v9904
        %v9906 = vpop.f32.mrf.mxu0
        %9907 = vmatprep.mubr.bf16.mxu0 0
        %9908 = vmatmul.mubr.bf16.gmra.mxu0 %v9486
        %v9909 = vpop.f32.mrf.mxu0
        %v9910 = vadd.f32 %v9749, %v9909
        %v9911 = vpop.f32.mrf.mxu0
        %v9912 = vpop.f32.mrf.mxu0
        %v9913 = vadd.f32 %v9752, %v9912
        %v9914 = vpop.f32.mrf.mxu0
        %9915 = vmatprep.mubr.bf16.mxu0 0
        %9916 = vmatmul.mubr.bf16.gmra.mxu0 %v9489
        %v9917 = vpop.f32.mrf.mxu0
        %v9918 = vadd.f32 %v9757, %v9917
        %v9919 = vpop.f32.mrf.mxu0
        %v9920 = vpop.f32.mrf.mxu0
        %v9921 = vadd.f32 %v9760, %v9920
        %v9922 = vpop.f32.mrf.mxu0
        %9923 = vmatprep.mubr.bf16.mxu0 0
        %9924 = vmatmul.mubr.bf16.gmra.mxu0 %v9492
        %v9925 = vpop.f32.mrf.mxu0
        %v9926 = vadd.f32 %v9765, %v9925
        %v9927 = vpop.f32.mrf.mxu0
        %v9928 = vpop.f32.mrf.mxu0
        %v9929 = vadd.f32 %v9768, %v9928
        %v9930 = vpop.f32.mrf.mxu0
        %9931 = vmatprep.mubr.bf16.mxu0 0
        %9932 = vmatmul.mubr.bf16.gmra.mxu0 %v9495
        %v9933 = vpop.f32.mrf.mxu0
        %v9934 = vadd.f32 %v9773, %v9933
        %v9935 = vpop.f32.mrf.mxu0
        %v9936 = vpop.f32.mrf.mxu0
        %v9937 = vadd.f32 %v9776, %v9936
        %v9938 = vpop.f32.mrf.mxu0
        %9939 = vmatprep.mubr.bf16.mxu0 0
        %9940 = vmatmul.mubr.bf16.gmra.mxu0 %v9498
        %v9941 = vpop.f32.mrf.mxu0
        %v9942 = vadd.f32 %v9781, %v9941
        %v9943 = vpop.f32.mrf.mxu0
        %v9944 = vpop.f32.mrf.mxu0
        %v9945 = vadd.f32 %v9784, %v9944
        %v9946 = vpop.f32.mrf.mxu0
        %9947 = vmatprep.mubr.bf16.mxu0 0
        %9948 = vmatmul.mubr.bf16.gmra.mxu0 %v9501
        %v9949 = vpop.f32.mrf.mxu0
        %v9950 = vadd.f32 %v9789, %v9949
        %v9951 = vpop.f32.mrf.mxu0
        %v9952 = vpop.f32.mrf.mxu0
        %v9953 = vadd.f32 %v9792, %v9952
        %v9954 = vpop.f32.mrf.mxu0
        %9955 = vmatprep.mubr.bf16.mxu0 0
        %9956 = vmatmul.mubr.bf16.gmra.mxu0 %v9504
        %v9957 = vpop.f32.mrf.mxu0
        %v9958 = vadd.f32 %v9797, %v9957
        %v9959 = vpop.f32.mrf.mxu0
        %v9960 = vpop.f32.mrf.mxu0
        %v9961 = vadd.f32 %v9800, %v9960
        %v9962 = vpop.f32.mrf.mxu0
        %9963 = vmatprep.mubr.bf16.mxu0 0
        %9964 = vmatmul.mubr.bf16.gmra.mxu0 %v9507
        %v9965 = vpop.f32.mrf.mxu0
        %v9966 = vadd.f32 %v9805, %v9965
        %v9967 = vpop.f32.mrf.mxu0
        %v9968 = vpop.f32.mrf.mxu0
        %v9969 = vadd.f32 %v9808, %v9968
        %v9970 = vpop.f32.mrf.mxu0
        %9971 = vmatprep.mubr.bf16.mxu0 0
        %9972 = vmatmul.mubr.bf16.gmra.mxu0 %v9510
        %v9973 = vpop.f32.mrf.mxu0
        %v9974 = vadd.f32 %v9813, %v9973
        %v9975 = vpop.f32.mrf.mxu0
        %v9976 = vpop.f32.mrf.mxu0
        %v9977 = vadd.f32 %v9816, %v9976
        %v9978 = vpop.f32.mrf.mxu0
        %9979 = vmatprep.mubr.bf16.mxu0 0
        %9980 = vmatmul.mubr.bf16.gmra.mxu0 %v9513
        %v9981 = vpop.f32.mrf.mxu0
        %v9982 = vadd.f32 %v9821, %v9981
        %v9983 = vpop.f32.mrf.mxu0
        %v9984 = vpop.f32.mrf.mxu0
        %v9985 = vadd.f32 %v9824, %v9984
        %v9986 = vpop.f32.mrf.mxu0
        %9987 = vmatprep.mubr.bf16.mxu0 0
        %9988 = vmatmul.mubr.bf16.gmra.mxu0 %v9516
        %v9989 = vpop.f32.mrf.mxu0
        %v9990 = vadd.f32 %v9829, %v9989
        %v9991 = vpop.f32.mrf.mxu0
        %v9992 = vpop.f32.mrf.mxu0
        %v9993 = vadd.f32 %v9832, %v9992
        %v9994 = vpop.f32.mrf.mxu0
        %9995 = vmatprep.mubr.bf16.mxu0 0
        %9996 = vmatmul.mubr.bf16.gmra.mxu0 %v9519
        %v9997 = vpop.f32.mrf.mxu0
        %v9998 = vadd.f32 %v9837, %v9997
        %v9999 = vpop.f32.mrf.mxu0
        %v10000 = vpop.f32.mrf.mxu0
        %v10001 = vadd.f32 %v9840, %v10000
        %v10002 = vpop.f32.mrf.mxu0
        %10003 = vdwg.mxu0
        %v10004 = vsub.f32 0.0, %v9878
        %v10005 = vsub.f32 0.0, %v9881
        %v10006 = vsub.f32 0.0, %v9886
        %v10007 = vsub.f32 0.0, %v9889
        %v10008 = vsub.f32 0.0, %v9894
        %v10009 = vsub.f32 0.0, %v9897
        %v10010 = vsub.f32 0.0, %v9902
        %v10011 = vsub.f32 0.0, %v9905
        %v10012 = vsub.f32 0.0, %v9910
        %v10013 = vsub.f32 0.0, %v9913
        %v10014 = vsub.f32 0.0, %v9918
        %v10015 = vsub.f32 0.0, %v9921
        %v10016 = vsub.f32 0.0, %v9926
        %v10017 = vsub.f32 0.0, %v9929
        %v10018 = vsub.f32 0.0, %v9934
        %v10019 = vsub.f32 0.0, %v9937
        %v10020 = vsub.f32 0.0, %v9942
        %v10021 = vsub.f32 0.0, %v9945
        %v10022 = vsub.f32 0.0, %v9950
        %v10023 = vsub.f32 0.0, %v9953
        %v10024 = vsub.f32 0.0, %v9958
        %v10025 = vsub.f32 0.0, %v9961
        %v10026 = vsub.f32 0.0, %v9966
        %v10027 = vsub.f32 0.0, %v9969
        %v10028 = vsub.f32 0.0, %v9974
        %v10029 = vsub.f32 0.0, %v9977
        %v10030 = vsub.f32 0.0, %v9982
        %v10031 = vsub.f32 0.0, %v9985
        %v10032 = vsub.f32 0.0, %v9990
        %v10033 = vsub.f32 0.0, %v9993
        %v10034 = vsub.f32 0.0, %v9998
        %v10035 = vsub.f32 0.0, %v10001
        %v10036 = vmul.f32 %v10004, 1.442695
        %v10037 = vpow.pop %v10036
        %v10038 = vmul.f32 %v10005, 1.442695
        %v10039 = vpow.pop %v10038
        %v10040 = vmul.f32 %v10006, 1.442695
        %v10041 = vpow.pop %v10040
        %v10042 = vmul.f32 %v10007, 1.442695
        %v10043 = vpow.pop %v10042
        %v10044 = vmul.f32 %v10008, 1.442695
        %v10045 = vpow.pop %v10044
        %v10046 = vmul.f32 %v10009, 1.442695
        %v10047 = vpow.pop %v10046
        %v10048 = vmul.f32 %v10010, 1.442695
        %v10049 = vpow.pop %v10048
        %v10050 = vmul.f32 %v10011, 1.442695
        %v10051 = vpow.pop %v10050
        %v10052 = vmul.f32 %v10012, 1.442695
        %v10053 = vpow.pop %v10052
        %v10054 = vmul.f32 %v10013, 1.442695
        %v10055 = vpow.pop %v10054
        %v10056 = vmul.f32 %v10014, 1.442695
        %v10057 = vpow.pop %v10056
        %v10058 = vmul.f32 %v10015, 1.442695
        %v10059 = vpow.pop %v10058
        %v10060 = vmul.f32 %v10016, 1.442695
        %v10061 = vpow.pop %v10060
        %v10062 = vmul.f32 %v10017, 1.442695
        %v10063 = vpow.pop %v10062
        %v10064 = vmul.f32 %v10018, 1.442695
        %v10065 = vpow.pop %v10064
        %v10066 = vmul.f32 %v10019, 1.442695
        %v10067 = vpow.pop %v10066
        %v10068 = vmul.f32 %v10020, 1.442695
        %v10069 = vpow.pop %v10068
        %v10070 = vmul.f32 %v10021, 1.442695
        %v10071 = vpow.pop %v10070
        %v10072 = vmul.f32 %v10022, 1.442695
        %v10073 = vpow.pop %v10072
        %v10074 = vmul.f32 %v10023, 1.442695
        %v10075 = vpow.pop %v10074
        %v10076 = vmul.f32 %v10024, 1.442695
        %v10077 = vpow.pop %v10076
        %v10078 = vmul.f32 %v10025, 1.442695
        %v10079 = vpow.pop %v10078
        %v10080 = vmul.f32 %v10026, 1.442695
        %v10081 = vpow.pop %v10080
        %v10082 = vmul.f32 %v10027, 1.442695
        %v10083 = vpow.pop %v10082
        %v10084 = vmul.f32 %v10028, 1.442695
        %v10085 = vpow.pop %v10084
        %v10086 = vmul.f32 %v10029, 1.442695
        %v10087 = vpow.pop %v10086
        %v10088 = vmul.f32 %v10030, 1.442695
        %v10089 = vpow.pop %v10088
        %v10090 = vmul.f32 %v10031, 1.442695
        %v10091 = vpow.pop %v10090
        %v10092 = vmul.f32 %v10032, 1.442695
        %v10093 = vpow.pop %v10092
        %v10094 = vmul.f32 %v10033, 1.442695
        %v10095 = vpow.pop %v10094
        %v10096 = vmul.f32 %v10034, 1.442695
        %v10097 = vpow.pop %v10096
        %v10098 = vmul.f32 %v10035, 1.442695
        %v10099 = vpow.pop %v10098
        %v10100 = vadd.f32 %v10037, 1.0
        %v10101 = vadd.f32 %v10039, 1.0
        %v10102 = vadd.f32 %v10041, 1.0
        %v10103 = vadd.f32 %v10043, 1.0
        %v10104 = vadd.f32 %v10045, 1.0
        %v10105 = vadd.f32 %v10047, 1.0
        %v10106 = vadd.f32 %v10049, 1.0
        %v10107 = vadd.f32 %v10051, 1.0
        %v10108 = vadd.f32 %v10053, 1.0
        %v10109 = vadd.f32 %v10055, 1.0
        %v10110 = vadd.f32 %v10057, 1.0
        %v10111 = vadd.f32 %v10059, 1.0
        %v10112 = vadd.f32 %v10061, 1.0
        %v10113 = vadd.f32 %v10063, 1.0
        %v10114 = vadd.f32 %v10065, 1.0
        %v10115 = vadd.f32 %v10067, 1.0
        %v10116 = vadd.f32 %v10069, 1.0
        %v10117 = vadd.f32 %v10071, 1.0
        %v10118 = vadd.f32 %v10073, 1.0
        %v10119 = vadd.f32 %v10075, 1.0
        %v10120 = vadd.f32 %v10077, 1.0
        %v10121 = vadd.f32 %v10079, 1.0
        %v10122 = vadd.f32 %v10081, 1.0
        %v10123 = vadd.f32 %v10083, 1.0
        %v10124 = vadd.f32 %v10085, 1.0
        %v10125 = vadd.f32 %v10087, 1.0
        %v10126 = vadd.f32 %v10089, 1.0
        %v10127 = vadd.f32 %v10091, 1.0
        %v10128 = vadd.f32 %v10093, 1.0
        %v10129 = vadd.f32 %v10095, 1.0
        %v10130 = vadd.f32 %v10097, 1.0
        %v10131 = vadd.f32 %v10099, 1.0
        %v10132 = vrcp.pop %v10100
        %v10133 = vrcp.pop %v10101
        %v10134 = vrcp.pop %v10102
        %v10135 = vrcp.pop %v10103
        %v10136 = vrcp.pop %v10104
        %v10137 = vrcp.pop %v10105
        %v10138 = vrcp.pop %v10106
        %v10139 = vrcp.pop %v10107
        %v10140 = vrcp.pop %v10108
        %v10141 = vrcp.pop %v10109
        %v10142 = vrcp.pop %v10110
        %v10143 = vrcp.pop %v10111
        %v10144 = vrcp.pop %v10112
        %v10145 = vrcp.pop %v10113
        %v10146 = vrcp.pop %v10114
        %v10147 = vrcp.pop %v10115
        %v10148 = vrcp.pop %v10116
        %v10149 = vrcp.pop %v10117
        %v10150 = vrcp.pop %v10118
        %v10151 = vrcp.pop %v10119
        %v10152 = vrcp.pop %v10120
        %v10153 = vrcp.pop %v10121
        %v10154 = vrcp.pop %v10122
        %v10155 = vrcp.pop %v10123
        %v10156 = vrcp.pop %v10124
        %v10157 = vrcp.pop %v10125
        %v10158 = vrcp.pop %v10126
        %v10159 = vrcp.pop %v10127
        %v10160 = vrcp.pop %v10128
        %v10161 = vrcp.pop %v10129
        %v10162 = vrcp.pop %v10130
        %v10163 = vrcp.pop %v10131
        %v10164 = vmul.f32 %v9878, %v10132
        %v10165 = vmul.f32 %v9881, %v10133
        %v10166 = vmul.f32 %v9886, %v10134
        %v10167 = vmul.f32 %v9889, %v10135
        %v10168 = vmul.f32 %v9894, %v10136
        %v10169 = vmul.f32 %v9897, %v10137
        %v10170 = vmul.f32 %v9902, %v10138
        %v10171 = vmul.f32 %v9905, %v10139
        %v10172 = vmul.f32 %v9910, %v10140
        %v10173 = vmul.f32 %v9913, %v10141
        %v10174 = vmul.f32 %v9918, %v10142
        %v10175 = vmul.f32 %v9921, %v10143
        %v10176 = vmul.f32 %v9926, %v10144
        %v10177 = vmul.f32 %v9929, %v10145
        %v10178 = vmul.f32 %v9934, %v10146
        %v10179 = vmul.f32 %v9937, %v10147
        %v10180 = vmul.f32 %v9942, %v10148
        %v10181 = vmul.f32 %v9945, %v10149
        %v10182 = vmul.f32 %v9950, %v10150
        %v10183 = vmul.f32 %v9953, %v10151
        %v10184 = vmul.f32 %v9958, %v10152
        %v10185 = vmul.f32 %v9961, %v10153
        %v10186 = vmul.f32 %v9966, %v10154
        %v10187 = vmul.f32 %v9969, %v10155
        %v10188 = vmul.f32 %v9974, %v10156
        %v10189 = vmul.f32 %v9977, %v10157
        %v10190 = vmul.f32 %v9982, %v10158
        %v10191 = vmul.f32 %v9985, %v10159
        %v10192 = vmul.f32 %v9990, %v10160
        %v10193 = vmul.f32 %v9993, %v10161
        %v10194 = vmul.f32 %v9998, %v10162
        %v10195 = vmul.f32 %v10001, %v10163
        %v10196 = vld [vmem:[%s289] sm:$0xff]
        %v10197 = vld [vmem:[%s289 + $0x8] sm:$0xff]
        %v10198 = vld [vmem:[%s289 + $0x10] sm:$0xff]
        %v10199 = vld [vmem:[%s289 + $0x18] sm:$0xff]
        %v10200 = vld [vmem:[%s289 + $0x20] sm:$0xff]
        %v10201 = vld [vmem:[%s289 + $0x28] sm:$0xff]
        %v10202 = vld [vmem:[%s289 + $0x30] sm:$0xff]
        %v10203 = vld [vmem:[%s289 + $0x38] sm:$0xff]
        %v10204 = vld [vmem:[%s289 + $0x40] sm:$0xff]
        %v10205 = vld [vmem:[%s289 + $0x48] sm:$0xff]
        %v10206 = vld [vmem:[%s289 + $0x50] sm:$0xff]
        %v10207 = vld [vmem:[%s289 + $0x58] sm:$0xff]
        %v10208 = vld [vmem:[%s289 + $0x60] sm:$0xff]
        %v10209 = vld [vmem:[%s289 + $0x68] sm:$0xff]
        %v10210 = vld [vmem:[%s289 + $0x70] sm:$0xff]
        %v10211 = vld [vmem:[%s289 + $0x78] sm:$0xff]
        %v10212 = vld [vmem:[%s289 + $0x80] sm:$0xff]
        %v10213 = vld [vmem:[%s289 + $0x88] sm:$0xff]
        %v10214 = vld [vmem:[%s289 + $0x90] sm:$0xff]
        %v10215 = vld [vmem:[%s289 + $0x98] sm:$0xff]
        %v10216 = vld [vmem:[%s289 + $0xa0] sm:$0xff]
        %v10217 = vld [vmem:[%s289 + $0xa8] sm:$0xff]
        %v10218 = vld [vmem:[%s289 + $0xb0] sm:$0xff]
        %v10219 = vld [vmem:[%s289 + $0xb8] sm:$0xff]
        %v10220 = vld [vmem:[%s289 + $0xc0] sm:$0xff]
        %v10221 = vld [vmem:[%s289 + $0xc8] sm:$0xff]
        %v10222 = vld [vmem:[%s289 + $0xd0] sm:$0xff]
        %v10223 = vld [vmem:[%s289 + $0xd8] sm:$0xff]
        %v10224 = vld [vmem:[%s289 + $0xe0] sm:$0xff]
        %v10225 = vld [vmem:[%s289 + $0xe8] sm:$0xff]
        %v10226 = vld [vmem:[%s289 + $0xf0] sm:$0xff]
        %v10227 = vld [vmem:[%s289 + $0xf8] sm:$0xff]
        %v10228 = vadd.f32 %v10164, %v10196
        %v10229 = vadd.f32 %v10165, %v10197
        %v10230 = vadd.f32 %v10166, %v10198
        %v10231 = vadd.f32 %v10167, %v10199
        %v10232 = vadd.f32 %v10168, %v10200
        %v10233 = vadd.f32 %v10169, %v10201
        %v10234 = vadd.f32 %v10170, %v10202
        %v10235 = vadd.f32 %v10171, %v10203
        %v10236 = vadd.f32 %v10172, %v10204
        %v10237 = vadd.f32 %v10173, %v10205
        %v10238 = vadd.f32 %v10174, %v10206
        %v10239 = vadd.f32 %v10175, %v10207
        %v10240 = vadd.f32 %v10176, %v10208
        %v10241 = vadd.f32 %v10177, %v10209
        %v10242 = vadd.f32 %v10178, %v10210
        %v10243 = vadd.f32 %v10179, %v10211
        %v10244 = vadd.f32 %v10180, %v10212
        %v10245 = vadd.f32 %v10181, %v10213
        %v10246 = vadd.f32 %v10182, %v10214
        %v10247 = vadd.f32 %v10183, %v10215
        %v10248 = vadd.f32 %v10184, %v10216
        %v10249 = vadd.f32 %v10185, %v10217
        %v10250 = vadd.f32 %v10186, %v10218
        %v10251 = vadd.f32 %v10187, %v10219
        %v10252 = vadd.f32 %v10188, %v10220
        %v10253 = vadd.f32 %v10189, %v10221
        %v10254 = vadd.f32 %v10190, %v10222
        %v10255 = vadd.f32 %v10191, %v10223
        %v10256 = vadd.f32 %v10192, %v10224
        %v10257 = vadd.f32 %v10193, %v10225
        %v10258 = vadd.f32 %v10194, %v10226
        %v10259 = vadd.f32 %v10195, %v10227
        %10260 = vst [vmem:[%s284] sm:$0xff] %v10228
        %10261 = vst [vmem:[%s284 + $0x8] sm:$0xff] %v10229
        %10262 = vst [vmem:[%s284 + $0x10] sm:$0xff] %v10230
        %10263 = vst [vmem:[%s284 + $0x18] sm:$0xff] %v10231
        %10264 = vst [vmem:[%s284 + $0x20] sm:$0xff] %v10232
        %10265 = vst [vmem:[%s284 + $0x28] sm:$0xff] %v10233
        %10266 = vst [vmem:[%s284 + $0x30] sm:$0xff] %v10234
        %10267 = vst [vmem:[%s284 + $0x38] sm:$0xff] %v10235
        %10268 = vst [vmem:[%s284 + $0x40] sm:$0xff] %v10236
        %10269 = vst [vmem:[%s284 + $0x48] sm:$0xff] %v10237
        %10270 = vst [vmem:[%s284 + $0x50] sm:$0xff] %v10238
        %10271 = vst [vmem:[%s284 + $0x58] sm:$0xff] %v10239
        %10272 = vst [vmem:[%s284 + $0x60] sm:$0xff] %v10240
        %10273 = vst [vmem:[%s284 + $0x68] sm:$0xff] %v10241
        %10274 = vst [vmem:[%s284 + $0x70] sm:$0xff] %v10242
        %10275 = vst [vmem:[%s284 + $0x78] sm:$0xff] %v10243
        %10276 = vst [vmem:[%s284 + $0x80] sm:$0xff] %v10244
        %10277 = vst [vmem:[%s284 + $0x88] sm:$0xff] %v10245
        %10278 = vst [vmem:[%s284 + $0x90] sm:$0xff] %v10246
        %10279 = vst [vmem:[%s284 + $0x98] sm:$0xff] %v10247
        %10280 = vst [vmem:[%s284 + $0xa0] sm:$0xff] %v10248
        %10281 = vst [vmem:[%s284 + $0xa8] sm:$0xff] %v10249
        %10282 = vst [vmem:[%s284 + $0xb0] sm:$0xff] %v10250
        %10283 = vst [vmem:[%s284 + $0xb8] sm:$0xff] %v10251
        %10284 = vst [vmem:[%s284 + $0xc0] sm:$0xff] %v10252
        %10285 = vst [vmem:[%s284 + $0xc8] sm:$0xff] %v10253
        %10286 = vst [vmem:[%s284 + $0xd0] sm:$0xff] %v10254
        %10287 = vst [vmem:[%s284 + $0xd8] sm:$0xff] %v10255
        %10288 = vst [vmem:[%s284 + $0xe0] sm:$0xff] %v10256
        %10289 = vst [vmem:[%s284 + $0xe8] sm:$0xff] %v10257
        %10290 = vst [vmem:[%s284 + $0xf0] sm:$0xff] %v10258
        %10291 = vst [vmem:[%s284 + $0xf8] sm:$0xff] %v10259
        %s10292 = sand.u32 %s167, 1
        %s10293 = scalar_lea.sflag [#allocation7], %s10292
        %s10294 = sand.u32 %s167, 1
        %s10295 = smul.addr %s10294, 256
        %s10296 = scalar_lea.vmem [#allocation8], %s10295
        // Predicated region
        $region49: #{tpu_custom_call.1} parent=43 // pred_check
          %p10297 = pneg %p177
        $region50: #{tpu_custom_call.1} parent=43 // pred_check_branch
          %10299 = sbr.rel (%p10297) target = $region52
        $region51: #{tpu_custom_call.1} parent=43 // pred_region
          %s10301 = ssub.s32 4096, 4096
          %10302 = vsyncadd %s10293, %s10301
          %s10303 = smul.addr %s23, 32
          %s10304 = smul.addr %s10303, 128
          %s10305 = scalar_lea.hbm %s6, %s10304
          %s10306 = sshll.u32 %s10296, 4
          %s10307 = int_to_ptr.vmem [resolvable:$true] %s10306
          %10312 = dma.vmem_to_hbm [thread:$0]  %s10307, 4096, %s10305, %s10293, 128, 128, 8
        $region52: #{tpu_custom_call.1} parent=43 // pred_fallthru
          _
      $region44: #{tpu_custom_call.1} parent=5 // pred_fallthru
        _
      %p10313 = scmp.le.s32.totalorder 2, %s18
      // Predicated region
      $region53: #{tpu_custom_call.1} parent=5 // pred_check
        %p10314 = pneg %p10313
      $region54: #{tpu_custom_call.1} parent=5 // pred_check_branch
        %10316 = sbr.rel (%p10314) target = $region56
      $region55: #{tpu_custom_call.1} parent=5 // pred_region
        %s10317 = ssub.s32 %s18, 2
        // Predicated region
        $region57: #{tpu_custom_call.1} parent=55 // pred_check
          %p10318 = pneg %p183
        $region58: #{tpu_custom_call.1} parent=55 // pred_check_branch
          %10320 = sbr.rel (%p10318) target = $region60
        $region59: #{tpu_custom_call.1} parent=55 // pred_region
          %s10321 = sand.u32 %s168, 1
          %s10322 = scalar_lea.sflag [#allocation7], %s10321
          %s10323 = sand.u32 %s168, 1
          %s10324 = smul.addr %s10323, 256
          %s10325 = scalar_lea.vmem [#allocation8], %s10324
          %10326 = dma.done %s10322, 4096
        $region60: #{tpu_custom_call.1} parent=55 // pred_fallthru
          _
      $region56: #{tpu_custom_call.1} parent=5 // pred_fallthru
        _
    $region6: #{tpu_custom_call.1} parent=1 // loop_footer
      %s22 = sadd.s32 1, %s18
    $region7: #{tpu_custom_call.1} parent=1 // loop_footer_branch
      %17 = sbr.rel target = $region3
    $region8: #{tpu_custom_call.1} parent=1 // loop_exit
      _
    %10327 = vsyncpa [#allocation6], 1
    %s10328 = scalar_lea.sflag [#allocation6], 1
    %10329 = vsyncpa %s10328, 1
    %10330 = vsyncpa [#allocation7], 1
    %s10331 = scalar_lea.sflag [#allocation7], 1
    %10332 = vsyncpa %s10331, 1

</llo_original>
